<compile_context>
chip_gen: v7x
topology: tpu7x:2x2x1
jax: 0.10.0
libtpu: 0.0.40
codegen_flags: <defaults>
</compile_context>

<pallas_src>
import numpy as np
import jax
import jax.numpy as jnp
from jax import lax
from jax.experimental import pallas as pl
from jax.experimental.pallas import tpu as pltpu

BN_EPS = 1e-5
LANE = 128


def _round_up(x, m):
    return (x + m - 1) // m * m


# ---------------------------------------------------------------- kernels ---
def _up_matmul_kernel(a_ref, b_ref, o_ref):
    # (M,K)bf16 @ (K,N)bf16 -> (M,N)f32, default precision, f32 accumulation.
    o_ref[...] = jnp.dot(a_ref[...], b_ref[...],
                         preferred_element_type=jnp.float32)


def _conv1_stats_kernel(x2_ref, x1u_ref, w_ref, y_ref, st_ref, xpad_ref):
    """Fused concat(skip, upsampled) -> zero halo pad -> 3x3 conv (9 shifted
    matmuls) -> partial BN stats.  One grid step == one batch image.

    x2_ref  : (1, H, W, C2)   f32  skip connection
    x1u_ref : (1, H, W, C1)   f32  upsampled x1
    w_ref   : (9, C2+C1, Cop) bf16 packed conv1 weights (Cout lane-padded)
    y_ref   : (1, H, W, Cop)  f32  raw conv output
    st_ref  : (1, 2, Cop)     f32  per-image [sum, sum-of-squares]
    xpad_ref: (H+2, W+2, C2+C1) f32 scratch (halo-padded input)
    """
    _, H, W, C2 = x2_ref.shape
    C1 = x1u_ref.shape[3]
    CT = C2 + C1
    cop = y_ref.shape[3]

    xcat = jnp.concatenate([x2_ref[0], x1u_ref[0]], axis=-1)
    xpad_ref[...] = jnp.zeros(xpad_ref.shape, xpad_ref.dtype)
    xpad_ref[1:H + 1, 1:W + 1, :] = xcat

    acc = jnp.zeros((H * W, cop), jnp.float32)
    for k in range(9):
        dy, dx = divmod(k, 3)
        patch = xpad_ref[dy:dy + H, dx:dx + W, :].reshape(H * W, CT)
        acc = acc + jnp.dot(patch.astype(jnp.bfloat16), w_ref[k],
                            preferred_element_type=jnp.float32)

    y_ref[0] = acc.reshape(H, W, cop)
    st_ref[0, 0:1, :] = jnp.sum(acc, axis=0, keepdims=True)
    st_ref[0, 1:2, :] = jnp.sum(acc * acc, axis=0, keepdims=True)


def _bn_relu_conv_stats_kernel(y1_ref, sc_ref, sh_ref, w_ref,
                               y2_ref, st_ref, apad_ref):
    """Fused BN1(scale/shift)+ReLU -> zero halo pad -> 3x3 conv #2 ->
    partial BN2 stats.  One grid step == one batch image."""
    _, H, W, C = y1_ref.shape
    cop = y2_ref.shape[3]

    a = jnp.maximum(y1_ref[0] * sc_ref[...] + sh_ref[...], 0.0)
    apad_ref[...] = jnp.zeros(apad_ref.shape, apad_ref.dtype)
    apad_ref[1:H + 1, 1:W + 1, :] = a

    acc = jnp.zeros((H * W, cop), jnp.float32)
    for k in range(9):
        dy, dx = divmod(k, 3)
        patch = apad_ref[dy:dy + H, dx:dx + W, :].reshape(H * W, C)
        acc = acc + jnp.dot(patch.astype(jnp.bfloat16), w_ref[k],
                            preferred_element_type=jnp.float32)

    y2_ref[0] = acc.reshape(H, W, cop)
    st_ref[0, 0:1, :] = jnp.sum(acc, axis=0, keepdims=True)
    st_ref[0, 1:2, :] = jnp.sum(acc * acc, axis=0, keepdims=True)


def _bn_relu_kernel(y_ref, sc_ref, sh_ref, o_ref):
    o_ref[0] = jnp.maximum(y_ref[0] * sc_ref[...] + sh_ref[...], 0.0)


# ----------------------------------------------------------- pallas calls ---
def _pallas_matmul(a_bf16, b_bf16):
    m, k = a_bf16.shape
    n = b_bf16.shape[1]
    return pl.pallas_call(
        _up_matmul_kernel,
        out_shape=jax.ShapeDtypeStruct((m, n), jnp.float32),
        cost_estimate=pl.CostEstimate(
            flops=2 * m * k * n, transcendentals=0,
            bytes_accessed=2 * (m * k + k * n) + 4 * m * n),
    )(a_bf16, b_bf16)


def _conv1_stats(x2n, x1u, w1p):
    n, H, W, c2 = x2n.shape
    c1 = x1u.shape[3]
    ct = c2 + c1
    cop = w1p.shape[2]
    gs = pltpu.PrefetchScalarGridSpec(
        num_scalar_prefetch=0, grid=(n,),
        in_specs=[
            pl.BlockSpec((1, H, W, c2), lambda i: (i, 0, 0, 0)),
            pl.BlockSpec((1, H, W, c1), lambda i: (i, 0, 0, 0)),
            pl.BlockSpec((9, ct, cop), lambda i: (0, 0, 0)),   # weights resident
        ],
        out_specs=[
            pl.BlockSpec((1, H, W, cop), lambda i: (i, 0, 0, 0)),
            pl.BlockSpec((1, 2, cop), lambda i: (i, 0, 0)),
        ],
        scratch_shapes=[pltpu.VMEM((H + 2, W + 2, ct), jnp.float32)],
    )
    return pl.pallas_call(
        _conv1_stats_kernel,
        grid_spec=gs,
        out_shape=(jax.ShapeDtypeStruct((n, H, W, cop), jnp.float32),
                   jax.ShapeDtypeStruct((n, 2, cop), jnp.float32)),
        compiler_params=pltpu.CompilerParams(dimension_semantics=("parallel",)),
        cost_estimate=pl.CostEstimate(
            flops=2 * 9 * n * H * W * ct * cop, transcendentals=0,
            bytes_accessed=4 * (x2n.size + x1u.size + n * H * W * cop
                                + n * 2 * cop) + 2 * w1p.size),
    )(x2n, x1u, w1p)


def _conv2_stats(y1, sc1, sh1, w2p):
    n, H, W, c = y1.shape
    cop = w2p.shape[2]
    gs = pltpu.PrefetchScalarGridSpec(
        num_scalar_prefetch=0, grid=(n,),
        in_specs=[
            pl.BlockSpec((1, H, W, c), lambda i: (i, 0, 0, 0)),
            pl.BlockSpec((1, c), lambda i: (0, 0)),
            pl.BlockSpec((1, c), lambda i: (0, 0)),
            pl.BlockSpec((9, c, cop), lambda i: (0, 0, 0)),
        ],
        out_specs=[
            pl.BlockSpec((1, H, W, cop), lambda i: (i, 0, 0, 0)),
            pl.BlockSpec((1, 2, cop), lambda i: (i, 0, 0)),
        ],
        scratch_shapes=[pltpu.VMEM((H + 2, W + 2, c), jnp.float32)],
    )
    return pl.pallas_call(
        _bn_relu_conv_stats_kernel,
        grid_spec=gs,
        out_shape=(jax.ShapeDtypeStruct((n, H, W, cop), jnp.float32),
                   jax.ShapeDtypeStruct((n, 2, cop), jnp.float32)),
        compiler_params=pltpu.CompilerParams(dimension_semantics=("parallel",)),
        cost_estimate=pl.CostEstimate(
            flops=2 * 9 * n * H * W * c * cop, transcendentals=0,
            bytes_accessed=4 * (y1.size + n * H * W * cop + n * 2 * cop)
                           + 2 * w2p.size),
    )(y1, sc1, sh1, w2p)


def _bn_relu(y, sc, sh):
    n, H, W, c = y.shape
    gs = pltpu.PrefetchScalarGridSpec(
        num_scalar_prefetch=0, grid=(n,),
        in_specs=[
            pl.BlockSpec((1, H, W, c), lambda i: (i, 0, 0, 0)),
            pl.BlockSpec((1, c), lambda i: (0, 0)),
            pl.BlockSpec((1, c), lambda i: (0, 0)),
        ],
        out_specs=pl.BlockSpec((1, H, W, c), lambda i: (i, 0, 0, 0)),
    )
    return pl.pallas_call(
        _bn_relu_kernel,
        grid_spec=gs,
        out_shape=jax.ShapeDtypeStruct((n, H, W, c), jnp.float32),
        compiler_params=pltpu.CompilerParams(dimension_semantics=("parallel",)),
        cost_estimate=pl.CostEstimate(flops=3 * y.size, transcendentals=0,
                                      bytes_accessed=8 * y.size),
    )(y, sc, sh)


# ------------------------------------------------------------------- glue ---
def _interp_matrix(n_in, n_out):
    """Row-interpolation matrix for bilinear upsample, align_corners=True."""
    p = np.arange(n_out, dtype=np.float64)
    src = np.zeros(n_out) if n_out == 1 else p * (n_in - 1) / (n_out - 1)
    i0 = np.clip(np.floor(src).astype(np.int64), 0, n_in - 1)
    i1 = np.minimum(i0 + 1, n_in - 1)
    frac = src - i0
    A = np.zeros((n_out, n_in), np.float32)
    A[np.arange(n_out), i0] += (1.0 - frac).astype(np.float32)
    A[np.arange(n_out), i1] += frac.astype(np.float32)
    return A


def _pack_conv_weight(w_oihw, cin_pad, cout_pad):
    co, ci, kh, kw = w_oihw.shape
    w = jnp.transpose(w_oihw, (2, 3, 1, 0)).reshape(kh * kw, ci, co)  # (9,Ci,Co)
    w = jnp.pad(w, ((0, 0), (0, cin_pad - ci), (0, cout_pad - co)))
    return w.astype(jnp.bfloat16)


def _pad_channels(v, width):
    return jnp.pad(v, (0, width - v.shape[0]))


def _bn_fold(stats, gamma, beta, count):
    """Global training-mode BN stats from per-image partial sums ->
    per-channel (scale, shift).  Padded channels fold to (0, 0)."""
    s = jnp.sum(stats[:, 0, :], axis=0)
    ss = jnp.sum(stats[:, 1, :], axis=0)
    mu = s / count
    var = jnp.maximum(ss / count - mu * mu, 0.0)
    scale = gamma * lax.rsqrt(var + BN_EPS)
    shift = beta - mu * scale
    return scale[None, :], shift[None, :]


def up_forward(x1, x2, params):
    """Up.forward(x1, x2) with bilinear=True.  x1, x2 are NCHW float32."""
    n, c1, h1, w1 = x1.shape
    _, c2, hh, ww = x2.shape
    ho, wo = 2 * h1, 2 * w1

    # --- separable bilinear x2 upsample (align_corners=True): 2 tiny matmuls
    a_h = jnp.asarray(_interp_matrix(h1, ho)).astype(jnp.bfloat16)
    a_w = jnp.asarray(_interp_matrix(w1, wo)).astype(jnp.bfloat16)
    xh = jnp.transpose(x1, (2, 0, 1, 3)).reshape(h1, n * c1 * w1)
    yh = _pallas_matmul(a_h, xh.astype(jnp.bfloat16))            # (ho, n*c1*w1)
    yw_in = (yh.reshape(ho, n, c1, w1).transpose(3, 1, 2, 0)
               .reshape(w1, n * c1 * ho))
    yw = _pallas_matmul(a_w, yw_in.astype(jnp.bfloat16))         # (wo, n*c1*ho)
    x1u = yw.reshape(wo, n, c1, ho).transpose(1, 3, 0, 2)        # (n,ho,wo,c1) NHWC

    # --- F.pad to the skip-connection spatial size (no-op when equal)
    dy, dx = hh - ho, ww - wo
    if dy or dx:
        x1u = jnp.pad(x1u, ((0, 0), (dy // 2, dy - dy // 2),
                            (dx // 2, dx - dx // 2), (0, 0)))
    x2n = jnp.transpose(x2, (0, 2, 3, 1))                        # skip, NHWC

    mid = params["w1"].shape[0]
    cout = params["w2"].shape[0]
    c1p = _round_up(mid, LANE)                                   # lane-padded widths
    c2p = _round_up(cout, LANE)
    w1p = _pack_conv_weight(params["w1"], c1 + c2, c1p)
    w2p = _pack_conv_weight(params["w2"], c1p, c2p)
    count = float(n * hh * ww)

    # --- DoubleConv: conv1(+concat/pad fused) -> BN1+ReLU+conv2 -> BN2+ReLU
    # (conv biases are dropped: exactly cancelled by training-mode BN mean.)
    y1, st1 = _conv1_stats(x2n, x1u, w1p)
    sc1, sh1 = _bn_fold(st1, _pad_channels(params["g1"], c1p),
                        _pad_channels(params["be1"], c1p), count)
    y2, st2 = _conv2_stats(y1, sc1, sh1, w2p)
    sc2, sh2 = _bn_fold(st2, _pad_channels(params["g2"], c2p),
                        _pad_channels(params["be2"], c2p), count)
    out = _bn_relu(y2, sc2, sh2)
    out = out[..., :cout]                                        # drop lane padding
    return jnp.transpose(out, (0, 3, 1, 2))                      # back to NCHW


# ----------------------------------------------------------- pure-JAX ref ---
def _ref_up_forward(x1, x2, params):
    """Pure-JAX NCHW reference at the same bf16-operand / f32-accumulate
    matmul precision policy as the kernels."""
    n, c1, h1, w1 = x1.shape
    ho, wo = 2 * h1, 2 * w1
    a_h = jnp.asarray(_interp_matrix(h1, ho)).astype(jnp.bfloat16)
    a_w = jnp.asarray(_interp_matrix(w1, wo)).astype(jnp.bfloat16)
    t = jnp.einsum("ph,nchw->ncpw", a_h, x1.astype(jnp.bfloat16),
                   preferred_element_type=jnp.float32)
    x1u = jnp.einsum("qw,ncpw->ncpq", a_w, t.astype(jnp.bfloat16),
                     preferred_element_type=jnp.float32)
    dy = x2.shape[2] - x1u.shape[2]
    dx = x2.shape[3] - x1u.shape[3]
    x1u = jnp.pad(x1u, ((0, 0), (0, 0), (dy // 2, dy - dy // 2),
                        (dx // 2, dx - dx // 2)))
    x = jnp.concatenate([x2, x1u], axis=1)

    def conv3x3(x, w, b):
        nn_, ci, H, W = x.shape
        co = w.shape[0]
        xp = jnp.pad(x, ((0, 0), (0, 0), (1, 1), (1, 1))).astype(jnp.bfloat16)
        wb = w.astype(jnp.bfloat16)
        y = jnp.zeros((nn_, co, H, W), jnp.float32)
        for ky in range(3):
            for kx in range(3):
                y = y + jnp.einsum("nihw,oi->nohw",
                                   xp[:, :, ky:ky + H, kx:kx + W],
                                   wb[:, :, ky, kx],
                                   preferred_element_type=jnp.float32)
        return y + b[None, :, None, None]

    def bn_relu(y, g, be):
        mu = jnp.mean(y, axis=(0, 2, 3), keepdims=True)
        var = jnp.mean((y - mu) ** 2, axis=(0, 2, 3), keepdims=True)
        yh = (y - mu) * lax.rsqrt(var + BN_EPS)
        return jnp.maximum(yh * g[None, :, None, None]
                           + be[None, :, None, None], 0.0)

    h = bn_relu(conv3x3(x, params["w1"], params["b1"]),
                params["g1"], params["be1"])
    h = bn_relu(conv3x3(h, params["w2"], params["b2"]),
                params["g2"], params["be2"])
    return h


# ------------------------------------------------------------------- main ---
if __name__ == "__main__":
    # Up(in_channels=8, out_channels=4, bilinear=True)
    in_channels, out_channels = 8, 4
    mid_channels = in_channels // 2                  # DoubleConv mid
    N, H1, W1 = 2, 8, 8                              # x1 low-res; output is 16x16

    key = jax.random.PRNGKey(0)
    k = jax.random.split(key, 6)
    # x1 has in_channels//2 channels (UNet convention: concat -> in_channels)
    x1 = jax.random.normal(k[0], (N, in_channels // 2, H1, W1), jnp.float32)
    x2 = jax.random.normal(k[1], (N, in_channels // 2, 2 * H1, 2 * W1), jnp.float32)

    params = {
        "w1": 0.1 * jax.random.normal(k[2], (mid_channels, in_channels, 3, 3), jnp.float32),
        "b1": 0.1 * jax.random.normal(k[3], (mid_channels,), jnp.float32),
        "g1": jnp.ones((mid_channels,), jnp.float32),     # BN default init
        "be1": jnp.zeros((mid_channels,), jnp.float32),
        "w2": 0.1 * jax.random.normal(k[4], (out_channels, mid_channels, 3, 3), jnp.float32),
        "b2": 0.1 * jax.random.normal(k[5], (out_channels,), jnp.float32),
        "g2": jnp.ones((out_channels,), jnp.float32),
        "be2": jnp.zeros((out_channels,), jnp.float32),
    }

    out = jax.block_until_ready(jax.jit(up_forward)(x1, x2, params))
    ref = jax.block_until_ready(_ref_up_forward(x1, x2, params))

    assert out.shape == (N, out_channels, 2 * H1, 2 * W1), out.shape
    max_err = float(jnp.max(jnp.abs(out - ref)))
    assert np.allclose(np.asarray(out), np.asarray(ref), rtol=2e-3, atol=2e-3), max_err
    print("KERNEL_OK")
</pallas_src>

<mosaic_0001>
module attributes {stable_mosaic.version = 11 : i64} {
  func.func @_conv1_stats_kernel(%arg0: i32, %arg1: memref<1x16x16x4xf32, #tpu.memory_space<vmem>>, %arg2: memref<1x16x16x4xf32, #tpu.memory_space<vmem>>, %arg3: memref<9x8x128xbf16, #tpu.memory_space<vmem>>, %arg4: memref<1x16x16x128xf32, #tpu.memory_space<vmem>>, %arg5: memref<1x2x128xf32, #tpu.memory_space<vmem>>, %arg6: memref<18x18x8xf32, #tpu.memory_space<vmem>>) attributes {dimension_semantics = [#tpu.dimension_semantics<parallel>], iteration_bounds = array<i64: 2>, scalar_prefetch = 0 : i64, scratch_operands = 1 : i64, tpu.core_type = #tpu.core_type<tc>, window_params = [{transform_indices = @transform_0, window_bounds = array<i64: 1, 16, 16, 4>}, {transform_indices = @transform_1, window_bounds = array<i64: 1, 16, 16, 4>}, {pipeline_mode = #tpu.pipeline_mode<synchronous>, transform_indices = @transform_2, window_bounds = array<i64: 9, 8, 128>}, {transform_indices = @transform_3, window_bounds = array<i64: 1, 16, 16, 128>}, {transform_indices = @transform_4, window_bounds = array<i64: 1, 2, 128>}]} {
    %c0 = arith.constant 0 : index
    %c0_0 = arith.constant 0 : index
    %c0_1 = arith.constant 0 : index
    %c0_2 = arith.constant 0 : index
    %0 = vector.load %arg1[%c0, %c0_0, %c0_1, %c0_2] : memref<1x16x16x4xf32, #tpu.memory_space<vmem>>, vector<1x16x16x4xf32>
    %1 = vector.shape_cast %0 : vector<1x16x16x4xf32> to vector<16x16x4xf32>
    %c0_3 = arith.constant 0 : index
    %c0_4 = arith.constant 0 : index
    %c0_5 = arith.constant 0 : index
    %c0_6 = arith.constant 0 : index
    %2 = vector.load %arg2[%c0_3, %c0_4, %c0_5, %c0_6] : memref<1x16x16x4xf32, #tpu.memory_space<vmem>>, vector<1x16x16x4xf32>
    %3 = vector.shape_cast %2 : vector<1x16x16x4xf32> to vector<16x16x4xf32>
    %4 = tpu.concatenate %1, %3 in 2 : vector<16x16x4xf32>, vector<16x16x4xf32> -> vector<16x16x8xf32>
    %cst = arith.constant 0.000000e+00 : f32
    %5 = vector.broadcast %cst : f32 to vector<18x18x8xf32>
    %c0_7 = arith.constant 0 : index
    %c0_8 = arith.constant 0 : index
    %c0_9 = arith.constant 0 : index
    %6 = vector.load %arg6[%c0_7, %c0_8, %c0_9] : memref<18x18x8xf32, #tpu.memory_space<vmem>>, vector<18x18x8xf32>
    tpu.vector_store %arg6[%c0_7, %c0_8, %c0_9], %5 {strides = array<i32>} : memref<18x18x8xf32, #tpu.memory_space<vmem>>, vector<18x18x8xf32>,
    %c1 = arith.constant 1 : index
    %c1_10 = arith.constant 1 : index
    %c0_11 = arith.constant 0 : index
    %7 = vector.load %arg6[%c1, %c1_10, %c0_11] : memref<18x18x8xf32, #tpu.memory_space<vmem>>, vector<16x16x8xf32>
    tpu.vector_store %arg6[%c1, %c1_10, %c0_11], %4 {strides = array<i32>} : memref<18x18x8xf32, #tpu.memory_space<vmem>>, vector<16x16x8xf32>,
    %cst_12 = arith.constant 0.000000e+00 : f32
    %8 = vector.broadcast %cst_12 : f32 to vector<256x128xf32>
    %c0_13 = arith.constant 0 : index
    %c0_14 = arith.constant 0 : index
    %c0_15 = arith.constant 0 : index
    %9 = vector.load %arg6[%c0_13, %c0_14, %c0_15] : memref<18x18x8xf32, #tpu.memory_space<vmem>>, vector<16x16x8xf32>
    %10 = vector.shape_cast %9 : vector<16x16x8xf32> to vector<256x8xf32>
    %11 = arith.truncf %10 : vector<256x8xf32> to vector<256x8xbf16>
    %c0_16 = arith.constant 0 : index
    %c0_17 = arith.constant 0 : index
    %c0_18 = arith.constant 0 : index
    %12 = vector.load %arg3[%c0_16, %c0_17, %c0_18] : memref<9x8x128xbf16, #tpu.memory_space<vmem>>, vector<1x8x128xbf16>
    %13 = vector.shape_cast %12 : vector<1x8x128xbf16> to vector<8x128xbf16>
    %cst_19 = arith.constant dense<0.000000e+00> : vector<256x128xf32>
    %14 = tpu.matmul %11, %13, %cst_19 {dimension_numbers = #tpu.dot_dimension_numbers<[1], [0], [0], [1], [0, 0, 1, 1], [], []>} : vector<256x8xbf16>, vector<8x128xbf16>, vector<256x128xf32> -> vector<256x128xf32>
    %15 = arith.addf %8, %14 : vector<256x128xf32>
    %c0_20 = arith.constant 0 : index
    %c1_21 = arith.constant 1 : index
    %c0_22 = arith.constant 0 : index
    %16 = vector.load %arg6[%c0_20, %c1_21, %c0_22] : memref<18x18x8xf32, #tpu.memory_space<vmem>>, vector<16x16x8xf32>
    %17 = vector.shape_cast %16 : vector<16x16x8xf32> to vector<256x8xf32>
    %18 = arith.truncf %17 : vector<256x8xf32> to vector<256x8xbf16>
    %c1_23 = arith.constant 1 : index
    %c0_24 = arith.constant 0 : index
    %c0_25 = arith.constant 0 : index
    %19 = vector.load %arg3[%c1_23, %c0_24, %c0_25] : memref<9x8x128xbf16, #tpu.memory_space<vmem>>, vector<1x8x128xbf16>
    %20 = vector.shape_cast %19 : vector<1x8x128xbf16> to vector<8x128xbf16>
    %cst_26 = arith.constant dense<0.000000e+00> : vector<256x128xf32>
    %21 = tpu.matmul %18, %20, %cst_26 {dimension_numbers = #tpu.dot_dimension_numbers<[1], [0], [0], [1], [0, 0, 1, 1], [], []>} : vector<256x8xbf16>, vector<8x128xbf16>, vector<256x128xf32> -> vector<256x128xf32>
    %22 = arith.addf %15, %21 : vector<256x128xf32>
    %c0_27 = arith.constant 0 : index
    %c2 = arith.constant 2 : index
    %c0_28 = arith.constant 0 : index
    %23 = vector.load %arg6[%c0_27, %c2, %c0_28] : memref<18x18x8xf32, #tpu.memory_space<vmem>>, vector<16x16x8xf32>
    %24 = vector.shape_cast %23 : vector<16x16x8xf32> to vector<256x8xf32>
    %25 = arith.truncf %24 : vector<256x8xf32> to vector<256x8xbf16>
    %c2_29 = arith.constant 2 : index
    %c0_30 = arith.constant 0 : index
    %c0_31 = arith.constant 0 : index
    %26 = vector.load %arg3[%c2_29, %c0_30, %c0_31] : memref<9x8x128xbf16, #tpu.memory_space<vmem>>, vector<1x8x128xbf16>
    %27 = vector.shape_cast %26 : vector<1x8x128xbf16> to vector<8x128xbf16>
    %cst_32 = arith.constant dense<0.000000e+00> : vector<256x128xf32>
    %28 = tpu.matmul %25, %27, %cst_32 {dimension_numbers = #tpu.dot_dimension_numbers<[1], [0], [0], [1], [0, 0, 1, 1], [], []>} : vector<256x8xbf16>, vector<8x128xbf16>, vector<256x128xf32> -> vector<256x128xf32>
    %29 = arith.addf %22, %28 : vector<256x128xf32>
    %c1_33 = arith.constant 1 : index
    %c0_34 = arith.constant 0 : index
    %c0_35 = arith.constant 0 : index
    %30 = vector.load %arg6[%c1_33, %c0_34, %c0_35] : memref<18x18x8xf32, #tpu.memory_space<vmem>>, vector<16x16x8xf32>
    %31 = vector.shape_cast %30 : vector<16x16x8xf32> to vector<256x8xf32>
    %32 = arith.truncf %31 : vector<256x8xf32> to vector<256x8xbf16>
    %c3 = arith.constant 3 : index
    %c0_36 = arith.constant 0 : index
    %c0_37 = arith.constant 0 : index
    %33 = vector.load %arg3[%c3, %c0_36, %c0_37] : memref<9x8x128xbf16, #tpu.memory_space<vmem>>, vector<1x8x128xbf16>
    %34 = vector.shape_cast %33 : vector<1x8x128xbf16> to vector<8x128xbf16>
    %cst_38 = arith.constant dense<0.000000e+00> : vector<256x128xf32>
    %35 = tpu.matmul %32, %34, %cst_38 {dimension_numbers = #tpu.dot_dimension_numbers<[1], [0], [0], [1], [0, 0, 1, 1], [], []>} : vector<256x8xbf16>, vector<8x128xbf16>, vector<256x128xf32> -> vector<256x128xf32>
    %36 = arith.addf %29, %35 : vector<256x128xf32>
    %c1_39 = arith.constant 1 : index
    %c1_40 = arith.constant 1 : index
    %c0_41 = arith.constant 0 : index
    %37 = vector.load %arg6[%c1_39, %c1_40, %c0_41] : memref<18x18x8xf32, #tpu.memory_space<vmem>>, vector<16x16x8xf32>
    %38 = vector.shape_cast %37 : vector<16x16x8xf32> to vector<256x8xf32>
    %39 = arith.truncf %38 : vector<256x8xf32> to vector<256x8xbf16>
    %c4 = arith.constant 4 : index
    %c0_42 = arith.constant 0 : index
    %c0_43 = arith.constant 0 : index
    %40 = vector.load %arg3[%c4, %c0_42, %c0_43] : memref<9x8x128xbf16, #tpu.memory_space<vmem>>, vector<1x8x128xbf16>
    %41 = vector.shape_cast %40 : vector<1x8x128xbf16> to vector<8x128xbf16>
    %cst_44 = arith.constant dense<0.000000e+00> : vector<256x128xf32>
    %42 = tpu.matmul %39, %41, %cst_44 {dimension_numbers = #tpu.dot_dimension_numbers<[1], [0], [0], [1], [0, 0, 1, 1], [], []>} : vector<256x8xbf16>, vector<8x128xbf16>, vector<256x128xf32> -> vector<256x128xf32>
    %43 = arith.addf %36, %42 : vector<256x128xf32>
    %c1_45 = arith.constant 1 : index
    %c2_46 = arith.constant 2 : index
    %c0_47 = arith.constant 0 : index
    %44 = vector.load %arg6[%c1_45, %c2_46, %c0_47] : memref<18x18x8xf32, #tpu.memory_space<vmem>>, vector<16x16x8xf32>
    %45 = vector.shape_cast %44 : vector<16x16x8xf32> to vector<256x8xf32>
    %46 = arith.truncf %45 : vector<256x8xf32> to vector<256x8xbf16>
    %c5 = arith.constant 5 : index
    %c0_48 = arith.constant 0 : index
    %c0_49 = arith.constant 0 : index
    %47 = vector.load %arg3[%c5, %c0_48, %c0_49] : memref<9x8x128xbf16, #tpu.memory_space<vmem>>, vector<1x8x128xbf16>
    %48 = vector.shape_cast %47 : vector<1x8x128xbf16> to vector<8x128xbf16>
    %cst_50 = arith.constant dense<0.000000e+00> : vector<256x128xf32>
    %49 = tpu.matmul %46, %48, %cst_50 {dimension_numbers = #tpu.dot_dimension_numbers<[1], [0], [0], [1], [0, 0, 1, 1], [], []>} : vector<256x8xbf16>, vector<8x128xbf16>, vector<256x128xf32> -> vector<256x128xf32>
    %50 = arith.addf %43, %49 : vector<256x128xf32>
    %c2_51 = arith.constant 2 : index
    %c0_52 = arith.constant 0 : index
    %c0_53 = arith.constant 0 : index
    %51 = vector.load %arg6[%c2_51, %c0_52, %c0_53] : memref<18x18x8xf32, #tpu.memory_space<vmem>>, vector<16x16x8xf32>
    %52 = vector.shape_cast %51 : vector<16x16x8xf32> to vector<256x8xf32>
    %53 = arith.truncf %52 : vector<256x8xf32> to vector<256x8xbf16>
    %c6 = arith.constant 6 : index
    %c0_54 = arith.constant 0 : index
    %c0_55 = arith.constant 0 : index
    %54 = vector.load %arg3[%c6, %c0_54, %c0_55] : memref<9x8x128xbf16, #tpu.memory_space<vmem>>, vector<1x8x128xbf16>
    %55 = vector.shape_cast %54 : vector<1x8x128xbf16> to vector<8x128xbf16>
    %cst_56 = arith.constant dense<0.000000e+00> : vector<256x128xf32>
    %56 = tpu.matmul %53, %55, %cst_56 {dimension_numbers = #tpu.dot_dimension_numbers<[1], [0], [0], [1], [0, 0, 1, 1], [], []>} : vector<256x8xbf16>, vector<8x128xbf16>, vector<256x128xf32> -> vector<256x128xf32>
    %57 = arith.addf %50, %56 : vector<256x128xf32>
    %c2_57 = arith.constant 2 : index
    %c1_58 = arith.constant 1 : index
    %c0_59 = arith.constant 0 : index
    %58 = vector.load %arg6[%c2_57, %c1_58, %c0_59] : memref<18x18x8xf32, #tpu.memory_space<vmem>>, vector<16x16x8xf32>
    %59 = vector.shape_cast %58 : vector<16x16x8xf32> to vector<256x8xf32>
    %60 = arith.truncf %59 : vector<256x8xf32> to vector<256x8xbf16>
    %c7 = arith.constant 7 : index
    %c0_60 = arith.constant 0 : index
    %c0_61 = arith.constant 0 : index
    %61 = vector.load %arg3[%c7, %c0_60, %c0_61] : memref<9x8x128xbf16, #tpu.memory_space<vmem>>, vector<1x8x128xbf16>
    %62 = vector.shape_cast %61 : vector<1x8x128xbf16> to vector<8x128xbf16>
    %cst_62 = arith.constant dense<0.000000e+00> : vector<256x128xf32>
    %63 = tpu.matmul %60, %62, %cst_62 {dimension_numbers = #tpu.dot_dimension_numbers<[1], [0], [0], [1], [0, 0, 1, 1], [], []>} : vector<256x8xbf16>, vector<8x128xbf16>, vector<256x128xf32> -> vector<256x128xf32>
    %64 = arith.addf %57, %63 : vector<256x128xf32>
    %c2_63 = arith.constant 2 : index
    %c2_64 = arith.constant 2 : index
    %c0_65 = arith.constant 0 : index
    %65 = vector.load %arg6[%c2_63, %c2_64, %c0_65] : memref<18x18x8xf32, #tpu.memory_space<vmem>>, vector<16x16x8xf32>
    %66 = vector.shape_cast %65 : vector<16x16x8xf32> to vector<256x8xf32>
    %67 = arith.truncf %66 : vector<256x8xf32> to vector<256x8xbf16>
    %c8 = arith.constant 8 : index
    %c0_66 = arith.constant 0 : index
    %c0_67 = arith.constant 0 : index
    %68 = vector.load %arg3[%c8, %c0_66, %c0_67] : memref<9x8x128xbf16, #tpu.memory_space<vmem>>, vector<1x8x128xbf16>
    %69 = vector.shape_cast %68 : vector<1x8x128xbf16> to vector<8x128xbf16>
    %cst_68 = arith.constant dense<0.000000e+00> : vector<256x128xf32>
    %70 = tpu.matmul %67, %69, %cst_68 {dimension_numbers = #tpu.dot_dimension_numbers<[1], [0], [0], [1], [0, 0, 1, 1], [], []>} : vector<256x8xbf16>, vector<8x128xbf16>, vector<256x128xf32> -> vector<256x128xf32>
    %71 = arith.addf %64, %70 : vector<256x128xf32>
    %72 = vector.shape_cast %71 : vector<256x128xf32> to vector<16x16x128xf32>
    %c0_69 = arith.constant 0 : index
    %c0_70 = arith.constant 0 : index
    %c0_71 = arith.constant 0 : index
    %c0_72 = arith.constant 0 : index
    %73 = vector.load %arg4[%c0_69, %c0_70, %c0_71, %c0_72] : memref<1x16x16x128xf32, #tpu.memory_space<vmem>>, vector<1x16x16x128xf32>
    %74 = vector.shape_cast %73 : vector<1x16x16x128xf32> to vector<16x16x128xf32>
    %75 = vector.shape_cast %72 : vector<16x16x128xf32> to vector<1x16x16x128xf32>
    tpu.vector_store %arg4[%c0_69, %c0_70, %c0_71, %c0_72], %75 {strides = array<i32>} : memref<1x16x16x128xf32, #tpu.memory_space<vmem>>, vector<1x16x16x128xf32>,
    %cst_73 = arith.constant dense<0.000000e+00> : vector<128xf32>
    %76 = vector.multi_reduction <add>, %71, %cst_73 [0] : vector<256x128xf32> to vector<128xf32>
    %77 = vector.shape_cast %76 : vector<128xf32> to vector<1x128xf32>
    %c0_74 = arith.constant 0 : index
    %c0_75 = arith.constant 0 : index
    %c0_76 = arith.constant 0 : index
    %78 = vector.load %arg5[%c0_74, %c0_75, %c0_76] : memref<1x2x128xf32, #tpu.memory_space<vmem>>, vector<1x1x128xf32>
    %79 = vector.shape_cast %78 : vector<1x1x128xf32> to vector<1x128xf32>
    %80 = vector.shape_cast %77 : vector<1x128xf32> to vector<1x1x128xf32>
    tpu.vector_store %arg5[%c0_74, %c0_75, %c0_76], %80 {strides = array<i32>} : memref<1x2x128xf32, #tpu.memory_space<vmem>>, vector<1x1x128xf32>,
    %81 = arith.mulf %71, %71 : vector<256x128xf32>
    %cst_77 = arith.constant dense<0.000000e+00> : vector<128xf32>
    %82 = vector.multi_reduction <add>, %81, %cst_77 [0] : vector<256x128xf32> to vector<128xf32>
    %83 = vector.shape_cast %82 : vector<128xf32> to vector<1x128xf32>
    %c0_78 = arith.constant 0 : index
    %c1_79 = arith.constant 1 : index
    %c0_80 = arith.constant 0 : index
    %84 = vector.load %arg5[%c0_78, %c1_79, %c0_80] : memref<1x2x128xf32, #tpu.memory_space<vmem>>, vector<1x1x128xf32>
    %85 = vector.shape_cast %84 : vector<1x1x128xf32> to vector<1x128xf32>
    %86 = vector.shape_cast %83 : vector<1x128xf32> to vector<1x1x128xf32>
    tpu.vector_store %arg5[%c0_78, %c1_79, %c0_80], %86 {strides = array<i32>} : memref<1x2x128xf32, #tpu.memory_space<vmem>>, vector<1x1x128xf32>,
    return
  }
  func.func @transform_0(%arg0: i32) -> (i32, i32, i32, i32) {
    %c0_i32 = arith.constant 0 : i32
    %c0_i32_0 = arith.constant 0 : i32
    %c0_i32_1 = arith.constant 0 : i32
    %c0_i32_2 = arith.constant 0 : i32
    return %arg0, %c0_i32, %c0_i32_0, %c0_i32_1 : i32, i32, i32, i32
  }
  func.func @transform_1(%arg0: i32) -> (i32, i32, i32, i32) {
    %c0_i32 = arith.constant 0 : i32
    %c0_i32_0 = arith.constant 0 : i32
    %c0_i32_1 = arith.constant 0 : i32
    %c0_i32_2 = arith.constant 0 : i32
    return %arg0, %c0_i32, %c0_i32_0, %c0_i32_1 : i32, i32, i32, i32
  }
  func.func @transform_2(%arg0: i32) -> (i32, i32, i32) {
    %c0_i32 = arith.constant 0 : i32
    %c0_i32_0 = arith.constant 0 : i32
    %c0_i32_1 = arith.constant 0 : i32
    %c0_i32_2 = arith.constant 0 : i32
    return %c0_i32, %c0_i32_0, %c0_i32_1 : i32, i32, i32
  }
  func.func @transform_3(%arg0: i32) -> (i32, i32, i32, i32) {
    %c0_i32 = arith.constant 0 : i32
    %c0_i32_0 = arith.constant 0 : i32
    %c0_i32_1 = arith.constant 0 : i32
    %c0_i32_2 = arith.constant 0 : i32
    return %arg0, %c0_i32, %c0_i32_0, %c0_i32_1 : i32, i32, i32, i32
  }
  func.func @transform_4(%arg0: i32) -> (i32, i32, i32) {
    %c0_i32 = arith.constant 0 : i32
    %c0_i32_0 = arith.constant 0 : i32
    %c0_i32_1 = arith.constant 0 : i32
    return %arg0, %c0_i32, %c0_i32_0 : i32, i32, i32
  }
}

module attributes {stable_mosaic.version = 11 : i64} {
  func.func @_up_matmul_kernel(%arg0: memref<16x8xbf16, #tpu.memory_space<vmem>>, %arg1: memref<8x64xbf16, #tpu.memory_space<vmem>>, %arg2: memref<16x64xf32, #tpu.memory_space<vmem>>) attributes {dimension_semantics = [], scalar_prefetch = 0 : i64, scratch_operands = 0 : i64, tpu.core_type = #tpu.core_type<tc>} {
    %c0 = arith.constant 0 : index
    %c0_0 = arith.constant 0 : index
    %0 = vector.load %arg0[%c0, %c0_0] : memref<16x8xbf16, #tpu.memory_space<vmem>>, vector<16x8xbf16>
    %c0_1 = arith.constant 0 : index
    %c0_2 = arith.constant 0 : index
    %1 = vector.load %arg1[%c0_1, %c0_2] : memref<8x64xbf16, #tpu.memory_space<vmem>>, vector<8x64xbf16>
    %cst = arith.constant dense<0.000000e+00> : vector<16x64xf32>
    %2 = tpu.matmul %0, %1, %cst {dimension_numbers = #tpu.dot_dimension_numbers<[1], [0], [0], [1], [0, 0, 1, 1], [], []>} : vector<16x8xbf16>, vector<8x64xbf16>, vector<16x64xf32> -> vector<16x64xf32>
    %c0_3 = arith.constant 0 : index
    %c0_4 = arith.constant 0 : index
    %3 = vector.load %arg2[%c0_3, %c0_4] : memref<16x64xf32, #tpu.memory_space<vmem>>, vector<16x64xf32>
    tpu.vector_store %arg2[%c0_3, %c0_4], %2 {strides = array<i32>} : memref<16x64xf32, #tpu.memory_space<vmem>>, vector<16x64xf32>,
    return
  }
}

module attributes {stable_mosaic.version = 11 : i64} {
  func.func @_up_matmul_kernel(%arg0: memref<16x8xbf16, #tpu.memory_space<vmem>>, %arg1: memref<8x128xbf16, #tpu.memory_space<vmem>>, %arg2: memref<16x128xf32, #tpu.memory_space<vmem>>) attributes {dimension_semantics = [], scalar_prefetch = 0 : i64, scratch_operands = 0 : i64, tpu.core_type = #tpu.core_type<tc>} {
    %c0 = arith.constant 0 : index
    %c0_0 = arith.constant 0 : index
    %0 = vector.load %arg0[%c0, %c0_0] : memref<16x8xbf16, #tpu.memory_space<vmem>>, vector<16x8xbf16>
    %c0_1 = arith.constant 0 : index
    %c0_2 = arith.constant 0 : index
    %1 = vector.load %arg1[%c0_1, %c0_2] : memref<8x128xbf16, #tpu.memory_space<vmem>>, vector<8x128xbf16>
    %cst = arith.constant dense<0.000000e+00> : vector<16x128xf32>
    %2 = tpu.matmul %0, %1, %cst {dimension_numbers = #tpu.dot_dimension_numbers<[1], [0], [0], [1], [0, 0, 1, 1], [], []>} : vector<16x8xbf16>, vector<8x128xbf16>, vector<16x128xf32> -> vector<16x128xf32>
    %c0_3 = arith.constant 0 : index
    %c0_4 = arith.constant 0 : index
    %3 = vector.load %arg2[%c0_3, %c0_4] : memref<16x128xf32, #tpu.memory_space<vmem>>, vector<16x128xf32>
    tpu.vector_store %arg2[%c0_3, %c0_4], %2 {strides = array<i32>} : memref<16x128xf32, #tpu.memory_space<vmem>>, vector<16x128xf32>,
    return
  }
}

module attributes {stable_mosaic.version = 11 : i64} {
  func.func @_bn_relu_conv_stats_kernel(%arg0: i32, %arg1: memref<1x16x16x128xf32, #tpu.memory_space<vmem>>, %arg2: memref<1x128xf32, #tpu.memory_space<vmem>>, %arg3: memref<1x128xf32, #tpu.memory_space<vmem>>, %arg4: memref<9x128x128xbf16, #tpu.memory_space<vmem>>, %arg5: memref<1x16x16x128xf32, #tpu.memory_space<vmem>>, %arg6: memref<1x2x128xf32, #tpu.memory_space<vmem>>, %arg7: memref<18x18x128xf32, #tpu.memory_space<vmem>>) attributes {dimension_semantics = [#tpu.dimension_semantics<parallel>], iteration_bounds = array<i64: 2>, scalar_prefetch = 0 : i64, scratch_operands = 1 : i64, tpu.core_type = #tpu.core_type<tc>, window_params = [{transform_indices = @transform_0, window_bounds = array<i64: 1, 16, 16, 128>}, {pipeline_mode = #tpu.pipeline_mode<synchronous>, transform_indices = @transform_1, window_bounds = array<i64: 1, 128>}, {pipeline_mode = #tpu.pipeline_mode<synchronous>, transform_indices = @transform_2, window_bounds = array<i64: 1, 128>}, {pipeline_mode = #tpu.pipeline_mode<synchronous>, transform_indices = @transform_3, window_bounds = array<i64: 9, 128, 128>}, {transform_indices = @transform_4, window_bounds = array<i64: 1, 16, 16, 128>}, {transform_indices = @transform_5, window_bounds = array<i64: 1, 2, 128>}]} {
    %c0 = arith.constant 0 : index
    %c0_0 = arith.constant 0 : index
    %c0_1 = arith.constant 0 : index
    %c0_2 = arith.constant 0 : index
    %0 = vector.load %arg1[%c0, %c0_0, %c0_1, %c0_2] : memref<1x16x16x128xf32, #tpu.memory_space<vmem>>, vector<1x16x16x128xf32>
    %1 = vector.shape_cast %0 : vector<1x16x16x128xf32> to vector<16x16x128xf32>
    %c0_3 = arith.constant 0 : index
    %c0_4 = arith.constant 0 : index
    %2 = vector.load %arg2[%c0_3, %c0_4] : memref<1x128xf32, #tpu.memory_space<vmem>>, vector<1x128xf32>
    %3 = vector.shape_cast %2 : vector<1x128xf32> to vector<1x1x128xf32>
    %4 = vector.broadcast %3 : vector<1x1x128xf32> to vector<16x16x128xf32>
    %5 = arith.mulf %1, %4 : vector<16x16x128xf32>
    %c0_5 = arith.constant 0 : index
    %c0_6 = arith.constant 0 : index
    %6 = vector.load %arg3[%c0_5, %c0_6] : memref<1x128xf32, #tpu.memory_space<vmem>>, vector<1x128xf32>
    %7 = vector.shape_cast %6 : vector<1x128xf32> to vector<1x1x128xf32>
    %8 = vector.broadcast %7 : vector<1x1x128xf32> to vector<16x16x128xf32>
    %9 = arith.addf %5, %8 : vector<16x16x128xf32>
    %cst = arith.constant 0.000000e+00 : f32
    %10 = vector.broadcast %cst : f32 to vector<16x16x128xf32>
    %11 = arith.maximumf %9, %10 : vector<16x16x128xf32>
    %cst_7 = arith.constant 0.000000e+00 : f32
    %12 = vector.broadcast %cst_7 : f32 to vector<18x18x128xf32>
    %c0_8 = arith.constant 0 : index
    %c0_9 = arith.constant 0 : index
    %c0_10 = arith.constant 0 : index
    %13 = vector.load %arg7[%c0_8, %c0_9, %c0_10] : memref<18x18x128xf32, #tpu.memory_space<vmem>>, vector<18x18x128xf32>
    tpu.vector_store %arg7[%c0_8, %c0_9, %c0_10], %12 {strides = array<i32>} : memref<18x18x128xf32, #tpu.memory_space<vmem>>, vector<18x18x128xf32>,
    %c1 = arith.constant 1 : index
    %c1_11 = arith.constant 1 : index
    %c0_12 = arith.constant 0 : index
    %14 = vector.load %arg7[%c1, %c1_11, %c0_12] : memref<18x18x128xf32, #tpu.memory_space<vmem>>, vector<16x16x128xf32>
    tpu.vector_store %arg7[%c1, %c1_11, %c0_12], %11 {strides = array<i32>} : memref<18x18x128xf32, #tpu.memory_space<vmem>>, vector<16x16x128xf32>,
    %cst_13 = arith.constant 0.000000e+00 : f32
    %15 = vector.broadcast %cst_13 : f32 to vector<256x128xf32>
    %c0_14 = arith.constant 0 : index
    %c0_15 = arith.constant 0 : index
    %c0_16 = arith.constant 0 : index
    %16 = vector.load %arg7[%c0_14, %c0_15, %c0_16] : memref<18x18x128xf32, #tpu.memory_space<vmem>>, vector<16x16x128xf32>
    %17 = vector.shape_cast %16 : vector<16x16x128xf32> to vector<256x128xf32>
    %18 = arith.truncf %17 : vector<256x128xf32> to vector<256x128xbf16>
    %c0_17 = arith.constant 0 : index
    %c0_18 = arith.constant 0 : index
    %c0_19 = arith.constant 0 : index
    %19 = vector.load %arg4[%c0_17, %c0_18, %c0_19] : memref<9x128x128xbf16, #tpu.memory_space<vmem>>, vector<1x128x128xbf16>
    %20 = vector.shape_cast %19 : vector<1x128x128xbf16> to vector<128x128xbf16>
    %cst_20 = arith.constant dense<0.000000e+00> : vector<256x128xf32>
    %21 = tpu.matmul %18, %20, %cst_20 {dimension_numbers = #tpu.dot_dimension_numbers<[1], [0], [0], [1], [0, 0, 1, 1], [], []>} : vector<256x128xbf16>, vector<128x128xbf16>, vector<256x128xf32> -> vector<256x128xf32>
    %22 = arith.addf %15, %21 : vector<256x128xf32>
    %c0_21 = arith.constant 0 : index
    %c1_22 = arith.constant 1 : index
    %c0_23 = arith.constant 0 : index
    %23 = vector.load %arg7[%c0_21, %c1_22, %c0_23] : memref<18x18x128xf32, #tpu.memory_space<vmem>>, vector<16x16x128xf32>
    %24 = vector.shape_cast %23 : vector<16x16x128xf32> to vector<256x128xf32>
    %25 = arith.truncf %24 : vector<256x128xf32> to vector<256x128xbf16>
    %c1_24 = arith.constant 1 : index
    %c0_25 = arith.constant 0 : index
    %c0_26 = arith.constant 0 : index
    %26 = vector.load %arg4[%c1_24, %c0_25, %c0_26] : memref<9x128x128xbf16, #tpu.memory_space<vmem>>, vector<1x128x128xbf16>
    %27 = vector.shape_cast %26 : vector<1x128x128xbf16> to vector<128x128xbf16>
    %cst_27 = arith.constant dense<0.000000e+00> : vector<256x128xf32>
    %28 = tpu.matmul %25, %27, %cst_27 {dimension_numbers = #tpu.dot_dimension_numbers<[1], [0], [0], [1], [0, 0, 1, 1], [], []>} : vector<256x128xbf16>, vector<128x128xbf16>, vector<256x128xf32> -> vector<256x128xf32>
    %29 = arith.addf %22, %28 : vector<256x128xf32>
    %c0_28 = arith.constant 0 : index
    %c2 = arith.constant 2 : index
    %c0_29 = arith.constant 0 : index
    %30 = vector.load %arg7[%c0_28, %c2, %c0_29] : memref<18x18x128xf32, #tpu.memory_space<vmem>>, vector<16x16x128xf32>
    %31 = vector.shape_cast %30 : vector<16x16x128xf32> to vector<256x128xf32>
    %32 = arith.truncf %31 : vector<256x128xf32> to vector<256x128xbf16>
    %c2_30 = arith.constant 2 : index
    %c0_31 = arith.constant 0 : index
    %c0_32 = arith.constant 0 : index
    %33 = vector.load %arg4[%c2_30, %c0_31, %c0_32] : memref<9x128x128xbf16, #tpu.memory_space<vmem>>, vector<1x128x128xbf16>
    %34 = vector.shape_cast %33 : vector<1x128x128xbf16> to vector<128x128xbf16>
    %cst_33 = arith.constant dense<0.000000e+00> : vector<256x128xf32>
    %35 = tpu.matmul %32, %34, %cst_33 {dimension_numbers = #tpu.dot_dimension_numbers<[1], [0], [0], [1], [0, 0, 1, 1], [], []>} : vector<256x128xbf16>, vector<128x128xbf16>, vector<256x128xf32> -> vector<256x128xf32>
    %36 = arith.addf %29, %35 : vector<256x128xf32>
    %c1_34 = arith.constant 1 : index
    %c0_35 = arith.constant 0 : index
    %c0_36 = arith.constant 0 : index
    %37 = vector.load %arg7[%c1_34, %c0_35, %c0_36] : memref<18x18x128xf32, #tpu.memory_space<vmem>>, vector<16x16x128xf32>
    %38 = vector.shape_cast %37 : vector<16x16x128xf32> to vector<256x128xf32>
    %39 = arith.truncf %38 : vector<256x128xf32> to vector<256x128xbf16>
    %c3 = arith.constant 3 : index
    %c0_37 = arith.constant 0 : index
    %c0_38 = arith.constant 0 : index
    %40 = vector.load %arg4[%c3, %c0_37, %c0_38] : memref<9x128x128xbf16, #tpu.memory_space<vmem>>, vector<1x128x128xbf16>
    %41 = vector.shape_cast %40 : vector<1x128x128xbf16> to vector<128x128xbf16>
    %cst_39 = arith.constant dense<0.000000e+00> : vector<256x128xf32>
    %42 = tpu.matmul %39, %41, %cst_39 {dimension_numbers = #tpu.dot_dimension_numbers<[1], [0], [0], [1], [0, 0, 1, 1], [], []>} : vector<256x128xbf16>, vector<128x128xbf16>, vector<256x128xf32> -> vector<256x128xf32>
    %43 = arith.addf %36, %42 : vector<256x128xf32>
    %c1_40 = arith.constant 1 : index
    %c1_41 = arith.constant 1 : index
    %c0_42 = arith.constant 0 : index
    %44 = vector.load %arg7[%c1_40, %c1_41, %c0_42] : memref<18x18x128xf32, #tpu.memory_space<vmem>>, vector<16x16x128xf32>
    %45 = vector.shape_cast %44 : vector<16x16x128xf32> to vector<256x128xf32>
    %46 = arith.truncf %45 : vector<256x128xf32> to vector<256x128xbf16>
    %c4 = arith.constant 4 : index
    %c0_43 = arith.constant 0 : index
    %c0_44 = arith.constant 0 : index
    %47 = vector.load %arg4[%c4, %c0_43, %c0_44] : memref<9x128x128xbf16, #tpu.memory_space<vmem>>, vector<1x128x128xbf16>
    %48 = vector.shape_cast %47 : vector<1x128x128xbf16> to vector<128x128xbf16>
    %cst_45 = arith.constant dense<0.000000e+00> : vector<256x128xf32>
    %49 = tpu.matmul %46, %48, %cst_45 {dimension_numbers = #tpu.dot_dimension_numbers<[1], [0], [0], [1], [0, 0, 1, 1], [], []>} : vector<256x128xbf16>, vector<128x128xbf16>, vector<256x128xf32> -> vector<256x128xf32>
    %50 = arith.addf %43, %49 : vector<256x128xf32>
    %c1_46 = arith.constant 1 : index
    %c2_47 = arith.constant 2 : index
    %c0_48 = arith.constant 0 : index
    %51 = vector.load %arg7[%c1_46, %c2_47, %c0_48] : memref<18x18x128xf32, #tpu.memory_space<vmem>>, vector<16x16x128xf32>
    %52 = vector.shape_cast %51 : vector<16x16x128xf32> to vector<256x128xf32>
    %53 = arith.truncf %52 : vector<256x128xf32> to vector<256x128xbf16>
    %c5 = arith.constant 5 : index
    %c0_49 = arith.constant 0 : index
    %c0_50 = arith.constant 0 : index
    %54 = vector.load %arg4[%c5, %c0_49, %c0_50] : memref<9x128x128xbf16, #tpu.memory_space<vmem>>, vector<1x128x128xbf16>
    %55 = vector.shape_cast %54 : vector<1x128x128xbf16> to vector<128x128xbf16>
    %cst_51 = arith.constant dense<0.000000e+00> : vector<256x128xf32>
    %56 = tpu.matmul %53, %55, %cst_51 {dimension_numbers = #tpu.dot_dimension_numbers<[1], [0], [0], [1], [0, 0, 1, 1], [], []>} : vector<256x128xbf16>, vector<128x128xbf16>, vector<256x128xf32> -> vector<256x128xf32>
    %57 = arith.addf %50, %56 : vector<256x128xf32>
    %c2_52 = arith.constant 2 : index
    %c0_53 = arith.constant 0 : index
    %c0_54 = arith.constant 0 : index
    %58 = vector.load %arg7[%c2_52, %c0_53, %c0_54] : memref<18x18x128xf32, #tpu.memory_space<vmem>>, vector<16x16x128xf32>
    %59 = vector.shape_cast %58 : vector<16x16x128xf32> to vector<256x128xf32>
    %60 = arith.truncf %59 : vector<256x128xf32> to vector<256x128xbf16>
    %c6 = arith.constant 6 : index
    %c0_55 = arith.constant 0 : index
    %c0_56 = arith.constant 0 : index
    %61 = vector.load %arg4[%c6, %c0_55, %c0_56] : memref<9x128x128xbf16, #tpu.memory_space<vmem>>, vector<1x128x128xbf16>
    %62 = vector.shape_cast %61 : vector<1x128x128xbf16> to vector<128x128xbf16>
    %cst_57 = arith.constant dense<0.000000e+00> : vector<256x128xf32>
    %63 = tpu.matmul %60, %62, %cst_57 {dimension_numbers = #tpu.dot_dimension_numbers<[1], [0], [0], [1], [0, 0, 1, 1], [], []>} : vector<256x128xbf16>, vector<128x128xbf16>, vector<256x128xf32> -> vector<256x128xf32>
    %64 = arith.addf %57, %63 : vector<256x128xf32>
    %c2_58 = arith.constant 2 : index
    %c1_59 = arith.constant 1 : index
    %c0_60 = arith.constant 0 : index
    %65 = vector.load %arg7[%c2_58, %c1_59, %c0_60] : memref<18x18x128xf32, #tpu.memory_space<vmem>>, vector<16x16x128xf32>
    %66 = vector.shape_cast %65 : vector<16x16x128xf32> to vector<256x128xf32>
    %67 = arith.truncf %66 : vector<256x128xf32> to vector<256x128xbf16>
    %c7 = arith.constant 7 : index
    %c0_61 = arith.constant 0 : index
    %c0_62 = arith.constant 0 : index
    %68 = vector.load %arg4[%c7, %c0_61, %c0_62] : memref<9x128x128xbf16, #tpu.memory_space<vmem>>, vector<1x128x128xbf16>
    %69 = vector.shape_cast %68 : vector<1x128x128xbf16> to vector<128x128xbf16>
    %cst_63 = arith.constant dense<0.000000e+00> : vector<256x128xf32>
    %70 = tpu.matmul %67, %69, %cst_63 {dimension_numbers = #tpu.dot_dimension_numbers<[1], [0], [0], [1], [0, 0, 1, 1], [], []>} : vector<256x128xbf16>, vector<128x128xbf16>, vector<256x128xf32> -> vector<256x128xf32>
    %71 = arith.addf %64, %70 : vector<256x128xf32>
    %c2_64 = arith.constant 2 : index
    %c2_65 = arith.constant 2 : index
    %c0_66 = arith.constant 0 : index
    %72 = vector.load %arg7[%c2_64, %c2_65, %c0_66] : memref<18x18x128xf32, #tpu.memory_space<vmem>>, vector<16x16x128xf32>
    %73 = vector.shape_cast %72 : vector<16x16x128xf32> to vector<256x128xf32>
    %74 = arith.truncf %73 : vector<256x128xf32> to vector<256x128xbf16>
    %c8 = arith.constant 8 : index
    %c0_67 = arith.constant 0 : index
    %c0_68 = arith.constant 0 : index
    %75 = vector.load %arg4[%c8, %c0_67, %c0_68] : memref<9x128x128xbf16, #tpu.memory_space<vmem>>, vector<1x128x128xbf16>
    %76 = vector.shape_cast %75 : vector<1x128x128xbf16> to vector<128x128xbf16>
    %cst_69 = arith.constant dense<0.000000e+00> : vector<256x128xf32>
    %77 = tpu.matmul %74, %76, %cst_69 {dimension_numbers = #tpu.dot_dimension_numbers<[1], [0], [0], [1], [0, 0, 1, 1], [], []>} : vector<256x128xbf16>, vector<128x128xbf16>, vector<256x128xf32> -> vector<256x128xf32>
    %78 = arith.addf %71, %77 : vector<256x128xf32>
    %79 = vector.shape_cast %78 : vector<256x128xf32> to vector<16x16x128xf32>
    %c0_70 = arith.constant 0 : index
    %c0_71 = arith.constant 0 : index
    %c0_72 = arith.constant 0 : index
    %c0_73 = arith.constant 0 : index
    %80 = vector.load %arg5[%c0_70, %c0_71, %c0_72, %c0_73] : memref<1x16x16x128xf32, #tpu.memory_space<vmem>>, vector<1x16x16x128xf32>
    %81 = vector.shape_cast %80 : vector<1x16x16x128xf32> to vector<16x16x128xf32>
    %82 = vector.shape_cast %79 : vector<16x16x128xf32> to vector<1x16x16x128xf32>
    tpu.vector_store %arg5[%c0_70, %c0_71, %c0_72, %c0_73], %82 {strides = array<i32>} : memref<1x16x16x128xf32, #tpu.memory_space<vmem>>, vector<1x16x16x128xf32>,
    %cst_74 = arith.constant dense<0.000000e+00> : vector<128xf32>
    %83 = vector.multi_reduction <add>, %78, %cst_74 [0] : vector<256x128xf32> to vector<128xf32>
    %84 = vector.shape_cast %83 : vector<128xf32> to vector<1x128xf32>
    %c0_75 = arith.constant 0 : index
    %c0_76 = arith.constant 0 : index
    %c0_77 = arith.constant 0 : index
    %85 = vector.load %arg6[%c0_75, %c0_76, %c0_77] : memref<1x2x128xf32, #tpu.memory_space<vmem>>, vector<1x1x128xf32>
    %86 = vector.shape_cast %85 : vector<1x1x128xf32> to vector<1x128xf32>
    %87 = vector.shape_cast %84 : vector<1x128xf32> to vector<1x1x128xf32>
    tpu.vector_store %arg6[%c0_75, %c0_76, %c0_77], %87 {strides = array<i32>} : memref<1x2x128xf32, #tpu.memory_space<vmem>>, vector<1x1x128xf32>,
    %88 = arith.mulf %78, %78 : vector<256x128xf32>
    %cst_78 = arith.constant dense<0.000000e+00> : vector<128xf32>
    %89 = vector.multi_reduction <add>, %88, %cst_78 [0] : vector<256x128xf32> to vector<128xf32>
    %90 = vector.shape_cast %89 : vector<128xf32> to vector<1x128xf32>
    %c0_79 = arith.constant 0 : index
    %c1_80 = arith.constant 1 : index
    %c0_81 = arith.constant 0 : index
    %91 = vector.load %arg6[%c0_79, %c1_80, %c0_81] : memref<1x2x128xf32, #tpu.memory_space<vmem>>, vector<1x1x128xf32>
    %92 = vector.shape_cast %91 : vector<1x1x128xf32> to vector<1x128xf32>
    %93 = vector.shape_cast %90 : vector<1x128xf32> to vector<1x1x128xf32>
    tpu.vector_store %arg6[%c0_79, %c1_80, %c0_81], %93 {strides = array<i32>} : memref<1x2x128xf32, #tpu.memory_space<vmem>>, vector<1x1x128xf32>,
    return
  }
  func.func @transform_0(%arg0: i32) -> (i32, i32, i32, i32) {
    %c0_i32 = arith.constant 0 : i32
    %c0_i32_0 = arith.constant 0 : i32
    %c0_i32_1 = arith.constant 0 : i32
    %c0_i32_2 = arith.constant 0 : i32
    return %arg0, %c0_i32, %c0_i32_0, %c0_i32_1 : i32, i32, i32, i32
  }
  func.func @transform_1(%arg0: i32) -> (i32, i32) {
    %c0_i32 = arith.constant 0 : i32
    %c0_i32_0 = arith.constant 0 : i32
    %c0_i32_1 = arith.constant 0 : i32
    return %c0_i32, %c0_i32_0 : i32, i32
  }
  func.func @transform_2(%arg0: i32) -> (i32, i32) {
    %c0_i32 = arith.constant 0 : i32
    %c0_i32_0 = arith.constant 0 : i32
    %c0_i32_1 = arith.constant 0 : i32
    return %c0_i32, %c0_i32_0 : i32, i32
  }
  func.func @transform_3(%arg0: i32) -> (i32, i32, i32) {
    %c0_i32 = arith.constant 0 : i32
    %c0_i32_0 = arith.constant 0 : i32
    %c0_i32_1 = arith.constant 0 : i32
    %c0_i32_2 = arith.constant 0 : i32
    return %c0_i32, %c0_i32_0, %c0_i32_1 : i32, i32, i32
  }
  func.func @transform_4(%arg0: i32) -> (i32, i32, i32, i32) {
    %c0_i32 = arith.constant 0 : i32
    %c0_i32_0 = arith.constant 0 : i32
    %c0_i32_1 = arith.constant 0 : i32
    %c0_i32_2 = arith.constant 0 : i32
    return %arg0, %c0_i32, %c0_i32_0, %c0_i32_1 : i32, i32, i32, i32
  }
  func.func @transform_5(%arg0: i32) -> (i32, i32, i32) {
    %c0_i32 = arith.constant 0 : i32
    %c0_i32_0 = arith.constant 0 : i32
    %c0_i32_1 = arith.constant 0 : i32
    return %arg0, %c0_i32, %c0_i32_0 : i32, i32, i32
  }
}

module attributes {stable_mosaic.version = 11 : i64} {
  func.func @_bn_relu_kernel(%arg0: i32, %arg1: memref<1x16x16x128xf32, #tpu.memory_space<vmem>>, %arg2: memref<1x128xf32, #tpu.memory_space<vmem>>, %arg3: memref<1x128xf32, #tpu.memory_space<vmem>>, %arg4: memref<1x16x16x128xf32, #tpu.memory_space<vmem>>) attributes {dimension_semantics = [#tpu.dimension_semantics<parallel>], iteration_bounds = array<i64: 2>, scalar_prefetch = 0 : i64, scratch_operands = 0 : i64, tpu.core_type = #tpu.core_type<tc>, window_params = [{transform_indices = @transform_0, window_bounds = array<i64: 1, 16, 16, 128>}, {pipeline_mode = #tpu.pipeline_mode<synchronous>, transform_indices = @transform_1, window_bounds = array<i64: 1, 128>}, {pipeline_mode = #tpu.pipeline_mode<synchronous>, transform_indices = @transform_2, window_bounds = array<i64: 1, 128>}, {transform_indices = @transform_3, window_bounds = array<i64: 1, 16, 16, 128>}]} {
    %c0 = arith.constant 0 : index
    %c0_0 = arith.constant 0 : index
    %c0_1 = arith.constant 0 : index
    %c0_2 = arith.constant 0 : index
    %0 = vector.load %arg1[%c0, %c0_0, %c0_1, %c0_2] : memref<1x16x16x128xf32, #tpu.memory_space<vmem>>, vector<1x16x16x128xf32>
    %1 = vector.shape_cast %0 : vector<1x16x16x128xf32> to vector<16x16x128xf32>
    %c0_3 = arith.constant 0 : index
    %c0_4 = arith.constant 0 : index
    %2 = vector.load %arg2[%c0_3, %c0_4] : memref<1x128xf32, #tpu.memory_space<vmem>>, vector<1x128xf32>
    %3 = vector.shape_cast %2 : vector<1x128xf32> to vector<1x1x128xf32>
    %4 = vector.broadcast %3 : vector<1x1x128xf32> to vector<16x16x128xf32>
    %5 = arith.mulf %1, %4 : vector<16x16x128xf32>
    %c0_5 = arith.constant 0 : index
    %c0_6 = arith.constant 0 : index
    %6 = vector.load %arg3[%c0_5, %c0_6] : memref<1x128xf32, #tpu.memory_space<vmem>>, vector<1x128xf32>
    %7 = vector.shape_cast %6 : vector<1x128xf32> to vector<1x1x128xf32>
    %8 = vector.broadcast %7 : vector<1x1x128xf32> to vector<16x16x128xf32>
    %9 = arith.addf %5, %8 : vector<16x16x128xf32>
    %cst = arith.constant 0.000000e+00 : f32
    %10 = vector.broadcast %cst : f32 to vector<16x16x128xf32>
    %11 = arith.maximumf %9, %10 : vector<16x16x128xf32>
    %c0_7 = arith.constant 0 : index
    %c0_8 = arith.constant 0 : index
    %c0_9 = arith.constant 0 : index
    %c0_10 = arith.constant 0 : index
    %12 = vector.load %arg4[%c0_7, %c0_8, %c0_9, %c0_10] : memref<1x16x16x128xf32, #tpu.memory_space<vmem>>, vector<1x16x16x128xf32>
    %13 = vector.shape_cast %12 : vector<1x16x16x128xf32> to vector<16x16x128xf32>
    %14 = vector.shape_cast %11 : vector<16x16x128xf32> to vector<1x16x16x128xf32>
    tpu.vector_store %arg4[%c0_7, %c0_8, %c0_9, %c0_10], %14 {strides = array<i32>} : memref<1x16x16x128xf32, #tpu.memory_space<vmem>>, vector<1x16x16x128xf32>,
    return
  }
  func.func @transform_0(%arg0: i32) -> (i32, i32, i32, i32) {
    %c0_i32 = arith.constant 0 : i32
    %c0_i32_0 = arith.constant 0 : i32
    %c0_i32_1 = arith.constant 0 : i32
    %c0_i32_2 = arith.constant 0 : i32
    return %arg0, %c0_i32, %c0_i32_0, %c0_i32_1 : i32, i32, i32, i32
  }
  func.func @transform_1(%arg0: i32) -> (i32, i32) {
    %c0_i32 = arith.constant 0 : i32
    %c0_i32_0 = arith.constant 0 : i32
    %c0_i32_1 = arith.constant 0 : i32
    return %c0_i32, %c0_i32_0 : i32, i32
  }
  func.func @transform_2(%arg0: i32) -> (i32, i32) {
    %c0_i32 = arith.constant 0 : i32
    %c0_i32_0 = arith.constant 0 : i32
    %c0_i32_1 = arith.constant 0 : i32
    return %c0_i32, %c0_i32_0 : i32, i32
  }
  func.func @transform_3(%arg0: i32) -> (i32, i32, i32, i32) {
    %c0_i32 = arith.constant 0 : i32
    %c0_i32_0 = arith.constant 0 : i32
    %c0_i32_1 = arith.constant 0 : i32
    %c0_i32_2 = arith.constant 0 : i32
    return %arg0, %c0_i32, %c0_i32_0, %c0_i32_1 : i32, i32, i32, i32
  }
}

</mosaic_0001>

<llo_original>
// kernel: up_forward.6
$region0: #{up_forward.6}
  #allocation0 [shape = 'u32[]', space=smem, size = 0x4, offset = 0x4, fixed_abs, tag = 'smem constant byte address 0x4 - core index']
  #allocation1 [shape = 'u32[144,128]{1,0:T(1,128)}', space=vmem, size = 0x12000, scoped, tag = 'internal scratch']
  %s0 = inlined_call_operand.vmem [shape: bf16[16,8], index: 0, kind: input, shape index: {}]
  %s1 = inlined_call_operand.vmem [shape: bf16[8,128], index: 1, kind: input, shape index: {}]
  %s2 = inlined_call_operand.vmem [shape: f32[16,128], index: 2, kind: output, shape index: {}]
  %s3 = sld [smem:[#allocation0]]
  $region18: #{up_forward.6} parent=0
    _
  %s5 = ssub.s32 1, %s3
  %s6 = scalar_select 0, %s5, %s3
  // Predicated region
  $region2: #{up_forward.6} parent=0 // pred_check
    _
  $region3: #{up_forward.6} parent=0 // pred_check_branch
    %8 = sbr.rel (0) target = $region5
  $region4: #{up_forward.6} parent=0 // pred_region
    _
  $region5: #{up_forward.6} parent=0 // pred_fallthru
    _
  // Predicated region
  $region6: #{up_forward.6} parent=0 // pred_check
    _
  $region7: #{up_forward.6} parent=0 // pred_check_branch
    %10 = sbr.rel (0) target = $region9
  $region8: #{up_forward.6} parent=0 // pred_region
    _
  $region9: #{up_forward.6} parent=0 // pred_fallthru
    _
  %v12 = vld [vmem:[%s0] sm:$0xf]
  %v13 = vld [vmem:[%s0 + $0x4] sm:$0xf]
  %v14 = vld [vmem:[%s1] sm:$0xf]
  %v17 = vunpack.c.l.b16 %v12
  %v18 = vunpack.c.l.b16 %v13
  %v19 = vpack.c.b16 %v18, %v17
  %vm20 = vcmask 64512
  %v22 = vsel %vm20, %v19, 0
  %vm24 = vcmask 1043456
  %v26 = vsel %vm24, %v14, 0
  %28 = vmatprep.subr.bf16.mxu0 0
  %29 = vmatpush1.bf16.msra.mxu0 %v26
  %30 = vmatprep.subr.bf16.mxu0 0
  %31 = vmatpush1.bf16.msra.mxu0 0
  %32 = vmatprep.subr.bf16.mxu0 0
  %33 = vmatpush1.bf16.msra.mxu0 0
  %34 = vmatprep.subr.bf16.mxu0 0
  %35 = vmatpush1.bf16.msra.mxu0 0
  %36 = vmatprep.subr.bf16.mxu0 0
  %37 = vmatpush1.bf16.msra.mxu0 0
  %38 = vmatprep.subr.bf16.mxu0 0
  %39 = vmatpush1.bf16.msra.mxu0 0
  %40 = vmatprep.subr.bf16.mxu0 0
  %41 = vmatpush1.bf16.msra.mxu0 0
  %42 = vmatprep.subr.bf16.mxu0 0
  %43 = vmatpush1.bf16.msra.mxu0 0
  %44 = vmatprep.subr.bf16.mxu0 0
  %45 = vmatpush1.bf16.msra.mxu0 0
  %46 = vmatprep.subr.bf16.mxu0 0
  %47 = vmatpush1.bf16.msra.mxu0 0
  %48 = vmatprep.subr.bf16.mxu0 0
  %49 = vmatpush1.bf16.msra.mxu0 0
  %50 = vmatprep.subr.bf16.mxu0 0
  %51 = vmatpush1.bf16.msra.mxu0 0
  %52 = vmatprep.subr.bf16.mxu0 0
  %53 = vmatpush1.bf16.msra.mxu0 0
  %54 = vmatprep.subr.bf16.mxu0 0
  %55 = vmatpush1.bf16.msra.mxu0 0
  %56 = vmatprep.subr.bf16.mxu0 0
  %57 = vmatpush1.bf16.msra.mxu0 0
  %58 = vmatprep.subr.bf16.mxu0 0
  %59 = vmatpush1.bf16.msra.mxu0 0
  %60 = vmatprep.mubr.bf16.mxu0 0
  %61 = vmatmul.mubr.bf16.gmra.mrb[0].mxu0 %v22
  %v62 = vpop.f32.mrb[0].mxu0
  %v63 = vadd.f32 0.0, %v62
  %v64 = vpop.f32.mrb[0].mxu0
  %v65 = vpop.f32.mrb[0].mxu0
  %v66 = vadd.f32 0.0, %v65
  %v67 = vpop.f32.mrb[0].mxu0
  %68 = vdwg.mxu0
  %69 = vst [vmem:[%s2] sm:$0xff] %v63
  %70 = vst [vmem:[%s2 + $0x8] sm:$0xff] %v66
  // Predicated region
  $region10: #{up_forward.6} parent=0 // pred_check
    _
  $region11: #{up_forward.6} parent=0 // pred_check_branch
    %72 = sbr.rel (0) target = $region13
  $region12: #{up_forward.6} parent=0 // pred_region
    _
  $region13: #{up_forward.6} parent=0 // pred_fallthru
    _
  // Predicated region
  $region14: #{up_forward.6} parent=0 // pred_check
    _
  $region15: #{up_forward.6} parent=0 // pred_check_branch
    %74 = sbr.rel (0) target = $region17
  $region16: #{up_forward.6} parent=0 // pred_region
    _
  $region17: #{up_forward.6} parent=0 // pred_fallthru
    _

// kernel: up_forward.5
$region0: #{up_forward.5}
  #allocation0 [shape = 'u32[]', space=smem, size = 0x4, offset = 0x4, fixed_abs, tag = 'smem constant byte address 0x4 - core index']
  #allocation1 [shape = 'u32[144,128]{1,0:T(1,128)}', space=vmem, size = 0x12000, scoped, tag = 'internal scratch']
  %s0 = inlined_call_operand.vmem [shape: bf16[16,8], index: 0, kind: input, shape index: {}]
  %s1 = inlined_call_operand.vmem [shape: bf16[8,64], index: 1, kind: input, shape index: {}]
  %s2 = inlined_call_operand.vmem [shape: f32[16,64], index: 2, kind: output, shape index: {}]
  %s3 = sld [smem:[#allocation0]]
  $region18: #{up_forward.5} parent=0
    _
  %s5 = ssub.s32 1, %s3
  %s6 = scalar_select 0, %s5, %s3
  // Predicated region
  $region2: #{up_forward.5} parent=0 // pred_check
    _
  $region3: #{up_forward.5} parent=0 // pred_check_branch
    %8 = sbr.rel (0) target = $region5
  $region4: #{up_forward.5} parent=0 // pred_region
    _
  $region5: #{up_forward.5} parent=0 // pred_fallthru
    _
  // Predicated region
  $region6: #{up_forward.5} parent=0 // pred_check
    _
  $region7: #{up_forward.5} parent=0 // pred_check_branch
    %10 = sbr.rel (0) target = $region9
  $region8: #{up_forward.5} parent=0 // pred_region
    _
  $region9: #{up_forward.5} parent=0 // pred_fallthru
    _
  %v12 = vld [vmem:[%s0] sm:$0xf]
  %v13 = vld [vmem:[%s0 + $0x4] sm:$0xf]
  %v14 = vld [vmem:[%s1] sm:$0xf]
  %v17 = vunpack.c.l.b16 %v12
  %v18 = vunpack.c.l.b16 %v13
  %v19 = vpack.c.b16 %v18, %v17
  %vm20 = vcmask 64512
  %v22 = vsel %vm20, %v19, 0
  %vm24 = vcmask 1043456
  %v26 = vsel %vm24, %v14, 0
  %28 = vmatprep.subr.bf16.mxu0 0
  %29 = vmatpush1.bf16.msra.mxu0 %v26
  %30 = vmatprep.subr.bf16.mxu0 0
  %31 = vmatpush1.bf16.msra.mxu0 0
  %32 = vmatprep.subr.bf16.mxu0 0
  %33 = vmatpush1.bf16.msra.mxu0 0
  %34 = vmatprep.subr.bf16.mxu0 0
  %35 = vmatpush1.bf16.msra.mxu0 0
  %36 = vmatprep.subr.bf16.mxu0 0
  %37 = vmatpush1.bf16.msra.mxu0 0
  %38 = vmatprep.subr.bf16.mxu0 0
  %39 = vmatpush1.bf16.msra.mxu0 0
  %40 = vmatprep.subr.bf16.mxu0 0
  %41 = vmatpush1.bf16.msra.mxu0 0
  %42 = vmatprep.subr.bf16.mxu0 0
  %43 = vmatpush1.bf16.msra.mxu0 0
  %44 = vmatprep.subr.bf16.mxu0 0
  %45 = vmatpush1.bf16.msra.mxu0 0
  %46 = vmatprep.subr.bf16.mxu0 0
  %47 = vmatpush1.bf16.msra.mxu0 0
  %48 = vmatprep.subr.bf16.mxu0 0
  %49 = vmatpush1.bf16.msra.mxu0 0
  %50 = vmatprep.subr.bf16.mxu0 0
  %51 = vmatpush1.bf16.msra.mxu0 0
  %52 = vmatprep.subr.bf16.mxu0 0
  %53 = vmatpush1.bf16.msra.mxu0 0
  %54 = vmatprep.subr.bf16.mxu0 0
  %55 = vmatpush1.bf16.msra.mxu0 0
  %56 = vmatprep.subr.bf16.mxu0 0
  %57 = vmatpush1.bf16.msra.mxu0 0
  %58 = vmatprep.subr.bf16.mxu0 0
  %59 = vmatpush1.bf16.msra.mxu0 0
  %60 = vmatprep.mubr.bf16.mxu0 0
  %61 = vmatmul.mubr.bf16.gmra.mrb[0].mxu0 %v22
  %v62 = vpop.f32.mrb[0].mxu0
  %v63 = vadd.f32 0.0, %v62
  %v64 = vpop.f32.mrb[0].mxu0
  %v65 = vpop.f32.mrb[0].mxu0
  %v66 = vadd.f32 0.0, %v65
  %v67 = vpop.f32.mrb[0].mxu0
  %68 = vdwg.mxu0
  %vm69 = vcmask 523264
  %70 = vst.msk [vmem:[%s2] sm:$0xff] %vm69, %v63
  %71 = vst.msk [vmem:[%s2 + $0x8] sm:$0xff] %vm69, %v66
  // Predicated region
  $region10: #{up_forward.5} parent=0 // pred_check
    _
  $region11: #{up_forward.5} parent=0 // pred_check_branch
    %73 = sbr.rel (0) target = $region13
  $region12: #{up_forward.5} parent=0 // pred_region
    _
  $region13: #{up_forward.5} parent=0 // pred_fallthru
    _
  // Predicated region
  $region14: #{up_forward.5} parent=0 // pred_check
    _
  $region15: #{up_forward.5} parent=0 // pred_check_branch
    %75 = sbr.rel (0) target = $region17
  $region16: #{up_forward.5} parent=0 // pred_region
    _
  $region17: #{up_forward.5} parent=0 // pred_fallthru
    _

// kernel: up_forward.9
$region0: #{up_forward.9}
  #allocation0 [shape = 'u32[]', space=smem, size = 0x4, offset = 0x4, fixed_abs, tag = 'smem constant byte address 0x4 - core index']
  #allocation1 [shape = 'u32[144,128]{1,0:T(1,128)}', space=vmem, size = 0x12000, scoped, tag = 'internal scratch']
  %s0 = inlined_call_operand.vmem [shape: f32[2,16,16,128], index: 0, kind: input, shape index: {}]
  %s1 = inlined_call_operand.vmem [shape: f32[1,128], index: 1, kind: input, shape index: {}]
  %s2 = inlined_call_operand.vmem [shape: f32[1,128], index: 2, kind: input, shape index: {}]
  %s3 = inlined_call_operand.vmem [shape: f32[2,16,16,128], index: 3, kind: output, shape index: {}]
  %s4 = sld [smem:[#allocation0]]
  $region45: #{up_forward.9} parent=0
    _
  %s6 = ssub.s32 1, %s4
  %s7 = scalar_select 0, %s6, %s4
  loop: start=0, step=1, limit=4
  $region2: #{up_forward.9} parent=0 // loop_pre_header
    _
  $region3: #{up_forward.9} parent=0 // loop_header
    %s9 = sphi 0, %s13
    %p10 = scmp.ge.s32.totalorder %s9, 4
    %s19 = sphi 0, %s21
    %s22 = sphi 0, %s19
    %s23 = sphi 0, %s22
    %s39 = sphi 0, %s23
    %s43 = sphi 0, %s43
    %s45 = sphi 0, %s43
    %s46 = sphi 0, %s45
    %s60 = sphi 0, %s46
    %s64 = sphi 0, %s64
    %s66 = sphi 0, %s64
    %s67 = sphi 0, %s66
    %s81 = sphi 0, %s67
    %s87 = sphi 0, %s89
    %s90 = sphi 0, %s87
    %s91 = sphi 0, %s90
    %s107 = sphi 0, %s91
  $region4: #{up_forward.9} parent=0 // loop_header_branch
    %12 = sbr.rel (%p10) target = $region8
  $region5: #{up_forward.9} parent=0 // loop_body
    %s14 = ssub.s32 %s9, 1
    %s15 = ssub.s32 %s9, 2
    %s16 = sadd.s32 %s9, 1
    %s17 = ssub.s32 %s9, %s16
    %p18 = scmp.eq.s32.totalorder %s17, 0
    %s20 = sadd.s32 %s19, 1
    %s21 = scalar_select %p18, %s19, %s20
    %p24 = pneg %p18
    %p25 = scmp.eq.s32.totalorder %s9, 1
    %p26 = por %p24, %p25
    %p27 = scmp.ne.s32.totalorder %s19, %s22
    %p28 = scmp.eq.s32.totalorder %s9, 0
    %p29 = por %p27, %p28
    %p30 = scmp.ne.s32.totalorder %s19, %s22
    %p31 = scmp.eq.s32.totalorder %s14, 1
    %p32 = por %p30, %p31
    %p33 = scmp.ne.s32.totalorder %s22, %s23
    %p34 = scmp.eq.s32.totalorder %s14, 0
    %p35 = por %p33, %p34
    %p36 = scmp.ne.s32.totalorder %s22, %s23
    %p37 = scmp.eq.s32.totalorder %s15, 1
    %p38 = por %p36, %p37
    %p40 = scmp.ne.s32.totalorder %s23, %s39
    %p41 = scmp.eq.s32.totalorder %s15, 0
    %p42 = por %p40, %p41
    %s44 = sadd.s32 %s43, 1
    %p47 = scmp.eq.s32.totalorder %s9, 1
    %p48 = scmp.ne.s32.totalorder %s43, %s45
    %p49 = scmp.eq.s32.totalorder %s9, 0
    %p50 = por %p48, %p49
    %p51 = scmp.ne.s32.totalorder %s43, %s45
    %p52 = scmp.eq.s32.totalorder %s14, 1
    %p53 = por %p51, %p52
    %p54 = scmp.ne.s32.totalorder %s45, %s46
    %p55 = scmp.eq.s32.totalorder %s14, 0
    %p56 = por %p54, %p55
    %p57 = scmp.ne.s32.totalorder %s45, %s46
    %p58 = scmp.eq.s32.totalorder %s15, 1
    %p59 = por %p57, %p58
    %p61 = scmp.ne.s32.totalorder %s46, %s60
    %p62 = scmp.eq.s32.totalorder %s15, 0
    %p63 = por %p61, %p62
    %s65 = sadd.s32 %s64, 1
    %p68 = scmp.eq.s32.totalorder %s9, 1
    %p69 = scmp.ne.s32.totalorder %s64, %s66
    %p70 = scmp.eq.s32.totalorder %s9, 0
    %p71 = por %p69, %p70
    %p72 = scmp.ne.s32.totalorder %s64, %s66
    %p73 = scmp.eq.s32.totalorder %s14, 1
    %p74 = por %p72, %p73
    %p75 = scmp.ne.s32.totalorder %s66, %s67
    %p76 = scmp.eq.s32.totalorder %s14, 0
    %p77 = por %p75, %p76
    %p78 = scmp.ne.s32.totalorder %s66, %s67
    %p79 = scmp.eq.s32.totalorder %s15, 1
    %p80 = por %p78, %p79
    %p82 = scmp.ne.s32.totalorder %s67, %s81
    %p83 = scmp.eq.s32.totalorder %s15, 0
    %p84 = por %p82, %p83
    %s85 = ssub.s32 %s9, %s16
    %p86 = scmp.eq.s32.totalorder %s85, 0
    %s88 = sadd.s32 %s87, 1
    %s89 = scalar_select %p86, %s87, %s88
    %p92 = pneg %p86
    %p93 = scmp.eq.s32.totalorder %s9, 1
    %p94 = por %p92, %p93
    %p95 = scmp.ne.s32.totalorder %s87, %s90
    %p96 = scmp.eq.s32.totalorder %s9, 0
    %p97 = por %p95, %p96
    %p98 = scmp.ne.s32.totalorder %s87, %s90
    %p99 = scmp.eq.s32.totalorder %s14, 1
    %p100 = por %p98, %p99
    %p101 = scmp.ne.s32.totalorder %s90, %s91
    %p102 = scmp.eq.s32.totalorder %s14, 0
    %p103 = por %p101, %p102
    %p104 = scmp.ne.s32.totalorder %s90, %s91
    %p105 = scmp.eq.s32.totalorder %s15, 1
    %p106 = por %p104, %p105
    %p108 = scmp.ne.s32.totalorder %s91, %s107
    %p109 = scmp.eq.s32.totalorder %s15, 0
    %p110 = por %p108, %p109
    %p111 = scmp.le.s32.totalorder 1, %s9
    %p112 = scmp.lt.s32.totalorder %s9, 3
    %p113 = pnand %p111, %p112
    %p114 = pneg %p113
    // Predicated region
    $region9: #{up_forward.9} parent=5 // pred_check
      _
    $region10: #{up_forward.9} parent=5 // pred_check_branch
      %116 = sbr.rel (%p113) target = $region12
    $region11: #{up_forward.9} parent=5 // pred_region
      %s117 = ssub.s32 %s9, 1
      // Predicated region
      $region13: #{up_forward.9} parent=11 // pred_check
        %p118 = pneg %p56
      $region14: #{up_forward.9} parent=11 // pred_check_branch
        %120 = sbr.rel (%p118) target = $region16
      $region15: #{up_forward.9} parent=11 // pred_region
        _
      $region16: #{up_forward.9} parent=11 // pred_fallthru
        _
      // Predicated region
      $region17: #{up_forward.9} parent=11 // pred_check
        %p121 = pneg %p77
      $region18: #{up_forward.9} parent=11 // pred_check_branch
        %123 = sbr.rel (%p121) target = $region20
      $region19: #{up_forward.9} parent=11 // pred_region
        _
      $region20: #{up_forward.9} parent=11 // pred_fallthru
        _
    $region12: #{up_forward.9} parent=5 // pred_fallthru
      _
    %p124 = scmp.lt.s32.totalorder %s9, 2
    // Predicated region
    $region21: #{up_forward.9} parent=5 // pred_check
      %p125 = pneg %p124
    $region22: #{up_forward.9} parent=5 // pred_check_branch
      %127 = sbr.rel (%p125) target = $region24
    $region23: #{up_forward.9} parent=5 // pred_region
      // Predicated region
      $region25: #{up_forward.9} parent=23 // pred_check
        %p128 = pneg %p29
      $region26: #{up_forward.9} parent=23 // pred_check_branch
        %130 = sbr.rel (%p128) target = $region28
      $region27: #{up_forward.9} parent=23 // pred_region
        %p131 = scmp.lt.s32.totalorder %s9, 1
        %s132 = scalar_select %p131, %s9, 1
        %s133 = smul.addr %s132, 32
        %s134 = smul.addr %s133, 8
        %s135 = scalar_lea.vmem %s0, %s134
      $region28: #{up_forward.9} parent=23 // pred_fallthru
        _
    $region24: #{up_forward.9} parent=5 // pred_fallthru
      _
    %p136 = scmp.le.s32.totalorder 1, %s9
    %p137 = scmp.lt.s32.totalorder %s9, 3
    %p138 = pnand %p136, %p137
    %p139 = pneg %p138
    // Predicated region
    $region29: #{up_forward.9} parent=5 // pred_check
      _
    $region30: #{up_forward.9} parent=5 // pred_check_branch
      %141 = sbr.rel (%p138) target = $region32
    $region31: #{up_forward.9} parent=5 // pred_region
      %s142 = ssub.s32 %s9, 1
      %p143 = scmp.lt.s32.totalorder %s14, 1
      %s144 = scalar_select %p143, %s14, 1
      %s145 = smul.addr %s144, 32
      %s146 = smul.addr %s145, 8
      %s147 = scalar_lea.vmem %s0, %s146
      %p148 = pneg %p35
      %p149 = pneg %p32
      %p150 = pneg %p56
      %p151 = pneg %p53
      %p152 = pneg %p77
      %p153 = pneg %p74
      %p154 = pneg %p103
      %p155 = pneg %p100
      %p156 = scmp.lt.s32.totalorder %s14, 1
      %s157 = scalar_select %p156, %s14, 1
      %s158 = smul.addr %s157, 32
      %s159 = smul.addr %s158, 8
      %s160 = scalar_lea.vmem %s3, %s159
      %p161 = scmp.lt.s32.totalorder %s14, 1
      %s162 = scalar_select %p161, %s14, 1
      %s163 = smul.addr %s162, 32
      %s164 = smul.addr %s163, 8
      %s165 = scalar_lea.vmem %s0, %s164
      %p166 = scmp.lt.s32.totalorder %s14, 1
      %s167 = scalar_select %p166, %s14, 1
      %s168 = smul.addr %s167, 32
      %s169 = smul.addr %s168, 8
      %s170 = scalar_lea.vmem %s3, %s169
      %v171 = vld [vmem:[%s165] sm:$0xff]
      %v172 = vld [vmem:[%s165 + $0x8] sm:$0xff]
      %v173 = vld [vmem:[%s165 + $0x10] sm:$0xff]
      %v174 = vld [vmem:[%s165 + $0x18] sm:$0xff]
      %v175 = vld [vmem:[%s165 + $0x20] sm:$0xff]
      %v176 = vld [vmem:[%s165 + $0x28] sm:$0xff]
      %v177 = vld [vmem:[%s165 + $0x30] sm:$0xff]
      %v178 = vld [vmem:[%s165 + $0x38] sm:$0xff]
      %v179 = vld [vmem:[%s165 + $0x40] sm:$0xff]
      %v180 = vld [vmem:[%s165 + $0x48] sm:$0xff]
      %v181 = vld [vmem:[%s165 + $0x50] sm:$0xff]
      %v182 = vld [vmem:[%s165 + $0x58] sm:$0xff]
      %v183 = vld [vmem:[%s165 + $0x60] sm:$0xff]
      %v184 = vld [vmem:[%s165 + $0x68] sm:$0xff]
      %v185 = vld [vmem:[%s165 + $0x70] sm:$0xff]
      %v186 = vld [vmem:[%s165 + $0x78] sm:$0xff]
      %v187 = vld [vmem:[%s165 + $0x80] sm:$0xff]
      %v188 = vld [vmem:[%s165 + $0x88] sm:$0xff]
      %v189 = vld [vmem:[%s165 + $0x90] sm:$0xff]
      %v190 = vld [vmem:[%s165 + $0x98] sm:$0xff]
      %v191 = vld [vmem:[%s165 + $0xa0] sm:$0xff]
      %v192 = vld [vmem:[%s165 + $0xa8] sm:$0xff]
      %v193 = vld [vmem:[%s165 + $0xb0] sm:$0xff]
      %v194 = vld [vmem:[%s165 + $0xb8] sm:$0xff]
      %v195 = vld [vmem:[%s165 + $0xc0] sm:$0xff]
      %v196 = vld [vmem:[%s165 + $0xc8] sm:$0xff]
      %v197 = vld [vmem:[%s165 + $0xd0] sm:$0xff]
      %v198 = vld [vmem:[%s165 + $0xd8] sm:$0xff]
      %v199 = vld [vmem:[%s165 + $0xe0] sm:$0xff]
      %v200 = vld [vmem:[%s165 + $0xe8] sm:$0xff]
      %v201 = vld [vmem:[%s165 + $0xf0] sm:$0xff]
      %v202 = vld [vmem:[%s165 + $0xf8] sm:$0xff]
      %v203 = vld [vmem:[%s1] sm:$0x1]
      %v205 = vlaneseq
      %v206 = vshrl.u32 %v205, 7
      %v207 = vsub.s32 0, %v206
      %v208 = vrot.slane %v203, %v207
      %v210 = vmul.f32 %v171, %v208
      %v211 = vmul.f32 %v172, %v208
      %v212 = vmul.f32 %v173, %v208
      %v213 = vmul.f32 %v174, %v208
      %v214 = vmul.f32 %v175, %v208
      %v215 = vmul.f32 %v176, %v208
      %v216 = vmul.f32 %v177, %v208
      %v217 = vmul.f32 %v178, %v208
      %v218 = vmul.f32 %v179, %v208
      %v219 = vmul.f32 %v180, %v208
      %v220 = vmul.f32 %v181, %v208
      %v221 = vmul.f32 %v182, %v208
      %v222 = vmul.f32 %v183, %v208
      %v223 = vmul.f32 %v184, %v208
      %v224 = vmul.f32 %v185, %v208
      %v225 = vmul.f32 %v186, %v208
      %v226 = vmul.f32 %v187, %v208
      %v227 = vmul.f32 %v188, %v208
      %v228 = vmul.f32 %v189, %v208
      %v229 = vmul.f32 %v190, %v208
      %v230 = vmul.f32 %v191, %v208
      %v231 = vmul.f32 %v192, %v208
      %v232 = vmul.f32 %v193, %v208
      %v233 = vmul.f32 %v194, %v208
      %v234 = vmul.f32 %v195, %v208
      %v235 = vmul.f32 %v196, %v208
      %v236 = vmul.f32 %v197, %v208
      %v237 = vmul.f32 %v198, %v208
      %v238 = vmul.f32 %v199, %v208
      %v239 = vmul.f32 %v200, %v208
      %v240 = vmul.f32 %v201, %v208
      %v241 = vmul.f32 %v202, %v208
      %v242 = vld [vmem:[%s2] sm:$0x1]
      %v244 = vlaneseq
      %v245 = vshrl.u32 %v244, 7
      %v246 = vsub.s32 0, %v245
      %v247 = vrot.slane %v242, %v246
      %v249 = vadd.f32 %v210, %v247
      %v250 = vadd.f32 %v211, %v247
      %v251 = vadd.f32 %v212, %v247
      %v252 = vadd.f32 %v213, %v247
      %v253 = vadd.f32 %v214, %v247
      %v254 = vadd.f32 %v215, %v247
      %v255 = vadd.f32 %v216, %v247
      %v256 = vadd.f32 %v217, %v247
      %v257 = vadd.f32 %v218, %v247
      %v258 = vadd.f32 %v219, %v247
      %v259 = vadd.f32 %v220, %v247
      %v260 = vadd.f32 %v221, %v247
      %v261 = vadd.f32 %v222, %v247
      %v262 = vadd.f32 %v223, %v247
      %v263 = vadd.f32 %v224, %v247
      %v264 = vadd.f32 %v225, %v247
      %v265 = vadd.f32 %v226, %v247
      %v266 = vadd.f32 %v227, %v247
      %v267 = vadd.f32 %v228, %v247
      %v268 = vadd.f32 %v229, %v247
      %v269 = vadd.f32 %v230, %v247
      %v270 = vadd.f32 %v231, %v247
      %v271 = vadd.f32 %v232, %v247
      %v272 = vadd.f32 %v233, %v247
      %v273 = vadd.f32 %v234, %v247
      %v274 = vadd.f32 %v235, %v247
      %v275 = vadd.f32 %v236, %v247
      %v276 = vadd.f32 %v237, %v247
      %v277 = vadd.f32 %v238, %v247
      %v278 = vadd.f32 %v239, %v247
      %v279 = vadd.f32 %v240, %v247
      %v280 = vadd.f32 %v241, %v247
      %v281 = vmax.f32 %v249, 0.0
      %v282 = vmax.f32 %v250, 0.0
      %v283 = vmax.f32 %v251, 0.0
      %v284 = vmax.f32 %v252, 0.0
      %v285 = vmax.f32 %v253, 0.0
      %v286 = vmax.f32 %v254, 0.0
      %v287 = vmax.f32 %v255, 0.0
      %v288 = vmax.f32 %v256, 0.0
      %v289 = vmax.f32 %v257, 0.0
      %v290 = vmax.f32 %v258, 0.0
      %v291 = vmax.f32 %v259, 0.0
      %v292 = vmax.f32 %v260, 0.0
      %v293 = vmax.f32 %v261, 0.0
      %v294 = vmax.f32 %v262, 0.0
      %v295 = vmax.f32 %v263, 0.0
      %v296 = vmax.f32 %v264, 0.0
      %v297 = vmax.f32 %v265, 0.0
      %v298 = vmax.f32 %v266, 0.0
      %v299 = vmax.f32 %v267, 0.0
      %v300 = vmax.f32 %v268, 0.0
      %v301 = vmax.f32 %v269, 0.0
      %v302 = vmax.f32 %v270, 0.0
      %v303 = vmax.f32 %v271, 0.0
      %v304 = vmax.f32 %v272, 0.0
      %v305 = vmax.f32 %v273, 0.0
      %v306 = vmax.f32 %v274, 0.0
      %v307 = vmax.f32 %v275, 0.0
      %v308 = vmax.f32 %v276, 0.0
      %v309 = vmax.f32 %v277, 0.0
      %v310 = vmax.f32 %v278, 0.0
      %v311 = vmax.f32 %v279, 0.0
      %v312 = vmax.f32 %v280, 0.0
      %313 = vst [vmem:[%s170] sm:$0xff] %v281
      %314 = vst [vmem:[%s170 + $0x8] sm:$0xff] %v282
      %315 = vst [vmem:[%s170 + $0x10] sm:$0xff] %v283
      %316 = vst [vmem:[%s170 + $0x18] sm:$0xff] %v284
      %317 = vst [vmem:[%s170 + $0x20] sm:$0xff] %v285
      %318 = vst [vmem:[%s170 + $0x28] sm:$0xff] %v286
      %319 = vst [vmem:[%s170 + $0x30] sm:$0xff] %v287
      %320 = vst [vmem:[%s170 + $0x38] sm:$0xff] %v288
      %321 = vst [vmem:[%s170 + $0x40] sm:$0xff] %v289
      %322 = vst [vmem:[%s170 + $0x48] sm:$0xff] %v290
      %323 = vst [vmem:[%s170 + $0x50] sm:$0xff] %v291
      %324 = vst [vmem:[%s170 + $0x58] sm:$0xff] %v292
      %325 = vst [vmem:[%s170 + $0x60] sm:$0xff] %v293
      %326 = vst [vmem:[%s170 + $0x68] sm:$0xff] %v294
      %327 = vst [vmem:[%s170 + $0x70] sm:$0xff] %v295
      %328 = vst [vmem:[%s170 + $0x78] sm:$0xff] %v296
      %329 = vst [vmem:[%s170 + $0x80] sm:$0xff] %v297
      %330 = vst [vmem:[%s170 + $0x88] sm:$0xff] %v298
      %331 = vst [vmem:[%s170 + $0x90] sm:$0xff] %v299
      %332 = vst [vmem:[%s170 + $0x98] sm:$0xff] %v300
      %333 = vst [vmem:[%s170 + $0xa0] sm:$0xff] %v301
      %334 = vst [vmem:[%s170 + $0xa8] sm:$0xff] %v302
      %335 = vst [vmem:[%s170 + $0xb0] sm:$0xff] %v303
      %336 = vst [vmem:[%s170 + $0xb8] sm:$0xff] %v304
      %337 = vst [vmem:[%s170 + $0xc0] sm:$0xff] %v305
      %338 = vst [vmem:[%s170 + $0xc8] sm:$0xff] %v306
      %339 = vst [vmem:[%s170 + $0xd0] sm:$0xff] %v307
      %340 = vst [vmem:[%s170 + $0xd8] sm:$0xff] %v308
      %341 = vst [vmem:[%s170 + $0xe0] sm:$0xff] %v309
      %342 = vst [vmem:[%s170 + $0xe8] sm:$0xff] %v310
      %343 = vst [vmem:[%s170 + $0xf0] sm:$0xff] %v311
      %344 = vst [vmem:[%s170 + $0xf8] sm:$0xff] %v312
      %p345 = scmp.lt.s32.totalorder %s14, 1
      %s346 = scalar_select %p345, %s14, 1
      %s347 = smul.addr %s346, 32
      %s348 = smul.addr %s347, 8
      %s349 = scalar_lea.vmem %s3, %s348
      // Predicated region
      $region33: #{up_forward.9} parent=31 // pred_check
        %p350 = pneg %p100
      $region34: #{up_forward.9} parent=31 // pred_check_branch
        %352 = sbr.rel (%p350) target = $region36
      $region35: #{up_forward.9} parent=31 // pred_region
        _
      $region36: #{up_forward.9} parent=31 // pred_fallthru
        _
    $region32: #{up_forward.9} parent=5 // pred_fallthru
      _
    %p353 = scmp.le.s32.totalorder 2, %s9
    // Predicated region
    $region37: #{up_forward.9} parent=5 // pred_check
      %p354 = pneg %p353
    $region38: #{up_forward.9} parent=5 // pred_check_branch
      %356 = sbr.rel (%p354) target = $region40
    $region39: #{up_forward.9} parent=5 // pred_region
      %s357 = ssub.s32 %s9, 2
      // Predicated region
      $region41: #{up_forward.9} parent=39 // pred_check
        %p358 = pneg %p106
      $region42: #{up_forward.9} parent=39 // pred_check_branch
        %360 = sbr.rel (%p358) target = $region44
      $region43: #{up_forward.9} parent=39 // pred_region
        %p361 = scmp.lt.s32.totalorder %s15, 1
        %s362 = scalar_select %p361, %s15, 1
        %s363 = smul.addr %s362, 32
        %s364 = smul.addr %s363, 8
        %s365 = scalar_lea.vmem %s3, %s364
      $region44: #{up_forward.9} parent=39 // pred_fallthru
        _
    $region40: #{up_forward.9} parent=5 // pred_fallthru
      _
  $region6: #{up_forward.9} parent=0 // loop_footer
    %s13 = sadd.s32 1, %s9
  $region7: #{up_forward.9} parent=0 // loop_footer_branch
    %8 = sbr.rel target = $region3
  $region8: #{up_forward.9} parent=0 // loop_exit
    _

// kernel: up_forward.7
$region0: #{up_forward.7}
  #allocation0 [shape = 'u32[]', space=smem, size = 0x4, offset = 0x4, fixed_abs, tag = 'smem constant byte address 0x4 - core index']
  #allocation1 [shape = 'u32[144,128]{1,0:T(1,128)}', space=vmem, size = 0x12000, scoped, tag = 'internal scratch']
  #allocation2 [shape = 'f32[18,18,8]{2,1,0:T(8,128)}', space=vmem, size = 0x36000, scoped, tag = 'scratch operand']
  %s0 = inlined_call_operand.vmem [shape: f32[2,16,16,4], index: 0, kind: input, shape index: {}]
  %s1 = inlined_call_operand.vmem [shape: f32[2,16,16,4], index: 1, kind: input, shape index: {}]
  %s2 = inlined_call_operand.vmem [shape: bf16[9,8,128], index: 2, kind: input, shape index: {}]
  %s3 = inlined_call_operand.vmem [shape: f32[2,16,16,128], index: 3, kind: output, shape index: {0}]
  %s4 = inlined_call_operand.vmem [shape: f32[2,2,128], index: 4, kind: output, shape index: {1}]
  %5 = xla_tuple %s3, %s4
  %s6 = sld [smem:[#allocation0]]
  $region53: #{up_forward.7} parent=0
    _
  %s8 = ssub.s32 1, %s6
  %s9 = scalar_select 0, %s8, %s6
  loop: start=0, step=1, limit=4
  $region2: #{up_forward.7} parent=0 // loop_pre_header
    _
  $region3: #{up_forward.7} parent=0 // loop_header
    %s11 = sphi 0, %s15
    %p12 = scmp.ge.s32.totalorder %s11, 4
    %s21 = sphi 0, %s23
    %s24 = sphi 0, %s21
    %s25 = sphi 0, %s24
    %s41 = sphi 0, %s25
    %s47 = sphi 0, %s49
    %s50 = sphi 0, %s47
    %s51 = sphi 0, %s50
    %s67 = sphi 0, %s51
    %s71 = sphi 0, %s71
    %s73 = sphi 0, %s71
    %s74 = sphi 0, %s73
    %s88 = sphi 0, %s74
    %s94 = sphi 0, %s96
    %s97 = sphi 0, %s94
    %s98 = sphi 0, %s97
    %s114 = sphi 0, %s98
    %s120 = sphi 0, %s122
    %s123 = sphi 0, %s120
    %s124 = sphi 0, %s123
    %s140 = sphi 0, %s124
  $region4: #{up_forward.7} parent=0 // loop_header_branch
    %14 = sbr.rel (%p12) target = $region8
  $region5: #{up_forward.7} parent=0 // loop_body
    %s16 = ssub.s32 %s11, 1
    %s17 = ssub.s32 %s11, 2
    %s18 = sadd.s32 %s11, 1
    %s19 = ssub.s32 %s11, %s18
    %p20 = scmp.eq.s32.totalorder %s19, 0
    %s22 = sadd.s32 %s21, 1
    %s23 = scalar_select %p20, %s21, %s22
    %p26 = pneg %p20
    %p27 = scmp.eq.s32.totalorder %s11, 1
    %p28 = por %p26, %p27
    %p29 = scmp.ne.s32.totalorder %s21, %s24
    %p30 = scmp.eq.s32.totalorder %s11, 0
    %p31 = por %p29, %p30
    %p32 = scmp.ne.s32.totalorder %s21, %s24
    %p33 = scmp.eq.s32.totalorder %s16, 1
    %p34 = por %p32, %p33
    %p35 = scmp.ne.s32.totalorder %s24, %s25
    %p36 = scmp.eq.s32.totalorder %s16, 0
    %p37 = por %p35, %p36
    %p38 = scmp.ne.s32.totalorder %s24, %s25
    %p39 = scmp.eq.s32.totalorder %s17, 1
    %p40 = por %p38, %p39
    %p42 = scmp.ne.s32.totalorder %s25, %s41
    %p43 = scmp.eq.s32.totalorder %s17, 0
    %p44 = por %p42, %p43
    %s45 = ssub.s32 %s11, %s18
    %p46 = scmp.eq.s32.totalorder %s45, 0
    %s48 = sadd.s32 %s47, 1
    %s49 = scalar_select %p46, %s47, %s48
    %p52 = pneg %p46
    %p53 = scmp.eq.s32.totalorder %s11, 1
    %p54 = por %p52, %p53
    %p55 = scmp.ne.s32.totalorder %s47, %s50
    %p56 = scmp.eq.s32.totalorder %s11, 0
    %p57 = por %p55, %p56
    %p58 = scmp.ne.s32.totalorder %s47, %s50
    %p59 = scmp.eq.s32.totalorder %s16, 1
    %p60 = por %p58, %p59
    %p61 = scmp.ne.s32.totalorder %s50, %s51
    %p62 = scmp.eq.s32.totalorder %s16, 0
    %p63 = por %p61, %p62
    %p64 = scmp.ne.s32.totalorder %s50, %s51
    %p65 = scmp.eq.s32.totalorder %s17, 1
    %p66 = por %p64, %p65
    %p68 = scmp.ne.s32.totalorder %s51, %s67
    %p69 = scmp.eq.s32.totalorder %s17, 0
    %p70 = por %p68, %p69
    %s72 = sadd.s32 %s71, 1
    %p75 = scmp.eq.s32.totalorder %s11, 1
    %p76 = scmp.ne.s32.totalorder %s71, %s73
    %p77 = scmp.eq.s32.totalorder %s11, 0
    %p78 = por %p76, %p77
    %p79 = scmp.ne.s32.totalorder %s71, %s73
    %p80 = scmp.eq.s32.totalorder %s16, 1
    %p81 = por %p79, %p80
    %p82 = scmp.ne.s32.totalorder %s73, %s74
    %p83 = scmp.eq.s32.totalorder %s16, 0
    %p84 = por %p82, %p83
    %p85 = scmp.ne.s32.totalorder %s73, %s74
    %p86 = scmp.eq.s32.totalorder %s17, 1
    %p87 = por %p85, %p86
    %p89 = scmp.ne.s32.totalorder %s74, %s88
    %p90 = scmp.eq.s32.totalorder %s17, 0
    %p91 = por %p89, %p90
    %s92 = ssub.s32 %s11, %s18
    %p93 = scmp.eq.s32.totalorder %s92, 0
    %s95 = sadd.s32 %s94, 1
    %s96 = scalar_select %p93, %s94, %s95
    %p99 = pneg %p93
    %p100 = scmp.eq.s32.totalorder %s11, 1
    %p101 = por %p99, %p100
    %p102 = scmp.ne.s32.totalorder %s94, %s97
    %p103 = scmp.eq.s32.totalorder %s11, 0
    %p104 = por %p102, %p103
    %p105 = scmp.ne.s32.totalorder %s94, %s97
    %p106 = scmp.eq.s32.totalorder %s16, 1
    %p107 = por %p105, %p106
    %p108 = scmp.ne.s32.totalorder %s97, %s98
    %p109 = scmp.eq.s32.totalorder %s16, 0
    %p110 = por %p108, %p109
    %p111 = scmp.ne.s32.totalorder %s97, %s98
    %p112 = scmp.eq.s32.totalorder %s17, 1
    %p113 = por %p111, %p112
    %p115 = scmp.ne.s32.totalorder %s98, %s114
    %p116 = scmp.eq.s32.totalorder %s17, 0
    %p117 = por %p115, %p116
    %s118 = ssub.s32 %s11, %s18
    %p119 = scmp.eq.s32.totalorder %s118, 0
    %s121 = sadd.s32 %s120, 1
    %s122 = scalar_select %p119, %s120, %s121
    %p125 = pneg %p119
    %p126 = scmp.eq.s32.totalorder %s11, 1
    %p127 = por %p125, %p126
    %p128 = scmp.ne.s32.totalorder %s120, %s123
    %p129 = scmp.eq.s32.totalorder %s11, 0
    %p130 = por %p128, %p129
    %p131 = scmp.ne.s32.totalorder %s120, %s123
    %p132 = scmp.eq.s32.totalorder %s16, 1
    %p133 = por %p131, %p132
    %p134 = scmp.ne.s32.totalorder %s123, %s124
    %p135 = scmp.eq.s32.totalorder %s16, 0
    %p136 = por %p134, %p135
    %p137 = scmp.ne.s32.totalorder %s123, %s124
    %p138 = scmp.eq.s32.totalorder %s17, 1
    %p139 = por %p137, %p138
    %p141 = scmp.ne.s32.totalorder %s124, %s140
    %p142 = scmp.eq.s32.totalorder %s17, 0
    %p143 = por %p141, %p142
    %p144 = scmp.le.s32.totalorder 1, %s11
    %p145 = scmp.lt.s32.totalorder %s11, 3
    %p146 = pnand %p144, %p145
    %p147 = pneg %p146
    // Predicated region
    $region9: #{up_forward.7} parent=5 // pred_check
      _
    $region10: #{up_forward.7} parent=5 // pred_check_branch
      %149 = sbr.rel (%p146) target = $region12
    $region11: #{up_forward.7} parent=5 // pred_region
      %s150 = ssub.s32 %s11, 1
      // Predicated region
      $region13: #{up_forward.7} parent=11 // pred_check
        %p151 = pneg %p84
      $region14: #{up_forward.7} parent=11 // pred_check_branch
        %153 = sbr.rel (%p151) target = $region16
      $region15: #{up_forward.7} parent=11 // pred_region
        _
      $region16: #{up_forward.7} parent=11 // pred_fallthru
        _
    $region12: #{up_forward.7} parent=5 // pred_fallthru
      _
    %p154 = scmp.lt.s32.totalorder %s11, 2
    // Predicated region
    $region17: #{up_forward.7} parent=5 // pred_check
      %p155 = pneg %p154
    $region18: #{up_forward.7} parent=5 // pred_check_branch
      %157 = sbr.rel (%p155) target = $region20
    $region19: #{up_forward.7} parent=5 // pred_region
      // Predicated region
      $region21: #{up_forward.7} parent=19 // pred_check
        %p158 = pneg %p31
      $region22: #{up_forward.7} parent=19 // pred_check_branch
        %160 = sbr.rel (%p158) target = $region24
      $region23: #{up_forward.7} parent=19 // pred_region
        %p161 = scmp.lt.s32.totalorder %s11, 1
        %s162 = scalar_select %p161, %s11, 1
        %s163 = smul.addr %s162, 32
        %s164 = smul.addr %s163, 8
        %s165 = scalar_lea.vmem %s0, %s164
      $region24: #{up_forward.7} parent=19 // pred_fallthru
        _
      // Predicated region
      $region25: #{up_forward.7} parent=19 // pred_check
        %p166 = pneg %p57
      $region26: #{up_forward.7} parent=19 // pred_check_branch
        %168 = sbr.rel (%p166) target = $region28
      $region27: #{up_forward.7} parent=19 // pred_region
        %p169 = scmp.lt.s32.totalorder %s11, 1
        %s170 = scalar_select %p169, %s11, 1
        %s171 = smul.addr %s170, 32
        %s172 = smul.addr %s171, 8
        %s173 = scalar_lea.vmem %s1, %s172
      $region28: #{up_forward.7} parent=19 // pred_fallthru
        _
    $region20: #{up_forward.7} parent=5 // pred_fallthru
      _
    %p174 = scmp.le.s32.totalorder 1, %s11
    %p175 = scmp.lt.s32.totalorder %s11, 3
    %p176 = pnand %p174, %p175
    %p177 = pneg %p176
    // Predicated region
    $region29: #{up_forward.7} parent=5 // pred_check
      _
    $region30: #{up_forward.7} parent=5 // pred_check_branch
      %179 = sbr.rel (%p176) target = $region32
    $region31: #{up_forward.7} parent=5 // pred_region
      %s180 = ssub.s32 %s11, 1
      %p181 = scmp.lt.s32.totalorder %s16, 1
      %s182 = scalar_select %p181, %s16, 1
      %s183 = smul.addr %s182, 32
      %s184 = smul.addr %s183, 8
      %s185 = scalar_lea.vmem %s0, %s184
      %p186 = pneg %p37
      %p187 = pneg %p34
      %p188 = scmp.lt.s32.totalorder %s16, 1
      %s189 = scalar_select %p188, %s16, 1
      %s190 = smul.addr %s189, 32
      %s191 = smul.addr %s190, 8
      %s192 = scalar_lea.vmem %s1, %s191
      %p193 = pneg %p63
      %p194 = pneg %p60
      %p195 = pneg %p84
      %p196 = pneg %p81
      %p197 = pneg %p110
      %p198 = pneg %p107
      %p199 = scmp.lt.s32.totalorder %s16, 1
      %s200 = scalar_select %p199, %s16, 1
      %s201 = smul.addr %s200, 32
      %s202 = smul.addr %s201, 8
      %s203 = scalar_lea.vmem %s3, %s202
      %p204 = pneg %p136
      %p205 = pneg %p133
      %p206 = scmp.lt.s32.totalorder %s16, 1
      %s207 = scalar_select %p206, %s16, 1
      %s208 = smul.addr %s207, 2
      %s209 = scalar_lea.vmem %s4, %s208
      %p210 = scmp.lt.s32.totalorder %s16, 1
      %s211 = scalar_select %p210, %s16, 1
      %s212 = smul.addr %s211, 32
      %s213 = smul.addr %s212, 8
      %s214 = scalar_lea.vmem %s0, %s213
      %p215 = scmp.lt.s32.totalorder %s16, 1
      %s216 = scalar_select %p215, %s16, 1
      %s217 = smul.addr %s216, 32
      %s218 = smul.addr %s217, 8
      %s219 = scalar_lea.vmem %s1, %s218
      %p220 = scmp.lt.s32.totalorder %s16, 1
      %s221 = scalar_select %p220, %s16, 1
      %s222 = smul.addr %s221, 32
      %s223 = smul.addr %s222, 8
      %s224 = scalar_lea.vmem %s3, %s223
      %p225 = scmp.lt.s32.totalorder %s16, 1
      %s226 = scalar_select %p225, %s16, 1
      %s227 = smul.addr %s226, 2
      %s228 = scalar_lea.vmem %s4, %s227
      %v230 = vld [vmem:[%s214] sm:$0xff]
      %v231 = vld [vmem:[%s214 + $0x8] sm:$0xff]
      %v232 = vld [vmem:[%s214 + $0x10] sm:$0xff]
      %v233 = vld [vmem:[%s214 + $0x18] sm:$0xff]
      %v234 = vld [vmem:[%s214 + $0x20] sm:$0xff]
      %v235 = vld [vmem:[%s214 + $0x28] sm:$0xff]
      %v236 = vld [vmem:[%s214 + $0x30] sm:$0xff]
      %v237 = vld [vmem:[%s214 + $0x38] sm:$0xff]
      %v238 = vld [vmem:[%s214 + $0x40] sm:$0xff]
      %v239 = vld [vmem:[%s214 + $0x48] sm:$0xff]
      %v240 = vld [vmem:[%s214 + $0x50] sm:$0xff]
      %v241 = vld [vmem:[%s214 + $0x58] sm:$0xff]
      %v242 = vld [vmem:[%s214 + $0x60] sm:$0xff]
      %v243 = vld [vmem:[%s214 + $0x68] sm:$0xff]
      %v244 = vld [vmem:[%s214 + $0x70] sm:$0xff]
      %v245 = vld [vmem:[%s214 + $0x78] sm:$0xff]
      %v246 = vld [vmem:[%s214 + $0x80] sm:$0xff]
      %v247 = vld [vmem:[%s214 + $0x88] sm:$0xff]
      %v248 = vld [vmem:[%s214 + $0x90] sm:$0xff]
      %v249 = vld [vmem:[%s214 + $0x98] sm:$0xff]
      %v250 = vld [vmem:[%s214 + $0xa0] sm:$0xff]
      %v251 = vld [vmem:[%s214 + $0xa8] sm:$0xff]
      %v252 = vld [vmem:[%s214 + $0xb0] sm:$0xff]
      %v253 = vld [vmem:[%s214 + $0xb8] sm:$0xff]
      %v254 = vld [vmem:[%s214 + $0xc0] sm:$0xff]
      %v255 = vld [vmem:[%s214 + $0xc8] sm:$0xff]
      %v256 = vld [vmem:[%s214 + $0xd0] sm:$0xff]
      %v257 = vld [vmem:[%s214 + $0xd8] sm:$0xff]
      %v258 = vld [vmem:[%s214 + $0xe0] sm:$0xff]
      %v259 = vld [vmem:[%s214 + $0xe8] sm:$0xff]
      %v260 = vld [vmem:[%s214 + $0xf0] sm:$0xff]
      %v261 = vld [vmem:[%s214 + $0xf8] sm:$0xff]
      %v262 = vld [vmem:[%s219] sm:$0xff]
      %v263 = vld [vmem:[%s219 + $0x8] sm:$0xff]
      %v264 = vld [vmem:[%s219 + $0x10] sm:$0xff]
      %v265 = vld [vmem:[%s219 + $0x18] sm:$0xff]
      %v266 = vld [vmem:[%s219 + $0x20] sm:$0xff]
      %v267 = vld [vmem:[%s219 + $0x28] sm:$0xff]
      %v268 = vld [vmem:[%s219 + $0x30] sm:$0xff]
      %v269 = vld [vmem:[%s219 + $0x38] sm:$0xff]
      %v270 = vld [vmem:[%s219 + $0x40] sm:$0xff]
      %v271 = vld [vmem:[%s219 + $0x48] sm:$0xff]
      %v272 = vld [vmem:[%s219 + $0x50] sm:$0xff]
      %v273 = vld [vmem:[%s219 + $0x58] sm:$0xff]
      %v274 = vld [vmem:[%s219 + $0x60] sm:$0xff]
      %v275 = vld [vmem:[%s219 + $0x68] sm:$0xff]
      %v276 = vld [vmem:[%s219 + $0x70] sm:$0xff]
      %v277 = vld [vmem:[%s219 + $0x78] sm:$0xff]
      %v278 = vld [vmem:[%s219 + $0x80] sm:$0xff]
      %v279 = vld [vmem:[%s219 + $0x88] sm:$0xff]
      %v280 = vld [vmem:[%s219 + $0x90] sm:$0xff]
      %v281 = vld [vmem:[%s219 + $0x98] sm:$0xff]
      %v282 = vld [vmem:[%s219 + $0xa0] sm:$0xff]
      %v283 = vld [vmem:[%s219 + $0xa8] sm:$0xff]
      %v284 = vld [vmem:[%s219 + $0xb0] sm:$0xff]
      %v285 = vld [vmem:[%s219 + $0xb8] sm:$0xff]
      %v286 = vld [vmem:[%s219 + $0xc0] sm:$0xff]
      %v287 = vld [vmem:[%s219 + $0xc8] sm:$0xff]
      %v288 = vld [vmem:[%s219 + $0xd0] sm:$0xff]
      %v289 = vld [vmem:[%s219 + $0xd8] sm:$0xff]
      %v290 = vld [vmem:[%s219 + $0xe0] sm:$0xff]
      %v291 = vld [vmem:[%s219 + $0xe8] sm:$0xff]
      %v292 = vld [vmem:[%s219 + $0xf0] sm:$0xff]
      %v293 = vld [vmem:[%s219 + $0xf8] sm:$0xff]
      %326 = vrot.lane.b32.xlu0 %v262, 4
      %v327 = vpop.permute.xlu0 %326
      %328 = vrot.lane.b32.xlu0 %v263, 4
      %v329 = vpop.permute.xlu0 %328
      %330 = vrot.lane.b32.xlu0 %v264, 4
      %v331 = vpop.permute.xlu0 %330
      %332 = vrot.lane.b32.xlu0 %v265, 4
      %v333 = vpop.permute.xlu0 %332
      %334 = vrot.lane.b32.xlu0 %v266, 4
      %v335 = vpop.permute.xlu0 %334
      %336 = vrot.lane.b32.xlu0 %v267, 4
      %v337 = vpop.permute.xlu0 %336
      %338 = vrot.lane.b32.xlu0 %v268, 4
      %v339 = vpop.permute.xlu0 %338
      %340 = vrot.lane.b32.xlu0 %v269, 4
      %v341 = vpop.permute.xlu0 %340
      %342 = vrot.lane.b32.xlu0 %v270, 4
      %v343 = vpop.permute.xlu0 %342
      %344 = vrot.lane.b32.xlu0 %v271, 4
      %v345 = vpop.permute.xlu0 %344
      %346 = vrot.lane.b32.xlu0 %v272, 4
      %v347 = vpop.permute.xlu0 %346
      %348 = vrot.lane.b32.xlu0 %v273, 4
      %v349 = vpop.permute.xlu0 %348
      %350 = vrot.lane.b32.xlu0 %v274, 4
      %v351 = vpop.permute.xlu0 %350
      %352 = vrot.lane.b32.xlu0 %v275, 4
      %v353 = vpop.permute.xlu0 %352
      %354 = vrot.lane.b32.xlu0 %v276, 4
      %v355 = vpop.permute.xlu0 %354
      %356 = vrot.lane.b32.xlu0 %v277, 4
      %v357 = vpop.permute.xlu0 %356
      %358 = vrot.lane.b32.xlu0 %v278, 4
      %v359 = vpop.permute.xlu0 %358
      %360 = vrot.lane.b32.xlu0 %v279, 4
      %v361 = vpop.permute.xlu0 %360
      %362 = vrot.lane.b32.xlu0 %v280, 4
      %v363 = vpop.permute.xlu0 %362
      %364 = vrot.lane.b32.xlu0 %v281, 4
      %v365 = vpop.permute.xlu0 %364
      %366 = vrot.lane.b32.xlu0 %v282, 4
      %v367 = vpop.permute.xlu0 %366
      %368 = vrot.lane.b32.xlu0 %v283, 4
      %v369 = vpop.permute.xlu0 %368
      %370 = vrot.lane.b32.xlu0 %v284, 4
      %v371 = vpop.permute.xlu0 %370
      %372 = vrot.lane.b32.xlu0 %v285, 4
      %v373 = vpop.permute.xlu0 %372
      %374 = vrot.lane.b32.xlu0 %v286, 4
      %v375 = vpop.permute.xlu0 %374
      %376 = vrot.lane.b32.xlu0 %v287, 4
      %v377 = vpop.permute.xlu0 %376
      %378 = vrot.lane.b32.xlu0 %v288, 4
      %v379 = vpop.permute.xlu0 %378
      %380 = vrot.lane.b32.xlu0 %v289, 4
      %v381 = vpop.permute.xlu0 %380
      %382 = vrot.lane.b32.xlu0 %v290, 4
      %v383 = vpop.permute.xlu0 %382
      %384 = vrot.lane.b32.xlu0 %v291, 4
      %v385 = vpop.permute.xlu0 %384
      %386 = vrot.lane.b32.xlu0 %v292, 4
      %v387 = vpop.permute.xlu0 %386
      %388 = vrot.lane.b32.xlu0 %v293, 4
      %v389 = vpop.permute.xlu0 %388
      %vm422 = vcmask 31744
      %v423 = vsel %vm422, %v230, %v327
      %v424 = vsel %vm422, %v231, %v329
      %v425 = vsel %vm422, %v232, %v331
      %v426 = vsel %vm422, %v233, %v333
      %v427 = vsel %vm422, %v234, %v335
      %v428 = vsel %vm422, %v235, %v337
      %v429 = vsel %vm422, %v236, %v339
      %v430 = vsel %vm422, %v237, %v341
      %v431 = vsel %vm422, %v238, %v343
      %v432 = vsel %vm422, %v239, %v345
      %v433 = vsel %vm422, %v240, %v347
      %v434 = vsel %vm422, %v241, %v349
      %v435 = vsel %vm422, %v242, %v351
      %v436 = vsel %vm422, %v243, %v353
      %v437 = vsel %vm422, %v244, %v355
      %v438 = vsel %vm422, %v245, %v357
      %v439 = vsel %vm422, %v246, %v359
      %v440 = vsel %vm422, %v247, %v361
      %v441 = vsel %vm422, %v248, %v363
      %v442 = vsel %vm422, %v249, %v365
      %v443 = vsel %vm422, %v250, %v367
      %v444 = vsel %vm422, %v251, %v369
      %v445 = vsel %vm422, %v252, %v371
      %v446 = vsel %vm422, %v253, %v373
      %v447 = vsel %vm422, %v254, %v375
      %v448 = vsel %vm422, %v255, %v377
      %v449 = vsel %vm422, %v256, %v379
      %v450 = vsel %vm422, %v257, %v381
      %v451 = vsel %vm422, %v258, %v383
      %v452 = vsel %vm422, %v259, %v385
      %v453 = vsel %vm422, %v260, %v387
      %v454 = vsel %vm422, %v261, %v389
      %vm455 = vcmask 64512
      %456 = vst.msk [vmem:[#allocation2] sm:$0xff] %vm455, 0.0
      %457 = vst.msk [vmem:[#allocation2 + $0x8] sm:$0xff] %vm455, 0.0
      %vm458 = vcmask 58368
      %459 = vst.msk [vmem:[#allocation2 + $0x10] sm:$0x3] %vm458, 0.0
      %460 = vst.msk [vmem:[#allocation2 + $0x18] sm:$0xff] %vm455, 0.0
      %461 = vst.msk [vmem:[#allocation2 + $0x20] sm:$0xff] %vm455, 0.0
      %462 = vst.msk [vmem:[#allocation2 + $0x28] sm:$0x3] %vm458, 0.0
      %463 = vst.msk [vmem:[#allocation2 + $0x30] sm:$0xff] %vm455, 0.0
      %464 = vst.msk [vmem:[#allocation2 + $0x38] sm:$0xff] %vm455, 0.0
      %465 = vst.msk [vmem:[#allocation2 + $0x40] sm:$0x3] %vm458, 0.0
      %466 = vst.msk [vmem:[#allocation2 + $0x48] sm:$0xff] %vm455, 0.0
      %467 = vst.msk [vmem:[#allocation2 + $0x50] sm:$0xff] %vm455, 0.0
      %468 = vst.msk [vmem:[#allocation2 + $0x58] sm:$0x3] %vm458, 0.0
      %469 = vst.msk [vmem:[#allocation2 + $0x60] sm:$0xff] %vm455, 0.0
      %470 = vst.msk [vmem:[#allocation2 + $0x68] sm:$0xff] %vm455, 0.0
      %471 = vst.msk [vmem:[#allocation2 + $0x70] sm:$0x3] %vm458, 0.0
      %472 = vst.msk [vmem:[#allocation2 + $0x78] sm:$0xff] %vm455, 0.0
      %473 = vst.msk [vmem:[#allocation2 + $0x80] sm:$0xff] %vm455, 0.0
      %474 = vst.msk [vmem:[#allocation2 + $0x88] sm:$0x3] %vm458, 0.0
      %475 = vst.msk [vmem:[#allocation2 + $0x90] sm:$0xff] %vm455, 0.0
      %476 = vst.msk [vmem:[#allocation2 + $0x98] sm:$0xff] %vm455, 0.0
      %477 = vst.msk [vmem:[#allocation2 + $0xa0] sm:$0x3] %vm458, 0.0
      %478 = vst.msk [vmem:[#allocation2 + $0xa8] sm:$0xff] %vm455, 0.0
      %479 = vst.msk [vmem:[#allocation2 + $0xb0] sm:$0xff] %vm455, 0.0
      %480 = vst.msk [vmem:[#allocation2 + $0xb8] sm:$0x3] %vm458, 0.0
      %481 = vst.msk [vmem:[#allocation2 + $0xc0] sm:$0xff] %vm455, 0.0
      %482 = vst.msk [vmem:[#allocation2 + $0xc8] sm:$0xff] %vm455, 0.0
      %483 = vst.msk [vmem:[#allocation2 + $0xd0] sm:$0x3] %vm458, 0.0
      %484 = vst.msk [vmem:[#allocation2 + $0xd8] sm:$0xff] %vm455, 0.0
      %485 = vst.msk [vmem:[#allocation2 + $0xe0] sm:$0xff] %vm455, 0.0
      %486 = vst.msk [vmem:[#allocation2 + $0xe8] sm:$0x3] %vm458, 0.0
      %487 = vst.msk [vmem:[#allocation2 + $0xf0] sm:$0xff] %vm455, 0.0
      %488 = vst.msk [vmem:[#allocation2 + $0xf8] sm:$0xff] %vm455, 0.0
      %489 = vst.msk [vmem:[#allocation2 + $0x100] sm:$0x3] %vm458, 0.0
      %490 = vst.msk [vmem:[#allocation2 + $0x108] sm:$0xff] %vm455, 0.0
      %491 = vst.msk [vmem:[#allocation2 + $0x110] sm:$0xff] %vm455, 0.0
      %492 = vst.msk [vmem:[#allocation2 + $0x118] sm:$0x3] %vm458, 0.0
      %493 = vst.msk [vmem:[#allocation2 + $0x120] sm:$0xff] %vm455, 0.0
      %494 = vst.msk [vmem:[#allocation2 + $0x128] sm:$0xff] %vm455, 0.0
      %495 = vst.msk [vmem:[#allocation2 + $0x130] sm:$0x3] %vm458, 0.0
      %496 = vst.msk [vmem:[#allocation2 + $0x138] sm:$0xff] %vm455, 0.0
      %497 = vst.msk [vmem:[#allocation2 + $0x140] sm:$0xff] %vm455, 0.0
      %498 = vst.msk [vmem:[#allocation2 + $0x148] sm:$0x3] %vm458, 0.0
      %499 = vst.msk [vmem:[#allocation2 + $0x150] sm:$0xff] %vm455, 0.0
      %500 = vst.msk [vmem:[#allocation2 + $0x158] sm:$0xff] %vm455, 0.0
      %501 = vst.msk [vmem:[#allocation2 + $0x160] sm:$0x3] %vm458, 0.0
      %502 = vst.msk [vmem:[#allocation2 + $0x168] sm:$0xff] %vm455, 0.0
      %503 = vst.msk [vmem:[#allocation2 + $0x170] sm:$0xff] %vm455, 0.0
      %504 = vst.msk [vmem:[#allocation2 + $0x178] sm:$0x3] %vm458, 0.0
      %505 = vst.msk [vmem:[#allocation2 + $0x180] sm:$0xff] %vm455, 0.0
      %506 = vst.msk [vmem:[#allocation2 + $0x188] sm:$0xff] %vm455, 0.0
      %507 = vst.msk [vmem:[#allocation2 + $0x190] sm:$0x3] %vm458, 0.0
      %508 = vst.msk [vmem:[#allocation2 + $0x198] sm:$0xff] %vm455, 0.0
      %509 = vst.msk [vmem:[#allocation2 + $0x1a0] sm:$0xff] %vm455, 0.0
      %510 = vst.msk [vmem:[#allocation2 + $0x1a8] sm:$0x3] %vm458, 0.0
      %s511 = scalar_lea.vmem [#allocation2], 24
      %512 = vst.msk [vmem:[%s511 + $0x1] sm:$0xff] %vm455, %v423
      %513 = vst.msk [vmem:[%s511 + $0x9] sm:$0xff] %vm455, %v424
      %514 = vst.msk [vmem:[%s511 + $0x19] sm:$0xff] %vm455, %v425
      %515 = vst.msk [vmem:[%s511 + $0x21] sm:$0xff] %vm455, %v426
      %516 = vst.msk [vmem:[%s511 + $0x31] sm:$0xff] %vm455, %v427
      %517 = vst.msk [vmem:[%s511 + $0x39] sm:$0xff] %vm455, %v428
      %518 = vst.msk [vmem:[%s511 + $0x49] sm:$0xff] %vm455, %v429
      %519 = vst.msk [vmem:[%s511 + $0x51] sm:$0xff] %vm455, %v430
      %520 = vst.msk [vmem:[%s511 + $0x61] sm:$0xff] %vm455, %v431
      %521 = vst.msk [vmem:[%s511 + $0x69] sm:$0xff] %vm455, %v432
      %522 = vst.msk [vmem:[%s511 + $0x79] sm:$0xff] %vm455, %v433
      %523 = vst.msk [vmem:[%s511 + $0x81] sm:$0xff] %vm455, %v434
      %524 = vst.msk [vmem:[%s511 + $0x91] sm:$0xff] %vm455, %v435
      %525 = vst.msk [vmem:[%s511 + $0x99] sm:$0xff] %vm455, %v436
      %526 = vst.msk [vmem:[%s511 + $0xa9] sm:$0xff] %vm455, %v437
      %527 = vst.msk [vmem:[%s511 + $0xb1] sm:$0xff] %vm455, %v438
      %528 = vst.msk [vmem:[%s511 + $0xc1] sm:$0xff] %vm455, %v439
      %529 = vst.msk [vmem:[%s511 + $0xc9] sm:$0xff] %vm455, %v440
      %530 = vst.msk [vmem:[%s511 + $0xd9] sm:$0xff] %vm455, %v441
      %531 = vst.msk [vmem:[%s511 + $0xe1] sm:$0xff] %vm455, %v442
      %532 = vst.msk [vmem:[%s511 + $0xf1] sm:$0xff] %vm455, %v443
      %533 = vst.msk [vmem:[%s511 + $0xf9] sm:$0xff] %vm455, %v444
      %534 = vst.msk [vmem:[%s511 + $0x109] sm:$0xff] %vm455, %v445
      %535 = vst.msk [vmem:[%s511 + $0x111] sm:$0xff] %vm455, %v446
      %536 = vst.msk [vmem:[%s511 + $0x121] sm:$0xff] %vm455, %v447
      %537 = vst.msk [vmem:[%s511 + $0x129] sm:$0xff] %vm455, %v448
      %538 = vst.msk [vmem:[%s511 + $0x139] sm:$0xff] %vm455, %v449
      %539 = vst.msk [vmem:[%s511 + $0x141] sm:$0xff] %vm455, %v450
      %540 = vst.msk [vmem:[%s511 + $0x151] sm:$0xff] %vm455, %v451
      %541 = vst.msk [vmem:[%s511 + $0x159] sm:$0xff] %vm455, %v452
      %542 = vst.msk [vmem:[%s511 + $0x169] sm:$0xff] %vm455, %v453
      %543 = vst.msk [vmem:[%s511 + $0x171] sm:$0xff] %vm455, %v454
      %v544 = vld [vmem:[#allocation2] sm:$0xff]
      %v545 = vld [vmem:[#allocation2 + $0x8] sm:$0xff]
      %v546 = vld [vmem:[#allocation2 + $0x18] sm:$0xff]
      %v547 = vld [vmem:[#allocation2 + $0x20] sm:$0xff]
      %v548 = vld [vmem:[#allocation2 + $0x30] sm:$0xff]
      %v549 = vld [vmem:[#allocation2 + $0x38] sm:$0xff]
      %v550 = vld [vmem:[#allocation2 + $0x48] sm:$0xff]
      %v551 = vld [vmem:[#allocation2 + $0x50] sm:$0xff]
      %v552 = vld [vmem:[#allocation2 + $0x60] sm:$0xff]
      %v553 = vld [vmem:[#allocation2 + $0x68] sm:$0xff]
      %v554 = vld [vmem:[#allocation2 + $0x78] sm:$0xff]
      %v555 = vld [vmem:[#allocation2 + $0x80] sm:$0xff]
      %v556 = vld [vmem:[#allocation2 + $0x90] sm:$0xff]
      %v557 = vld [vmem:[#allocation2 + $0x98] sm:$0xff]
      %v558 = vld [vmem:[#allocation2 + $0xa8] sm:$0xff]
      %v559 = vld [vmem:[#allocation2 + $0xb0] sm:$0xff]
      %v560 = vld [vmem:[#allocation2 + $0xc0] sm:$0xff]
      %v561 = vld [vmem:[#allocation2 + $0xc8] sm:$0xff]
      %v562 = vld [vmem:[#allocation2 + $0xd8] sm:$0xff]
      %v563 = vld [vmem:[#allocation2 + $0xe0] sm:$0xff]
      %v564 = vld [vmem:[#allocation2 + $0xf0] sm:$0xff]
      %v565 = vld [vmem:[#allocation2 + $0xf8] sm:$0xff]
      %v566 = vld [vmem:[#allocation2 + $0x108] sm:$0xff]
      %v567 = vld [vmem:[#allocation2 + $0x110] sm:$0xff]
      %v568 = vld [vmem:[#allocation2 + $0x120] sm:$0xff]
      %v569 = vld [vmem:[#allocation2 + $0x128] sm:$0xff]
      %v570 = vld [vmem:[#allocation2 + $0x138] sm:$0xff]
      %v571 = vld [vmem:[#allocation2 + $0x140] sm:$0xff]
      %v572 = vld [vmem:[#allocation2 + $0x150] sm:$0xff]
      %v573 = vld [vmem:[#allocation2 + $0x158] sm:$0xff]
      %v574 = vld [vmem:[#allocation2 + $0x168] sm:$0xff]
      %v575 = vld [vmem:[#allocation2 + $0x170] sm:$0xff]
      %v576 = vpack.c.bf16 %v545, %v544
      %v577 = vpack.c.bf16 %v547, %v546
      %v578 = vpack.c.bf16 %v549, %v548
      %v579 = vpack.c.bf16 %v551, %v550
      %v580 = vpack.c.bf16 %v553, %v552
      %v581 = vpack.c.bf16 %v555, %v554
      %v582 = vpack.c.bf16 %v557, %v556
      %v583 = vpack.c.bf16 %v559, %v558
      %v584 = vpack.c.bf16 %v561, %v560
      %v585 = vpack.c.bf16 %v563, %v562
      %v586 = vpack.c.bf16 %v565, %v564
      %v587 = vpack.c.bf16 %v567, %v566
      %v588 = vpack.c.bf16 %v569, %v568
      %v589 = vpack.c.bf16 %v571, %v570
      %v590 = vpack.c.bf16 %v573, %v572
      %v591 = vpack.c.bf16 %v575, %v574
      %v592 = vld [vmem:[%s2] sm:$0xf]
      %v593 = vld [vmem:[#allocation2 + $0x1] sm:$0xff]
      %v594 = vld [vmem:[#allocation2 + $0x9] sm:$0xff]
      %v595 = vld [vmem:[#allocation2 + $0x19] sm:$0xff]
      %v596 = vld [vmem:[#allocation2 + $0x21] sm:$0xff]
      %v597 = vld [vmem:[#allocation2 + $0x31] sm:$0xff]
      %v598 = vld [vmem:[#allocation2 + $0x39] sm:$0xff]
      %v599 = vld [vmem:[#allocation2 + $0x49] sm:$0xff]
      %v600 = vld [vmem:[#allocation2 + $0x51] sm:$0xff]
      %v601 = vld [vmem:[#allocation2 + $0x61] sm:$0xff]
      %v602 = vld [vmem:[#allocation2 + $0x69] sm:$0xff]
      %v603 = vld [vmem:[#allocation2 + $0x79] sm:$0xff]
      %v604 = vld [vmem:[#allocation2 + $0x81] sm:$0xff]
      %v605 = vld [vmem:[#allocation2 + $0x91] sm:$0xff]
      %v606 = vld [vmem:[#allocation2 + $0x99] sm:$0xff]
      %v607 = vld [vmem:[#allocation2 + $0xa9] sm:$0xff]
      %v608 = vld [vmem:[#allocation2 + $0xb1] sm:$0xff]
      %v609 = vld [vmem:[#allocation2 + $0xc1] sm:$0xff]
      %v610 = vld [vmem:[#allocation2 + $0xc9] sm:$0xff]
      %v611 = vld [vmem:[#allocation2 + $0xd9] sm:$0xff]
      %v612 = vld [vmem:[#allocation2 + $0xe1] sm:$0xff]
      %v613 = vld [vmem:[#allocation2 + $0xf1] sm:$0xff]
      %v614 = vld [vmem:[#allocation2 + $0xf9] sm:$0xff]
      %v615 = vld [vmem:[#allocation2 + $0x109] sm:$0xff]
      %v616 = vld [vmem:[#allocation2 + $0x111] sm:$0xff]
      %v617 = vld [vmem:[#allocation2 + $0x121] sm:$0xff]
      %v618 = vld [vmem:[#allocation2 + $0x129] sm:$0xff]
      %v619 = vld [vmem:[#allocation2 + $0x139] sm:$0xff]
      %v620 = vld [vmem:[#allocation2 + $0x141] sm:$0xff]
      %v621 = vld [vmem:[#allocation2 + $0x151] sm:$0xff]
      %v622 = vld [vmem:[#allocation2 + $0x159] sm:$0xff]
      %v623 = vld [vmem:[#allocation2 + $0x169] sm:$0xff]
      %v624 = vld [vmem:[#allocation2 + $0x171] sm:$0xff]
      %v625 = vpack.c.bf16 %v594, %v593
      %v626 = vpack.c.bf16 %v596, %v595
      %v627 = vpack.c.bf16 %v598, %v597
      %v628 = vpack.c.bf16 %v600, %v599
      %v629 = vpack.c.bf16 %v602, %v601
      %v630 = vpack.c.bf16 %v604, %v603
      %v631 = vpack.c.bf16 %v606, %v605
      %v632 = vpack.c.bf16 %v608, %v607
      %v633 = vpack.c.bf16 %v610, %v609
      %v634 = vpack.c.bf16 %v612, %v611
      %v635 = vpack.c.bf16 %v614, %v613
      %v636 = vpack.c.bf16 %v616, %v615
      %v637 = vpack.c.bf16 %v618, %v617
      %v638 = vpack.c.bf16 %v620, %v619
      %v639 = vpack.c.bf16 %v622, %v621
      %v640 = vpack.c.bf16 %v624, %v623
      %s641 = scalar_lea.vmem %s2, 4
      %v642 = vld [vmem:[%s641] sm:$0xf]
      %v644 = vsel %vm455, %v625, 0
      %v647 = vsel %vm455, %v626, 0
      %v650 = vsel %vm455, %v627, 0
      %v653 = vsel %vm455, %v628, 0
      %v656 = vsel %vm455, %v629, 0
      %v659 = vsel %vm455, %v630, 0
      %v662 = vsel %vm455, %v631, 0
      %v665 = vsel %vm455, %v632, 0
      %v668 = vsel %vm455, %v633, 0
      %v671 = vsel %vm455, %v634, 0
      %v674 = vsel %vm455, %v635, 0
      %v677 = vsel %vm455, %v636, 0
      %v680 = vsel %vm455, %v637, 0
      %v683 = vsel %vm455, %v638, 0
      %v686 = vsel %vm455, %v639, 0
      %v689 = vsel %vm455, %v640, 0
      %vm691 = vcmask 1043456
      %v693 = vsel %vm691, %v642, 0
      %695 = vmatprep.subr.bf16.mxu0 0
      %696 = vmatpush1.bf16.msra.mxu0 %v693
      %697 = vmatprep.subr.bf16.mxu0 0
      %698 = vmatpush1.bf16.msra.mxu0 0
      %699 = vmatprep.subr.bf16.mxu0 0
      %700 = vmatpush1.bf16.msra.mxu0 0
      %701 = vmatprep.subr.bf16.mxu0 0
      %702 = vmatpush1.bf16.msra.mxu0 0
      %703 = vmatprep.subr.bf16.mxu0 0
      %704 = vmatpush1.bf16.msra.mxu0 0
      %705 = vmatprep.subr.bf16.mxu0 0
      %706 = vmatpush1.bf16.msra.mxu0 0
      %707 = vmatprep.subr.bf16.mxu0 0
      %708 = vmatpush1.bf16.msra.mxu0 0
      %709 = vmatprep.subr.bf16.mxu0 0
      %710 = vmatpush1.bf16.msra.mxu0 0
      %711 = vmatprep.subr.bf16.mxu0 0
      %712 = vmatpush1.bf16.msra.mxu0 0
      %713 = vmatprep.subr.bf16.mxu0 0
      %714 = vmatpush1.bf16.msra.mxu0 0
      %715 = vmatprep.subr.bf16.mxu0 0
      %716 = vmatpush1.bf16.msra.mxu0 0
      %717 = vmatprep.subr.bf16.mxu0 0
      %718 = vmatpush1.bf16.msra.mxu0 0
      %719 = vmatprep.subr.bf16.mxu0 0
      %720 = vmatpush1.bf16.msra.mxu0 0
      %721 = vmatprep.subr.bf16.mxu0 0
      %722 = vmatpush1.bf16.msra.mxu0 0
      %723 = vmatprep.subr.bf16.mxu0 0
      %724 = vmatpush1.bf16.msra.mxu0 0
      %725 = vmatprep.subr.bf16.mxu0 0
      %726 = vmatpush1.bf16.msra.mxu0 0
      %727 = vmatprep.mubr.bf16.mxu0 0
      %728 = vmatmul.mubr.bf16.gmra.mrb[0].mxu0 %v644
      %v729 = vpop.f32.mrb[0].mxu0
      %v730 = vadd.f32 0.0, %v729
      %v731 = vpop.f32.mrb[0].mxu0
      %v732 = vpop.f32.mrb[0].mxu0
      %v733 = vadd.f32 0.0, %v732
      %v734 = vpop.f32.mrb[0].mxu0
      %735 = vmatprep.mubr.bf16.mxu0 0
      %736 = vmatmul.mubr.bf16.gmra.mrb[0].mxu0 %v647
      %v737 = vpop.f32.mrb[0].mxu0
      %v738 = vadd.f32 0.0, %v737
      %v739 = vpop.f32.mrb[0].mxu0
      %v740 = vpop.f32.mrb[0].mxu0
      %v741 = vadd.f32 0.0, %v740
      %v742 = vpop.f32.mrb[0].mxu0
      %743 = vmatprep.mubr.bf16.mxu0 0
      %744 = vmatmul.mubr.bf16.gmra.mrb[0].mxu0 %v650
      %v745 = vpop.f32.mrb[0].mxu0
      %v746 = vadd.f32 0.0, %v745
      %v747 = vpop.f32.mrb[0].mxu0
      %v748 = vpop.f32.mrb[0].mxu0
      %v749 = vadd.f32 0.0, %v748
      %v750 = vpop.f32.mrb[0].mxu0
      %751 = vmatprep.mubr.bf16.mxu0 0
      %752 = vmatmul.mubr.bf16.gmra.mrb[0].mxu0 %v653
      %v753 = vpop.f32.mrb[0].mxu0
      %v754 = vadd.f32 0.0, %v753
      %v755 = vpop.f32.mrb[0].mxu0
      %v756 = vpop.f32.mrb[0].mxu0
      %v757 = vadd.f32 0.0, %v756
      %v758 = vpop.f32.mrb[0].mxu0
      %759 = vmatprep.mubr.bf16.mxu0 0
      %760 = vmatmul.mubr.bf16.gmra.mrb[0].mxu0 %v656
      %v761 = vpop.f32.mrb[0].mxu0
      %v762 = vadd.f32 0.0, %v761
      %v763 = vpop.f32.mrb[0].mxu0
      %v764 = vpop.f32.mrb[0].mxu0
      %v765 = vadd.f32 0.0, %v764
      %v766 = vpop.f32.mrb[0].mxu0
      %767 = vmatprep.mubr.bf16.mxu0 0
      %768 = vmatmul.mubr.bf16.gmra.mrb[0].mxu0 %v659
      %v769 = vpop.f32.mrb[0].mxu0
      %v770 = vadd.f32 0.0, %v769
      %v771 = vpop.f32.mrb[0].mxu0
      %v772 = vpop.f32.mrb[0].mxu0
      %v773 = vadd.f32 0.0, %v772
      %v774 = vpop.f32.mrb[0].mxu0
      %775 = vmatprep.mubr.bf16.mxu0 0
      %776 = vmatmul.mubr.bf16.gmra.mrb[0].mxu0 %v662
      %v777 = vpop.f32.mrb[0].mxu0
      %v778 = vadd.f32 0.0, %v777
      %v779 = vpop.f32.mrb[0].mxu0
      %v780 = vpop.f32.mrb[0].mxu0
      %v781 = vadd.f32 0.0, %v780
      %v782 = vpop.f32.mrb[0].mxu0
      %783 = vmatprep.mubr.bf16.mxu0 0
      %784 = vmatmul.mubr.bf16.gmra.mrb[0].mxu0 %v665
      %v785 = vpop.f32.mrb[0].mxu0
      %v786 = vadd.f32 0.0, %v785
      %v787 = vpop.f32.mrb[0].mxu0
      %v788 = vpop.f32.mrb[0].mxu0
      %v789 = vadd.f32 0.0, %v788
      %v790 = vpop.f32.mrb[0].mxu0
      %791 = vmatprep.mubr.bf16.mxu0 0
      %792 = vmatmul.mubr.bf16.gmra.mrb[0].mxu0 %v668
      %v793 = vpop.f32.mrb[0].mxu0
      %v794 = vadd.f32 0.0, %v793
      %v795 = vpop.f32.mrb[0].mxu0
      %v796 = vpop.f32.mrb[0].mxu0
      %v797 = vadd.f32 0.0, %v796
      %v798 = vpop.f32.mrb[0].mxu0
      %799 = vmatprep.mubr.bf16.mxu0 0
      %800 = vmatmul.mubr.bf16.gmra.mrb[0].mxu0 %v671
      %v801 = vpop.f32.mrb[0].mxu0
      %v802 = vadd.f32 0.0, %v801
      %v803 = vpop.f32.mrb[0].mxu0
      %v804 = vpop.f32.mrb[0].mxu0
      %v805 = vadd.f32 0.0, %v804
      %v806 = vpop.f32.mrb[0].mxu0
      %807 = vmatprep.mubr.bf16.mxu0 0
      %808 = vmatmul.mubr.bf16.gmra.mrb[0].mxu0 %v674
      %v809 = vpop.f32.mrb[0].mxu0
      %v810 = vadd.f32 0.0, %v809
      %v811 = vpop.f32.mrb[0].mxu0
      %v812 = vpop.f32.mrb[0].mxu0
      %v813 = vadd.f32 0.0, %v812
      %v814 = vpop.f32.mrb[0].mxu0
      %815 = vmatprep.mubr.bf16.mxu0 0
      %816 = vmatmul.mubr.bf16.gmra.mrb[0].mxu0 %v677
      %v817 = vpop.f32.mrb[0].mxu0
      %v818 = vadd.f32 0.0, %v817
      %v819 = vpop.f32.mrb[0].mxu0
      %v820 = vpop.f32.mrb[0].mxu0
      %v821 = vadd.f32 0.0, %v820
      %v822 = vpop.f32.mrb[0].mxu0
      %823 = vmatprep.mubr.bf16.mxu0 0
      %824 = vmatmul.mubr.bf16.gmra.mrb[0].mxu0 %v680
      %v825 = vpop.f32.mrb[0].mxu0
      %v826 = vadd.f32 0.0, %v825
      %v827 = vpop.f32.mrb[0].mxu0
      %v828 = vpop.f32.mrb[0].mxu0
      %v829 = vadd.f32 0.0, %v828
      %v830 = vpop.f32.mrb[0].mxu0
      %831 = vmatprep.mubr.bf16.mxu0 0
      %832 = vmatmul.mubr.bf16.gmra.mrb[0].mxu0 %v683
      %v833 = vpop.f32.mrb[0].mxu0
      %v834 = vadd.f32 0.0, %v833
      %v835 = vpop.f32.mrb[0].mxu0
      %v836 = vpop.f32.mrb[0].mxu0
      %v837 = vadd.f32 0.0, %v836
      %v838 = vpop.f32.mrb[0].mxu0
      %839 = vmatprep.mubr.bf16.mxu0 0
      %840 = vmatmul.mubr.bf16.gmra.mrb[0].mxu0 %v686
      %v841 = vpop.f32.mrb[0].mxu0
      %v842 = vadd.f32 0.0, %v841
      %v843 = vpop.f32.mrb[0].mxu0
      %v844 = vpop.f32.mrb[0].mxu0
      %v845 = vadd.f32 0.0, %v844
      %v846 = vpop.f32.mrb[0].mxu0
      %847 = vmatprep.mubr.bf16.mxu0 0
      %848 = vmatmul.mubr.bf16.gmra.mrb[0].mxu0 %v689
      %v849 = vpop.f32.mrb[0].mxu0
      %v850 = vadd.f32 0.0, %v849
      %v851 = vpop.f32.mrb[0].mxu0
      %v852 = vpop.f32.mrb[0].mxu0
      %v853 = vadd.f32 0.0, %v852
      %v854 = vpop.f32.mrb[0].mxu0
      %855 = vdwg.mxu0
      %v857 = vsel %vm455, %v576, 0
      %v860 = vsel %vm455, %v577, 0
      %v863 = vsel %vm455, %v578, 0
      %v866 = vsel %vm455, %v579, 0
      %v869 = vsel %vm455, %v580, 0
      %v872 = vsel %vm455, %v581, 0
      %v875 = vsel %vm455, %v582, 0
      %v878 = vsel %vm455, %v583, 0
      %v881 = vsel %vm455, %v584, 0
      %v884 = vsel %vm455, %v585, 0
      %v887 = vsel %vm455, %v586, 0
      %v890 = vsel %vm455, %v587, 0
      %v893 = vsel %vm455, %v588, 0
      %v896 = vsel %vm455, %v589, 0
      %v899 = vsel %vm455, %v590, 0
      %v902 = vsel %vm455, %v591, 0
      %v905 = vsel %vm691, %v592, 0
      %907 = vmatprep.subr.bf16.mxu0 0
      %908 = vmatpush1.bf16.msra.mxu0 %v905
      %909 = vmatprep.subr.bf16.mxu0 0
      %910 = vmatpush1.bf16.msra.mxu0 0
      %911 = vmatprep.subr.bf16.mxu0 0
      %912 = vmatpush1.bf16.msra.mxu0 0
      %913 = vmatprep.subr.bf16.mxu0 0
      %914 = vmatpush1.bf16.msra.mxu0 0
      %915 = vmatprep.subr.bf16.mxu0 0
      %916 = vmatpush1.bf16.msra.mxu0 0
      %917 = vmatprep.subr.bf16.mxu0 0
      %918 = vmatpush1.bf16.msra.mxu0 0
      %919 = vmatprep.subr.bf16.mxu0 0
      %920 = vmatpush1.bf16.msra.mxu0 0
      %921 = vmatprep.subr.bf16.mxu0 0
      %922 = vmatpush1.bf16.msra.mxu0 0
      %923 = vmatprep.subr.bf16.mxu0 0
      %924 = vmatpush1.bf16.msra.mxu0 0
      %925 = vmatprep.subr.bf16.mxu0 0
      %926 = vmatpush1.bf16.msra.mxu0 0
      %927 = vmatprep.subr.bf16.mxu0 0
      %928 = vmatpush1.bf16.msra.mxu0 0
      %929 = vmatprep.subr.bf16.mxu0 0
      %930 = vmatpush1.bf16.msra.mxu0 0
      %931 = vmatprep.subr.bf16.mxu0 0
      %932 = vmatpush1.bf16.msra.mxu0 0
      %933 = vmatprep.subr.bf16.mxu0 0
      %934 = vmatpush1.bf16.msra.mxu0 0
      %935 = vmatprep.subr.bf16.mxu0 0
      %936 = vmatpush1.bf16.msra.mxu0 0
      %937 = vmatprep.subr.bf16.mxu0 0
      %938 = vmatpush1.bf16.msra.mxu0 0
      %939 = vmatprep.mubr.bf16.mxu0 0
      %940 = vmatmul.mubr.bf16.gmra.mrb[0].mxu0 %v857
      %v941 = vpop.f32.mrb[0].mxu0
      %v942 = vadd.f32 %v730, %v941
      %v943 = vpop.f32.mrb[0].mxu0
      %v944 = vpop.f32.mrb[0].mxu0
      %v945 = vadd.f32 %v733, %v944
      %v946 = vpop.f32.mrb[0].mxu0
      %947 = vmatprep.mubr.bf16.mxu0 0
      %948 = vmatmul.mubr.bf16.gmra.mrb[0].mxu0 %v860
      %v949 = vpop.f32.mrb[0].mxu0
      %v950 = vadd.f32 %v738, %v949
      %v951 = vpop.f32.mrb[0].mxu0
      %v952 = vpop.f32.mrb[0].mxu0
      %v953 = vadd.f32 %v741, %v952
      %v954 = vpop.f32.mrb[0].mxu0
      %955 = vmatprep.mubr.bf16.mxu0 0
      %956 = vmatmul.mubr.bf16.gmra.mrb[0].mxu0 %v863
      %v957 = vpop.f32.mrb[0].mxu0
      %v958 = vadd.f32 %v746, %v957
      %v959 = vpop.f32.mrb[0].mxu0
      %v960 = vpop.f32.mrb[0].mxu0
      %v961 = vadd.f32 %v749, %v960
      %v962 = vpop.f32.mrb[0].mxu0
      %963 = vmatprep.mubr.bf16.mxu0 0
      %964 = vmatmul.mubr.bf16.gmra.mrb[0].mxu0 %v866
      %v965 = vpop.f32.mrb[0].mxu0
      %v966 = vadd.f32 %v754, %v965
      %v967 = vpop.f32.mrb[0].mxu0
      %v968 = vpop.f32.mrb[0].mxu0
      %v969 = vadd.f32 %v757, %v968
      %v970 = vpop.f32.mrb[0].mxu0
      %971 = vmatprep.mubr.bf16.mxu0 0
      %972 = vmatmul.mubr.bf16.gmra.mrb[0].mxu0 %v869
      %v973 = vpop.f32.mrb[0].mxu0
      %v974 = vadd.f32 %v762, %v973
      %v975 = vpop.f32.mrb[0].mxu0
      %v976 = vpop.f32.mrb[0].mxu0
      %v977 = vadd.f32 %v765, %v976
      %v978 = vpop.f32.mrb[0].mxu0
      %979 = vmatprep.mubr.bf16.mxu0 0
      %980 = vmatmul.mubr.bf16.gmra.mrb[0].mxu0 %v872
      %v981 = vpop.f32.mrb[0].mxu0
      %v982 = vadd.f32 %v770, %v981
      %v983 = vpop.f32.mrb[0].mxu0
      %v984 = vpop.f32.mrb[0].mxu0
      %v985 = vadd.f32 %v773, %v984
      %v986 = vpop.f32.mrb[0].mxu0
      %987 = vmatprep.mubr.bf16.mxu0 0
      %988 = vmatmul.mubr.bf16.gmra.mrb[0].mxu0 %v875
      %v989 = vpop.f32.mrb[0].mxu0
      %v990 = vadd.f32 %v778, %v989
      %v991 = vpop.f32.mrb[0].mxu0
      %v992 = vpop.f32.mrb[0].mxu0
      %v993 = vadd.f32 %v781, %v992
      %v994 = vpop.f32.mrb[0].mxu0
      %995 = vmatprep.mubr.bf16.mxu0 0
      %996 = vmatmul.mubr.bf16.gmra.mrb[0].mxu0 %v878
      %v997 = vpop.f32.mrb[0].mxu0
      %v998 = vadd.f32 %v786, %v997
      %v999 = vpop.f32.mrb[0].mxu0
      %v1000 = vpop.f32.mrb[0].mxu0
      %v1001 = vadd.f32 %v789, %v1000
      %v1002 = vpop.f32.mrb[0].mxu0
      %1003 = vmatprep.mubr.bf16.mxu0 0
      %1004 = vmatmul.mubr.bf16.gmra.mrb[0].mxu0 %v881
      %v1005 = vpop.f32.mrb[0].mxu0
      %v1006 = vadd.f32 %v794, %v1005
      %v1007 = vpop.f32.mrb[0].mxu0
      %v1008 = vpop.f32.mrb[0].mxu0
      %v1009 = vadd.f32 %v797, %v1008
      %v1010 = vpop.f32.mrb[0].mxu0
      %1011 = vmatprep.mubr.bf16.mxu0 0
      %1012 = vmatmul.mubr.bf16.gmra.mrb[0].mxu0 %v884
      %v1013 = vpop.f32.mrb[0].mxu0
      %v1014 = vadd.f32 %v802, %v1013
      %v1015 = vpop.f32.mrb[0].mxu0
      %v1016 = vpop.f32.mrb[0].mxu0
      %v1017 = vadd.f32 %v805, %v1016
      %v1018 = vpop.f32.mrb[0].mxu0
      %1019 = vmatprep.mubr.bf16.mxu0 0
      %1020 = vmatmul.mubr.bf16.gmra.mrb[0].mxu0 %v887
      %v1021 = vpop.f32.mrb[0].mxu0
      %v1022 = vadd.f32 %v810, %v1021
      %v1023 = vpop.f32.mrb[0].mxu0
      %v1024 = vpop.f32.mrb[0].mxu0
      %v1025 = vadd.f32 %v813, %v1024
      %v1026 = vpop.f32.mrb[0].mxu0
      %1027 = vmatprep.mubr.bf16.mxu0 0
      %1028 = vmatmul.mubr.bf16.gmra.mrb[0].mxu0 %v890
      %v1029 = vpop.f32.mrb[0].mxu0
      %v1030 = vadd.f32 %v818, %v1029
      %v1031 = vpop.f32.mrb[0].mxu0
      %v1032 = vpop.f32.mrb[0].mxu0
      %v1033 = vadd.f32 %v821, %v1032
      %v1034 = vpop.f32.mrb[0].mxu0
      %1035 = vmatprep.mubr.bf16.mxu0 0
      %1036 = vmatmul.mubr.bf16.gmra.mrb[0].mxu0 %v893
      %v1037 = vpop.f32.mrb[0].mxu0
      %v1038 = vadd.f32 %v826, %v1037
      %v1039 = vpop.f32.mrb[0].mxu0
      %v1040 = vpop.f32.mrb[0].mxu0
      %v1041 = vadd.f32 %v829, %v1040
      %v1042 = vpop.f32.mrb[0].mxu0
      %1043 = vmatprep.mubr.bf16.mxu0 0
      %1044 = vmatmul.mubr.bf16.gmra.mrb[0].mxu0 %v896
      %v1045 = vpop.f32.mrb[0].mxu0
      %v1046 = vadd.f32 %v834, %v1045
      %v1047 = vpop.f32.mrb[0].mxu0
      %v1048 = vpop.f32.mrb[0].mxu0
      %v1049 = vadd.f32 %v837, %v1048
      %v1050 = vpop.f32.mrb[0].mxu0
      %1051 = vmatprep.mubr.bf16.mxu0 0
      %1052 = vmatmul.mubr.bf16.gmra.mrb[0].mxu0 %v899
      %v1053 = vpop.f32.mrb[0].mxu0
      %v1054 = vadd.f32 %v842, %v1053
      %v1055 = vpop.f32.mrb[0].mxu0
      %v1056 = vpop.f32.mrb[0].mxu0
      %v1057 = vadd.f32 %v845, %v1056
      %v1058 = vpop.f32.mrb[0].mxu0
      %1059 = vmatprep.mubr.bf16.mxu0 0
      %1060 = vmatmul.mubr.bf16.gmra.mrb[0].mxu0 %v902
      %v1061 = vpop.f32.mrb[0].mxu0
      %v1062 = vadd.f32 %v850, %v1061
      %v1063 = vpop.f32.mrb[0].mxu0
      %v1064 = vpop.f32.mrb[0].mxu0
      %v1065 = vadd.f32 %v853, %v1064
      %v1066 = vpop.f32.mrb[0].mxu0
      %1067 = vdwg.mxu0
      %v1068 = vld [vmem:[#allocation2 + $0x2] sm:$0xff]
      %v1069 = vld [vmem:[#allocation2 + $0xa] sm:$0xff]
      %v1070 = vld [vmem:[#allocation2 + $0x1a] sm:$0xff]
      %v1071 = vld [vmem:[#allocation2 + $0x22] sm:$0xff]
      %v1072 = vld [vmem:[#allocation2 + $0x32] sm:$0xff]
      %v1073 = vld [vmem:[#allocation2 + $0x3a] sm:$0xff]
      %v1074 = vld [vmem:[#allocation2 + $0x4a] sm:$0xff]
      %v1075 = vld [vmem:[#allocation2 + $0x52] sm:$0xff]
      %v1076 = vld [vmem:[#allocation2 + $0x62] sm:$0xff]
      %v1077 = vld [vmem:[#allocation2 + $0x6a] sm:$0xff]
      %v1078 = vld [vmem:[#allocation2 + $0x7a] sm:$0xff]
      %v1079 = vld [vmem:[#allocation2 + $0x82] sm:$0xff]
      %v1080 = vld [vmem:[#allocation2 + $0x92] sm:$0xff]
      %v1081 = vld [vmem:[#allocation2 + $0x9a] sm:$0xff]
      %v1082 = vld [vmem:[#allocation2 + $0xaa] sm:$0xff]
      %v1083 = vld [vmem:[#allocation2 + $0xb2] sm:$0xff]
      %v1084 = vld [vmem:[#allocation2 + $0xc2] sm:$0xff]
      %v1085 = vld [vmem:[#allocation2 + $0xca] sm:$0xff]
      %v1086 = vld [vmem:[#allocation2 + $0xda] sm:$0xff]
      %v1087 = vld [vmem:[#allocation2 + $0xe2] sm:$0xff]
      %v1088 = vld [vmem:[#allocation2 + $0xf2] sm:$0xff]
      %v1089 = vld [vmem:[#allocation2 + $0xfa] sm:$0xff]
      %v1090 = vld [vmem:[#allocation2 + $0x10a] sm:$0xff]
      %v1091 = vld [vmem:[#allocation2 + $0x112] sm:$0xff]
      %v1092 = vld [vmem:[#allocation2 + $0x122] sm:$0xff]
      %v1093 = vld [vmem:[#allocation2 + $0x12a] sm:$0xff]
      %v1094 = vld [vmem:[#allocation2 + $0x13a] sm:$0xff]
      %v1095 = vld [vmem:[#allocation2 + $0x142] sm:$0xff]
      %v1096 = vld [vmem:[#allocation2 + $0x152] sm:$0xff]
      %v1097 = vld [vmem:[#allocation2 + $0x15a] sm:$0xff]
      %v1098 = vld [vmem:[#allocation2 + $0x16a] sm:$0xff]
      %v1099 = vld [vmem:[#allocation2 + $0x172] sm:$0xff]
      %v1100 = vpack.c.bf16 %v1069, %v1068
      %v1101 = vpack.c.bf16 %v1071, %v1070
      %v1102 = vpack.c.bf16 %v1073, %v1072
      %v1103 = vpack.c.bf16 %v1075, %v1074
      %v1104 = vpack.c.bf16 %v1077, %v1076
      %v1105 = vpack.c.bf16 %v1079, %v1078
      %v1106 = vpack.c.bf16 %v1081, %v1080
      %v1107 = vpack.c.bf16 %v1083, %v1082
      %v1108 = vpack.c.bf16 %v1085, %v1084
      %v1109 = vpack.c.bf16 %v1087, %v1086
      %v1110 = vpack.c.bf16 %v1089, %v1088
      %v1111 = vpack.c.bf16 %v1091, %v1090
      %v1112 = vpack.c.bf16 %v1093, %v1092
      %v1113 = vpack.c.bf16 %v1095, %v1094
      %v1114 = vpack.c.bf16 %v1097, %v1096
      %v1115 = vpack.c.bf16 %v1099, %v1098
      %s1116 = scalar_lea.vmem %s2, 8
      %v1117 = vld [vmem:[%s1116] sm:$0xf]
      %v1119 = vsel %vm455, %v1100, 0
      %v1122 = vsel %vm455, %v1101, 0
      %v1125 = vsel %vm455, %v1102, 0
      %v1128 = vsel %vm455, %v1103, 0
      %v1131 = vsel %vm455, %v1104, 0
      %v1134 = vsel %vm455, %v1105, 0
      %v1137 = vsel %vm455, %v1106, 0
      %v1140 = vsel %vm455, %v1107, 0
      %v1143 = vsel %vm455, %v1108, 0
      %v1146 = vsel %vm455, %v1109, 0
      %v1149 = vsel %vm455, %v1110, 0
      %v1152 = vsel %vm455, %v1111, 0
      %v1155 = vsel %vm455, %v1112, 0
      %v1158 = vsel %vm455, %v1113, 0
      %v1161 = vsel %vm455, %v1114, 0
      %v1164 = vsel %vm455, %v1115, 0
      %v1167 = vsel %vm691, %v1117, 0
      %1169 = vmatprep.subr.bf16.mxu0 0
      %1170 = vmatpush1.bf16.msra.mxu0 %v1167
      %1171 = vmatprep.subr.bf16.mxu0 0
      %1172 = vmatpush1.bf16.msra.mxu0 0
      %1173 = vmatprep.subr.bf16.mxu0 0
      %1174 = vmatpush1.bf16.msra.mxu0 0
      %1175 = vmatprep.subr.bf16.mxu0 0
      %1176 = vmatpush1.bf16.msra.mxu0 0
      %1177 = vmatprep.subr.bf16.mxu0 0
      %1178 = vmatpush1.bf16.msra.mxu0 0
      %1179 = vmatprep.subr.bf16.mxu0 0
      %1180 = vmatpush1.bf16.msra.mxu0 0
      %1181 = vmatprep.subr.bf16.mxu0 0
      %1182 = vmatpush1.bf16.msra.mxu0 0
      %1183 = vmatprep.subr.bf16.mxu0 0
      %1184 = vmatpush1.bf16.msra.mxu0 0
      %1185 = vmatprep.subr.bf16.mxu0 0
      %1186 = vmatpush1.bf16.msra.mxu0 0
      %1187 = vmatprep.subr.bf16.mxu0 0
      %1188 = vmatpush1.bf16.msra.mxu0 0
      %1189 = vmatprep.subr.bf16.mxu0 0
      %1190 = vmatpush1.bf16.msra.mxu0 0
      %1191 = vmatprep.subr.bf16.mxu0 0
      %1192 = vmatpush1.bf16.msra.mxu0 0
      %1193 = vmatprep.subr.bf16.mxu0 0
      %1194 = vmatpush1.bf16.msra.mxu0 0
      %1195 = vmatprep.subr.bf16.mxu0 0
      %1196 = vmatpush1.bf16.msra.mxu0 0
      %1197 = vmatprep.subr.bf16.mxu0 0
      %1198 = vmatpush1.bf16.msra.mxu0 0
      %1199 = vmatprep.subr.bf16.mxu0 0
      %1200 = vmatpush1.bf16.msra.mxu0 0
      %1201 = vmatprep.mubr.bf16.mxu0 0
      %1202 = vmatmul.mubr.bf16.gmra.mrb[0].mxu0 %v1119
      %v1203 = vpop.f32.mrb[0].mxu0
      %v1204 = vadd.f32 0.0, %v1203
      %v1205 = vpop.f32.mrb[0].mxu0
      %v1206 = vpop.f32.mrb[0].mxu0
      %v1207 = vadd.f32 0.0, %v1206
      %v1208 = vpop.f32.mrb[0].mxu0
      %1209 = vmatprep.mubr.bf16.mxu0 0
      %1210 = vmatmul.mubr.bf16.gmra.mrb[0].mxu0 %v1122
      %v1211 = vpop.f32.mrb[0].mxu0
      %v1212 = vadd.f32 0.0, %v1211
      %v1213 = vpop.f32.mrb[0].mxu0
      %v1214 = vpop.f32.mrb[0].mxu0
      %v1215 = vadd.f32 0.0, %v1214
      %v1216 = vpop.f32.mrb[0].mxu0
      %1217 = vmatprep.mubr.bf16.mxu0 0
      %1218 = vmatmul.mubr.bf16.gmra.mrb[0].mxu0 %v1125
      %v1219 = vpop.f32.mrb[0].mxu0
      %v1220 = vadd.f32 0.0, %v1219
      %v1221 = vpop.f32.mrb[0].mxu0
      %v1222 = vpop.f32.mrb[0].mxu0
      %v1223 = vadd.f32 0.0, %v1222
      %v1224 = vpop.f32.mrb[0].mxu0
      %1225 = vmatprep.mubr.bf16.mxu0 0
      %1226 = vmatmul.mubr.bf16.gmra.mrb[0].mxu0 %v1128
      %v1227 = vpop.f32.mrb[0].mxu0
      %v1228 = vadd.f32 0.0, %v1227
      %v1229 = vpop.f32.mrb[0].mxu0
      %v1230 = vpop.f32.mrb[0].mxu0
      %v1231 = vadd.f32 0.0, %v1230
      %v1232 = vpop.f32.mrb[0].mxu0
      %1233 = vmatprep.mubr.bf16.mxu0 0
      %1234 = vmatmul.mubr.bf16.gmra.mrb[0].mxu0 %v1131
      %v1235 = vpop.f32.mrb[0].mxu0
      %v1236 = vadd.f32 0.0, %v1235
      %v1237 = vpop.f32.mrb[0].mxu0
      %v1238 = vpop.f32.mrb[0].mxu0
      %v1239 = vadd.f32 0.0, %v1238
      %v1240 = vpop.f32.mrb[0].mxu0
      %1241 = vmatprep.mubr.bf16.mxu0 0
      %1242 = vmatmul.mubr.bf16.gmra.mrb[0].mxu0 %v1134
      %v1243 = vpop.f32.mrb[0].mxu0
      %v1244 = vadd.f32 0.0, %v1243
      %v1245 = vpop.f32.mrb[0].mxu0
      %v1246 = vpop.f32.mrb[0].mxu0
      %v1247 = vadd.f32 0.0, %v1246
      %v1248 = vpop.f32.mrb[0].mxu0
      %1249 = vmatprep.mubr.bf16.mxu0 0
      %1250 = vmatmul.mubr.bf16.gmra.mrb[0].mxu0 %v1137
      %v1251 = vpop.f32.mrb[0].mxu0
      %v1252 = vadd.f32 0.0, %v1251
      %v1253 = vpop.f32.mrb[0].mxu0
      %v1254 = vpop.f32.mrb[0].mxu0
      %v1255 = vadd.f32 0.0, %v1254
      %v1256 = vpop.f32.mrb[0].mxu0
      %1257 = vmatprep.mubr.bf16.mxu0 0
      %1258 = vmatmul.mubr.bf16.gmra.mrb[0].mxu0 %v1140
      %v1259 = vpop.f32.mrb[0].mxu0
      %v1260 = vadd.f32 0.0, %v1259
      %v1261 = vpop.f32.mrb[0].mxu0
      %v1262 = vpop.f32.mrb[0].mxu0
      %v1263 = vadd.f32 0.0, %v1262
      %v1264 = vpop.f32.mrb[0].mxu0
      %1265 = vmatprep.mubr.bf16.mxu0 0
      %1266 = vmatmul.mubr.bf16.gmra.mrb[0].mxu0 %v1143
      %v1267 = vpop.f32.mrb[0].mxu0
      %v1268 = vadd.f32 0.0, %v1267
      %v1269 = vpop.f32.mrb[0].mxu0
      %v1270 = vpop.f32.mrb[0].mxu0
      %v1271 = vadd.f32 0.0, %v1270
      %v1272 = vpop.f32.mrb[0].mxu0
      %1273 = vmatprep.mubr.bf16.mxu0 0
      %1274 = vmatmul.mubr.bf16.gmra.mrb[0].mxu0 %v1146
      %v1275 = vpop.f32.mrb[0].mxu0
      %v1276 = vadd.f32 0.0, %v1275
      %v1277 = vpop.f32.mrb[0].mxu0
      %v1278 = vpop.f32.mrb[0].mxu0
      %v1279 = vadd.f32 0.0, %v1278
      %v1280 = vpop.f32.mrb[0].mxu0
      %1281 = vmatprep.mubr.bf16.mxu0 0
      %1282 = vmatmul.mubr.bf16.gmra.mrb[0].mxu0 %v1149
      %v1283 = vpop.f32.mrb[0].mxu0
      %v1284 = vadd.f32 0.0, %v1283
      %v1285 = vpop.f32.mrb[0].mxu0
      %v1286 = vpop.f32.mrb[0].mxu0
      %v1287 = vadd.f32 0.0, %v1286
      %v1288 = vpop.f32.mrb[0].mxu0
      %1289 = vmatprep.mubr.bf16.mxu0 0
      %1290 = vmatmul.mubr.bf16.gmra.mrb[0].mxu0 %v1152
      %v1291 = vpop.f32.mrb[0].mxu0
      %v1292 = vadd.f32 0.0, %v1291
      %v1293 = vpop.f32.mrb[0].mxu0
      %v1294 = vpop.f32.mrb[0].mxu0
      %v1295 = vadd.f32 0.0, %v1294
      %v1296 = vpop.f32.mrb[0].mxu0
      %1297 = vmatprep.mubr.bf16.mxu0 0
      %1298 = vmatmul.mubr.bf16.gmra.mrb[0].mxu0 %v1155
      %v1299 = vpop.f32.mrb[0].mxu0
      %v1300 = vadd.f32 0.0, %v1299
      %v1301 = vpop.f32.mrb[0].mxu0
      %v1302 = vpop.f32.mrb[0].mxu0
      %v1303 = vadd.f32 0.0, %v1302
      %v1304 = vpop.f32.mrb[0].mxu0
      %1305 = vmatprep.mubr.bf16.mxu0 0
      %1306 = vmatmul.mubr.bf16.gmra.mrb[0].mxu0 %v1158
      %v1307 = vpop.f32.mrb[0].mxu0
      %v1308 = vadd.f32 0.0, %v1307
      %v1309 = vpop.f32.mrb[0].mxu0
      %v1310 = vpop.f32.mrb[0].mxu0
      %v1311 = vadd.f32 0.0, %v1310
      %v1312 = vpop.f32.mrb[0].mxu0
      %1313 = vmatprep.mubr.bf16.mxu0 0
      %1314 = vmatmul.mubr.bf16.gmra.mrb[0].mxu0 %v1161
      %v1315 = vpop.f32.mrb[0].mxu0
      %v1316 = vadd.f32 0.0, %v1315
      %v1317 = vpop.f32.mrb[0].mxu0
      %v1318 = vpop.f32.mrb[0].mxu0
      %v1319 = vadd.f32 0.0, %v1318
      %v1320 = vpop.f32.mrb[0].mxu0
      %1321 = vmatprep.mubr.bf16.mxu0 0
      %1322 = vmatmul.mubr.bf16.gmra.mrb[0].mxu0 %v1164
      %v1323 = vpop.f32.mrb[0].mxu0
      %v1324 = vadd.f32 0.0, %v1323
      %v1325 = vpop.f32.mrb[0].mxu0
      %v1326 = vpop.f32.mrb[0].mxu0
      %v1327 = vadd.f32 0.0, %v1326
      %v1328 = vpop.f32.mrb[0].mxu0
      %1329 = vdwg.mxu0
      %v1330 = vadd.f32 %v942, %v1204
      %v1331 = vadd.f32 %v945, %v1207
      %v1332 = vadd.f32 %v950, %v1212
      %v1333 = vadd.f32 %v953, %v1215
      %v1334 = vadd.f32 %v958, %v1220
      %v1335 = vadd.f32 %v961, %v1223
      %v1336 = vadd.f32 %v966, %v1228
      %v1337 = vadd.f32 %v969, %v1231
      %v1338 = vadd.f32 %v974, %v1236
      %v1339 = vadd.f32 %v977, %v1239
      %v1340 = vadd.f32 %v982, %v1244
      %v1341 = vadd.f32 %v985, %v1247
      %v1342 = vadd.f32 %v990, %v1252
      %v1343 = vadd.f32 %v993, %v1255
      %v1344 = vadd.f32 %v998, %v1260
      %v1345 = vadd.f32 %v1001, %v1263
      %v1346 = vadd.f32 %v1006, %v1268
      %v1347 = vadd.f32 %v1009, %v1271
      %v1348 = vadd.f32 %v1014, %v1276
      %v1349 = vadd.f32 %v1017, %v1279
      %v1350 = vadd.f32 %v1022, %v1284
      %v1351 = vadd.f32 %v1025, %v1287
      %v1352 = vadd.f32 %v1030, %v1292
      %v1353 = vadd.f32 %v1033, %v1295
      %v1354 = vadd.f32 %v1038, %v1300
      %v1355 = vadd.f32 %v1041, %v1303
      %v1356 = vadd.f32 %v1046, %v1308
      %v1357 = vadd.f32 %v1049, %v1311
      %v1358 = vadd.f32 %v1054, %v1316
      %v1359 = vadd.f32 %v1057, %v1319
      %v1360 = vadd.f32 %v1062, %v1324
      %v1361 = vadd.f32 %v1065, %v1327
      %v1362 = vld [vmem:[%s511] sm:$0xff]
      %v1363 = vld [vmem:[%s511 + $0x8] sm:$0xff]
      %v1364 = vld [vmem:[%s511 + $0x18] sm:$0xff]
      %v1365 = vld [vmem:[%s511 + $0x20] sm:$0xff]
      %v1366 = vld [vmem:[%s511 + $0x30] sm:$0xff]
      %v1367 = vld [vmem:[%s511 + $0x38] sm:$0xff]
      %v1368 = vld [vmem:[%s511 + $0x48] sm:$0xff]
      %v1369 = vld [vmem:[%s511 + $0x50] sm:$0xff]
      %v1370 = vld [vmem:[%s511 + $0x60] sm:$0xff]
      %v1371 = vld [vmem:[%s511 + $0x68] sm:$0xff]
      %v1372 = vld [vmem:[%s511 + $0x78] sm:$0xff]
      %v1373 = vld [vmem:[%s511 + $0x80] sm:$0xff]
      %v1374 = vld [vmem:[%s511 + $0x90] sm:$0xff]
      %v1375 = vld [vmem:[%s511 + $0x98] sm:$0xff]
      %v1376 = vld [vmem:[%s511 + $0xa8] sm:$0xff]
      %v1377 = vld [vmem:[%s511 + $0xb0] sm:$0xff]
      %v1378 = vld [vmem:[%s511 + $0xc0] sm:$0xff]
      %v1379 = vld [vmem:[%s511 + $0xc8] sm:$0xff]
      %v1380 = vld [vmem:[%s511 + $0xd8] sm:$0xff]
      %v1381 = vld [vmem:[%s511 + $0xe0] sm:$0xff]
      %v1382 = vld [vmem:[%s511 + $0xf0] sm:$0xff]
      %v1383 = vld [vmem:[%s511 + $0xf8] sm:$0xff]
      %v1384 = vld [vmem:[%s511 + $0x108] sm:$0xff]
      %v1385 = vld [vmem:[%s511 + $0x110] sm:$0xff]
      %v1386 = vld [vmem:[%s511 + $0x120] sm:$0xff]
      %v1387 = vld [vmem:[%s511 + $0x128] sm:$0xff]
      %v1388 = vld [vmem:[%s511 + $0x138] sm:$0xff]
      %v1389 = vld [vmem:[%s511 + $0x140] sm:$0xff]
      %v1390 = vld [vmem:[%s511 + $0x150] sm:$0xff]
      %v1391 = vld [vmem:[%s511 + $0x158] sm:$0xff]
      %v1392 = vld [vmem:[%s511 + $0x168] sm:$0xff]
      %v1393 = vld [vmem:[%s511 + $0x170] sm:$0xff]
      %v1394 = vpack.c.bf16 %v1363, %v1362
      %v1395 = vpack.c.bf16 %v1365, %v1364
      %v1396 = vpack.c.bf16 %v1367, %v1366
      %v1397 = vpack.c.bf16 %v1369, %v1368
      %v1398 = vpack.c.bf16 %v1371, %v1370
      %v1399 = vpack.c.bf16 %v1373, %v1372
      %v1400 = vpack.c.bf16 %v1375, %v1374
      %v1401 = vpack.c.bf16 %v1377, %v1376
      %v1402 = vpack.c.bf16 %v1379, %v1378
      %v1403 = vpack.c.bf16 %v1381, %v1380
      %v1404 = vpack.c.bf16 %v1383, %v1382
      %v1405 = vpack.c.bf16 %v1385, %v1384
      %v1406 = vpack.c.bf16 %v1387, %v1386
      %v1407 = vpack.c.bf16 %v1389, %v1388
      %v1408 = vpack.c.bf16 %v1391, %v1390
      %v1409 = vpack.c.bf16 %v1393, %v1392
      %s1410 = scalar_lea.vmem %s2, 12
      %v1411 = vld [vmem:[%s1410] sm:$0xf]
      %v1413 = vsel %vm455, %v1394, 0
      %v1416 = vsel %vm455, %v1395, 0
      %v1419 = vsel %vm455, %v1396, 0
      %v1422 = vsel %vm455, %v1397, 0
      %v1425 = vsel %vm455, %v1398, 0
      %v1428 = vsel %vm455, %v1399, 0
      %v1431 = vsel %vm455, %v1400, 0
      %v1434 = vsel %vm455, %v1401, 0
      %v1437 = vsel %vm455, %v1402, 0
      %v1440 = vsel %vm455, %v1403, 0
      %v1443 = vsel %vm455, %v1404, 0
      %v1446 = vsel %vm455, %v1405, 0
      %v1449 = vsel %vm455, %v1406, 0
      %v1452 = vsel %vm455, %v1407, 0
      %v1455 = vsel %vm455, %v1408, 0
      %v1458 = vsel %vm455, %v1409, 0
      %v1461 = vsel %vm691, %v1411, 0
      %1463 = vmatprep.subr.bf16.mxu0 0
      %1464 = vmatpush1.bf16.msra.mxu0 %v1461
      %1465 = vmatprep.subr.bf16.mxu0 0
      %1466 = vmatpush1.bf16.msra.mxu0 0
      %1467 = vmatprep.subr.bf16.mxu0 0
      %1468 = vmatpush1.bf16.msra.mxu0 0
      %1469 = vmatprep.subr.bf16.mxu0 0
      %1470 = vmatpush1.bf16.msra.mxu0 0
      %1471 = vmatprep.subr.bf16.mxu0 0
      %1472 = vmatpush1.bf16.msra.mxu0 0
      %1473 = vmatprep.subr.bf16.mxu0 0
      %1474 = vmatpush1.bf16.msra.mxu0 0
      %1475 = vmatprep.subr.bf16.mxu0 0
      %1476 = vmatpush1.bf16.msra.mxu0 0
      %1477 = vmatprep.subr.bf16.mxu0 0
      %1478 = vmatpush1.bf16.msra.mxu0 0
      %1479 = vmatprep.subr.bf16.mxu0 0
      %1480 = vmatpush1.bf16.msra.mxu0 0
      %1481 = vmatprep.subr.bf16.mxu0 0
      %1482 = vmatpush1.bf16.msra.mxu0 0
      %1483 = vmatprep.subr.bf16.mxu0 0
      %1484 = vmatpush1.bf16.msra.mxu0 0
      %1485 = vmatprep.subr.bf16.mxu0 0
      %1486 = vmatpush1.bf16.msra.mxu0 0
      %1487 = vmatprep.subr.bf16.mxu0 0
      %1488 = vmatpush1.bf16.msra.mxu0 0
      %1489 = vmatprep.subr.bf16.mxu0 0
      %1490 = vmatpush1.bf16.msra.mxu0 0
      %1491 = vmatprep.subr.bf16.mxu0 0
      %1492 = vmatpush1.bf16.msra.mxu0 0
      %1493 = vmatprep.subr.bf16.mxu0 0
      %1494 = vmatpush1.bf16.msra.mxu0 0
      %1495 = vmatprep.mubr.bf16.mxu0 0
      %1496 = vmatmul.mubr.bf16.gmra.mrb[0].mxu0 %v1413
      %v1497 = vpop.f32.mrb[0].mxu0
      %v1498 = vadd.f32 0.0, %v1497
      %v1499 = vpop.f32.mrb[0].mxu0
      %v1500 = vpop.f32.mrb[0].mxu0
      %v1501 = vadd.f32 0.0, %v1500
      %v1502 = vpop.f32.mrb[0].mxu0
      %1503 = vmatprep.mubr.bf16.mxu0 0
      %1504 = vmatmul.mubr.bf16.gmra.mrb[0].mxu0 %v1416
      %v1505 = vpop.f32.mrb[0].mxu0
      %v1506 = vadd.f32 0.0, %v1505
      %v1507 = vpop.f32.mrb[0].mxu0
      %v1508 = vpop.f32.mrb[0].mxu0
      %v1509 = vadd.f32 0.0, %v1508
      %v1510 = vpop.f32.mrb[0].mxu0
      %1511 = vmatprep.mubr.bf16.mxu0 0
      %1512 = vmatmul.mubr.bf16.gmra.mrb[0].mxu0 %v1419
      %v1513 = vpop.f32.mrb[0].mxu0
      %v1514 = vadd.f32 0.0, %v1513
      %v1515 = vpop.f32.mrb[0].mxu0
      %v1516 = vpop.f32.mrb[0].mxu0
      %v1517 = vadd.f32 0.0, %v1516
      %v1518 = vpop.f32.mrb[0].mxu0
      %1519 = vmatprep.mubr.bf16.mxu0 0
      %1520 = vmatmul.mubr.bf16.gmra.mrb[0].mxu0 %v1422
      %v1521 = vpop.f32.mrb[0].mxu0
      %v1522 = vadd.f32 0.0, %v1521
      %v1523 = vpop.f32.mrb[0].mxu0
      %v1524 = vpop.f32.mrb[0].mxu0
      %v1525 = vadd.f32 0.0, %v1524
      %v1526 = vpop.f32.mrb[0].mxu0
      %1527 = vmatprep.mubr.bf16.mxu0 0
      %1528 = vmatmul.mubr.bf16.gmra.mrb[0].mxu0 %v1425
      %v1529 = vpop.f32.mrb[0].mxu0
      %v1530 = vadd.f32 0.0, %v1529
      %v1531 = vpop.f32.mrb[0].mxu0
      %v1532 = vpop.f32.mrb[0].mxu0
      %v1533 = vadd.f32 0.0, %v1532
      %v1534 = vpop.f32.mrb[0].mxu0
      %1535 = vmatprep.mubr.bf16.mxu0 0
      %1536 = vmatmul.mubr.bf16.gmra.mrb[0].mxu0 %v1428
      %v1537 = vpop.f32.mrb[0].mxu0
      %v1538 = vadd.f32 0.0, %v1537
      %v1539 = vpop.f32.mrb[0].mxu0
      %v1540 = vpop.f32.mrb[0].mxu0
      %v1541 = vadd.f32 0.0, %v1540
      %v1542 = vpop.f32.mrb[0].mxu0
      %1543 = vmatprep.mubr.bf16.mxu0 0
      %1544 = vmatmul.mubr.bf16.gmra.mrb[0].mxu0 %v1431
      %v1545 = vpop.f32.mrb[0].mxu0
      %v1546 = vadd.f32 0.0, %v1545
      %v1547 = vpop.f32.mrb[0].mxu0
      %v1548 = vpop.f32.mrb[0].mxu0
      %v1549 = vadd.f32 0.0, %v1548
      %v1550 = vpop.f32.mrb[0].mxu0
      %1551 = vmatprep.mubr.bf16.mxu0 0
      %1552 = vmatmul.mubr.bf16.gmra.mrb[0].mxu0 %v1434
      %v1553 = vpop.f32.mrb[0].mxu0
      %v1554 = vadd.f32 0.0, %v1553
      %v1555 = vpop.f32.mrb[0].mxu0
      %v1556 = vpop.f32.mrb[0].mxu0
      %v1557 = vadd.f32 0.0, %v1556
      %v1558 = vpop.f32.mrb[0].mxu0
      %1559 = vmatprep.mubr.bf16.mxu0 0
      %1560 = vmatmul.mubr.bf16.gmra.mrb[0].mxu0 %v1437
      %v1561 = vpop.f32.mrb[0].mxu0
      %v1562 = vadd.f32 0.0, %v1561
      %v1563 = vpop.f32.mrb[0].mxu0
      %v1564 = vpop.f32.mrb[0].mxu0
      %v1565 = vadd.f32 0.0, %v1564
      %v1566 = vpop.f32.mrb[0].mxu0
      %1567 = vmatprep.mubr.bf16.mxu0 0
      %1568 = vmatmul.mubr.bf16.gmra.mrb[0].mxu0 %v1440
      %v1569 = vpop.f32.mrb[0].mxu0
      %v1570 = vadd.f32 0.0, %v1569
      %v1571 = vpop.f32.mrb[0].mxu0
      %v1572 = vpop.f32.mrb[0].mxu0
      %v1573 = vadd.f32 0.0, %v1572
      %v1574 = vpop.f32.mrb[0].mxu0
      %1575 = vmatprep.mubr.bf16.mxu0 0
      %1576 = vmatmul.mubr.bf16.gmra.mrb[0].mxu0 %v1443
      %v1577 = vpop.f32.mrb[0].mxu0
      %v1578 = vadd.f32 0.0, %v1577
      %v1579 = vpop.f32.mrb[0].mxu0
      %v1580 = vpop.f32.mrb[0].mxu0
      %v1581 = vadd.f32 0.0, %v1580
      %v1582 = vpop.f32.mrb[0].mxu0
      %1583 = vmatprep.mubr.bf16.mxu0 0
      %1584 = vmatmul.mubr.bf16.gmra.mrb[0].mxu0 %v1446
      %v1585 = vpop.f32.mrb[0].mxu0
      %v1586 = vadd.f32 0.0, %v1585
      %v1587 = vpop.f32.mrb[0].mxu0
      %v1588 = vpop.f32.mrb[0].mxu0
      %v1589 = vadd.f32 0.0, %v1588
      %v1590 = vpop.f32.mrb[0].mxu0
      %1591 = vmatprep.mubr.bf16.mxu0 0
      %1592 = vmatmul.mubr.bf16.gmra.mrb[0].mxu0 %v1449
      %v1593 = vpop.f32.mrb[0].mxu0
      %v1594 = vadd.f32 0.0, %v1593
      %v1595 = vpop.f32.mrb[0].mxu0
      %v1596 = vpop.f32.mrb[0].mxu0
      %v1597 = vadd.f32 0.0, %v1596
      %v1598 = vpop.f32.mrb[0].mxu0
      %1599 = vmatprep.mubr.bf16.mxu0 0
      %1600 = vmatmul.mubr.bf16.gmra.mrb[0].mxu0 %v1452
      %v1601 = vpop.f32.mrb[0].mxu0
      %v1602 = vadd.f32 0.0, %v1601
      %v1603 = vpop.f32.mrb[0].mxu0
      %v1604 = vpop.f32.mrb[0].mxu0
      %v1605 = vadd.f32 0.0, %v1604
      %v1606 = vpop.f32.mrb[0].mxu0
      %1607 = vmatprep.mubr.bf16.mxu0 0
      %1608 = vmatmul.mubr.bf16.gmra.mrb[0].mxu0 %v1455
      %v1609 = vpop.f32.mrb[0].mxu0
      %v1610 = vadd.f32 0.0, %v1609
      %v1611 = vpop.f32.mrb[0].mxu0
      %v1612 = vpop.f32.mrb[0].mxu0
      %v1613 = vadd.f32 0.0, %v1612
      %v1614 = vpop.f32.mrb[0].mxu0
      %1615 = vmatprep.mubr.bf16.mxu0 0
      %1616 = vmatmul.mubr.bf16.gmra.mrb[0].mxu0 %v1458
      %v1617 = vpop.f32.mrb[0].mxu0
      %v1618 = vadd.f32 0.0, %v1617
      %v1619 = vpop.f32.mrb[0].mxu0
      %v1620 = vpop.f32.mrb[0].mxu0
      %v1621 = vadd.f32 0.0, %v1620
      %v1622 = vpop.f32.mrb[0].mxu0
      %1623 = vdwg.mxu0
      %v1624 = vadd.f32 %v1330, %v1498
      %v1625 = vadd.f32 %v1331, %v1501
      %v1626 = vadd.f32 %v1332, %v1506
      %v1627 = vadd.f32 %v1333, %v1509
      %v1628 = vadd.f32 %v1334, %v1514
      %v1629 = vadd.f32 %v1335, %v1517
      %v1630 = vadd.f32 %v1336, %v1522
      %v1631 = vadd.f32 %v1337, %v1525
      %v1632 = vadd.f32 %v1338, %v1530
      %v1633 = vadd.f32 %v1339, %v1533
      %v1634 = vadd.f32 %v1340, %v1538
      %v1635 = vadd.f32 %v1341, %v1541
      %v1636 = vadd.f32 %v1342, %v1546
      %v1637 = vadd.f32 %v1343, %v1549
      %v1638 = vadd.f32 %v1344, %v1554
      %v1639 = vadd.f32 %v1345, %v1557
      %v1640 = vadd.f32 %v1346, %v1562
      %v1641 = vadd.f32 %v1347, %v1565
      %v1642 = vadd.f32 %v1348, %v1570
      %v1643 = vadd.f32 %v1349, %v1573
      %v1644 = vadd.f32 %v1350, %v1578
      %v1645 = vadd.f32 %v1351, %v1581
      %v1646 = vadd.f32 %v1352, %v1586
      %v1647 = vadd.f32 %v1353, %v1589
      %v1648 = vadd.f32 %v1354, %v1594
      %v1649 = vadd.f32 %v1355, %v1597
      %v1650 = vadd.f32 %v1356, %v1602
      %v1651 = vadd.f32 %v1357, %v1605
      %v1652 = vadd.f32 %v1358, %v1610
      %v1653 = vadd.f32 %v1359, %v1613
      %v1654 = vadd.f32 %v1360, %v1618
      %v1655 = vadd.f32 %v1361, %v1621
      %v1656 = vld [vmem:[%s511 + $0x1] sm:$0xff]
      %v1657 = vld [vmem:[%s511 + $0x9] sm:$0xff]
      %v1658 = vld [vmem:[%s511 + $0x19] sm:$0xff]
      %v1659 = vld [vmem:[%s511 + $0x21] sm:$0xff]
      %v1660 = vld [vmem:[%s511 + $0x31] sm:$0xff]
      %v1661 = vld [vmem:[%s511 + $0x39] sm:$0xff]
      %v1662 = vld [vmem:[%s511 + $0x49] sm:$0xff]
      %v1663 = vld [vmem:[%s511 + $0x51] sm:$0xff]
      %v1664 = vld [vmem:[%s511 + $0x61] sm:$0xff]
      %v1665 = vld [vmem:[%s511 + $0x69] sm:$0xff]
      %v1666 = vld [vmem:[%s511 + $0x79] sm:$0xff]
      %v1667 = vld [vmem:[%s511 + $0x81] sm:$0xff]
      %v1668 = vld [vmem:[%s511 + $0x91] sm:$0xff]
      %v1669 = vld [vmem:[%s511 + $0x99] sm:$0xff]
      %v1670 = vld [vmem:[%s511 + $0xa9] sm:$0xff]
      %v1671 = vld [vmem:[%s511 + $0xb1] sm:$0xff]
      %v1672 = vld [vmem:[%s511 + $0xc1] sm:$0xff]
      %v1673 = vld [vmem:[%s511 + $0xc9] sm:$0xff]
      %v1674 = vld [vmem:[%s511 + $0xd9] sm:$0xff]
      %v1675 = vld [vmem:[%s511 + $0xe1] sm:$0xff]
      %v1676 = vld [vmem:[%s511 + $0xf1] sm:$0xff]
      %v1677 = vld [vmem:[%s511 + $0xf9] sm:$0xff]
      %v1678 = vld [vmem:[%s511 + $0x109] sm:$0xff]
      %v1679 = vld [vmem:[%s511 + $0x111] sm:$0xff]
      %v1680 = vld [vmem:[%s511 + $0x121] sm:$0xff]
      %v1681 = vld [vmem:[%s511 + $0x129] sm:$0xff]
      %v1682 = vld [vmem:[%s511 + $0x139] sm:$0xff]
      %v1683 = vld [vmem:[%s511 + $0x141] sm:$0xff]
      %v1684 = vld [vmem:[%s511 + $0x151] sm:$0xff]
      %v1685 = vld [vmem:[%s511 + $0x159] sm:$0xff]
      %v1686 = vld [vmem:[%s511 + $0x169] sm:$0xff]
      %v1687 = vld [vmem:[%s511 + $0x171] sm:$0xff]
      %v1688 = vpack.c.bf16 %v1657, %v1656
      %v1689 = vpack.c.bf16 %v1659, %v1658
      %v1690 = vpack.c.bf16 %v1661, %v1660
      %v1691 = vpack.c.bf16 %v1663, %v1662
      %v1692 = vpack.c.bf16 %v1665, %v1664
      %v1693 = vpack.c.bf16 %v1667, %v1666
      %v1694 = vpack.c.bf16 %v1669, %v1668
      %v1695 = vpack.c.bf16 %v1671, %v1670
      %v1696 = vpack.c.bf16 %v1673, %v1672
      %v1697 = vpack.c.bf16 %v1675, %v1674
      %v1698 = vpack.c.bf16 %v1677, %v1676
      %v1699 = vpack.c.bf16 %v1679, %v1678
      %v1700 = vpack.c.bf16 %v1681, %v1680
      %v1701 = vpack.c.bf16 %v1683, %v1682
      %v1702 = vpack.c.bf16 %v1685, %v1684
      %v1703 = vpack.c.bf16 %v1687, %v1686
      %s1704 = scalar_lea.vmem %s2, 16
      %v1705 = vld [vmem:[%s1704] sm:$0xf]
      %v1707 = vsel %vm455, %v1688, 0
      %v1710 = vsel %vm455, %v1689, 0
      %v1713 = vsel %vm455, %v1690, 0
      %v1716 = vsel %vm455, %v1691, 0
      %v1719 = vsel %vm455, %v1692, 0
      %v1722 = vsel %vm455, %v1693, 0
      %v1725 = vsel %vm455, %v1694, 0
      %v1728 = vsel %vm455, %v1695, 0
      %v1731 = vsel %vm455, %v1696, 0
      %v1734 = vsel %vm455, %v1697, 0
      %v1737 = vsel %vm455, %v1698, 0
      %v1740 = vsel %vm455, %v1699, 0
      %v1743 = vsel %vm455, %v1700, 0
      %v1746 = vsel %vm455, %v1701, 0
      %v1749 = vsel %vm455, %v1702, 0
      %v1752 = vsel %vm455, %v1703, 0
      %v1755 = vsel %vm691, %v1705, 0
      %1757 = vmatprep.subr.bf16.mxu0 0
      %1758 = vmatpush1.bf16.msra.mxu0 %v1755
      %1759 = vmatprep.subr.bf16.mxu0 0
      %1760 = vmatpush1.bf16.msra.mxu0 0
      %1761 = vmatprep.subr.bf16.mxu0 0
      %1762 = vmatpush1.bf16.msra.mxu0 0
      %1763 = vmatprep.subr.bf16.mxu0 0
      %1764 = vmatpush1.bf16.msra.mxu0 0
      %1765 = vmatprep.subr.bf16.mxu0 0
      %1766 = vmatpush1.bf16.msra.mxu0 0
      %1767 = vmatprep.subr.bf16.mxu0 0
      %1768 = vmatpush1.bf16.msra.mxu0 0
      %1769 = vmatprep.subr.bf16.mxu0 0
      %1770 = vmatpush1.bf16.msra.mxu0 0
      %1771 = vmatprep.subr.bf16.mxu0 0
      %1772 = vmatpush1.bf16.msra.mxu0 0
      %1773 = vmatprep.subr.bf16.mxu0 0
      %1774 = vmatpush1.bf16.msra.mxu0 0
      %1775 = vmatprep.subr.bf16.mxu0 0
      %1776 = vmatpush1.bf16.msra.mxu0 0
      %1777 = vmatprep.subr.bf16.mxu0 0
      %1778 = vmatpush1.bf16.msra.mxu0 0
      %1779 = vmatprep.subr.bf16.mxu0 0
      %1780 = vmatpush1.bf16.msra.mxu0 0
      %1781 = vmatprep.subr.bf16.mxu0 0
      %1782 = vmatpush1.bf16.msra.mxu0 0
      %1783 = vmatprep.subr.bf16.mxu0 0
      %1784 = vmatpush1.bf16.msra.mxu0 0
      %1785 = vmatprep.subr.bf16.mxu0 0
      %1786 = vmatpush1.bf16.msra.mxu0 0
      %1787 = vmatprep.subr.bf16.mxu0 0
      %1788 = vmatpush1.bf16.msra.mxu0 0
      %1789 = vmatprep.mubr.bf16.mxu0 0
      %1790 = vmatmul.mubr.bf16.gmra.mrb[0].mxu0 %v1707
      %v1791 = vpop.f32.mrb[0].mxu0
      %v1792 = vadd.f32 0.0, %v1791
      %v1793 = vpop.f32.mrb[0].mxu0
      %v1794 = vpop.f32.mrb[0].mxu0
      %v1795 = vadd.f32 0.0, %v1794
      %v1796 = vpop.f32.mrb[0].mxu0
      %1797 = vmatprep.mubr.bf16.mxu0 0
      %1798 = vmatmul.mubr.bf16.gmra.mrb[0].mxu0 %v1710
      %v1799 = vpop.f32.mrb[0].mxu0
      %v1800 = vadd.f32 0.0, %v1799
      %v1801 = vpop.f32.mrb[0].mxu0
      %v1802 = vpop.f32.mrb[0].mxu0
      %v1803 = vadd.f32 0.0, %v1802
      %v1804 = vpop.f32.mrb[0].mxu0
      %1805 = vmatprep.mubr.bf16.mxu0 0
      %1806 = vmatmul.mubr.bf16.gmra.mrb[0].mxu0 %v1713
      %v1807 = vpop.f32.mrb[0].mxu0
      %v1808 = vadd.f32 0.0, %v1807
      %v1809 = vpop.f32.mrb[0].mxu0
      %v1810 = vpop.f32.mrb[0].mxu0
      %v1811 = vadd.f32 0.0, %v1810
      %v1812 = vpop.f32.mrb[0].mxu0
      %1813 = vmatprep.mubr.bf16.mxu0 0
      %1814 = vmatmul.mubr.bf16.gmra.mrb[0].mxu0 %v1716
      %v1815 = vpop.f32.mrb[0].mxu0
      %v1816 = vadd.f32 0.0, %v1815
      %v1817 = vpop.f32.mrb[0].mxu0
      %v1818 = vpop.f32.mrb[0].mxu0
      %v1819 = vadd.f32 0.0, %v1818
      %v1820 = vpop.f32.mrb[0].mxu0
      %1821 = vmatprep.mubr.bf16.mxu0 0
      %1822 = vmatmul.mubr.bf16.gmra.mrb[0].mxu0 %v1719
      %v1823 = vpop.f32.mrb[0].mxu0
      %v1824 = vadd.f32 0.0, %v1823
      %v1825 = vpop.f32.mrb[0].mxu0
      %v1826 = vpop.f32.mrb[0].mxu0
      %v1827 = vadd.f32 0.0, %v1826
      %v1828 = vpop.f32.mrb[0].mxu0
      %1829 = vmatprep.mubr.bf16.mxu0 0
      %1830 = vmatmul.mubr.bf16.gmra.mrb[0].mxu0 %v1722
      %v1831 = vpop.f32.mrb[0].mxu0
      %v1832 = vadd.f32 0.0, %v1831
      %v1833 = vpop.f32.mrb[0].mxu0
      %v1834 = vpop.f32.mrb[0].mxu0
      %v1835 = vadd.f32 0.0, %v1834
      %v1836 = vpop.f32.mrb[0].mxu0
      %1837 = vmatprep.mubr.bf16.mxu0 0
      %1838 = vmatmul.mubr.bf16.gmra.mrb[0].mxu0 %v1725
      %v1839 = vpop.f32.mrb[0].mxu0
      %v1840 = vadd.f32 0.0, %v1839
      %v1841 = vpop.f32.mrb[0].mxu0
      %v1842 = vpop.f32.mrb[0].mxu0
      %v1843 = vadd.f32 0.0, %v1842
      %v1844 = vpop.f32.mrb[0].mxu0
      %1845 = vmatprep.mubr.bf16.mxu0 0
      %1846 = vmatmul.mubr.bf16.gmra.mrb[0].mxu0 %v1728
      %v1847 = vpop.f32.mrb[0].mxu0
      %v1848 = vadd.f32 0.0, %v1847
      %v1849 = vpop.f32.mrb[0].mxu0
      %v1850 = vpop.f32.mrb[0].mxu0
      %v1851 = vadd.f32 0.0, %v1850
      %v1852 = vpop.f32.mrb[0].mxu0
      %1853 = vmatprep.mubr.bf16.mxu0 0
      %1854 = vmatmul.mubr.bf16.gmra.mrb[0].mxu0 %v1731
      %v1855 = vpop.f32.mrb[0].mxu0
      %v1856 = vadd.f32 0.0, %v1855
      %v1857 = vpop.f32.mrb[0].mxu0
      %v1858 = vpop.f32.mrb[0].mxu0
      %v1859 = vadd.f32 0.0, %v1858
      %v1860 = vpop.f32.mrb[0].mxu0
      %1861 = vmatprep.mubr.bf16.mxu0 0
      %1862 = vmatmul.mubr.bf16.gmra.mrb[0].mxu0 %v1734
      %v1863 = vpop.f32.mrb[0].mxu0
      %v1864 = vadd.f32 0.0, %v1863
      %v1865 = vpop.f32.mrb[0].mxu0
      %v1866 = vpop.f32.mrb[0].mxu0
      %v1867 = vadd.f32 0.0, %v1866
      %v1868 = vpop.f32.mrb[0].mxu0
      %1869 = vmatprep.mubr.bf16.mxu0 0
      %1870 = vmatmul.mubr.bf16.gmra.mrb[0].mxu0 %v1737
      %v1871 = vpop.f32.mrb[0].mxu0
      %v1872 = vadd.f32 0.0, %v1871
      %v1873 = vpop.f32.mrb[0].mxu0
      %v1874 = vpop.f32.mrb[0].mxu0
      %v1875 = vadd.f32 0.0, %v1874
      %v1876 = vpop.f32.mrb[0].mxu0
      %1877 = vmatprep.mubr.bf16.mxu0 0
      %1878 = vmatmul.mubr.bf16.gmra.mrb[0].mxu0 %v1740
      %v1879 = vpop.f32.mrb[0].mxu0
      %v1880 = vadd.f32 0.0, %v1879
      %v1881 = vpop.f32.mrb[0].mxu0
      %v1882 = vpop.f32.mrb[0].mxu0
      %v1883 = vadd.f32 0.0, %v1882
      %v1884 = vpop.f32.mrb[0].mxu0
      %1885 = vmatprep.mubr.bf16.mxu0 0
      %1886 = vmatmul.mubr.bf16.gmra.mrb[0].mxu0 %v1743
      %v1887 = vpop.f32.mrb[0].mxu0
      %v1888 = vadd.f32 0.0, %v1887
      %v1889 = vpop.f32.mrb[0].mxu0
      %v1890 = vpop.f32.mrb[0].mxu0
      %v1891 = vadd.f32 0.0, %v1890
      %v1892 = vpop.f32.mrb[0].mxu0
      %1893 = vmatprep.mubr.bf16.mxu0 0
      %1894 = vmatmul.mubr.bf16.gmra.mrb[0].mxu0 %v1746
      %v1895 = vpop.f32.mrb[0].mxu0
      %v1896 = vadd.f32 0.0, %v1895
      %v1897 = vpop.f32.mrb[0].mxu0
      %v1898 = vpop.f32.mrb[0].mxu0
      %v1899 = vadd.f32 0.0, %v1898
      %v1900 = vpop.f32.mrb[0].mxu0
      %1901 = vmatprep.mubr.bf16.mxu0 0
      %1902 = vmatmul.mubr.bf16.gmra.mrb[0].mxu0 %v1749
      %v1903 = vpop.f32.mrb[0].mxu0
      %v1904 = vadd.f32 0.0, %v1903
      %v1905 = vpop.f32.mrb[0].mxu0
      %v1906 = vpop.f32.mrb[0].mxu0
      %v1907 = vadd.f32 0.0, %v1906
      %v1908 = vpop.f32.mrb[0].mxu0
      %1909 = vmatprep.mubr.bf16.mxu0 0
      %1910 = vmatmul.mubr.bf16.gmra.mrb[0].mxu0 %v1752
      %v1911 = vpop.f32.mrb[0].mxu0
      %v1912 = vadd.f32 0.0, %v1911
      %v1913 = vpop.f32.mrb[0].mxu0
      %v1914 = vpop.f32.mrb[0].mxu0
      %v1915 = vadd.f32 0.0, %v1914
      %v1916 = vpop.f32.mrb[0].mxu0
      %1917 = vdwg.mxu0
      %v1918 = vadd.f32 %v1624, %v1792
      %v1919 = vadd.f32 %v1625, %v1795
      %v1920 = vadd.f32 %v1626, %v1800
      %v1921 = vadd.f32 %v1627, %v1803
      %v1922 = vadd.f32 %v1628, %v1808
      %v1923 = vadd.f32 %v1629, %v1811
      %v1924 = vadd.f32 %v1630, %v1816
      %v1925 = vadd.f32 %v1631, %v1819
      %v1926 = vadd.f32 %v1632, %v1824
      %v1927 = vadd.f32 %v1633, %v1827
      %v1928 = vadd.f32 %v1634, %v1832
      %v1929 = vadd.f32 %v1635, %v1835
      %v1930 = vadd.f32 %v1636, %v1840
      %v1931 = vadd.f32 %v1637, %v1843
      %v1932 = vadd.f32 %v1638, %v1848
      %v1933 = vadd.f32 %v1639, %v1851
      %v1934 = vadd.f32 %v1640, %v1856
      %v1935 = vadd.f32 %v1641, %v1859
      %v1936 = vadd.f32 %v1642, %v1864
      %v1937 = vadd.f32 %v1643, %v1867
      %v1938 = vadd.f32 %v1644, %v1872
      %v1939 = vadd.f32 %v1645, %v1875
      %v1940 = vadd.f32 %v1646, %v1880
      %v1941 = vadd.f32 %v1647, %v1883
      %v1942 = vadd.f32 %v1648, %v1888
      %v1943 = vadd.f32 %v1649, %v1891
      %v1944 = vadd.f32 %v1650, %v1896
      %v1945 = vadd.f32 %v1651, %v1899
      %v1946 = vadd.f32 %v1652, %v1904
      %v1947 = vadd.f32 %v1653, %v1907
      %v1948 = vadd.f32 %v1654, %v1912
      %v1949 = vadd.f32 %v1655, %v1915
      %v1950 = vld [vmem:[%s511 + $0x2] sm:$0xff]
      %v1951 = vld [vmem:[%s511 + $0xa] sm:$0xff]
      %v1952 = vld [vmem:[%s511 + $0x1a] sm:$0xff]
      %v1953 = vld [vmem:[%s511 + $0x22] sm:$0xff]
      %v1954 = vld [vmem:[%s511 + $0x32] sm:$0xff]
      %v1955 = vld [vmem:[%s511 + $0x3a] sm:$0xff]
      %v1956 = vld [vmem:[%s511 + $0x4a] sm:$0xff]
      %v1957 = vld [vmem:[%s511 + $0x52] sm:$0xff]
      %v1958 = vld [vmem:[%s511 + $0x62] sm:$0xff]
      %v1959 = vld [vmem:[%s511 + $0x6a] sm:$0xff]
      %v1960 = vld [vmem:[%s511 + $0x7a] sm:$0xff]
      %v1961 = vld [vmem:[%s511 + $0x82] sm:$0xff]
      %v1962 = vld [vmem:[%s511 + $0x92] sm:$0xff]
      %v1963 = vld [vmem:[%s511 + $0x9a] sm:$0xff]
      %v1964 = vld [vmem:[%s511 + $0xaa] sm:$0xff]
      %v1965 = vld [vmem:[%s511 + $0xb2] sm:$0xff]
      %v1966 = vld [vmem:[%s511 + $0xc2] sm:$0xff]
      %v1967 = vld [vmem:[%s511 + $0xca] sm:$0xff]
      %v1968 = vld [vmem:[%s511 + $0xda] sm:$0xff]
      %v1969 = vld [vmem:[%s511 + $0xe2] sm:$0xff]
      %v1970 = vld [vmem:[%s511 + $0xf2] sm:$0xff]
      %v1971 = vld [vmem:[%s511 + $0xfa] sm:$0xff]
      %v1972 = vld [vmem:[%s511 + $0x10a] sm:$0xff]
      %v1973 = vld [vmem:[%s511 + $0x112] sm:$0xff]
      %v1974 = vld [vmem:[%s511 + $0x122] sm:$0xff]
      %v1975 = vld [vmem:[%s511 + $0x12a] sm:$0xff]
      %v1976 = vld [vmem:[%s511 + $0x13a] sm:$0xff]
      %v1977 = vld [vmem:[%s511 + $0x142] sm:$0xff]
      %v1978 = vld [vmem:[%s511 + $0x152] sm:$0xff]
      %v1979 = vld [vmem:[%s511 + $0x15a] sm:$0xff]
      %v1980 = vld [vmem:[%s511 + $0x16a] sm:$0xff]
      %v1981 = vld [vmem:[%s511 + $0x172] sm:$0xff]
      %v1982 = vpack.c.bf16 %v1951, %v1950
      %v1983 = vpack.c.bf16 %v1953, %v1952
      %v1984 = vpack.c.bf16 %v1955, %v1954
      %v1985 = vpack.c.bf16 %v1957, %v1956
      %v1986 = vpack.c.bf16 %v1959, %v1958
      %v1987 = vpack.c.bf16 %v1961, %v1960
      %v1988 = vpack.c.bf16 %v1963, %v1962
      %v1989 = vpack.c.bf16 %v1965, %v1964
      %v1990 = vpack.c.bf16 %v1967, %v1966
      %v1991 = vpack.c.bf16 %v1969, %v1968
      %v1992 = vpack.c.bf16 %v1971, %v1970
      %v1993 = vpack.c.bf16 %v1973, %v1972
      %v1994 = vpack.c.bf16 %v1975, %v1974
      %v1995 = vpack.c.bf16 %v1977, %v1976
      %v1996 = vpack.c.bf16 %v1979, %v1978
      %v1997 = vpack.c.bf16 %v1981, %v1980
      %s1998 = scalar_lea.vmem %s2, 20
      %v1999 = vld [vmem:[%s1998] sm:$0xf]
      %v2001 = vsel %vm455, %v1982, 0
      %v2004 = vsel %vm455, %v1983, 0
      %v2007 = vsel %vm455, %v1984, 0
      %v2010 = vsel %vm455, %v1985, 0
      %v2013 = vsel %vm455, %v1986, 0
      %v2016 = vsel %vm455, %v1987, 0
      %v2019 = vsel %vm455, %v1988, 0
      %v2022 = vsel %vm455, %v1989, 0
      %v2025 = vsel %vm455, %v1990, 0
      %v2028 = vsel %vm455, %v1991, 0
      %v2031 = vsel %vm455, %v1992, 0
      %v2034 = vsel %vm455, %v1993, 0
      %v2037 = vsel %vm455, %v1994, 0
      %v2040 = vsel %vm455, %v1995, 0
      %v2043 = vsel %vm455, %v1996, 0
      %v2046 = vsel %vm455, %v1997, 0
      %v2049 = vsel %vm691, %v1999, 0
      %2051 = vmatprep.subr.bf16.mxu0 0
      %2052 = vmatpush1.bf16.msra.mxu0 %v2049
      %2053 = vmatprep.subr.bf16.mxu0 0
      %2054 = vmatpush1.bf16.msra.mxu0 0
      %2055 = vmatprep.subr.bf16.mxu0 0
      %2056 = vmatpush1.bf16.msra.mxu0 0
      %2057 = vmatprep.subr.bf16.mxu0 0
      %2058 = vmatpush1.bf16.msra.mxu0 0
      %2059 = vmatprep.subr.bf16.mxu0 0
      %2060 = vmatpush1.bf16.msra.mxu0 0
      %2061 = vmatprep.subr.bf16.mxu0 0
      %2062 = vmatpush1.bf16.msra.mxu0 0
      %2063 = vmatprep.subr.bf16.mxu0 0
      %2064 = vmatpush1.bf16.msra.mxu0 0
      %2065 = vmatprep.subr.bf16.mxu0 0
      %2066 = vmatpush1.bf16.msra.mxu0 0
      %2067 = vmatprep.subr.bf16.mxu0 0
      %2068 = vmatpush1.bf16.msra.mxu0 0
      %2069 = vmatprep.subr.bf16.mxu0 0
      %2070 = vmatpush1.bf16.msra.mxu0 0
      %2071 = vmatprep.subr.bf16.mxu0 0
      %2072 = vmatpush1.bf16.msra.mxu0 0
      %2073 = vmatprep.subr.bf16.mxu0 0
      %2074 = vmatpush1.bf16.msra.mxu0 0
      %2075 = vmatprep.subr.bf16.mxu0 0
      %2076 = vmatpush1.bf16.msra.mxu0 0
      %2077 = vmatprep.subr.bf16.mxu0 0
      %2078 = vmatpush1.bf16.msra.mxu0 0
      %2079 = vmatprep.subr.bf16.mxu0 0
      %2080 = vmatpush1.bf16.msra.mxu0 0
      %2081 = vmatprep.subr.bf16.mxu0 0
      %2082 = vmatpush1.bf16.msra.mxu0 0
      %2083 = vmatprep.mubr.bf16.mxu0 0
      %2084 = vmatmul.mubr.bf16.gmra.mrb[0].mxu0 %v2001
      %v2085 = vpop.f32.mrb[0].mxu0
      %v2086 = vadd.f32 0.0, %v2085
      %v2087 = vpop.f32.mrb[0].mxu0
      %v2088 = vpop.f32.mrb[0].mxu0
      %v2089 = vadd.f32 0.0, %v2088
      %v2090 = vpop.f32.mrb[0].mxu0
      %2091 = vmatprep.mubr.bf16.mxu0 0
      %2092 = vmatmul.mubr.bf16.gmra.mrb[0].mxu0 %v2004
      %v2093 = vpop.f32.mrb[0].mxu0
      %v2094 = vadd.f32 0.0, %v2093
      %v2095 = vpop.f32.mrb[0].mxu0
      %v2096 = vpop.f32.mrb[0].mxu0
      %v2097 = vadd.f32 0.0, %v2096
      %v2098 = vpop.f32.mrb[0].mxu0
      %2099 = vmatprep.mubr.bf16.mxu0 0
      %2100 = vmatmul.mubr.bf16.gmra.mrb[0].mxu0 %v2007
      %v2101 = vpop.f32.mrb[0].mxu0
      %v2102 = vadd.f32 0.0, %v2101
      %v2103 = vpop.f32.mrb[0].mxu0
      %v2104 = vpop.f32.mrb[0].mxu0
      %v2105 = vadd.f32 0.0, %v2104
      %v2106 = vpop.f32.mrb[0].mxu0
      %2107 = vmatprep.mubr.bf16.mxu0 0
      %2108 = vmatmul.mubr.bf16.gmra.mrb[0].mxu0 %v2010
      %v2109 = vpop.f32.mrb[0].mxu0
      %v2110 = vadd.f32 0.0, %v2109
      %v2111 = vpop.f32.mrb[0].mxu0
      %v2112 = vpop.f32.mrb[0].mxu0
      %v2113 = vadd.f32 0.0, %v2112
      %v2114 = vpop.f32.mrb[0].mxu0
      %2115 = vmatprep.mubr.bf16.mxu0 0
      %2116 = vmatmul.mubr.bf16.gmra.mrb[0].mxu0 %v2013
      %v2117 = vpop.f32.mrb[0].mxu0
      %v2118 = vadd.f32 0.0, %v2117
      %v2119 = vpop.f32.mrb[0].mxu0
      %v2120 = vpop.f32.mrb[0].mxu0
      %v2121 = vadd.f32 0.0, %v2120
      %v2122 = vpop.f32.mrb[0].mxu0
      %2123 = vmatprep.mubr.bf16.mxu0 0
      %2124 = vmatmul.mubr.bf16.gmra.mrb[0].mxu0 %v2016
      %v2125 = vpop.f32.mrb[0].mxu0
      %v2126 = vadd.f32 0.0, %v2125
      %v2127 = vpop.f32.mrb[0].mxu0
      %v2128 = vpop.f32.mrb[0].mxu0
      %v2129 = vadd.f32 0.0, %v2128
      %v2130 = vpop.f32.mrb[0].mxu0
      %2131 = vmatprep.mubr.bf16.mxu0 0
      %2132 = vmatmul.mubr.bf16.gmra.mrb[0].mxu0 %v2019
      %v2133 = vpop.f32.mrb[0].mxu0
      %v2134 = vadd.f32 0.0, %v2133
      %v2135 = vpop.f32.mrb[0].mxu0
      %v2136 = vpop.f32.mrb[0].mxu0
      %v2137 = vadd.f32 0.0, %v2136
      %v2138 = vpop.f32.mrb[0].mxu0
      %2139 = vmatprep.mubr.bf16.mxu0 0
      %2140 = vmatmul.mubr.bf16.gmra.mrb[0].mxu0 %v2022
      %v2141 = vpop.f32.mrb[0].mxu0
      %v2142 = vadd.f32 0.0, %v2141
      %v2143 = vpop.f32.mrb[0].mxu0
      %v2144 = vpop.f32.mrb[0].mxu0
      %v2145 = vadd.f32 0.0, %v2144
      %v2146 = vpop.f32.mrb[0].mxu0
      %2147 = vmatprep.mubr.bf16.mxu0 0
      %2148 = vmatmul.mubr.bf16.gmra.mrb[0].mxu0 %v2025
      %v2149 = vpop.f32.mrb[0].mxu0
      %v2150 = vadd.f32 0.0, %v2149
      %v2151 = vpop.f32.mrb[0].mxu0
      %v2152 = vpop.f32.mrb[0].mxu0
      %v2153 = vadd.f32 0.0, %v2152
      %v2154 = vpop.f32.mrb[0].mxu0
      %2155 = vmatprep.mubr.bf16.mxu0 0
      %2156 = vmatmul.mubr.bf16.gmra.mrb[0].mxu0 %v2028
      %v2157 = vpop.f32.mrb[0].mxu0
      %v2158 = vadd.f32 0.0, %v2157
      %v2159 = vpop.f32.mrb[0].mxu0
      %v2160 = vpop.f32.mrb[0].mxu0
      %v2161 = vadd.f32 0.0, %v2160
      %v2162 = vpop.f32.mrb[0].mxu0
      %2163 = vmatprep.mubr.bf16.mxu0 0
      %2164 = vmatmul.mubr.bf16.gmra.mrb[0].mxu0 %v2031
      %v2165 = vpop.f32.mrb[0].mxu0
      %v2166 = vadd.f32 0.0, %v2165
      %v2167 = vpop.f32.mrb[0].mxu0
      %v2168 = vpop.f32.mrb[0].mxu0
      %v2169 = vadd.f32 0.0, %v2168
      %v2170 = vpop.f32.mrb[0].mxu0
      %2171 = vmatprep.mubr.bf16.mxu0 0
      %2172 = vmatmul.mubr.bf16.gmra.mrb[0].mxu0 %v2034
      %v2173 = vpop.f32.mrb[0].mxu0
      %v2174 = vadd.f32 0.0, %v2173
      %v2175 = vpop.f32.mrb[0].mxu0
      %v2176 = vpop.f32.mrb[0].mxu0
      %v2177 = vadd.f32 0.0, %v2176
      %v2178 = vpop.f32.mrb[0].mxu0
      %2179 = vmatprep.mubr.bf16.mxu0 0
      %2180 = vmatmul.mubr.bf16.gmra.mrb[0].mxu0 %v2037
      %v2181 = vpop.f32.mrb[0].mxu0
      %v2182 = vadd.f32 0.0, %v2181
      %v2183 = vpop.f32.mrb[0].mxu0
      %v2184 = vpop.f32.mrb[0].mxu0
      %v2185 = vadd.f32 0.0, %v2184
      %v2186 = vpop.f32.mrb[0].mxu0
      %2187 = vmatprep.mubr.bf16.mxu0 0
      %2188 = vmatmul.mubr.bf16.gmra.mrb[0].mxu0 %v2040
      %v2189 = vpop.f32.mrb[0].mxu0
      %v2190 = vadd.f32 0.0, %v2189
      %v2191 = vpop.f32.mrb[0].mxu0
      %v2192 = vpop.f32.mrb[0].mxu0
      %v2193 = vadd.f32 0.0, %v2192
      %v2194 = vpop.f32.mrb[0].mxu0
      %2195 = vmatprep.mubr.bf16.mxu0 0
      %2196 = vmatmul.mubr.bf16.gmra.mrb[0].mxu0 %v2043
      %v2197 = vpop.f32.mrb[0].mxu0
      %v2198 = vadd.f32 0.0, %v2197
      %v2199 = vpop.f32.mrb[0].mxu0
      %v2200 = vpop.f32.mrb[0].mxu0
      %v2201 = vadd.f32 0.0, %v2200
      %v2202 = vpop.f32.mrb[0].mxu0
      %2203 = vmatprep.mubr.bf16.mxu0 0
      %2204 = vmatmul.mubr.bf16.gmra.mrb[0].mxu0 %v2046
      %v2205 = vpop.f32.mrb[0].mxu0
      %v2206 = vadd.f32 0.0, %v2205
      %v2207 = vpop.f32.mrb[0].mxu0
      %v2208 = vpop.f32.mrb[0].mxu0
      %v2209 = vadd.f32 0.0, %v2208
      %v2210 = vpop.f32.mrb[0].mxu0
      %2211 = vdwg.mxu0
      %v2212 = vadd.f32 %v1918, %v2086
      %v2213 = vadd.f32 %v1919, %v2089
      %v2214 = vadd.f32 %v1920, %v2094
      %v2215 = vadd.f32 %v1921, %v2097
      %v2216 = vadd.f32 %v1922, %v2102
      %v2217 = vadd.f32 %v1923, %v2105
      %v2218 = vadd.f32 %v1924, %v2110
      %v2219 = vadd.f32 %v1925, %v2113
      %v2220 = vadd.f32 %v1926, %v2118
      %v2221 = vadd.f32 %v1927, %v2121
      %v2222 = vadd.f32 %v1928, %v2126
      %v2223 = vadd.f32 %v1929, %v2129
      %v2224 = vadd.f32 %v1930, %v2134
      %v2225 = vadd.f32 %v1931, %v2137
      %v2226 = vadd.f32 %v1932, %v2142
      %v2227 = vadd.f32 %v1933, %v2145
      %v2228 = vadd.f32 %v1934, %v2150
      %v2229 = vadd.f32 %v1935, %v2153
      %v2230 = vadd.f32 %v1936, %v2158
      %v2231 = vadd.f32 %v1937, %v2161
      %v2232 = vadd.f32 %v1938, %v2166
      %v2233 = vadd.f32 %v1939, %v2169
      %v2234 = vadd.f32 %v1940, %v2174
      %v2235 = vadd.f32 %v1941, %v2177
      %v2236 = vadd.f32 %v1942, %v2182
      %v2237 = vadd.f32 %v1943, %v2185
      %v2238 = vadd.f32 %v1944, %v2190
      %v2239 = vadd.f32 %v1945, %v2193
      %v2240 = vadd.f32 %v1946, %v2198
      %v2241 = vadd.f32 %v1947, %v2201
      %v2242 = vadd.f32 %v1948, %v2206
      %v2243 = vadd.f32 %v1949, %v2209
      %s2244 = scalar_lea.vmem [#allocation2], 48
      %v2245 = vld [vmem:[%s2244] sm:$0xff]
      %v2246 = vld [vmem:[%s2244 + $0x8] sm:$0xff]
      %v2247 = vld [vmem:[%s2244 + $0x18] sm:$0xff]
      %v2248 = vld [vmem:[%s2244 + $0x20] sm:$0xff]
      %v2249 = vld [vmem:[%s2244 + $0x30] sm:$0xff]
      %v2250 = vld [vmem:[%s2244 + $0x38] sm:$0xff]
      %v2251 = vld [vmem:[%s2244 + $0x48] sm:$0xff]
      %v2252 = vld [vmem:[%s2244 + $0x50] sm:$0xff]
      %v2253 = vld [vmem:[%s2244 + $0x60] sm:$0xff]
      %v2254 = vld [vmem:[%s2244 + $0x68] sm:$0xff]
      %v2255 = vld [vmem:[%s2244 + $0x78] sm:$0xff]
      %v2256 = vld [vmem:[%s2244 + $0x80] sm:$0xff]
      %v2257 = vld [vmem:[%s2244 + $0x90] sm:$0xff]
      %v2258 = vld [vmem:[%s2244 + $0x98] sm:$0xff]
      %v2259 = vld [vmem:[%s2244 + $0xa8] sm:$0xff]
      %v2260 = vld [vmem:[%s2244 + $0xb0] sm:$0xff]
      %v2261 = vld [vmem:[%s2244 + $0xc0] sm:$0xff]
      %v2262 = vld [vmem:[%s2244 + $0xc8] sm:$0xff]
      %v2263 = vld [vmem:[%s2244 + $0xd8] sm:$0xff]
      %v2264 = vld [vmem:[%s2244 + $0xe0] sm:$0xff]
      %v2265 = vld [vmem:[%s2244 + $0xf0] sm:$0xff]
      %v2266 = vld [vmem:[%s2244 + $0xf8] sm:$0xff]
      %v2267 = vld [vmem:[%s2244 + $0x108] sm:$0xff]
      %v2268 = vld [vmem:[%s2244 + $0x110] sm:$0xff]
      %v2269 = vld [vmem:[%s2244 + $0x120] sm:$0xff]
      %v2270 = vld [vmem:[%s2244 + $0x128] sm:$0xff]
      %v2271 = vld [vmem:[%s2244 + $0x138] sm:$0xff]
      %v2272 = vld [vmem:[%s2244 + $0x140] sm:$0xff]
      %v2273 = vld [vmem:[%s2244 + $0x150] sm:$0xff]
      %v2274 = vld [vmem:[%s2244 + $0x158] sm:$0xff]
      %v2275 = vld [vmem:[%s2244 + $0x168] sm:$0xff]
      %v2276 = vld [vmem:[%s2244 + $0x170] sm:$0xff]
      %v2277 = vpack.c.bf16 %v2246, %v2245
      %v2278 = vpack.c.bf16 %v2248, %v2247
      %v2279 = vpack.c.bf16 %v2250, %v2249
      %v2280 = vpack.c.bf16 %v2252, %v2251
      %v2281 = vpack.c.bf16 %v2254, %v2253
      %v2282 = vpack.c.bf16 %v2256, %v2255
      %v2283 = vpack.c.bf16 %v2258, %v2257
      %v2284 = vpack.c.bf16 %v2260, %v2259
      %v2285 = vpack.c.bf16 %v2262, %v2261
      %v2286 = vpack.c.bf16 %v2264, %v2263
      %v2287 = vpack.c.bf16 %v2266, %v2265
      %v2288 = vpack.c.bf16 %v2268, %v2267
      %v2289 = vpack.c.bf16 %v2270, %v2269
      %v2290 = vpack.c.bf16 %v2272, %v2271
      %v2291 = vpack.c.bf16 %v2274, %v2273
      %v2292 = vpack.c.bf16 %v2276, %v2275
      %s2293 = scalar_lea.vmem %s2, 24
      %v2294 = vld [vmem:[%s2293] sm:$0xf]
      %v2296 = vsel %vm455, %v2277, 0
      %v2299 = vsel %vm455, %v2278, 0
      %v2302 = vsel %vm455, %v2279, 0
      %v2305 = vsel %vm455, %v2280, 0
      %v2308 = vsel %vm455, %v2281, 0
      %v2311 = vsel %vm455, %v2282, 0
      %v2314 = vsel %vm455, %v2283, 0
      %v2317 = vsel %vm455, %v2284, 0
      %v2320 = vsel %vm455, %v2285, 0
      %v2323 = vsel %vm455, %v2286, 0
      %v2326 = vsel %vm455, %v2287, 0
      %v2329 = vsel %vm455, %v2288, 0
      %v2332 = vsel %vm455, %v2289, 0
      %v2335 = vsel %vm455, %v2290, 0
      %v2338 = vsel %vm455, %v2291, 0
      %v2341 = vsel %vm455, %v2292, 0
      %v2344 = vsel %vm691, %v2294, 0
      %2346 = vmatprep.subr.bf16.mxu0 0
      %2347 = vmatpush1.bf16.msra.mxu0 %v2344
      %2348 = vmatprep.subr.bf16.mxu0 0
      %2349 = vmatpush1.bf16.msra.mxu0 0
      %2350 = vmatprep.subr.bf16.mxu0 0
      %2351 = vmatpush1.bf16.msra.mxu0 0
      %2352 = vmatprep.subr.bf16.mxu0 0
      %2353 = vmatpush1.bf16.msra.mxu0 0
      %2354 = vmatprep.subr.bf16.mxu0 0
      %2355 = vmatpush1.bf16.msra.mxu0 0
      %2356 = vmatprep.subr.bf16.mxu0 0
      %2357 = vmatpush1.bf16.msra.mxu0 0
      %2358 = vmatprep.subr.bf16.mxu0 0
      %2359 = vmatpush1.bf16.msra.mxu0 0
      %2360 = vmatprep.subr.bf16.mxu0 0
      %2361 = vmatpush1.bf16.msra.mxu0 0
      %2362 = vmatprep.subr.bf16.mxu0 0
      %2363 = vmatpush1.bf16.msra.mxu0 0
      %2364 = vmatprep.subr.bf16.mxu0 0
      %2365 = vmatpush1.bf16.msra.mxu0 0
      %2366 = vmatprep.subr.bf16.mxu0 0
      %2367 = vmatpush1.bf16.msra.mxu0 0
      %2368 = vmatprep.subr.bf16.mxu0 0
      %2369 = vmatpush1.bf16.msra.mxu0 0
      %2370 = vmatprep.subr.bf16.mxu0 0
      %2371 = vmatpush1.bf16.msra.mxu0 0
      %2372 = vmatprep.subr.bf16.mxu0 0
      %2373 = vmatpush1.bf16.msra.mxu0 0
      %2374 = vmatprep.subr.bf16.mxu0 0
      %2375 = vmatpush1.bf16.msra.mxu0 0
      %2376 = vmatprep.subr.bf16.mxu0 0
      %2377 = vmatpush1.bf16.msra.mxu0 0
      %2378 = vmatprep.mubr.bf16.mxu0 0
      %2379 = vmatmul.mubr.bf16.gmra.mrb[0].mxu0 %v2296
      %v2380 = vpop.f32.mrb[0].mxu0
      %v2381 = vadd.f32 0.0, %v2380
      %v2382 = vpop.f32.mrb[0].mxu0
      %v2383 = vpop.f32.mrb[0].mxu0
      %v2384 = vadd.f32 0.0, %v2383
      %v2385 = vpop.f32.mrb[0].mxu0
      %2386 = vmatprep.mubr.bf16.mxu0 0
      %2387 = vmatmul.mubr.bf16.gmra.mrb[0].mxu0 %v2299
      %v2388 = vpop.f32.mrb[0].mxu0
      %v2389 = vadd.f32 0.0, %v2388
      %v2390 = vpop.f32.mrb[0].mxu0
      %v2391 = vpop.f32.mrb[0].mxu0
      %v2392 = vadd.f32 0.0, %v2391
      %v2393 = vpop.f32.mrb[0].mxu0
      %2394 = vmatprep.mubr.bf16.mxu0 0
      %2395 = vmatmul.mubr.bf16.gmra.mrb[0].mxu0 %v2302
      %v2396 = vpop.f32.mrb[0].mxu0
      %v2397 = vadd.f32 0.0, %v2396
      %v2398 = vpop.f32.mrb[0].mxu0
      %v2399 = vpop.f32.mrb[0].mxu0
      %v2400 = vadd.f32 0.0, %v2399
      %v2401 = vpop.f32.mrb[0].mxu0
      %2402 = vmatprep.mubr.bf16.mxu0 0
      %2403 = vmatmul.mubr.bf16.gmra.mrb[0].mxu0 %v2305
      %v2404 = vpop.f32.mrb[0].mxu0
      %v2405 = vadd.f32 0.0, %v2404
      %v2406 = vpop.f32.mrb[0].mxu0
      %v2407 = vpop.f32.mrb[0].mxu0
      %v2408 = vadd.f32 0.0, %v2407
      %v2409 = vpop.f32.mrb[0].mxu0
      %2410 = vmatprep.mubr.bf16.mxu0 0
      %2411 = vmatmul.mubr.bf16.gmra.mrb[0].mxu0 %v2308
      %v2412 = vpop.f32.mrb[0].mxu0
      %v2413 = vadd.f32 0.0, %v2412
      %v2414 = vpop.f32.mrb[0].mxu0
      %v2415 = vpop.f32.mrb[0].mxu0
      %v2416 = vadd.f32 0.0, %v2415
      %v2417 = vpop.f32.mrb[0].mxu0
      %2418 = vmatprep.mubr.bf16.mxu0 0
      %2419 = vmatmul.mubr.bf16.gmra.mrb[0].mxu0 %v2311
      %v2420 = vpop.f32.mrb[0].mxu0
      %v2421 = vadd.f32 0.0, %v2420
      %v2422 = vpop.f32.mrb[0].mxu0
      %v2423 = vpop.f32.mrb[0].mxu0
      %v2424 = vadd.f32 0.0, %v2423
      %v2425 = vpop.f32.mrb[0].mxu0
      %2426 = vmatprep.mubr.bf16.mxu0 0
      %2427 = vmatmul.mubr.bf16.gmra.mrb[0].mxu0 %v2314
      %v2428 = vpop.f32.mrb[0].mxu0
      %v2429 = vadd.f32 0.0, %v2428
      %v2430 = vpop.f32.mrb[0].mxu0
      %v2431 = vpop.f32.mrb[0].mxu0
      %v2432 = vadd.f32 0.0, %v2431
      %v2433 = vpop.f32.mrb[0].mxu0
      %2434 = vmatprep.mubr.bf16.mxu0 0
      %2435 = vmatmul.mubr.bf16.gmra.mrb[0].mxu0 %v2317
      %v2436 = vpop.f32.mrb[0].mxu0
      %v2437 = vadd.f32 0.0, %v2436
      %v2438 = vpop.f32.mrb[0].mxu0
      %v2439 = vpop.f32.mrb[0].mxu0
      %v2440 = vadd.f32 0.0, %v2439
      %v2441 = vpop.f32.mrb[0].mxu0
      %2442 = vmatprep.mubr.bf16.mxu0 0
      %2443 = vmatmul.mubr.bf16.gmra.mrb[0].mxu0 %v2320
      %v2444 = vpop.f32.mrb[0].mxu0
      %v2445 = vadd.f32 0.0, %v2444
      %v2446 = vpop.f32.mrb[0].mxu0
      %v2447 = vpop.f32.mrb[0].mxu0
      %v2448 = vadd.f32 0.0, %v2447
      %v2449 = vpop.f32.mrb[0].mxu0
      %2450 = vmatprep.mubr.bf16.mxu0 0
      %2451 = vmatmul.mubr.bf16.gmra.mrb[0].mxu0 %v2323
      %v2452 = vpop.f32.mrb[0].mxu0
      %v2453 = vadd.f32 0.0, %v2452
      %v2454 = vpop.f32.mrb[0].mxu0
      %v2455 = vpop.f32.mrb[0].mxu0
      %v2456 = vadd.f32 0.0, %v2455
      %v2457 = vpop.f32.mrb[0].mxu0
      %2458 = vmatprep.mubr.bf16.mxu0 0
      %2459 = vmatmul.mubr.bf16.gmra.mrb[0].mxu0 %v2326
      %v2460 = vpop.f32.mrb[0].mxu0
      %v2461 = vadd.f32 0.0, %v2460
      %v2462 = vpop.f32.mrb[0].mxu0
      %v2463 = vpop.f32.mrb[0].mxu0
      %v2464 = vadd.f32 0.0, %v2463
      %v2465 = vpop.f32.mrb[0].mxu0
      %2466 = vmatprep.mubr.bf16.mxu0 0
      %2467 = vmatmul.mubr.bf16.gmra.mrb[0].mxu0 %v2329
      %v2468 = vpop.f32.mrb[0].mxu0
      %v2469 = vadd.f32 0.0, %v2468
      %v2470 = vpop.f32.mrb[0].mxu0
      %v2471 = vpop.f32.mrb[0].mxu0
      %v2472 = vadd.f32 0.0, %v2471
      %v2473 = vpop.f32.mrb[0].mxu0
      %2474 = vmatprep.mubr.bf16.mxu0 0
      %2475 = vmatmul.mubr.bf16.gmra.mrb[0].mxu0 %v2332
      %v2476 = vpop.f32.mrb[0].mxu0
      %v2477 = vadd.f32 0.0, %v2476
      %v2478 = vpop.f32.mrb[0].mxu0
      %v2479 = vpop.f32.mrb[0].mxu0
      %v2480 = vadd.f32 0.0, %v2479
      %v2481 = vpop.f32.mrb[0].mxu0
      %2482 = vmatprep.mubr.bf16.mxu0 0
      %2483 = vmatmul.mubr.bf16.gmra.mrb[0].mxu0 %v2335
      %v2484 = vpop.f32.mrb[0].mxu0
      %v2485 = vadd.f32 0.0, %v2484
      %v2486 = vpop.f32.mrb[0].mxu0
      %v2487 = vpop.f32.mrb[0].mxu0
      %v2488 = vadd.f32 0.0, %v2487
      %v2489 = vpop.f32.mrb[0].mxu0
      %2490 = vmatprep.mubr.bf16.mxu0 0
      %2491 = vmatmul.mubr.bf16.gmra.mrb[0].mxu0 %v2338
      %v2492 = vpop.f32.mrb[0].mxu0
      %v2493 = vadd.f32 0.0, %v2492
      %v2494 = vpop.f32.mrb[0].mxu0
      %v2495 = vpop.f32.mrb[0].mxu0
      %v2496 = vadd.f32 0.0, %v2495
      %v2497 = vpop.f32.mrb[0].mxu0
      %2498 = vmatprep.mubr.bf16.mxu0 0
      %2499 = vmatmul.mubr.bf16.gmra.mrb[0].mxu0 %v2341
      %v2500 = vpop.f32.mrb[0].mxu0
      %v2501 = vadd.f32 0.0, %v2500
      %v2502 = vpop.f32.mrb[0].mxu0
      %v2503 = vpop.f32.mrb[0].mxu0
      %v2504 = vadd.f32 0.0, %v2503
      %v2505 = vpop.f32.mrb[0].mxu0
      %2506 = vdwg.mxu0
      %v2507 = vadd.f32 %v2212, %v2381
      %v2508 = vadd.f32 %v2213, %v2384
      %v2509 = vadd.f32 %v2214, %v2389
      %v2510 = vadd.f32 %v2215, %v2392
      %v2511 = vadd.f32 %v2216, %v2397
      %v2512 = vadd.f32 %v2217, %v2400
      %v2513 = vadd.f32 %v2218, %v2405
      %v2514 = vadd.f32 %v2219, %v2408
      %v2515 = vadd.f32 %v2220, %v2413
      %v2516 = vadd.f32 %v2221, %v2416
      %v2517 = vadd.f32 %v2222, %v2421
      %v2518 = vadd.f32 %v2223, %v2424
      %v2519 = vadd.f32 %v2224, %v2429
      %v2520 = vadd.f32 %v2225, %v2432
      %v2521 = vadd.f32 %v2226, %v2437
      %v2522 = vadd.f32 %v2227, %v2440
      %v2523 = vadd.f32 %v2228, %v2445
      %v2524 = vadd.f32 %v2229, %v2448
      %v2525 = vadd.f32 %v2230, %v2453
      %v2526 = vadd.f32 %v2231, %v2456
      %v2527 = vadd.f32 %v2232, %v2461
      %v2528 = vadd.f32 %v2233, %v2464
      %v2529 = vadd.f32 %v2234, %v2469
      %v2530 = vadd.f32 %v2235, %v2472
      %v2531 = vadd.f32 %v2236, %v2477
      %v2532 = vadd.f32 %v2237, %v2480
      %v2533 = vadd.f32 %v2238, %v2485
      %v2534 = vadd.f32 %v2239, %v2488
      %v2535 = vadd.f32 %v2240, %v2493
      %v2536 = vadd.f32 %v2241, %v2496
      %v2537 = vadd.f32 %v2242, %v2501
      %v2538 = vadd.f32 %v2243, %v2504
      %v2539 = vld [vmem:[%s2244 + $0x1] sm:$0xff]
      %v2540 = vld [vmem:[%s2244 + $0x9] sm:$0xff]
      %v2541 = vld [vmem:[%s2244 + $0x19] sm:$0xff]
      %v2542 = vld [vmem:[%s2244 + $0x21] sm:$0xff]
      %v2543 = vld [vmem:[%s2244 + $0x31] sm:$0xff]
      %v2544 = vld [vmem:[%s2244 + $0x39] sm:$0xff]
      %v2545 = vld [vmem:[%s2244 + $0x49] sm:$0xff]
      %v2546 = vld [vmem:[%s2244 + $0x51] sm:$0xff]
      %v2547 = vld [vmem:[%s2244 + $0x61] sm:$0xff]
      %v2548 = vld [vmem:[%s2244 + $0x69] sm:$0xff]
      %v2549 = vld [vmem:[%s2244 + $0x79] sm:$0xff]
      %v2550 = vld [vmem:[%s2244 + $0x81] sm:$0xff]
      %v2551 = vld [vmem:[%s2244 + $0x91] sm:$0xff]
      %v2552 = vld [vmem:[%s2244 + $0x99] sm:$0xff]
      %v2553 = vld [vmem:[%s2244 + $0xa9] sm:$0xff]
      %v2554 = vld [vmem:[%s2244 + $0xb1] sm:$0xff]
      %v2555 = vld [vmem:[%s2244 + $0xc1] sm:$0xff]
      %v2556 = vld [vmem:[%s2244 + $0xc9] sm:$0xff]
      %v2557 = vld [vmem:[%s2244 + $0xd9] sm:$0xff]
      %v2558 = vld [vmem:[%s2244 + $0xe1] sm:$0xff]
      %v2559 = vld [vmem:[%s2244 + $0xf1] sm:$0xff]
      %v2560 = vld [vmem:[%s2244 + $0xf9] sm:$0xff]
      %v2561 = vld [vmem:[%s2244 + $0x109] sm:$0xff]
      %v2562 = vld [vmem:[%s2244 + $0x111] sm:$0xff]
      %v2563 = vld [vmem:[%s2244 + $0x121] sm:$0xff]
      %v2564 = vld [vmem:[%s2244 + $0x129] sm:$0xff]
      %v2565 = vld [vmem:[%s2244 + $0x139] sm:$0xff]
      %v2566 = vld [vmem:[%s2244 + $0x141] sm:$0xff]
      %v2567 = vld [vmem:[%s2244 + $0x151] sm:$0xff]
      %v2568 = vld [vmem:[%s2244 + $0x159] sm:$0xff]
      %v2569 = vld [vmem:[%s2244 + $0x169] sm:$0xff]
      %v2570 = vld [vmem:[%s2244 + $0x171] sm:$0xff]
      %v2571 = vpack.c.bf16 %v2540, %v2539
      %v2572 = vpack.c.bf16 %v2542, %v2541
      %v2573 = vpack.c.bf16 %v2544, %v2543
      %v2574 = vpack.c.bf16 %v2546, %v2545
      %v2575 = vpack.c.bf16 %v2548, %v2547
      %v2576 = vpack.c.bf16 %v2550, %v2549
      %v2577 = vpack.c.bf16 %v2552, %v2551
      %v2578 = vpack.c.bf16 %v2554, %v2553
      %v2579 = vpack.c.bf16 %v2556, %v2555
      %v2580 = vpack.c.bf16 %v2558, %v2557
      %v2581 = vpack.c.bf16 %v2560, %v2559
      %v2582 = vpack.c.bf16 %v2562, %v2561
      %v2583 = vpack.c.bf16 %v2564, %v2563
      %v2584 = vpack.c.bf16 %v2566, %v2565
      %v2585 = vpack.c.bf16 %v2568, %v2567
      %v2586 = vpack.c.bf16 %v2570, %v2569
      %s2587 = scalar_lea.vmem %s2, 28
      %v2588 = vld [vmem:[%s2587] sm:$0xf]
      %v2590 = vsel %vm455, %v2571, 0
      %v2593 = vsel %vm455, %v2572, 0
      %v2596 = vsel %vm455, %v2573, 0
      %v2599 = vsel %vm455, %v2574, 0
      %v2602 = vsel %vm455, %v2575, 0
      %v2605 = vsel %vm455, %v2576, 0
      %v2608 = vsel %vm455, %v2577, 0
      %v2611 = vsel %vm455, %v2578, 0
      %v2614 = vsel %vm455, %v2579, 0
      %v2617 = vsel %vm455, %v2580, 0
      %v2620 = vsel %vm455, %v2581, 0
      %v2623 = vsel %vm455, %v2582, 0
      %v2626 = vsel %vm455, %v2583, 0
      %v2629 = vsel %vm455, %v2584, 0
      %v2632 = vsel %vm455, %v2585, 0
      %v2635 = vsel %vm455, %v2586, 0
      %v2638 = vsel %vm691, %v2588, 0
      %2640 = vmatprep.subr.bf16.mxu0 0
      %2641 = vmatpush1.bf16.msra.mxu0 %v2638
      %2642 = vmatprep.subr.bf16.mxu0 0
      %2643 = vmatpush1.bf16.msra.mxu0 0
      %2644 = vmatprep.subr.bf16.mxu0 0
      %2645 = vmatpush1.bf16.msra.mxu0 0
      %2646 = vmatprep.subr.bf16.mxu0 0
      %2647 = vmatpush1.bf16.msra.mxu0 0
      %2648 = vmatprep.subr.bf16.mxu0 0
      %2649 = vmatpush1.bf16.msra.mxu0 0
      %2650 = vmatprep.subr.bf16.mxu0 0
      %2651 = vmatpush1.bf16.msra.mxu0 0
      %2652 = vmatprep.subr.bf16.mxu0 0
      %2653 = vmatpush1.bf16.msra.mxu0 0
      %2654 = vmatprep.subr.bf16.mxu0 0
      %2655 = vmatpush1.bf16.msra.mxu0 0
      %2656 = vmatprep.subr.bf16.mxu0 0
      %2657 = vmatpush1.bf16.msra.mxu0 0
      %2658 = vmatprep.subr.bf16.mxu0 0
      %2659 = vmatpush1.bf16.msra.mxu0 0
      %2660 = vmatprep.subr.bf16.mxu0 0
      %2661 = vmatpush1.bf16.msra.mxu0 0
      %2662 = vmatprep.subr.bf16.mxu0 0
      %2663 = vmatpush1.bf16.msra.mxu0 0
      %2664 = vmatprep.subr.bf16.mxu0 0
      %2665 = vmatpush1.bf16.msra.mxu0 0
      %2666 = vmatprep.subr.bf16.mxu0 0
      %2667 = vmatpush1.bf16.msra.mxu0 0
      %2668 = vmatprep.subr.bf16.mxu0 0
      %2669 = vmatpush1.bf16.msra.mxu0 0
      %2670 = vmatprep.subr.bf16.mxu0 0
      %2671 = vmatpush1.bf16.msra.mxu0 0
      %2672 = vmatprep.mubr.bf16.mxu0 0
      %2673 = vmatmul.mubr.bf16.gmra.mrb[0].mxu0 %v2590
      %v2674 = vpop.f32.mrb[0].mxu0
      %v2675 = vadd.f32 0.0, %v2674
      %v2676 = vpop.f32.mrb[0].mxu0
      %v2677 = vpop.f32.mrb[0].mxu0
      %v2678 = vadd.f32 0.0, %v2677
      %v2679 = vpop.f32.mrb[0].mxu0
      %2680 = vmatprep.mubr.bf16.mxu0 0
      %2681 = vmatmul.mubr.bf16.gmra.mrb[0].mxu0 %v2593
      %v2682 = vpop.f32.mrb[0].mxu0
      %v2683 = vadd.f32 0.0, %v2682
      %v2684 = vpop.f32.mrb[0].mxu0
      %v2685 = vpop.f32.mrb[0].mxu0
      %v2686 = vadd.f32 0.0, %v2685
      %v2687 = vpop.f32.mrb[0].mxu0
      %2688 = vmatprep.mubr.bf16.mxu0 0
      %2689 = vmatmul.mubr.bf16.gmra.mrb[0].mxu0 %v2596
      %v2690 = vpop.f32.mrb[0].mxu0
      %v2691 = vadd.f32 0.0, %v2690
      %v2692 = vpop.f32.mrb[0].mxu0
      %v2693 = vpop.f32.mrb[0].mxu0
      %v2694 = vadd.f32 0.0, %v2693
      %v2695 = vpop.f32.mrb[0].mxu0
      %2696 = vmatprep.mubr.bf16.mxu0 0
      %2697 = vmatmul.mubr.bf16.gmra.mrb[0].mxu0 %v2599
      %v2698 = vpop.f32.mrb[0].mxu0
      %v2699 = vadd.f32 0.0, %v2698
      %v2700 = vpop.f32.mrb[0].mxu0
      %v2701 = vpop.f32.mrb[0].mxu0
      %v2702 = vadd.f32 0.0, %v2701
      %v2703 = vpop.f32.mrb[0].mxu0
      %2704 = vmatprep.mubr.bf16.mxu0 0
      %2705 = vmatmul.mubr.bf16.gmra.mrb[0].mxu0 %v2602
      %v2706 = vpop.f32.mrb[0].mxu0
      %v2707 = vadd.f32 0.0, %v2706
      %v2708 = vpop.f32.mrb[0].mxu0
      %v2709 = vpop.f32.mrb[0].mxu0
      %v2710 = vadd.f32 0.0, %v2709
      %v2711 = vpop.f32.mrb[0].mxu0
      %2712 = vmatprep.mubr.bf16.mxu0 0
      %2713 = vmatmul.mubr.bf16.gmra.mrb[0].mxu0 %v2605
      %v2714 = vpop.f32.mrb[0].mxu0
      %v2715 = vadd.f32 0.0, %v2714
      %v2716 = vpop.f32.mrb[0].mxu0
      %v2717 = vpop.f32.mrb[0].mxu0
      %v2718 = vadd.f32 0.0, %v2717
      %v2719 = vpop.f32.mrb[0].mxu0
      %2720 = vmatprep.mubr.bf16.mxu0 0
      %2721 = vmatmul.mubr.bf16.gmra.mrb[0].mxu0 %v2608
      %v2722 = vpop.f32.mrb[0].mxu0
      %v2723 = vadd.f32 0.0, %v2722
      %v2724 = vpop.f32.mrb[0].mxu0
      %v2725 = vpop.f32.mrb[0].mxu0
      %v2726 = vadd.f32 0.0, %v2725
      %v2727 = vpop.f32.mrb[0].mxu0
      %2728 = vmatprep.mubr.bf16.mxu0 0
      %2729 = vmatmul.mubr.bf16.gmra.mrb[0].mxu0 %v2611
      %v2730 = vpop.f32.mrb[0].mxu0
      %v2731 = vadd.f32 0.0, %v2730
      %v2732 = vpop.f32.mrb[0].mxu0
      %v2733 = vpop.f32.mrb[0].mxu0
      %v2734 = vadd.f32 0.0, %v2733
      %v2735 = vpop.f32.mrb[0].mxu0
      %2736 = vmatprep.mubr.bf16.mxu0 0
      %2737 = vmatmul.mubr.bf16.gmra.mrb[0].mxu0 %v2614
      %v2738 = vpop.f32.mrb[0].mxu0
      %v2739 = vadd.f32 0.0, %v2738
      %v2740 = vpop.f32.mrb[0].mxu0
      %v2741 = vpop.f32.mrb[0].mxu0
      %v2742 = vadd.f32 0.0, %v2741
      %v2743 = vpop.f32.mrb[0].mxu0
      %2744 = vmatprep.mubr.bf16.mxu0 0
      %2745 = vmatmul.mubr.bf16.gmra.mrb[0].mxu0 %v2617
      %v2746 = vpop.f32.mrb[0].mxu0
      %v2747 = vadd.f32 0.0, %v2746
      %v2748 = vpop.f32.mrb[0].mxu0
      %v2749 = vpop.f32.mrb[0].mxu0
      %v2750 = vadd.f32 0.0, %v2749
      %v2751 = vpop.f32.mrb[0].mxu0
      %2752 = vmatprep.mubr.bf16.mxu0 0
      %2753 = vmatmul.mubr.bf16.gmra.mrb[0].mxu0 %v2620
      %v2754 = vpop.f32.mrb[0].mxu0
      %v2755 = vadd.f32 0.0, %v2754
      %v2756 = vpop.f32.mrb[0].mxu0
      %v2757 = vpop.f32.mrb[0].mxu0
      %v2758 = vadd.f32 0.0, %v2757
      %v2759 = vpop.f32.mrb[0].mxu0
      %2760 = vmatprep.mubr.bf16.mxu0 0
      %2761 = vmatmul.mubr.bf16.gmra.mrb[0].mxu0 %v2623
      %v2762 = vpop.f32.mrb[0].mxu0
      %v2763 = vadd.f32 0.0, %v2762
      %v2764 = vpop.f32.mrb[0].mxu0
      %v2765 = vpop.f32.mrb[0].mxu0
      %v2766 = vadd.f32 0.0, %v2765
      %v2767 = vpop.f32.mrb[0].mxu0
      %2768 = vmatprep.mubr.bf16.mxu0 0
      %2769 = vmatmul.mubr.bf16.gmra.mrb[0].mxu0 %v2626
      %v2770 = vpop.f32.mrb[0].mxu0
      %v2771 = vadd.f32 0.0, %v2770
      %v2772 = vpop.f32.mrb[0].mxu0
      %v2773 = vpop.f32.mrb[0].mxu0
      %v2774 = vadd.f32 0.0, %v2773
      %v2775 = vpop.f32.mrb[0].mxu0
      %2776 = vmatprep.mubr.bf16.mxu0 0
      %2777 = vmatmul.mubr.bf16.gmra.mrb[0].mxu0 %v2629
      %v2778 = vpop.f32.mrb[0].mxu0
      %v2779 = vadd.f32 0.0, %v2778
      %v2780 = vpop.f32.mrb[0].mxu0
      %v2781 = vpop.f32.mrb[0].mxu0
      %v2782 = vadd.f32 0.0, %v2781
      %v2783 = vpop.f32.mrb[0].mxu0
      %2784 = vmatprep.mubr.bf16.mxu0 0
      %2785 = vmatmul.mubr.bf16.gmra.mrb[0].mxu0 %v2632
      %v2786 = vpop.f32.mrb[0].mxu0
      %v2787 = vadd.f32 0.0, %v2786
      %v2788 = vpop.f32.mrb[0].mxu0
      %v2789 = vpop.f32.mrb[0].mxu0
      %v2790 = vadd.f32 0.0, %v2789
      %v2791 = vpop.f32.mrb[0].mxu0
      %2792 = vmatprep.mubr.bf16.mxu0 0
      %2793 = vmatmul.mubr.bf16.gmra.mrb[0].mxu0 %v2635
      %v2794 = vpop.f32.mrb[0].mxu0
      %v2795 = vadd.f32 0.0, %v2794
      %v2796 = vpop.f32.mrb[0].mxu0
      %v2797 = vpop.f32.mrb[0].mxu0
      %v2798 = vadd.f32 0.0, %v2797
      %v2799 = vpop.f32.mrb[0].mxu0
      %2800 = vdwg.mxu0
      %v2801 = vadd.f32 %v2507, %v2675
      %v2802 = vadd.f32 %v2508, %v2678
      %v2803 = vadd.f32 %v2509, %v2683
      %v2804 = vadd.f32 %v2510, %v2686
      %v2805 = vadd.f32 %v2511, %v2691
      %v2806 = vadd.f32 %v2512, %v2694
      %v2807 = vadd.f32 %v2513, %v2699
      %v2808 = vadd.f32 %v2514, %v2702
      %v2809 = vadd.f32 %v2515, %v2707
      %v2810 = vadd.f32 %v2516, %v2710
      %v2811 = vadd.f32 %v2517, %v2715
      %v2812 = vadd.f32 %v2518, %v2718
      %v2813 = vadd.f32 %v2519, %v2723
      %v2814 = vadd.f32 %v2520, %v2726
      %v2815 = vadd.f32 %v2521, %v2731
      %v2816 = vadd.f32 %v2522, %v2734
      %v2817 = vadd.f32 %v2523, %v2739
      %v2818 = vadd.f32 %v2524, %v2742
      %v2819 = vadd.f32 %v2525, %v2747
      %v2820 = vadd.f32 %v2526, %v2750
      %v2821 = vadd.f32 %v2527, %v2755
      %v2822 = vadd.f32 %v2528, %v2758
      %v2823 = vadd.f32 %v2529, %v2763
      %v2824 = vadd.f32 %v2530, %v2766
      %v2825 = vadd.f32 %v2531, %v2771
      %v2826 = vadd.f32 %v2532, %v2774
      %v2827 = vadd.f32 %v2533, %v2779
      %v2828 = vadd.f32 %v2534, %v2782
      %v2829 = vadd.f32 %v2535, %v2787
      %v2830 = vadd.f32 %v2536, %v2790
      %v2831 = vadd.f32 %v2537, %v2795
      %v2832 = vadd.f32 %v2538, %v2798
      %v2833 = vld [vmem:[%s2244 + $0x2] sm:$0xff]
      %v2834 = vld [vmem:[%s2244 + $0xa] sm:$0xff]
      %v2835 = vld [vmem:[%s2244 + $0x1a] sm:$0xff]
      %v2836 = vld [vmem:[%s2244 + $0x22] sm:$0xff]
      %v2837 = vld [vmem:[%s2244 + $0x32] sm:$0xff]
      %v2838 = vld [vmem:[%s2244 + $0x3a] sm:$0xff]
      %v2839 = vld [vmem:[%s2244 + $0x4a] sm:$0xff]
      %v2840 = vld [vmem:[%s2244 + $0x52] sm:$0xff]
      %v2841 = vld [vmem:[%s2244 + $0x62] sm:$0xff]
      %v2842 = vld [vmem:[%s2244 + $0x6a] sm:$0xff]
      %v2843 = vld [vmem:[%s2244 + $0x7a] sm:$0xff]
      %v2844 = vld [vmem:[%s2244 + $0x82] sm:$0xff]
      %v2845 = vld [vmem:[%s2244 + $0x92] sm:$0xff]
      %v2846 = vld [vmem:[%s2244 + $0x9a] sm:$0xff]
      %v2847 = vld [vmem:[%s2244 + $0xaa] sm:$0xff]
      %v2848 = vld [vmem:[%s2244 + $0xb2] sm:$0xff]
      %v2849 = vld [vmem:[%s2244 + $0xc2] sm:$0xff]
      %v2850 = vld [vmem:[%s2244 + $0xca] sm:$0xff]
      %v2851 = vld [vmem:[%s2244 + $0xda] sm:$0xff]
      %v2852 = vld [vmem:[%s2244 + $0xe2] sm:$0xff]
      %v2853 = vld [vmem:[%s2244 + $0xf2] sm:$0xff]
      %v2854 = vld [vmem:[%s2244 + $0xfa] sm:$0xff]
      %v2855 = vld [vmem:[%s2244 + $0x10a] sm:$0xff]
      %v2856 = vld [vmem:[%s2244 + $0x112] sm:$0xff]
      %v2857 = vld [vmem:[%s2244 + $0x122] sm:$0xff]
      %v2858 = vld [vmem:[%s2244 + $0x12a] sm:$0xff]
      %v2859 = vld [vmem:[%s2244 + $0x13a] sm:$0xff]
      %v2860 = vld [vmem:[%s2244 + $0x142] sm:$0xff]
      %v2861 = vld [vmem:[%s2244 + $0x152] sm:$0xff]
      %v2862 = vld [vmem:[%s2244 + $0x15a] sm:$0xff]
      %v2863 = vld [vmem:[%s2244 + $0x16a] sm:$0xff]
      %v2864 = vld [vmem:[%s2244 + $0x172] sm:$0xff]
      %v2865 = vpack.c.bf16 %v2834, %v2833
      %v2866 = vpack.c.bf16 %v2836, %v2835
      %v2867 = vpack.c.bf16 %v2838, %v2837
      %v2868 = vpack.c.bf16 %v2840, %v2839
      %v2869 = vpack.c.bf16 %v2842, %v2841
      %v2870 = vpack.c.bf16 %v2844, %v2843
      %v2871 = vpack.c.bf16 %v2846, %v2845
      %v2872 = vpack.c.bf16 %v2848, %v2847
      %v2873 = vpack.c.bf16 %v2850, %v2849
      %v2874 = vpack.c.bf16 %v2852, %v2851
      %v2875 = vpack.c.bf16 %v2854, %v2853
      %v2876 = vpack.c.bf16 %v2856, %v2855
      %v2877 = vpack.c.bf16 %v2858, %v2857
      %v2878 = vpack.c.bf16 %v2860, %v2859
      %v2879 = vpack.c.bf16 %v2862, %v2861
      %v2880 = vpack.c.bf16 %v2864, %v2863
      %s2881 = scalar_lea.vmem %s2, 32
      %v2882 = vld [vmem:[%s2881] sm:$0xf]
      %v2884 = vsel %vm455, %v2865, 0
      %v2887 = vsel %vm455, %v2866, 0
      %v2890 = vsel %vm455, %v2867, 0
      %v2893 = vsel %vm455, %v2868, 0
      %v2896 = vsel %vm455, %v2869, 0
      %v2899 = vsel %vm455, %v2870, 0
      %v2902 = vsel %vm455, %v2871, 0
      %v2905 = vsel %vm455, %v2872, 0
      %v2908 = vsel %vm455, %v2873, 0
      %v2911 = vsel %vm455, %v2874, 0
      %v2914 = vsel %vm455, %v2875, 0
      %v2917 = vsel %vm455, %v2876, 0
      %v2920 = vsel %vm455, %v2877, 0
      %v2923 = vsel %vm455, %v2878, 0
      %v2926 = vsel %vm455, %v2879, 0
      %v2929 = vsel %vm455, %v2880, 0
      %v2932 = vsel %vm691, %v2882, 0
      %2934 = vmatprep.subr.bf16.mxu0 0
      %2935 = vmatpush1.bf16.msra.mxu0 %v2932
      %2936 = vmatprep.subr.bf16.mxu0 0
      %2937 = vmatpush1.bf16.msra.mxu0 0
      %2938 = vmatprep.subr.bf16.mxu0 0
      %2939 = vmatpush1.bf16.msra.mxu0 0
      %2940 = vmatprep.subr.bf16.mxu0 0
      %2941 = vmatpush1.bf16.msra.mxu0 0
      %2942 = vmatprep.subr.bf16.mxu0 0
      %2943 = vmatpush1.bf16.msra.mxu0 0
      %2944 = vmatprep.subr.bf16.mxu0 0
      %2945 = vmatpush1.bf16.msra.mxu0 0
      %2946 = vmatprep.subr.bf16.mxu0 0
      %2947 = vmatpush1.bf16.msra.mxu0 0
      %2948 = vmatprep.subr.bf16.mxu0 0
      %2949 = vmatpush1.bf16.msra.mxu0 0
      %2950 = vmatprep.subr.bf16.mxu0 0
      %2951 = vmatpush1.bf16.msra.mxu0 0
      %2952 = vmatprep.subr.bf16.mxu0 0
      %2953 = vmatpush1.bf16.msra.mxu0 0
      %2954 = vmatprep.subr.bf16.mxu0 0
      %2955 = vmatpush1.bf16.msra.mxu0 0
      %2956 = vmatprep.subr.bf16.mxu0 0
      %2957 = vmatpush1.bf16.msra.mxu0 0
      %2958 = vmatprep.subr.bf16.mxu0 0
      %2959 = vmatpush1.bf16.msra.mxu0 0
      %2960 = vmatprep.subr.bf16.mxu0 0
      %2961 = vmatpush1.bf16.msra.mxu0 0
      %2962 = vmatprep.subr.bf16.mxu0 0
      %2963 = vmatpush1.bf16.msra.mxu0 0
      %2964 = vmatprep.subr.bf16.mxu0 0
      %2965 = vmatpush1.bf16.msra.mxu0 0
      %2966 = vmatprep.mubr.bf16.mxu0 0
      %2967 = vmatmul.mubr.bf16.gmra.mrb[0].mxu0 %v2884
      %v2968 = vpop.f32.mrb[0].mxu0
      %v2969 = vadd.f32 0.0, %v2968
      %v2970 = vpop.f32.mrb[0].mxu0
      %v2971 = vpop.f32.mrb[0].mxu0
      %v2972 = vadd.f32 0.0, %v2971
      %v2973 = vpop.f32.mrb[0].mxu0
      %2974 = vmatprep.mubr.bf16.mxu0 0
      %2975 = vmatmul.mubr.bf16.gmra.mrb[0].mxu0 %v2887
      %v2976 = vpop.f32.mrb[0].mxu0
      %v2977 = vadd.f32 0.0, %v2976
      %v2978 = vpop.f32.mrb[0].mxu0
      %v2979 = vpop.f32.mrb[0].mxu0
      %v2980 = vadd.f32 0.0, %v2979
      %v2981 = vpop.f32.mrb[0].mxu0
      %2982 = vmatprep.mubr.bf16.mxu0 0
      %2983 = vmatmul.mubr.bf16.gmra.mrb[0].mxu0 %v2890
      %v2984 = vpop.f32.mrb[0].mxu0
      %v2985 = vadd.f32 0.0, %v2984
      %v2986 = vpop.f32.mrb[0].mxu0
      %v2987 = vpop.f32.mrb[0].mxu0
      %v2988 = vadd.f32 0.0, %v2987
      %v2989 = vpop.f32.mrb[0].mxu0
      %2990 = vmatprep.mubr.bf16.mxu0 0
      %2991 = vmatmul.mubr.bf16.gmra.mrb[0].mxu0 %v2893
      %v2992 = vpop.f32.mrb[0].mxu0
      %v2993 = vadd.f32 0.0, %v2992
      %v2994 = vpop.f32.mrb[0].mxu0
      %v2995 = vpop.f32.mrb[0].mxu0
      %v2996 = vadd.f32 0.0, %v2995
      %v2997 = vpop.f32.mrb[0].mxu0
      %2998 = vmatprep.mubr.bf16.mxu0 0
      %2999 = vmatmul.mubr.bf16.gmra.mrb[0].mxu0 %v2896
      %v3000 = vpop.f32.mrb[0].mxu0
      %v3001 = vadd.f32 0.0, %v3000
      %v3002 = vpop.f32.mrb[0].mxu0
      %v3003 = vpop.f32.mrb[0].mxu0
      %v3004 = vadd.f32 0.0, %v3003
      %v3005 = vpop.f32.mrb[0].mxu0
      %3006 = vmatprep.mubr.bf16.mxu0 0
      %3007 = vmatmul.mubr.bf16.gmra.mrb[0].mxu0 %v2899
      %v3008 = vpop.f32.mrb[0].mxu0
      %v3009 = vadd.f32 0.0, %v3008
      %v3010 = vpop.f32.mrb[0].mxu0
      %v3011 = vpop.f32.mrb[0].mxu0
      %v3012 = vadd.f32 0.0, %v3011
      %v3013 = vpop.f32.mrb[0].mxu0
      %3014 = vmatprep.mubr.bf16.mxu0 0
      %3015 = vmatmul.mubr.bf16.gmra.mrb[0].mxu0 %v2902
      %v3016 = vpop.f32.mrb[0].mxu0
      %v3017 = vadd.f32 0.0, %v3016
      %v3018 = vpop.f32.mrb[0].mxu0
      %v3019 = vpop.f32.mrb[0].mxu0
      %v3020 = vadd.f32 0.0, %v3019
      %v3021 = vpop.f32.mrb[0].mxu0
      %3022 = vmatprep.mubr.bf16.mxu0 0
      %3023 = vmatmul.mubr.bf16.gmra.mrb[0].mxu0 %v2905
      %v3024 = vpop.f32.mrb[0].mxu0
      %v3025 = vadd.f32 0.0, %v3024
      %v3026 = vpop.f32.mrb[0].mxu0
      %v3027 = vpop.f32.mrb[0].mxu0
      %v3028 = vadd.f32 0.0, %v3027
      %v3029 = vpop.f32.mrb[0].mxu0
      %3030 = vmatprep.mubr.bf16.mxu0 0
      %3031 = vmatmul.mubr.bf16.gmra.mrb[0].mxu0 %v2908
      %v3032 = vpop.f32.mrb[0].mxu0
      %v3033 = vadd.f32 0.0, %v3032
      %v3034 = vpop.f32.mrb[0].mxu0
      %v3035 = vpop.f32.mrb[0].mxu0
      %v3036 = vadd.f32 0.0, %v3035
      %v3037 = vpop.f32.mrb[0].mxu0
      %3038 = vmatprep.mubr.bf16.mxu0 0
      %3039 = vmatmul.mubr.bf16.gmra.mrb[0].mxu0 %v2911
      %v3040 = vpop.f32.mrb[0].mxu0
      %v3041 = vadd.f32 0.0, %v3040
      %v3042 = vpop.f32.mrb[0].mxu0
      %v3043 = vpop.f32.mrb[0].mxu0
      %v3044 = vadd.f32 0.0, %v3043
      %v3045 = vpop.f32.mrb[0].mxu0
      %3046 = vmatprep.mubr.bf16.mxu0 0
      %3047 = vmatmul.mubr.bf16.gmra.mrb[0].mxu0 %v2914
      %v3048 = vpop.f32.mrb[0].mxu0
      %v3049 = vadd.f32 0.0, %v3048
      %v3050 = vpop.f32.mrb[0].mxu0
      %v3051 = vpop.f32.mrb[0].mxu0
      %v3052 = vadd.f32 0.0, %v3051
      %v3053 = vpop.f32.mrb[0].mxu0
      %3054 = vmatprep.mubr.bf16.mxu0 0
      %3055 = vmatmul.mubr.bf16.gmra.mrb[0].mxu0 %v2917
      %v3056 = vpop.f32.mrb[0].mxu0
      %v3057 = vadd.f32 0.0, %v3056
      %v3058 = vpop.f32.mrb[0].mxu0
      %v3059 = vpop.f32.mrb[0].mxu0
      %v3060 = vadd.f32 0.0, %v3059
      %v3061 = vpop.f32.mrb[0].mxu0
      %3062 = vmatprep.mubr.bf16.mxu0 0
      %3063 = vmatmul.mubr.bf16.gmra.mrb[0].mxu0 %v2920
      %v3064 = vpop.f32.mrb[0].mxu0
      %v3065 = vadd.f32 0.0, %v3064
      %v3066 = vpop.f32.mrb[0].mxu0
      %v3067 = vpop.f32.mrb[0].mxu0
      %v3068 = vadd.f32 0.0, %v3067
      %v3069 = vpop.f32.mrb[0].mxu0
      %3070 = vmatprep.mubr.bf16.mxu0 0
      %3071 = vmatmul.mubr.bf16.gmra.mrb[0].mxu0 %v2923
      %v3072 = vpop.f32.mrb[0].mxu0
      %v3073 = vadd.f32 0.0, %v3072
      %v3074 = vpop.f32.mrb[0].mxu0
      %v3075 = vpop.f32.mrb[0].mxu0
      %v3076 = vadd.f32 0.0, %v3075
      %v3077 = vpop.f32.mrb[0].mxu0
      %3078 = vmatprep.mubr.bf16.mxu0 0
      %3079 = vmatmul.mubr.bf16.gmra.mrb[0].mxu0 %v2926
      %v3080 = vpop.f32.mrb[0].mxu0
      %v3081 = vadd.f32 0.0, %v3080
      %v3082 = vpop.f32.mrb[0].mxu0
      %v3083 = vpop.f32.mrb[0].mxu0
      %v3084 = vadd.f32 0.0, %v3083
      %v3085 = vpop.f32.mrb[0].mxu0
      %3086 = vmatprep.mubr.bf16.mxu0 0
      %3087 = vmatmul.mubr.bf16.gmra.mrb[0].mxu0 %v2929
      %v3088 = vpop.f32.mrb[0].mxu0
      %v3089 = vadd.f32 0.0, %v3088
      %v3090 = vpop.f32.mrb[0].mxu0
      %v3091 = vpop.f32.mrb[0].mxu0
      %v3092 = vadd.f32 0.0, %v3091
      %v3093 = vpop.f32.mrb[0].mxu0
      %3094 = vdwg.mxu0
      %v3095 = vadd.f32 %v2801, %v2969
      %v3096 = vadd.f32 %v2802, %v2972
      %v3097 = vadd.f32 %v2803, %v2977
      %v3098 = vadd.f32 %v2804, %v2980
      %v3099 = vadd.f32 %v2805, %v2985
      %v3100 = vadd.f32 %v2806, %v2988
      %v3101 = vadd.f32 %v2807, %v2993
      %v3102 = vadd.f32 %v2808, %v2996
      %v3103 = vadd.f32 %v2809, %v3001
      %v3104 = vadd.f32 %v2810, %v3004
      %v3105 = vadd.f32 %v2811, %v3009
      %v3106 = vadd.f32 %v2812, %v3012
      %v3107 = vadd.f32 %v2813, %v3017
      %v3108 = vadd.f32 %v2814, %v3020
      %v3109 = vadd.f32 %v2815, %v3025
      %v3110 = vadd.f32 %v2816, %v3028
      %v3111 = vadd.f32 %v2817, %v3033
      %v3112 = vadd.f32 %v2818, %v3036
      %v3113 = vadd.f32 %v2819, %v3041
      %v3114 = vadd.f32 %v2820, %v3044
      %v3115 = vadd.f32 %v2821, %v3049
      %v3116 = vadd.f32 %v2822, %v3052
      %v3117 = vadd.f32 %v2823, %v3057
      %v3118 = vadd.f32 %v2824, %v3060
      %v3119 = vadd.f32 %v2825, %v3065
      %v3120 = vadd.f32 %v2826, %v3068
      %v3121 = vadd.f32 %v2827, %v3073
      %v3122 = vadd.f32 %v2828, %v3076
      %v3123 = vadd.f32 %v2829, %v3081
      %v3124 = vadd.f32 %v2830, %v3084
      %v3125 = vadd.f32 %v2831, %v3089
      %v3126 = vadd.f32 %v2832, %v3092
      %3127 = vst [vmem:[%s224] sm:$0xff] %v3095
      %3128 = vst [vmem:[%s224 + $0x8] sm:$0xff] %v3096
      %3129 = vst [vmem:[%s224 + $0x10] sm:$0xff] %v3097
      %3130 = vst [vmem:[%s224 + $0x18] sm:$0xff] %v3098
      %3131 = vst [vmem:[%s224 + $0x20] sm:$0xff] %v3099
      %3132 = vst [vmem:[%s224 + $0x28] sm:$0xff] %v3100
      %3133 = vst [vmem:[%s224 + $0x30] sm:$0xff] %v3101
      %3134 = vst [vmem:[%s224 + $0x38] sm:$0xff] %v3102
      %3135 = vst [vmem:[%s224 + $0x40] sm:$0xff] %v3103
      %3136 = vst [vmem:[%s224 + $0x48] sm:$0xff] %v3104
      %3137 = vst [vmem:[%s224 + $0x50] sm:$0xff] %v3105
      %3138 = vst [vmem:[%s224 + $0x58] sm:$0xff] %v3106
      %3139 = vst [vmem:[%s224 + $0x60] sm:$0xff] %v3107
      %3140 = vst [vmem:[%s224 + $0x68] sm:$0xff] %v3108
      %3141 = vst [vmem:[%s224 + $0x70] sm:$0xff] %v3109
      %3142 = vst [vmem:[%s224 + $0x78] sm:$0xff] %v3110
      %3143 = vst [vmem:[%s224 + $0x80] sm:$0xff] %v3111
      %3144 = vst [vmem:[%s224 + $0x88] sm:$0xff] %v3112
      %3145 = vst [vmem:[%s224 + $0x90] sm:$0xff] %v3113
      %3146 = vst [vmem:[%s224 + $0x98] sm:$0xff] %v3114
      %3147 = vst [vmem:[%s224 + $0xa0] sm:$0xff] %v3115
      %3148 = vst [vmem:[%s224 + $0xa8] sm:$0xff] %v3116
      %3149 = vst [vmem:[%s224 + $0xb0] sm:$0xff] %v3117
      %3150 = vst [vmem:[%s224 + $0xb8] sm:$0xff] %v3118
      %3151 = vst [vmem:[%s224 + $0xc0] sm:$0xff] %v3119
      %3152 = vst [vmem:[%s224 + $0xc8] sm:$0xff] %v3120
      %3153 = vst [vmem:[%s224 + $0xd0] sm:$0xff] %v3121
      %3154 = vst [vmem:[%s224 + $0xd8] sm:$0xff] %v3122
      %3155 = vst [vmem:[%s224 + $0xe0] sm:$0xff] %v3123
      %3156 = vst [vmem:[%s224 + $0xe8] sm:$0xff] %v3124
      %3157 = vst [vmem:[%s224 + $0xf0] sm:$0xff] %v3125
      %3158 = vst [vmem:[%s224 + $0xf8] sm:$0xff] %v3126
      %v3159 = vadd.f32 %v3095, %v3096
      %v3160 = vadd.f32 %v3159, %v3097
      %v3161 = vadd.f32 %v3160, %v3098
      %v3162 = vadd.f32 %v3161, %v3099
      %v3163 = vadd.f32 %v3162, %v3100
      %v3164 = vadd.f32 %v3163, %v3101
      %v3165 = vadd.f32 %v3164, %v3102
      %v3166 = vadd.f32 %v3165, %v3103
      %v3167 = vadd.f32 %v3166, %v3104
      %v3168 = vadd.f32 %v3167, %v3105
      %v3169 = vadd.f32 %v3168, %v3106
      %v3170 = vadd.f32 %v3169, %v3107
      %v3171 = vadd.f32 %v3170, %v3108
      %v3172 = vadd.f32 %v3171, %v3109
      %v3173 = vadd.f32 %v3172, %v3110
      %v3174 = vadd.f32 %v3173, %v3111
      %v3175 = vadd.f32 %v3174, %v3112
      %v3176 = vadd.f32 %v3175, %v3113
      %v3177 = vadd.f32 %v3176, %v3114
      %v3178 = vadd.f32 %v3177, %v3115
      %v3179 = vadd.f32 %v3178, %v3116
      %v3180 = vadd.f32 %v3179, %v3117
      %v3181 = vadd.f32 %v3180, %v3118
      %v3182 = vadd.f32 %v3181, %v3119
      %v3183 = vadd.f32 %v3182, %v3120
      %v3184 = vadd.f32 %v3183, %v3121
      %v3185 = vadd.f32 %v3184, %v3122
      %v3186 = vadd.f32 %v3185, %v3123
      %v3187 = vadd.f32 %v3186, %v3124
      %v3188 = vadd.f32 %v3187, %v3125
      %v3189 = vadd.f32 %v3188, %v3126
      %v3190 = vrot.slane %v3189, 4
      %v3191 = vadd.f32 %v3189, %v3190
      %v3192 = vrot.slane %v3191, 2
      %v3193 = vadd.f32 %v3191, %v3192
      %v3194 = vrot.slane %v3193, 1
      %v3195 = vadd.f32 %v3193, %v3194
      %3196 = vst [vmem:[%s228] sm:$0x1] %v3195
      %v3197 = vmul.f32 %v3095, %v3095
      %v3198 = vmul.f32 %v3096, %v3096
      %v3199 = vmul.f32 %v3097, %v3097
      %v3200 = vmul.f32 %v3098, %v3098
      %v3201 = vmul.f32 %v3099, %v3099
      %v3202 = vmul.f32 %v3100, %v3100
      %v3203 = vmul.f32 %v3101, %v3101
      %v3204 = vmul.f32 %v3102, %v3102
      %v3205 = vmul.f32 %v3103, %v3103
      %v3206 = vmul.f32 %v3104, %v3104
      %v3207 = vmul.f32 %v3105, %v3105
      %v3208 = vmul.f32 %v3106, %v3106
      %v3209 = vmul.f32 %v3107, %v3107
      %v3210 = vmul.f32 %v3108, %v3108
      %v3211 = vmul.f32 %v3109, %v3109
      %v3212 = vmul.f32 %v3110, %v3110
      %v3213 = vmul.f32 %v3111, %v3111
      %v3214 = vmul.f32 %v3112, %v3112
      %v3215 = vmul.f32 %v3113, %v3113
      %v3216 = vmul.f32 %v3114, %v3114
      %v3217 = vmul.f32 %v3115, %v3115
      %v3218 = vmul.f32 %v3116, %v3116
      %v3219 = vmul.f32 %v3117, %v3117
      %v3220 = vmul.f32 %v3118, %v3118
      %v3221 = vmul.f32 %v3119, %v3119
      %v3222 = vmul.f32 %v3120, %v3120
      %v3223 = vmul.f32 %v3121, %v3121
      %v3224 = vmul.f32 %v3122, %v3122
      %v3225 = vmul.f32 %v3123, %v3123
      %v3226 = vmul.f32 %v3124, %v3124
      %v3227 = vmul.f32 %v3125, %v3125
      %v3228 = vmul.f32 %v3126, %v3126
      %v3229 = vadd.f32 %v3197, %v3198
      %v3230 = vadd.f32 %v3229, %v3199
      %v3231 = vadd.f32 %v3230, %v3200
      %v3232 = vadd.f32 %v3231, %v3201
      %v3233 = vadd.f32 %v3232, %v3202
      %v3234 = vadd.f32 %v3233, %v3203
      %v3235 = vadd.f32 %v3234, %v3204
      %v3236 = vadd.f32 %v3235, %v3205
      %v3237 = vadd.f32 %v3236, %v3206
      %v3238 = vadd.f32 %v3237, %v3207
      %v3239 = vadd.f32 %v3238, %v3208
      %v3240 = vadd.f32 %v3239, %v3209
      %v3241 = vadd.f32 %v3240, %v3210
      %v3242 = vadd.f32 %v3241, %v3211
      %v3243 = vadd.f32 %v3242, %v3212
      %v3244 = vadd.f32 %v3243, %v3213
      %v3245 = vadd.f32 %v3244, %v3214
      %v3246 = vadd.f32 %v3245, %v3215
      %v3247 = vadd.f32 %v3246, %v3216
      %v3248 = vadd.f32 %v3247, %v3217
      %v3249 = vadd.f32 %v3248, %v3218
      %v3250 = vadd.f32 %v3249, %v3219
      %v3251 = vadd.f32 %v3250, %v3220
      %v3252 = vadd.f32 %v3251, %v3221
      %v3253 = vadd.f32 %v3252, %v3222
      %v3254 = vadd.f32 %v3253, %v3223
      %v3255 = vadd.f32 %v3254, %v3224
      %v3256 = vadd.f32 %v3255, %v3225
      %v3257 = vadd.f32 %v3256, %v3226
      %v3258 = vadd.f32 %v3257, %v3227
      %v3259 = vadd.f32 %v3258, %v3228
      %v3260 = vrot.slane %v3259, 4
      %v3261 = vadd.f32 %v3259, %v3260
      %v3262 = vrot.slane %v3261, 2
      %v3263 = vadd.f32 %v3261, %v3262
      %v3264 = vrot.slane %v3263, 1
      %v3265 = vadd.f32 %v3263, %v3264
      %3266 = vst [vmem:[%s228 + $0x1] sm:$0x1] %v3265
      %p3267 = scmp.lt.s32.totalorder %s16, 1
      %s3268 = scalar_select %p3267, %s16, 1
      %s3269 = smul.addr %s3268, 32
      %s3270 = smul.addr %s3269, 8
      %s3271 = scalar_lea.vmem %s3, %s3270
      %p3272 = scmp.lt.s32.totalorder %s16, 1
      %s3273 = scalar_select %p3272, %s16, 1
      %s3274 = smul.addr %s3273, 2
      %s3275 = scalar_lea.vmem %s4, %s3274
      // Predicated region
      $region33: #{up_forward.7} parent=31 // pred_check
        %p3276 = pneg %p107
      $region34: #{up_forward.7} parent=31 // pred_check_branch
        %3278 = sbr.rel (%p3276) target = $region36
      $region35: #{up_forward.7} parent=31 // pred_region
        _
      $region36: #{up_forward.7} parent=31 // pred_fallthru
        _
      // Predicated region
      $region37: #{up_forward.7} parent=31 // pred_check
        %p3279 = pneg %p133
      $region38: #{up_forward.7} parent=31 // pred_check_branch
        %3281 = sbr.rel (%p3279) target = $region40
      $region39: #{up_forward.7} parent=31 // pred_region
        _
      $region40: #{up_forward.7} parent=31 // pred_fallthru
        _
    $region32: #{up_forward.7} parent=5 // pred_fallthru
      _
    %p3282 = scmp.le.s32.totalorder 2, %s11
    // Predicated region
    $region41: #{up_forward.7} parent=5 // pred_check
      %p3283 = pneg %p3282
    $region42: #{up_forward.7} parent=5 // pred_check_branch
      %3285 = sbr.rel (%p3283) target = $region44
    $region43: #{up_forward.7} parent=5 // pred_region
      %s3286 = ssub.s32 %s11, 2
      // Predicated region
      $region45: #{up_forward.7} parent=43 // pred_check
        %p3287 = pneg %p113
      $region46: #{up_forward.7} parent=43 // pred_check_branch
        %3289 = sbr.rel (%p3287) target = $region48
      $region47: #{up_forward.7} parent=43 // pred_region
        %p3290 = scmp.lt.s32.totalorder %s17, 1
        %s3291 = scalar_select %p3290, %s17, 1
        %s3292 = smul.addr %s3291, 32
        %s3293 = smul.addr %s3292, 8
        %s3294 = scalar_lea.vmem %s3, %s3293
      $region48: #{up_forward.7} parent=43 // pred_fallthru
        _
      // Predicated region
      $region49: #{up_forward.7} parent=43 // pred_check
        %p3295 = pneg %p139
      $region50: #{up_forward.7} parent=43 // pred_check_branch
        %3297 = sbr.rel (%p3295) target = $region52
      $region51: #{up_forward.7} parent=43 // pred_region
        %p3298 = scmp.lt.s32.totalorder %s17, 1
        %s3299 = scalar_select %p3298, %s17, 1
        %s3300 = smul.addr %s3299, 2
        %s3301 = scalar_lea.vmem %s4, %s3300
      $region52: #{up_forward.7} parent=43 // pred_fallthru
        _
    $region44: #{up_forward.7} parent=5 // pred_fallthru
      _
  $region6: #{up_forward.7} parent=0 // loop_footer
    %s15 = sadd.s32 1, %s11
  $region7: #{up_forward.7} parent=0 // loop_footer_branch
    %10 = sbr.rel target = $region3
  $region8: #{up_forward.7} parent=0 // loop_exit
    _

// kernel: up_forward.8
$region0: #{up_forward.8}
  #allocation0 [shape = 'u32[]', space=smem, size = 0x4, offset = 0x4, fixed_abs, tag = 'smem constant byte address 0x4 - core index']
  #allocation1 [shape = 'u32[144,128]{1,0:T(1,128)}', space=vmem, size = 0x12000, scoped, tag = 'internal scratch']
  #allocation2 [shape = 'f32[18,18,128]{2,1,0:T(8,128)}', space=vmem, size = 0x36000, scoped, tag = 'scratch operand']
  %s0 = inlined_call_operand.vmem [shape: f32[2,16,16,128], index: 0, kind: input, shape index: {}]
  %s1 = inlined_call_operand.vmem [shape: f32[1,128], index: 1, kind: input, shape index: {}]
  %s2 = inlined_call_operand.vmem [shape: f32[1,128], index: 2, kind: input, shape index: {}]
  %s3 = inlined_call_operand.vmem [shape: bf16[9,128,128], index: 3, kind: input, shape index: {}]
  %s4 = inlined_call_operand.vmem [shape: f32[2,16,16,128], index: 4, kind: output, shape index: {0}]
  %s5 = inlined_call_operand.vmem [shape: f32[2,2,128], index: 5, kind: output, shape index: {1}]
  %6 = xla_tuple %s4, %s5
  %s7 = sld [smem:[#allocation0]]
  $region57: #{up_forward.8} parent=0
    _
  %s9 = ssub.s32 1, %s7
  %s10 = scalar_select 0, %s9, %s7
  loop: start=0, step=1, limit=4
  $region2: #{up_forward.8} parent=0 // loop_pre_header
    _
  $region3: #{up_forward.8} parent=0 // loop_header
    %s12 = sphi 0, %s16
    %p13 = scmp.ge.s32.totalorder %s12, 4
    %s22 = sphi 0, %s24
    %s25 = sphi 0, %s22
    %s26 = sphi 0, %s25
    %s42 = sphi 0, %s26
    %s46 = sphi 0, %s46
    %s48 = sphi 0, %s46
    %s49 = sphi 0, %s48
    %s63 = sphi 0, %s49
    %s67 = sphi 0, %s67
    %s69 = sphi 0, %s67
    %s70 = sphi 0, %s69
    %s84 = sphi 0, %s70
    %s88 = sphi 0, %s88
    %s90 = sphi 0, %s88
    %s91 = sphi 0, %s90
    %s105 = sphi 0, %s91
    %s111 = sphi 0, %s113
    %s114 = sphi 0, %s111
    %s115 = sphi 0, %s114
    %s131 = sphi 0, %s115
    %s137 = sphi 0, %s139
    %s140 = sphi 0, %s137
    %s141 = sphi 0, %s140
    %s157 = sphi 0, %s141
  $region4: #{up_forward.8} parent=0 // loop_header_branch
    %15 = sbr.rel (%p13) target = $region8
  $region5: #{up_forward.8} parent=0 // loop_body
    %s17 = ssub.s32 %s12, 1
    %s18 = ssub.s32 %s12, 2
    %s19 = sadd.s32 %s12, 1
    %s20 = ssub.s32 %s12, %s19
    %p21 = scmp.eq.s32.totalorder %s20, 0
    %s23 = sadd.s32 %s22, 1
    %s24 = scalar_select %p21, %s22, %s23
    %p27 = pneg %p21
    %p28 = scmp.eq.s32.totalorder %s12, 1
    %p29 = por %p27, %p28
    %p30 = scmp.ne.s32.totalorder %s22, %s25
    %p31 = scmp.eq.s32.totalorder %s12, 0
    %p32 = por %p30, %p31
    %p33 = scmp.ne.s32.totalorder %s22, %s25
    %p34 = scmp.eq.s32.totalorder %s17, 1
    %p35 = por %p33, %p34
    %p36 = scmp.ne.s32.totalorder %s25, %s26
    %p37 = scmp.eq.s32.totalorder %s17, 0
    %p38 = por %p36, %p37
    %p39 = scmp.ne.s32.totalorder %s25, %s26
    %p40 = scmp.eq.s32.totalorder %s18, 1
    %p41 = por %p39, %p40
    %p43 = scmp.ne.s32.totalorder %s26, %s42
    %p44 = scmp.eq.s32.totalorder %s18, 0
    %p45 = por %p43, %p44
    %s47 = sadd.s32 %s46, 1
    %p50 = scmp.eq.s32.totalorder %s12, 1
    %p51 = scmp.ne.s32.totalorder %s46, %s48
    %p52 = scmp.eq.s32.totalorder %s12, 0
    %p53 = por %p51, %p52
    %p54 = scmp.ne.s32.totalorder %s46, %s48
    %p55 = scmp.eq.s32.totalorder %s17, 1
    %p56 = por %p54, %p55
    %p57 = scmp.ne.s32.totalorder %s48, %s49
    %p58 = scmp.eq.s32.totalorder %s17, 0
    %p59 = por %p57, %p58
    %p60 = scmp.ne.s32.totalorder %s48, %s49
    %p61 = scmp.eq.s32.totalorder %s18, 1
    %p62 = por %p60, %p61
    %p64 = scmp.ne.s32.totalorder %s49, %s63
    %p65 = scmp.eq.s32.totalorder %s18, 0
    %p66 = por %p64, %p65
    %s68 = sadd.s32 %s67, 1
    %p71 = scmp.eq.s32.totalorder %s12, 1
    %p72 = scmp.ne.s32.totalorder %s67, %s69
    %p73 = scmp.eq.s32.totalorder %s12, 0
    %p74 = por %p72, %p73
    %p75 = scmp.ne.s32.totalorder %s67, %s69
    %p76 = scmp.eq.s32.totalorder %s17, 1
    %p77 = por %p75, %p76
    %p78 = scmp.ne.s32.totalorder %s69, %s70
    %p79 = scmp.eq.s32.totalorder %s17, 0
    %p80 = por %p78, %p79
    %p81 = scmp.ne.s32.totalorder %s69, %s70
    %p82 = scmp.eq.s32.totalorder %s18, 1
    %p83 = por %p81, %p82
    %p85 = scmp.ne.s32.totalorder %s70, %s84
    %p86 = scmp.eq.s32.totalorder %s18, 0
    %p87 = por %p85, %p86
    %s89 = sadd.s32 %s88, 1
    %p92 = scmp.eq.s32.totalorder %s12, 1
    %p93 = scmp.ne.s32.totalorder %s88, %s90
    %p94 = scmp.eq.s32.totalorder %s12, 0
    %p95 = por %p93, %p94
    %p96 = scmp.ne.s32.totalorder %s88, %s90
    %p97 = scmp.eq.s32.totalorder %s17, 1
    %p98 = por %p96, %p97
    %p99 = scmp.ne.s32.totalorder %s90, %s91
    %p100 = scmp.eq.s32.totalorder %s17, 0
    %p101 = por %p99, %p100
    %p102 = scmp.ne.s32.totalorder %s90, %s91
    %p103 = scmp.eq.s32.totalorder %s18, 1
    %p104 = por %p102, %p103
    %p106 = scmp.ne.s32.totalorder %s91, %s105
    %p107 = scmp.eq.s32.totalorder %s18, 0
    %p108 = por %p106, %p107
    %s109 = ssub.s32 %s12, %s19
    %p110 = scmp.eq.s32.totalorder %s109, 0
    %s112 = sadd.s32 %s111, 1
    %s113 = scalar_select %p110, %s111, %s112
    %p116 = pneg %p110
    %p117 = scmp.eq.s32.totalorder %s12, 1
    %p118 = por %p116, %p117
    %p119 = scmp.ne.s32.totalorder %s111, %s114
    %p120 = scmp.eq.s32.totalorder %s12, 0
    %p121 = por %p119, %p120
    %p122 = scmp.ne.s32.totalorder %s111, %s114
    %p123 = scmp.eq.s32.totalorder %s17, 1
    %p124 = por %p122, %p123
    %p125 = scmp.ne.s32.totalorder %s114, %s115
    %p126 = scmp.eq.s32.totalorder %s17, 0
    %p127 = por %p125, %p126
    %p128 = scmp.ne.s32.totalorder %s114, %s115
    %p129 = scmp.eq.s32.totalorder %s18, 1
    %p130 = por %p128, %p129
    %p132 = scmp.ne.s32.totalorder %s115, %s131
    %p133 = scmp.eq.s32.totalorder %s18, 0
    %p134 = por %p132, %p133
    %s135 = ssub.s32 %s12, %s19
    %p136 = scmp.eq.s32.totalorder %s135, 0
    %s138 = sadd.s32 %s137, 1
    %s139 = scalar_select %p136, %s137, %s138
    %p142 = pneg %p136
    %p143 = scmp.eq.s32.totalorder %s12, 1
    %p144 = por %p142, %p143
    %p145 = scmp.ne.s32.totalorder %s137, %s140
    %p146 = scmp.eq.s32.totalorder %s12, 0
    %p147 = por %p145, %p146
    %p148 = scmp.ne.s32.totalorder %s137, %s140
    %p149 = scmp.eq.s32.totalorder %s17, 1
    %p150 = por %p148, %p149
    %p151 = scmp.ne.s32.totalorder %s140, %s141
    %p152 = scmp.eq.s32.totalorder %s17, 0
    %p153 = por %p151, %p152
    %p154 = scmp.ne.s32.totalorder %s140, %s141
    %p155 = scmp.eq.s32.totalorder %s18, 1
    %p156 = por %p154, %p155
    %p158 = scmp.ne.s32.totalorder %s141, %s157
    %p159 = scmp.eq.s32.totalorder %s18, 0
    %p160 = por %p158, %p159
    %p161 = scmp.le.s32.totalorder 1, %s12
    %p162 = scmp.lt.s32.totalorder %s12, 3
    %p163 = pnand %p161, %p162
    %p164 = pneg %p163
    // Predicated region
    $region9: #{up_forward.8} parent=5 // pred_check
      _
    $region10: #{up_forward.8} parent=5 // pred_check_branch
      %166 = sbr.rel (%p163) target = $region12
    $region11: #{up_forward.8} parent=5 // pred_region
      %s167 = ssub.s32 %s12, 1
      // Predicated region
      $region13: #{up_forward.8} parent=11 // pred_check
        %p168 = pneg %p59
      $region14: #{up_forward.8} parent=11 // pred_check_branch
        %170 = sbr.rel (%p168) target = $region16
      $region15: #{up_forward.8} parent=11 // pred_region
        _
      $region16: #{up_forward.8} parent=11 // pred_fallthru
        _
      // Predicated region
      $region17: #{up_forward.8} parent=11 // pred_check
        %p171 = pneg %p80
      $region18: #{up_forward.8} parent=11 // pred_check_branch
        %173 = sbr.rel (%p171) target = $region20
      $region19: #{up_forward.8} parent=11 // pred_region
        _
      $region20: #{up_forward.8} parent=11 // pred_fallthru
        _
      // Predicated region
      $region21: #{up_forward.8} parent=11 // pred_check
        %p174 = pneg %p101
      $region22: #{up_forward.8} parent=11 // pred_check_branch
        %176 = sbr.rel (%p174) target = $region24
      $region23: #{up_forward.8} parent=11 // pred_region
        _
      $region24: #{up_forward.8} parent=11 // pred_fallthru
        _
    $region12: #{up_forward.8} parent=5 // pred_fallthru
      _
    %p177 = scmp.lt.s32.totalorder %s12, 2
    // Predicated region
    $region25: #{up_forward.8} parent=5 // pred_check
      %p178 = pneg %p177
    $region26: #{up_forward.8} parent=5 // pred_check_branch
      %180 = sbr.rel (%p178) target = $region28
    $region27: #{up_forward.8} parent=5 // pred_region
      // Predicated region
      $region29: #{up_forward.8} parent=27 // pred_check
        %p181 = pneg %p32
      $region30: #{up_forward.8} parent=27 // pred_check_branch
        %183 = sbr.rel (%p181) target = $region32
      $region31: #{up_forward.8} parent=27 // pred_region
        %p184 = scmp.lt.s32.totalorder %s12, 1
        %s185 = scalar_select %p184, %s12, 1
        %s186 = smul.addr %s185, 32
        %s187 = smul.addr %s186, 8
        %s188 = scalar_lea.vmem %s0, %s187
      $region32: #{up_forward.8} parent=27 // pred_fallthru
        _
    $region28: #{up_forward.8} parent=5 // pred_fallthru
      _
    %p189 = scmp.le.s32.totalorder 1, %s12
    %p190 = scmp.lt.s32.totalorder %s12, 3
    %p191 = pnand %p189, %p190
    %p192 = pneg %p191
    // Predicated region
    $region33: #{up_forward.8} parent=5 // pred_check
      _
    $region34: #{up_forward.8} parent=5 // pred_check_branch
      %194 = sbr.rel (%p191) target = $region36
    $region35: #{up_forward.8} parent=5 // pred_region
      %s195 = ssub.s32 %s12, 1
      %p196 = scmp.lt.s32.totalorder %s17, 1
      %s197 = scalar_select %p196, %s17, 1
      %s198 = smul.addr %s197, 32
      %s199 = smul.addr %s198, 8
      %s200 = scalar_lea.vmem %s0, %s199
      %p201 = pneg %p38
      %p202 = pneg %p35
      %p203 = pneg %p59
      %p204 = pneg %p56
      %p205 = pneg %p80
      %p206 = pneg %p77
      %p207 = pneg %p101
      %p208 = pneg %p98
      %p209 = pneg %p127
      %p210 = pneg %p124
      %p211 = scmp.lt.s32.totalorder %s17, 1
      %s212 = scalar_select %p211, %s17, 1
      %s213 = smul.addr %s212, 32
      %s214 = smul.addr %s213, 8
      %s215 = scalar_lea.vmem %s4, %s214
      %p216 = pneg %p153
      %p217 = pneg %p150
      %p218 = scmp.lt.s32.totalorder %s17, 1
      %s219 = scalar_select %p218, %s17, 1
      %s220 = smul.addr %s219, 2
      %s221 = scalar_lea.vmem %s5, %s220
      %p222 = scmp.lt.s32.totalorder %s17, 1
      %s223 = scalar_select %p222, %s17, 1
      %s224 = smul.addr %s223, 32
      %s225 = smul.addr %s224, 8
      %s226 = scalar_lea.vmem %s0, %s225
      %p227 = scmp.lt.s32.totalorder %s17, 1
      %s228 = scalar_select %p227, %s17, 1
      %s229 = smul.addr %s228, 32
      %s230 = smul.addr %s229, 8
      %s231 = scalar_lea.vmem %s4, %s230
      %p232 = scmp.lt.s32.totalorder %s17, 1
      %s233 = scalar_select %p232, %s17, 1
      %s234 = smul.addr %s233, 2
      %s235 = scalar_lea.vmem %s5, %s234
      %v237 = vld [vmem:[%s226] sm:$0xff]
      %v238 = vld [vmem:[%s226 + $0x8] sm:$0xff]
      %v239 = vld [vmem:[%s226 + $0x10] sm:$0xff]
      %v240 = vld [vmem:[%s226 + $0x18] sm:$0xff]
      %v241 = vld [vmem:[%s226 + $0x20] sm:$0xff]
      %v242 = vld [vmem:[%s226 + $0x28] sm:$0xff]
      %v243 = vld [vmem:[%s226 + $0x30] sm:$0xff]
      %v244 = vld [vmem:[%s226 + $0x38] sm:$0xff]
      %v245 = vld [vmem:[%s226 + $0x40] sm:$0xff]
      %v246 = vld [vmem:[%s226 + $0x48] sm:$0xff]
      %v247 = vld [vmem:[%s226 + $0x50] sm:$0xff]
      %v248 = vld [vmem:[%s226 + $0x58] sm:$0xff]
      %v249 = vld [vmem:[%s226 + $0x60] sm:$0xff]
      %v250 = vld [vmem:[%s226 + $0x68] sm:$0xff]
      %v251 = vld [vmem:[%s226 + $0x70] sm:$0xff]
      %v252 = vld [vmem:[%s226 + $0x78] sm:$0xff]
      %v253 = vld [vmem:[%s226 + $0x80] sm:$0xff]
      %v254 = vld [vmem:[%s226 + $0x88] sm:$0xff]
      %v255 = vld [vmem:[%s226 + $0x90] sm:$0xff]
      %v256 = vld [vmem:[%s226 + $0x98] sm:$0xff]
      %v257 = vld [vmem:[%s226 + $0xa0] sm:$0xff]
      %v258 = vld [vmem:[%s226 + $0xa8] sm:$0xff]
      %v259 = vld [vmem:[%s226 + $0xb0] sm:$0xff]
      %v260 = vld [vmem:[%s226 + $0xb8] sm:$0xff]
      %v261 = vld [vmem:[%s226 + $0xc0] sm:$0xff]
      %v262 = vld [vmem:[%s226 + $0xc8] sm:$0xff]
      %v263 = vld [vmem:[%s226 + $0xd0] sm:$0xff]
      %v264 = vld [vmem:[%s226 + $0xd8] sm:$0xff]
      %v265 = vld [vmem:[%s226 + $0xe0] sm:$0xff]
      %v266 = vld [vmem:[%s226 + $0xe8] sm:$0xff]
      %v267 = vld [vmem:[%s226 + $0xf0] sm:$0xff]
      %v268 = vld [vmem:[%s226 + $0xf8] sm:$0xff]
      %v269 = vld [vmem:[%s1] sm:$0x1]
      %v271 = vlaneseq
      %v272 = vshrl.u32 %v271, 7
      %v273 = vsub.s32 0, %v272
      %v274 = vrot.slane %v269, %v273
      %v276 = vmul.f32 %v237, %v274
      %v277 = vmul.f32 %v238, %v274
      %v278 = vmul.f32 %v239, %v274
      %v279 = vmul.f32 %v240, %v274
      %v280 = vmul.f32 %v241, %v274
      %v281 = vmul.f32 %v242, %v274
      %v282 = vmul.f32 %v243, %v274
      %v283 = vmul.f32 %v244, %v274
      %v284 = vmul.f32 %v245, %v274
      %v285 = vmul.f32 %v246, %v274
      %v286 = vmul.f32 %v247, %v274
      %v287 = vmul.f32 %v248, %v274
      %v288 = vmul.f32 %v249, %v274
      %v289 = vmul.f32 %v250, %v274
      %v290 = vmul.f32 %v251, %v274
      %v291 = vmul.f32 %v252, %v274
      %v292 = vmul.f32 %v253, %v274
      %v293 = vmul.f32 %v254, %v274
      %v294 = vmul.f32 %v255, %v274
      %v295 = vmul.f32 %v256, %v274
      %v296 = vmul.f32 %v257, %v274
      %v297 = vmul.f32 %v258, %v274
      %v298 = vmul.f32 %v259, %v274
      %v299 = vmul.f32 %v260, %v274
      %v300 = vmul.f32 %v261, %v274
      %v301 = vmul.f32 %v262, %v274
      %v302 = vmul.f32 %v263, %v274
      %v303 = vmul.f32 %v264, %v274
      %v304 = vmul.f32 %v265, %v274
      %v305 = vmul.f32 %v266, %v274
      %v306 = vmul.f32 %v267, %v274
      %v307 = vmul.f32 %v268, %v274
      %v308 = vld [vmem:[%s2] sm:$0x1]
      %v310 = vlaneseq
      %v311 = vshrl.u32 %v310, 7
      %v312 = vsub.s32 0, %v311
      %v313 = vrot.slane %v308, %v312
      %v315 = vadd.f32 %v276, %v313
      %v316 = vadd.f32 %v277, %v313
      %v317 = vadd.f32 %v278, %v313
      %v318 = vadd.f32 %v279, %v313
      %v319 = vadd.f32 %v280, %v313
      %v320 = vadd.f32 %v281, %v313
      %v321 = vadd.f32 %v282, %v313
      %v322 = vadd.f32 %v283, %v313
      %v323 = vadd.f32 %v284, %v313
      %v324 = vadd.f32 %v285, %v313
      %v325 = vadd.f32 %v286, %v313
      %v326 = vadd.f32 %v287, %v313
      %v327 = vadd.f32 %v288, %v313
      %v328 = vadd.f32 %v289, %v313
      %v329 = vadd.f32 %v290, %v313
      %v330 = vadd.f32 %v291, %v313
      %v331 = vadd.f32 %v292, %v313
      %v332 = vadd.f32 %v293, %v313
      %v333 = vadd.f32 %v294, %v313
      %v334 = vadd.f32 %v295, %v313
      %v335 = vadd.f32 %v296, %v313
      %v336 = vadd.f32 %v297, %v313
      %v337 = vadd.f32 %v298, %v313
      %v338 = vadd.f32 %v299, %v313
      %v339 = vadd.f32 %v300, %v313
      %v340 = vadd.f32 %v301, %v313
      %v341 = vadd.f32 %v302, %v313
      %v342 = vadd.f32 %v303, %v313
      %v343 = vadd.f32 %v304, %v313
      %v344 = vadd.f32 %v305, %v313
      %v345 = vadd.f32 %v306, %v313
      %v346 = vadd.f32 %v307, %v313
      %v347 = vmax.f32 %v315, 0.0
      %v348 = vmax.f32 %v316, 0.0
      %v349 = vmax.f32 %v317, 0.0
      %v350 = vmax.f32 %v318, 0.0
      %v351 = vmax.f32 %v319, 0.0
      %v352 = vmax.f32 %v320, 0.0
      %v353 = vmax.f32 %v321, 0.0
      %v354 = vmax.f32 %v322, 0.0
      %v355 = vmax.f32 %v323, 0.0
      %v356 = vmax.f32 %v324, 0.0
      %v357 = vmax.f32 %v325, 0.0
      %v358 = vmax.f32 %v326, 0.0
      %v359 = vmax.f32 %v327, 0.0
      %v360 = vmax.f32 %v328, 0.0
      %v361 = vmax.f32 %v329, 0.0
      %v362 = vmax.f32 %v330, 0.0
      %v363 = vmax.f32 %v331, 0.0
      %v364 = vmax.f32 %v332, 0.0
      %v365 = vmax.f32 %v333, 0.0
      %v366 = vmax.f32 %v334, 0.0
      %v367 = vmax.f32 %v335, 0.0
      %v368 = vmax.f32 %v336, 0.0
      %v369 = vmax.f32 %v337, 0.0
      %v370 = vmax.f32 %v338, 0.0
      %v371 = vmax.f32 %v339, 0.0
      %v372 = vmax.f32 %v340, 0.0
      %v373 = vmax.f32 %v341, 0.0
      %v374 = vmax.f32 %v342, 0.0
      %v375 = vmax.f32 %v343, 0.0
      %v376 = vmax.f32 %v344, 0.0
      %v377 = vmax.f32 %v345, 0.0
      %v378 = vmax.f32 %v346, 0.0
      %379 = vst [vmem:[#allocation2] sm:$0xff] 0.0
      %380 = vst [vmem:[#allocation2 + $0x8] sm:$0xff] 0.0
      %381 = vst [vmem:[#allocation2 + $0x10] sm:$0x3] 0.0
      %382 = vst [vmem:[#allocation2 + $0x18] sm:$0xff] 0.0
      %383 = vst [vmem:[#allocation2 + $0x20] sm:$0xff] 0.0
      %384 = vst [vmem:[#allocation2 + $0x28] sm:$0x3] 0.0
      %385 = vst [vmem:[#allocation2 + $0x30] sm:$0xff] 0.0
      %386 = vst [vmem:[#allocation2 + $0x38] sm:$0xff] 0.0
      %387 = vst [vmem:[#allocation2 + $0x40] sm:$0x3] 0.0
      %388 = vst [vmem:[#allocation2 + $0x48] sm:$0xff] 0.0
      %389 = vst [vmem:[#allocation2 + $0x50] sm:$0xff] 0.0
      %390 = vst [vmem:[#allocation2 + $0x58] sm:$0x3] 0.0
      %391 = vst [vmem:[#allocation2 + $0x60] sm:$0xff] 0.0
      %392 = vst [vmem:[#allocation2 + $0x68] sm:$0xff] 0.0
      %393 = vst [vmem:[#allocation2 + $0x70] sm:$0x3] 0.0
      %394 = vst [vmem:[#allocation2 + $0x78] sm:$0xff] 0.0
      %395 = vst [vmem:[#allocation2 + $0x80] sm:$0xff] 0.0
      %396 = vst [vmem:[#allocation2 + $0x88] sm:$0x3] 0.0
      %397 = vst [vmem:[#allocation2 + $0x90] sm:$0xff] 0.0
      %398 = vst [vmem:[#allocation2 + $0x98] sm:$0xff] 0.0
      %399 = vst [vmem:[#allocation2 + $0xa0] sm:$0x3] 0.0
      %400 = vst [vmem:[#allocation2 + $0xa8] sm:$0xff] 0.0
      %401 = vst [vmem:[#allocation2 + $0xb0] sm:$0xff] 0.0
      %402 = vst [vmem:[#allocation2 + $0xb8] sm:$0x3] 0.0
      %403 = vst [vmem:[#allocation2 + $0xc0] sm:$0xff] 0.0
      %404 = vst [vmem:[#allocation2 + $0xc8] sm:$0xff] 0.0
      %405 = vst [vmem:[#allocation2 + $0xd0] sm:$0x3] 0.0
      %406 = vst [vmem:[#allocation2 + $0xd8] sm:$0xff] 0.0
      %407 = vst [vmem:[#allocation2 + $0xe0] sm:$0xff] 0.0
      %408 = vst [vmem:[#allocation2 + $0xe8] sm:$0x3] 0.0
      %409 = vst [vmem:[#allocation2 + $0xf0] sm:$0xff] 0.0
      %410 = vst [vmem:[#allocation2 + $0xf8] sm:$0xff] 0.0
      %411 = vst [vmem:[#allocation2 + $0x100] sm:$0x3] 0.0
      %412 = vst [vmem:[#allocation2 + $0x108] sm:$0xff] 0.0
      %413 = vst [vmem:[#allocation2 + $0x110] sm:$0xff] 0.0
      %414 = vst [vmem:[#allocation2 + $0x118] sm:$0x3] 0.0
      %415 = vst [vmem:[#allocation2 + $0x120] sm:$0xff] 0.0
      %416 = vst [vmem:[#allocation2 + $0x128] sm:$0xff] 0.0
      %417 = vst [vmem:[#allocation2 + $0x130] sm:$0x3] 0.0
      %418 = vst [vmem:[#allocation2 + $0x138] sm:$0xff] 0.0
      %419 = vst [vmem:[#allocation2 + $0x140] sm:$0xff] 0.0
      %420 = vst [vmem:[#allocation2 + $0x148] sm:$0x3] 0.0
      %421 = vst [vmem:[#allocation2 + $0x150] sm:$0xff] 0.0
      %422 = vst [vmem:[#allocation2 + $0x158] sm:$0xff] 0.0
      %423 = vst [vmem:[#allocation2 + $0x160] sm:$0x3] 0.0
      %424 = vst [vmem:[#allocation2 + $0x168] sm:$0xff] 0.0
      %425 = vst [vmem:[#allocation2 + $0x170] sm:$0xff] 0.0
      %426 = vst [vmem:[#allocation2 + $0x178] sm:$0x3] 0.0
      %427 = vst [vmem:[#allocation2 + $0x180] sm:$0xff] 0.0
      %428 = vst [vmem:[#allocation2 + $0x188] sm:$0xff] 0.0
      %429 = vst [vmem:[#allocation2 + $0x190] sm:$0x3] 0.0
      %430 = vst [vmem:[#allocation2 + $0x198] sm:$0xff] 0.0
      %431 = vst [vmem:[#allocation2 + $0x1a0] sm:$0xff] 0.0
      %432 = vst [vmem:[#allocation2 + $0x1a8] sm:$0x3] 0.0
      %s433 = scalar_lea.vmem [#allocation2], 24
      %434 = vst [vmem:[%s433 + $0x1] sm:$0xff] %v347
      %435 = vst [vmem:[%s433 + $0x9] sm:$0xff] %v348
      %436 = vst [vmem:[%s433 + $0x19] sm:$0xff] %v349
      %437 = vst [vmem:[%s433 + $0x21] sm:$0xff] %v350
      %438 = vst [vmem:[%s433 + $0x31] sm:$0xff] %v351
      %439 = vst [vmem:[%s433 + $0x39] sm:$0xff] %v352
      %440 = vst [vmem:[%s433 + $0x49] sm:$0xff] %v353
      %441 = vst [vmem:[%s433 + $0x51] sm:$0xff] %v354
      %442 = vst [vmem:[%s433 + $0x61] sm:$0xff] %v355
      %443 = vst [vmem:[%s433 + $0x69] sm:$0xff] %v356
      %444 = vst [vmem:[%s433 + $0x79] sm:$0xff] %v357
      %445 = vst [vmem:[%s433 + $0x81] sm:$0xff] %v358
      %446 = vst [vmem:[%s433 + $0x91] sm:$0xff] %v359
      %447 = vst [vmem:[%s433 + $0x99] sm:$0xff] %v360
      %448 = vst [vmem:[%s433 + $0xa9] sm:$0xff] %v361
      %449 = vst [vmem:[%s433 + $0xb1] sm:$0xff] %v362
      %450 = vst [vmem:[%s433 + $0xc1] sm:$0xff] %v363
      %451 = vst [vmem:[%s433 + $0xc9] sm:$0xff] %v364
      %452 = vst [vmem:[%s433 + $0xd9] sm:$0xff] %v365
      %453 = vst [vmem:[%s433 + $0xe1] sm:$0xff] %v366
      %454 = vst [vmem:[%s433 + $0xf1] sm:$0xff] %v367
      %455 = vst [vmem:[%s433 + $0xf9] sm:$0xff] %v368
      %456 = vst [vmem:[%s433 + $0x109] sm:$0xff] %v369
      %457 = vst [vmem:[%s433 + $0x111] sm:$0xff] %v370
      %458 = vst [vmem:[%s433 + $0x121] sm:$0xff] %v371
      %459 = vst [vmem:[%s433 + $0x129] sm:$0xff] %v372
      %460 = vst [vmem:[%s433 + $0x139] sm:$0xff] %v373
      %461 = vst [vmem:[%s433 + $0x141] sm:$0xff] %v374
      %462 = vst [vmem:[%s433 + $0x151] sm:$0xff] %v375
      %463 = vst [vmem:[%s433 + $0x159] sm:$0xff] %v376
      %464 = vst [vmem:[%s433 + $0x169] sm:$0xff] %v377
      %465 = vst [vmem:[%s433 + $0x171] sm:$0xff] %v378
      %v466 = vld [vmem:[#allocation2] sm:$0xff]
      %v467 = vld [vmem:[#allocation2 + $0x8] sm:$0xff]
      %v468 = vld [vmem:[#allocation2 + $0x18] sm:$0xff]
      %v469 = vld [vmem:[#allocation2 + $0x20] sm:$0xff]
      %v470 = vld [vmem:[#allocation2 + $0x30] sm:$0xff]
      %v471 = vld [vmem:[#allocation2 + $0x38] sm:$0xff]
      %v472 = vld [vmem:[#allocation2 + $0x48] sm:$0xff]
      %v473 = vld [vmem:[#allocation2 + $0x50] sm:$0xff]
      %v474 = vld [vmem:[#allocation2 + $0x60] sm:$0xff]
      %v475 = vld [vmem:[#allocation2 + $0x68] sm:$0xff]
      %v476 = vld [vmem:[#allocation2 + $0x78] sm:$0xff]
      %v477 = vld [vmem:[#allocation2 + $0x80] sm:$0xff]
      %v478 = vld [vmem:[#allocation2 + $0x90] sm:$0xff]
      %v479 = vld [vmem:[#allocation2 + $0x98] sm:$0xff]
      %v480 = vld [vmem:[#allocation2 + $0xa8] sm:$0xff]
      %v481 = vld [vmem:[#allocation2 + $0xb0] sm:$0xff]
      %v482 = vld [vmem:[#allocation2 + $0xc0] sm:$0xff]
      %v483 = vld [vmem:[#allocation2 + $0xc8] sm:$0xff]
      %v484 = vld [vmem:[#allocation2 + $0xd8] sm:$0xff]
      %v485 = vld [vmem:[#allocation2 + $0xe0] sm:$0xff]
      %v486 = vld [vmem:[#allocation2 + $0xf0] sm:$0xff]
      %v487 = vld [vmem:[#allocation2 + $0xf8] sm:$0xff]
      %v488 = vld [vmem:[#allocation2 + $0x108] sm:$0xff]
      %v489 = vld [vmem:[#allocation2 + $0x110] sm:$0xff]
      %v490 = vld [vmem:[#allocation2 + $0x120] sm:$0xff]
      %v491 = vld [vmem:[#allocation2 + $0x128] sm:$0xff]
      %v492 = vld [vmem:[#allocation2 + $0x138] sm:$0xff]
      %v493 = vld [vmem:[#allocation2 + $0x140] sm:$0xff]
      %v494 = vld [vmem:[#allocation2 + $0x150] sm:$0xff]
      %v495 = vld [vmem:[#allocation2 + $0x158] sm:$0xff]
      %v496 = vld [vmem:[#allocation2 + $0x168] sm:$0xff]
      %v497 = vld [vmem:[#allocation2 + $0x170] sm:$0xff]
      %v498 = vpack.c.bf16 %v467, %v466
      %v499 = vpack.c.bf16 %v469, %v468
      %v500 = vpack.c.bf16 %v471, %v470
      %v501 = vpack.c.bf16 %v473, %v472
      %v502 = vpack.c.bf16 %v475, %v474
      %v503 = vpack.c.bf16 %v477, %v476
      %v504 = vpack.c.bf16 %v479, %v478
      %v505 = vpack.c.bf16 %v481, %v480
      %v506 = vpack.c.bf16 %v483, %v482
      %v507 = vpack.c.bf16 %v485, %v484
      %v508 = vpack.c.bf16 %v487, %v486
      %v509 = vpack.c.bf16 %v489, %v488
      %v510 = vpack.c.bf16 %v491, %v490
      %v511 = vpack.c.bf16 %v493, %v492
      %v512 = vpack.c.bf16 %v495, %v494
      %v513 = vpack.c.bf16 %v497, %v496
      %v514 = vld [vmem:[%s3] sm:$0xf]
      %v515 = vld [vmem:[%s3 + $0x4] sm:$0xf]
      %v516 = vld [vmem:[%s3 + $0x8] sm:$0xf]
      %v517 = vld [vmem:[%s3 + $0xc] sm:$0xf]
      %v518 = vld [vmem:[%s3 + $0x10] sm:$0xf]
      %v519 = vld [vmem:[%s3 + $0x14] sm:$0xf]
      %v520 = vld [vmem:[%s3 + $0x18] sm:$0xf]
      %v521 = vld [vmem:[%s3 + $0x1c] sm:$0xf]
      %v522 = vld [vmem:[%s3 + $0x20] sm:$0xf]
      %v523 = vld [vmem:[%s3 + $0x24] sm:$0xf]
      %v524 = vld [vmem:[%s3 + $0x28] sm:$0xf]
      %v525 = vld [vmem:[%s3 + $0x2c] sm:$0xf]
      %v526 = vld [vmem:[%s3 + $0x30] sm:$0xf]
      %v527 = vld [vmem:[%s3 + $0x34] sm:$0xf]
      %v528 = vld [vmem:[%s3 + $0x38] sm:$0xf]
      %v529 = vld [vmem:[%s3 + $0x3c] sm:$0xf]
      %v530 = vld [vmem:[#allocation2 + $0x1] sm:$0xff]
      %v531 = vld [vmem:[#allocation2 + $0x9] sm:$0xff]
      %v532 = vld [vmem:[#allocation2 + $0x19] sm:$0xff]
      %v533 = vld [vmem:[#allocation2 + $0x21] sm:$0xff]
      %v534 = vld [vmem:[#allocation2 + $0x31] sm:$0xff]
      %v535 = vld [vmem:[#allocation2 + $0x39] sm:$0xff]
      %v536 = vld [vmem:[#allocation2 + $0x49] sm:$0xff]
      %v537 = vld [vmem:[#allocation2 + $0x51] sm:$0xff]
      %v538 = vld [vmem:[#allocation2 + $0x61] sm:$0xff]
      %v539 = vld [vmem:[#allocation2 + $0x69] sm:$0xff]
      %v540 = vld [vmem:[#allocation2 + $0x79] sm:$0xff]
      %v541 = vld [vmem:[#allocation2 + $0x81] sm:$0xff]
      %v542 = vld [vmem:[#allocation2 + $0x91] sm:$0xff]
      %v543 = vld [vmem:[#allocation2 + $0x99] sm:$0xff]
      %v544 = vld [vmem:[#allocation2 + $0xa9] sm:$0xff]
      %v545 = vld [vmem:[#allocation2 + $0xb1] sm:$0xff]
      %v546 = vld [vmem:[#allocation2 + $0xc1] sm:$0xff]
      %v547 = vld [vmem:[#allocation2 + $0xc9] sm:$0xff]
      %v548 = vld [vmem:[#allocation2 + $0xd9] sm:$0xff]
      %v549 = vld [vmem:[#allocation2 + $0xe1] sm:$0xff]
      %v550 = vld [vmem:[#allocation2 + $0xf1] sm:$0xff]
      %v551 = vld [vmem:[#allocation2 + $0xf9] sm:$0xff]
      %v552 = vld [vmem:[#allocation2 + $0x109] sm:$0xff]
      %v553 = vld [vmem:[#allocation2 + $0x111] sm:$0xff]
      %v554 = vld [vmem:[#allocation2 + $0x121] sm:$0xff]
      %v555 = vld [vmem:[#allocation2 + $0x129] sm:$0xff]
      %v556 = vld [vmem:[#allocation2 + $0x139] sm:$0xff]
      %v557 = vld [vmem:[#allocation2 + $0x141] sm:$0xff]
      %v558 = vld [vmem:[#allocation2 + $0x151] sm:$0xff]
      %v559 = vld [vmem:[#allocation2 + $0x159] sm:$0xff]
      %v560 = vld [vmem:[#allocation2 + $0x169] sm:$0xff]
      %v561 = vld [vmem:[#allocation2 + $0x171] sm:$0xff]
      %v562 = vpack.c.bf16 %v531, %v530
      %v563 = vpack.c.bf16 %v533, %v532
      %v564 = vpack.c.bf16 %v535, %v534
      %v565 = vpack.c.bf16 %v537, %v536
      %v566 = vpack.c.bf16 %v539, %v538
      %v567 = vpack.c.bf16 %v541, %v540
      %v568 = vpack.c.bf16 %v543, %v542
      %v569 = vpack.c.bf16 %v545, %v544
      %v570 = vpack.c.bf16 %v547, %v546
      %v571 = vpack.c.bf16 %v549, %v548
      %v572 = vpack.c.bf16 %v551, %v550
      %v573 = vpack.c.bf16 %v553, %v552
      %v574 = vpack.c.bf16 %v555, %v554
      %v575 = vpack.c.bf16 %v557, %v556
      %v576 = vpack.c.bf16 %v559, %v558
      %v577 = vpack.c.bf16 %v561, %v560
      %s578 = scalar_lea.vmem %s3, 64
      %v579 = vld [vmem:[%s578] sm:$0xf]
      %v580 = vld [vmem:[%s578 + $0x4] sm:$0xf]
      %v581 = vld [vmem:[%s578 + $0x8] sm:$0xf]
      %v582 = vld [vmem:[%s578 + $0xc] sm:$0xf]
      %v583 = vld [vmem:[%s578 + $0x10] sm:$0xf]
      %v584 = vld [vmem:[%s578 + $0x14] sm:$0xf]
      %v585 = vld [vmem:[%s578 + $0x18] sm:$0xf]
      %v586 = vld [vmem:[%s578 + $0x1c] sm:$0xf]
      %v587 = vld [vmem:[%s578 + $0x20] sm:$0xf]
      %v588 = vld [vmem:[%s578 + $0x24] sm:$0xf]
      %v589 = vld [vmem:[%s578 + $0x28] sm:$0xf]
      %v590 = vld [vmem:[%s578 + $0x2c] sm:$0xf]
      %v591 = vld [vmem:[%s578 + $0x30] sm:$0xf]
      %v592 = vld [vmem:[%s578 + $0x34] sm:$0xf]
      %v593 = vld [vmem:[%s578 + $0x38] sm:$0xf]
      %v594 = vld [vmem:[%s578 + $0x3c] sm:$0xf]
      %v611 = vunpack.c.l.b16 %v579
      %v612 = vunpack.c.l.b16 %v580
      %v613 = vunpack.c.l.b16 %v581
      %v614 = vunpack.c.l.b16 %v582
      %v615 = vunpack.c.l.b16 %v583
      %v616 = vunpack.c.l.b16 %v584
      %v617 = vunpack.c.l.b16 %v585
      %v618 = vunpack.c.l.b16 %v586
      %v619 = vunpack.c.l.b16 %v587
      %v620 = vunpack.c.l.b16 %v588
      %v621 = vunpack.c.l.b16 %v589
      %v622 = vunpack.c.l.b16 %v590
      %v623 = vunpack.c.l.b16 %v591
      %v624 = vunpack.c.l.b16 %v592
      %v625 = vunpack.c.l.b16 %v593
      %v626 = vunpack.c.l.b16 %v594
      %v627 = vpack.c.b16 %v612, %v611
      %v628 = vpack.c.b16 %v614, %v613
      %v629 = vpack.c.b16 %v616, %v615
      %v630 = vpack.c.b16 %v618, %v617
      %v631 = vpack.c.b16 %v620, %v619
      %v632 = vpack.c.b16 %v622, %v621
      %v633 = vpack.c.b16 %v624, %v623
      %v634 = vpack.c.b16 %v626, %v625
      %643 = vmatprep.subr.bf16.mxu0 0
      %644 = vmatpush1.bf16.msra.mxu0 %v627
      %645 = vmatprep.subr.bf16.mxu0 0
      %646 = vmatpush1.bf16.msra.mxu0 %v628
      %647 = vmatprep.subr.bf16.mxu0 0
      %648 = vmatpush1.bf16.msra.mxu0 %v629
      %649 = vmatprep.subr.bf16.mxu0 0
      %650 = vmatpush1.bf16.msra.mxu0 %v630
      %651 = vmatprep.subr.bf16.mxu0 0
      %652 = vmatpush1.bf16.msra.mxu0 %v631
      %653 = vmatprep.subr.bf16.mxu0 0
      %654 = vmatpush1.bf16.msra.mxu0 %v632
      %655 = vmatprep.subr.bf16.mxu0 0
      %656 = vmatpush1.bf16.msra.mxu0 %v633
      %657 = vmatprep.subr.bf16.mxu0 0
      %658 = vmatpush1.bf16.msra.mxu0 %v634
      %659 = vmatprep.subr.bf16.mxu0 0
      %660 = vmatpush1.bf16.msra.mxu0 0
      %661 = vmatprep.subr.bf16.mxu0 0
      %662 = vmatpush1.bf16.msra.mxu0 0
      %663 = vmatprep.subr.bf16.mxu0 0
      %664 = vmatpush1.bf16.msra.mxu0 0
      %665 = vmatprep.subr.bf16.mxu0 0
      %666 = vmatpush1.bf16.msra.mxu0 0
      %667 = vmatprep.subr.bf16.mxu0 0
      %668 = vmatpush1.bf16.msra.mxu0 0
      %669 = vmatprep.subr.bf16.mxu0 0
      %670 = vmatpush1.bf16.msra.mxu0 0
      %671 = vmatprep.subr.bf16.mxu0 0
      %672 = vmatpush1.bf16.msra.mxu0 0
      %673 = vmatprep.subr.bf16.mxu0 0
      %674 = vmatpush1.bf16.msra.mxu0 0
      %675 = vmatprep.mubr.bf16.mxu0 0
      %676 = vmatmul.mubr.bf16.gmra.mrb[0].mxu0 %v562
      %v677 = vpop.f32.mrb[0].mxu0
      %v678 = vadd.f32 0.0, %v677
      %v679 = vpop.f32.mrb[0].mxu0
      %v680 = vpop.f32.mrb[0].mxu0
      %v681 = vadd.f32 0.0, %v680
      %v682 = vpop.f32.mrb[0].mxu0
      %683 = vmatprep.mubr.bf16.mxu0 0
      %684 = vmatmul.mubr.bf16.gmra.mrb[0].mxu0 %v563
      %v685 = vpop.f32.mrb[0].mxu0
      %v686 = vadd.f32 0.0, %v685
      %v687 = vpop.f32.mrb[0].mxu0
      %v688 = vpop.f32.mrb[0].mxu0
      %v689 = vadd.f32 0.0, %v688
      %v690 = vpop.f32.mrb[0].mxu0
      %691 = vmatprep.mubr.bf16.mxu0 0
      %692 = vmatmul.mubr.bf16.gmra.mrb[0].mxu0 %v564
      %v693 = vpop.f32.mrb[0].mxu0
      %v694 = vadd.f32 0.0, %v693
      %v695 = vpop.f32.mrb[0].mxu0
      %v696 = vpop.f32.mrb[0].mxu0
      %v697 = vadd.f32 0.0, %v696
      %v698 = vpop.f32.mrb[0].mxu0
      %699 = vmatprep.mubr.bf16.mxu0 0
      %700 = vmatmul.mubr.bf16.gmra.mrb[0].mxu0 %v565
      %v701 = vpop.f32.mrb[0].mxu0
      %v702 = vadd.f32 0.0, %v701
      %v703 = vpop.f32.mrb[0].mxu0
      %v704 = vpop.f32.mrb[0].mxu0
      %v705 = vadd.f32 0.0, %v704
      %v706 = vpop.f32.mrb[0].mxu0
      %707 = vmatprep.mubr.bf16.mxu0 0
      %708 = vmatmul.mubr.bf16.gmra.mrb[0].mxu0 %v566
      %v709 = vpop.f32.mrb[0].mxu0
      %v710 = vadd.f32 0.0, %v709
      %v711 = vpop.f32.mrb[0].mxu0
      %v712 = vpop.f32.mrb[0].mxu0
      %v713 = vadd.f32 0.0, %v712
      %v714 = vpop.f32.mrb[0].mxu0
      %715 = vmatprep.mubr.bf16.mxu0 0
      %716 = vmatmul.mubr.bf16.gmra.mrb[0].mxu0 %v567
      %v717 = vpop.f32.mrb[0].mxu0
      %v718 = vadd.f32 0.0, %v717
      %v719 = vpop.f32.mrb[0].mxu0
      %v720 = vpop.f32.mrb[0].mxu0
      %v721 = vadd.f32 0.0, %v720
      %v722 = vpop.f32.mrb[0].mxu0
      %723 = vmatprep.mubr.bf16.mxu0 0
      %724 = vmatmul.mubr.bf16.gmra.mrb[0].mxu0 %v568
      %v725 = vpop.f32.mrb[0].mxu0
      %v726 = vadd.f32 0.0, %v725
      %v727 = vpop.f32.mrb[0].mxu0
      %v728 = vpop.f32.mrb[0].mxu0
      %v729 = vadd.f32 0.0, %v728
      %v730 = vpop.f32.mrb[0].mxu0
      %731 = vmatprep.mubr.bf16.mxu0 0
      %732 = vmatmul.mubr.bf16.gmra.mrb[0].mxu0 %v569
      %v733 = vpop.f32.mrb[0].mxu0
      %v734 = vadd.f32 0.0, %v733
      %v735 = vpop.f32.mrb[0].mxu0
      %v736 = vpop.f32.mrb[0].mxu0
      %v737 = vadd.f32 0.0, %v736
      %v738 = vpop.f32.mrb[0].mxu0
      %739 = vmatprep.mubr.bf16.mxu0 0
      %740 = vmatmul.mubr.bf16.gmra.mrb[0].mxu0 %v570
      %v741 = vpop.f32.mrb[0].mxu0
      %v742 = vadd.f32 0.0, %v741
      %v743 = vpop.f32.mrb[0].mxu0
      %v744 = vpop.f32.mrb[0].mxu0
      %v745 = vadd.f32 0.0, %v744
      %v746 = vpop.f32.mrb[0].mxu0
      %747 = vmatprep.mubr.bf16.mxu0 0
      %748 = vmatmul.mubr.bf16.gmra.mrb[0].mxu0 %v571
      %v749 = vpop.f32.mrb[0].mxu0
      %v750 = vadd.f32 0.0, %v749
      %v751 = vpop.f32.mrb[0].mxu0
      %v752 = vpop.f32.mrb[0].mxu0
      %v753 = vadd.f32 0.0, %v752
      %v754 = vpop.f32.mrb[0].mxu0
      %755 = vmatprep.mubr.bf16.mxu0 0
      %756 = vmatmul.mubr.bf16.gmra.mrb[0].mxu0 %v572
      %v757 = vpop.f32.mrb[0].mxu0
      %v758 = vadd.f32 0.0, %v757
      %v759 = vpop.f32.mrb[0].mxu0
      %v760 = vpop.f32.mrb[0].mxu0
      %v761 = vadd.f32 0.0, %v760
      %v762 = vpop.f32.mrb[0].mxu0
      %763 = vmatprep.mubr.bf16.mxu0 0
      %764 = vmatmul.mubr.bf16.gmra.mrb[0].mxu0 %v573
      %v765 = vpop.f32.mrb[0].mxu0
      %v766 = vadd.f32 0.0, %v765
      %v767 = vpop.f32.mrb[0].mxu0
      %v768 = vpop.f32.mrb[0].mxu0
      %v769 = vadd.f32 0.0, %v768
      %v770 = vpop.f32.mrb[0].mxu0
      %771 = vmatprep.mubr.bf16.mxu0 0
      %772 = vmatmul.mubr.bf16.gmra.mrb[0].mxu0 %v574
      %v773 = vpop.f32.mrb[0].mxu0
      %v774 = vadd.f32 0.0, %v773
      %v775 = vpop.f32.mrb[0].mxu0
      %v776 = vpop.f32.mrb[0].mxu0
      %v777 = vadd.f32 0.0, %v776
      %v778 = vpop.f32.mrb[0].mxu0
      %779 = vmatprep.mubr.bf16.mxu0 0
      %780 = vmatmul.mubr.bf16.gmra.mrb[0].mxu0 %v575
      %v781 = vpop.f32.mrb[0].mxu0
      %v782 = vadd.f32 0.0, %v781
      %v783 = vpop.f32.mrb[0].mxu0
      %v784 = vpop.f32.mrb[0].mxu0
      %v785 = vadd.f32 0.0, %v784
      %v786 = vpop.f32.mrb[0].mxu0
      %787 = vmatprep.mubr.bf16.mxu0 0
      %788 = vmatmul.mubr.bf16.gmra.mrb[0].mxu0 %v576
      %v789 = vpop.f32.mrb[0].mxu0
      %v790 = vadd.f32 0.0, %v789
      %v791 = vpop.f32.mrb[0].mxu0
      %v792 = vpop.f32.mrb[0].mxu0
      %v793 = vadd.f32 0.0, %v792
      %v794 = vpop.f32.mrb[0].mxu0
      %795 = vmatprep.mubr.bf16.mxu0 0
      %796 = vmatmul.mubr.bf16.gmra.mrb[0].mxu0 %v577
      %v797 = vpop.f32.mrb[0].mxu0
      %v798 = vadd.f32 0.0, %v797
      %v799 = vpop.f32.mrb[0].mxu0
      %v800 = vpop.f32.mrb[0].mxu0
      %v801 = vadd.f32 0.0, %v800
      %v802 = vpop.f32.mrb[0].mxu0
      %803 = vdwg.mxu0
      %v820 = vunpack.c.l.b16 %v514
      %v821 = vunpack.c.l.b16 %v515
      %v822 = vunpack.c.l.b16 %v516
      %v823 = vunpack.c.l.b16 %v517
      %v824 = vunpack.c.l.b16 %v518
      %v825 = vunpack.c.l.b16 %v519
      %v826 = vunpack.c.l.b16 %v520
      %v827 = vunpack.c.l.b16 %v521
      %v828 = vunpack.c.l.b16 %v522
      %v829 = vunpack.c.l.b16 %v523
      %v830 = vunpack.c.l.b16 %v524
      %v831 = vunpack.c.l.b16 %v525
      %v832 = vunpack.c.l.b16 %v526
      %v833 = vunpack.c.l.b16 %v527
      %v834 = vunpack.c.l.b16 %v528
      %v835 = vunpack.c.l.b16 %v529
      %v836 = vpack.c.b16 %v821, %v820
      %v837 = vpack.c.b16 %v823, %v822
      %v838 = vpack.c.b16 %v825, %v824
      %v839 = vpack.c.b16 %v827, %v826
      %v840 = vpack.c.b16 %v829, %v828
      %v841 = vpack.c.b16 %v831, %v830
      %v842 = vpack.c.b16 %v833, %v832
      %v843 = vpack.c.b16 %v835, %v834
      %852 = vmatprep.subr.bf16.mxu0 0
      %853 = vmatpush1.bf16.msra.mxu0 %v836
      %854 = vmatprep.subr.bf16.mxu0 0
      %855 = vmatpush1.bf16.msra.mxu0 %v837
      %856 = vmatprep.subr.bf16.mxu0 0
      %857 = vmatpush1.bf16.msra.mxu0 %v838
      %858 = vmatprep.subr.bf16.mxu0 0
      %859 = vmatpush1.bf16.msra.mxu0 %v839
      %860 = vmatprep.subr.bf16.mxu0 0
      %861 = vmatpush1.bf16.msra.mxu0 %v840
      %862 = vmatprep.subr.bf16.mxu0 0
      %863 = vmatpush1.bf16.msra.mxu0 %v841
      %864 = vmatprep.subr.bf16.mxu0 0
      %865 = vmatpush1.bf16.msra.mxu0 %v842
      %866 = vmatprep.subr.bf16.mxu0 0
      %867 = vmatpush1.bf16.msra.mxu0 %v843
      %868 = vmatprep.subr.bf16.mxu0 0
      %869 = vmatpush1.bf16.msra.mxu0 0
      %870 = vmatprep.subr.bf16.mxu0 0
      %871 = vmatpush1.bf16.msra.mxu0 0
      %872 = vmatprep.subr.bf16.mxu0 0
      %873 = vmatpush1.bf16.msra.mxu0 0
      %874 = vmatprep.subr.bf16.mxu0 0
      %875 = vmatpush1.bf16.msra.mxu0 0
      %876 = vmatprep.subr.bf16.mxu0 0
      %877 = vmatpush1.bf16.msra.mxu0 0
      %878 = vmatprep.subr.bf16.mxu0 0
      %879 = vmatpush1.bf16.msra.mxu0 0
      %880 = vmatprep.subr.bf16.mxu0 0
      %881 = vmatpush1.bf16.msra.mxu0 0
      %882 = vmatprep.subr.bf16.mxu0 0
      %883 = vmatpush1.bf16.msra.mxu0 0
      %884 = vmatprep.mubr.bf16.mxu0 0
      %885 = vmatmul.mubr.bf16.gmra.mrb[0].mxu0 %v498
      %v886 = vpop.f32.mrb[0].mxu0
      %v887 = vadd.f32 %v678, %v886
      %v888 = vpop.f32.mrb[0].mxu0
      %v889 = vpop.f32.mrb[0].mxu0
      %v890 = vadd.f32 %v681, %v889
      %v891 = vpop.f32.mrb[0].mxu0
      %892 = vmatprep.mubr.bf16.mxu0 0
      %893 = vmatmul.mubr.bf16.gmra.mrb[0].mxu0 %v499
      %v894 = vpop.f32.mrb[0].mxu0
      %v895 = vadd.f32 %v686, %v894
      %v896 = vpop.f32.mrb[0].mxu0
      %v897 = vpop.f32.mrb[0].mxu0
      %v898 = vadd.f32 %v689, %v897
      %v899 = vpop.f32.mrb[0].mxu0
      %900 = vmatprep.mubr.bf16.mxu0 0
      %901 = vmatmul.mubr.bf16.gmra.mrb[0].mxu0 %v500
      %v902 = vpop.f32.mrb[0].mxu0
      %v903 = vadd.f32 %v694, %v902
      %v904 = vpop.f32.mrb[0].mxu0
      %v905 = vpop.f32.mrb[0].mxu0
      %v906 = vadd.f32 %v697, %v905
      %v907 = vpop.f32.mrb[0].mxu0
      %908 = vmatprep.mubr.bf16.mxu0 0
      %909 = vmatmul.mubr.bf16.gmra.mrb[0].mxu0 %v501
      %v910 = vpop.f32.mrb[0].mxu0
      %v911 = vadd.f32 %v702, %v910
      %v912 = vpop.f32.mrb[0].mxu0
      %v913 = vpop.f32.mrb[0].mxu0
      %v914 = vadd.f32 %v705, %v913
      %v915 = vpop.f32.mrb[0].mxu0
      %916 = vmatprep.mubr.bf16.mxu0 0
      %917 = vmatmul.mubr.bf16.gmra.mrb[0].mxu0 %v502
      %v918 = vpop.f32.mrb[0].mxu0
      %v919 = vadd.f32 %v710, %v918
      %v920 = vpop.f32.mrb[0].mxu0
      %v921 = vpop.f32.mrb[0].mxu0
      %v922 = vadd.f32 %v713, %v921
      %v923 = vpop.f32.mrb[0].mxu0
      %924 = vmatprep.mubr.bf16.mxu0 0
      %925 = vmatmul.mubr.bf16.gmra.mrb[0].mxu0 %v503
      %v926 = vpop.f32.mrb[0].mxu0
      %v927 = vadd.f32 %v718, %v926
      %v928 = vpop.f32.mrb[0].mxu0
      %v929 = vpop.f32.mrb[0].mxu0
      %v930 = vadd.f32 %v721, %v929
      %v931 = vpop.f32.mrb[0].mxu0
      %932 = vmatprep.mubr.bf16.mxu0 0
      %933 = vmatmul.mubr.bf16.gmra.mrb[0].mxu0 %v504
      %v934 = vpop.f32.mrb[0].mxu0
      %v935 = vadd.f32 %v726, %v934
      %v936 = vpop.f32.mrb[0].mxu0
      %v937 = vpop.f32.mrb[0].mxu0
      %v938 = vadd.f32 %v729, %v937
      %v939 = vpop.f32.mrb[0].mxu0
      %940 = vmatprep.mubr.bf16.mxu0 0
      %941 = vmatmul.mubr.bf16.gmra.mrb[0].mxu0 %v505
      %v942 = vpop.f32.mrb[0].mxu0
      %v943 = vadd.f32 %v734, %v942
      %v944 = vpop.f32.mrb[0].mxu0
      %v945 = vpop.f32.mrb[0].mxu0
      %v946 = vadd.f32 %v737, %v945
      %v947 = vpop.f32.mrb[0].mxu0
      %948 = vmatprep.mubr.bf16.mxu0 0
      %949 = vmatmul.mubr.bf16.gmra.mrb[0].mxu0 %v506
      %v950 = vpop.f32.mrb[0].mxu0
      %v951 = vadd.f32 %v742, %v950
      %v952 = vpop.f32.mrb[0].mxu0
      %v953 = vpop.f32.mrb[0].mxu0
      %v954 = vadd.f32 %v745, %v953
      %v955 = vpop.f32.mrb[0].mxu0
      %956 = vmatprep.mubr.bf16.mxu0 0
      %957 = vmatmul.mubr.bf16.gmra.mrb[0].mxu0 %v507
      %v958 = vpop.f32.mrb[0].mxu0
      %v959 = vadd.f32 %v750, %v958
      %v960 = vpop.f32.mrb[0].mxu0
      %v961 = vpop.f32.mrb[0].mxu0
      %v962 = vadd.f32 %v753, %v961
      %v963 = vpop.f32.mrb[0].mxu0
      %964 = vmatprep.mubr.bf16.mxu0 0
      %965 = vmatmul.mubr.bf16.gmra.mrb[0].mxu0 %v508
      %v966 = vpop.f32.mrb[0].mxu0
      %v967 = vadd.f32 %v758, %v966
      %v968 = vpop.f32.mrb[0].mxu0
      %v969 = vpop.f32.mrb[0].mxu0
      %v970 = vadd.f32 %v761, %v969
      %v971 = vpop.f32.mrb[0].mxu0
      %972 = vmatprep.mubr.bf16.mxu0 0
      %973 = vmatmul.mubr.bf16.gmra.mrb[0].mxu0 %v509
      %v974 = vpop.f32.mrb[0].mxu0
      %v975 = vadd.f32 %v766, %v974
      %v976 = vpop.f32.mrb[0].mxu0
      %v977 = vpop.f32.mrb[0].mxu0
      %v978 = vadd.f32 %v769, %v977
      %v979 = vpop.f32.mrb[0].mxu0
      %980 = vmatprep.mubr.bf16.mxu0 0
      %981 = vmatmul.mubr.bf16.gmra.mrb[0].mxu0 %v510
      %v982 = vpop.f32.mrb[0].mxu0
      %v983 = vadd.f32 %v774, %v982
      %v984 = vpop.f32.mrb[0].mxu0
      %v985 = vpop.f32.mrb[0].mxu0
      %v986 = vadd.f32 %v777, %v985
      %v987 = vpop.f32.mrb[0].mxu0
      %988 = vmatprep.mubr.bf16.mxu0 0
      %989 = vmatmul.mubr.bf16.gmra.mrb[0].mxu0 %v511
      %v990 = vpop.f32.mrb[0].mxu0
      %v991 = vadd.f32 %v782, %v990
      %v992 = vpop.f32.mrb[0].mxu0
      %v993 = vpop.f32.mrb[0].mxu0
      %v994 = vadd.f32 %v785, %v993
      %v995 = vpop.f32.mrb[0].mxu0
      %996 = vmatprep.mubr.bf16.mxu0 0
      %997 = vmatmul.mubr.bf16.gmra.mrb[0].mxu0 %v512
      %v998 = vpop.f32.mrb[0].mxu0
      %v999 = vadd.f32 %v790, %v998
      %v1000 = vpop.f32.mrb[0].mxu0
      %v1001 = vpop.f32.mrb[0].mxu0
      %v1002 = vadd.f32 %v793, %v1001
      %v1003 = vpop.f32.mrb[0].mxu0
      %1004 = vmatprep.mubr.bf16.mxu0 0
      %1005 = vmatmul.mubr.bf16.gmra.mrb[0].mxu0 %v513
      %v1006 = vpop.f32.mrb[0].mxu0
      %v1007 = vadd.f32 %v798, %v1006
      %v1008 = vpop.f32.mrb[0].mxu0
      %v1009 = vpop.f32.mrb[0].mxu0
      %v1010 = vadd.f32 %v801, %v1009
      %v1011 = vpop.f32.mrb[0].mxu0
      %1012 = vdwg.mxu0
      %v1013 = vld [vmem:[#allocation2 + $0x2] sm:$0xff]
      %v1014 = vld [vmem:[#allocation2 + $0xa] sm:$0xff]
      %v1015 = vld [vmem:[#allocation2 + $0x1a] sm:$0xff]
      %v1016 = vld [vmem:[#allocation2 + $0x22] sm:$0xff]
      %v1017 = vld [vmem:[#allocation2 + $0x32] sm:$0xff]
      %v1018 = vld [vmem:[#allocation2 + $0x3a] sm:$0xff]
      %v1019 = vld [vmem:[#allocation2 + $0x4a] sm:$0xff]
      %v1020 = vld [vmem:[#allocation2 + $0x52] sm:$0xff]
      %v1021 = vld [vmem:[#allocation2 + $0x62] sm:$0xff]
      %v1022 = vld [vmem:[#allocation2 + $0x6a] sm:$0xff]
      %v1023 = vld [vmem:[#allocation2 + $0x7a] sm:$0xff]
      %v1024 = vld [vmem:[#allocation2 + $0x82] sm:$0xff]
      %v1025 = vld [vmem:[#allocation2 + $0x92] sm:$0xff]
      %v1026 = vld [vmem:[#allocation2 + $0x9a] sm:$0xff]
      %v1027 = vld [vmem:[#allocation2 + $0xaa] sm:$0xff]
      %v1028 = vld [vmem:[#allocation2 + $0xb2] sm:$0xff]
      %v1029 = vld [vmem:[#allocation2 + $0xc2] sm:$0xff]
      %v1030 = vld [vmem:[#allocation2 + $0xca] sm:$0xff]
      %v1031 = vld [vmem:[#allocation2 + $0xda] sm:$0xff]
      %v1032 = vld [vmem:[#allocation2 + $0xe2] sm:$0xff]
      %v1033 = vld [vmem:[#allocation2 + $0xf2] sm:$0xff]
      %v1034 = vld [vmem:[#allocation2 + $0xfa] sm:$0xff]
      %v1035 = vld [vmem:[#allocation2 + $0x10a] sm:$0xff]
      %v1036 = vld [vmem:[#allocation2 + $0x112] sm:$0xff]
      %v1037 = vld [vmem:[#allocation2 + $0x122] sm:$0xff]
      %v1038 = vld [vmem:[#allocation2 + $0x12a] sm:$0xff]
      %v1039 = vld [vmem:[#allocation2 + $0x13a] sm:$0xff]
      %v1040 = vld [vmem:[#allocation2 + $0x142] sm:$0xff]
      %v1041 = vld [vmem:[#allocation2 + $0x152] sm:$0xff]
      %v1042 = vld [vmem:[#allocation2 + $0x15a] sm:$0xff]
      %v1043 = vld [vmem:[#allocation2 + $0x16a] sm:$0xff]
      %v1044 = vld [vmem:[#allocation2 + $0x172] sm:$0xff]
      %v1045 = vpack.c.bf16 %v1014, %v1013
      %v1046 = vpack.c.bf16 %v1016, %v1015
      %v1047 = vpack.c.bf16 %v1018, %v1017
      %v1048 = vpack.c.bf16 %v1020, %v1019
      %v1049 = vpack.c.bf16 %v1022, %v1021
      %v1050 = vpack.c.bf16 %v1024, %v1023
      %v1051 = vpack.c.bf16 %v1026, %v1025
      %v1052 = vpack.c.bf16 %v1028, %v1027
      %v1053 = vpack.c.bf16 %v1030, %v1029
      %v1054 = vpack.c.bf16 %v1032, %v1031
      %v1055 = vpack.c.bf16 %v1034, %v1033
      %v1056 = vpack.c.bf16 %v1036, %v1035
      %v1057 = vpack.c.bf16 %v1038, %v1037
      %v1058 = vpack.c.bf16 %v1040, %v1039
      %v1059 = vpack.c.bf16 %v1042, %v1041
      %v1060 = vpack.c.bf16 %v1044, %v1043
      %s1061 = scalar_lea.vmem %s3, 128
      %v1062 = vld [vmem:[%s1061] sm:$0xf]
      %v1063 = vld [vmem:[%s1061 + $0x4] sm:$0xf]
      %v1064 = vld [vmem:[%s1061 + $0x8] sm:$0xf]
      %v1065 = vld [vmem:[%s1061 + $0xc] sm:$0xf]
      %v1066 = vld [vmem:[%s1061 + $0x10] sm:$0xf]
      %v1067 = vld [vmem:[%s1061 + $0x14] sm:$0xf]
      %v1068 = vld [vmem:[%s1061 + $0x18] sm:$0xf]
      %v1069 = vld [vmem:[%s1061 + $0x1c] sm:$0xf]
      %v1070 = vld [vmem:[%s1061 + $0x20] sm:$0xf]
      %v1071 = vld [vmem:[%s1061 + $0x24] sm:$0xf]
      %v1072 = vld [vmem:[%s1061 + $0x28] sm:$0xf]
      %v1073 = vld [vmem:[%s1061 + $0x2c] sm:$0xf]
      %v1074 = vld [vmem:[%s1061 + $0x30] sm:$0xf]
      %v1075 = vld [vmem:[%s1061 + $0x34] sm:$0xf]
      %v1076 = vld [vmem:[%s1061 + $0x38] sm:$0xf]
      %v1077 = vld [vmem:[%s1061 + $0x3c] sm:$0xf]
      %v1094 = vunpack.c.l.b16 %v1062
      %v1095 = vunpack.c.l.b16 %v1063
      %v1096 = vunpack.c.l.b16 %v1064
      %v1097 = vunpack.c.l.b16 %v1065
      %v1098 = vunpack.c.l.b16 %v1066
      %v1099 = vunpack.c.l.b16 %v1067
      %v1100 = vunpack.c.l.b16 %v1068
      %v1101 = vunpack.c.l.b16 %v1069
      %v1102 = vunpack.c.l.b16 %v1070
      %v1103 = vunpack.c.l.b16 %v1071
      %v1104 = vunpack.c.l.b16 %v1072
      %v1105 = vunpack.c.l.b16 %v1073
      %v1106 = vunpack.c.l.b16 %v1074
      %v1107 = vunpack.c.l.b16 %v1075
      %v1108 = vunpack.c.l.b16 %v1076
      %v1109 = vunpack.c.l.b16 %v1077
      %v1110 = vpack.c.b16 %v1095, %v1094
      %v1111 = vpack.c.b16 %v1097, %v1096
      %v1112 = vpack.c.b16 %v1099, %v1098
      %v1113 = vpack.c.b16 %v1101, %v1100
      %v1114 = vpack.c.b16 %v1103, %v1102
      %v1115 = vpack.c.b16 %v1105, %v1104
      %v1116 = vpack.c.b16 %v1107, %v1106
      %v1117 = vpack.c.b16 %v1109, %v1108
      %1126 = vmatprep.subr.bf16.mxu0 0
      %1127 = vmatpush1.bf16.msra.mxu0 %v1110
      %1128 = vmatprep.subr.bf16.mxu0 0
      %1129 = vmatpush1.bf16.msra.mxu0 %v1111
      %1130 = vmatprep.subr.bf16.mxu0 0
      %1131 = vmatpush1.bf16.msra.mxu0 %v1112
      %1132 = vmatprep.subr.bf16.mxu0 0
      %1133 = vmatpush1.bf16.msra.mxu0 %v1113
      %1134 = vmatprep.subr.bf16.mxu0 0
      %1135 = vmatpush1.bf16.msra.mxu0 %v1114
      %1136 = vmatprep.subr.bf16.mxu0 0
      %1137 = vmatpush1.bf16.msra.mxu0 %v1115
      %1138 = vmatprep.subr.bf16.mxu0 0
      %1139 = vmatpush1.bf16.msra.mxu0 %v1116
      %1140 = vmatprep.subr.bf16.mxu0 0
      %1141 = vmatpush1.bf16.msra.mxu0 %v1117
      %1142 = vmatprep.subr.bf16.mxu0 0
      %1143 = vmatpush1.bf16.msra.mxu0 0
      %1144 = vmatprep.subr.bf16.mxu0 0
      %1145 = vmatpush1.bf16.msra.mxu0 0
      %1146 = vmatprep.subr.bf16.mxu0 0
      %1147 = vmatpush1.bf16.msra.mxu0 0
      %1148 = vmatprep.subr.bf16.mxu0 0
      %1149 = vmatpush1.bf16.msra.mxu0 0
      %1150 = vmatprep.subr.bf16.mxu0 0
      %1151 = vmatpush1.bf16.msra.mxu0 0
      %1152 = vmatprep.subr.bf16.mxu0 0
      %1153 = vmatpush1.bf16.msra.mxu0 0
      %1154 = vmatprep.subr.bf16.mxu0 0
      %1155 = vmatpush1.bf16.msra.mxu0 0
      %1156 = vmatprep.subr.bf16.mxu0 0
      %1157 = vmatpush1.bf16.msra.mxu0 0
      %1158 = vmatprep.mubr.bf16.mxu0 0
      %1159 = vmatmul.mubr.bf16.gmra.mrb[0].mxu0 %v1045
      %v1160 = vpop.f32.mrb[0].mxu0
      %v1161 = vadd.f32 0.0, %v1160
      %v1162 = vpop.f32.mrb[0].mxu0
      %v1163 = vpop.f32.mrb[0].mxu0
      %v1164 = vadd.f32 0.0, %v1163
      %v1165 = vpop.f32.mrb[0].mxu0
      %1166 = vmatprep.mubr.bf16.mxu0 0
      %1167 = vmatmul.mubr.bf16.gmra.mrb[0].mxu0 %v1046
      %v1168 = vpop.f32.mrb[0].mxu0
      %v1169 = vadd.f32 0.0, %v1168
      %v1170 = vpop.f32.mrb[0].mxu0
      %v1171 = vpop.f32.mrb[0].mxu0
      %v1172 = vadd.f32 0.0, %v1171
      %v1173 = vpop.f32.mrb[0].mxu0
      %1174 = vmatprep.mubr.bf16.mxu0 0
      %1175 = vmatmul.mubr.bf16.gmra.mrb[0].mxu0 %v1047
      %v1176 = vpop.f32.mrb[0].mxu0
      %v1177 = vadd.f32 0.0, %v1176
      %v1178 = vpop.f32.mrb[0].mxu0
      %v1179 = vpop.f32.mrb[0].mxu0
      %v1180 = vadd.f32 0.0, %v1179
      %v1181 = vpop.f32.mrb[0].mxu0
      %1182 = vmatprep.mubr.bf16.mxu0 0
      %1183 = vmatmul.mubr.bf16.gmra.mrb[0].mxu0 %v1048
      %v1184 = vpop.f32.mrb[0].mxu0
      %v1185 = vadd.f32 0.0, %v1184
      %v1186 = vpop.f32.mrb[0].mxu0
      %v1187 = vpop.f32.mrb[0].mxu0
      %v1188 = vadd.f32 0.0, %v1187
      %v1189 = vpop.f32.mrb[0].mxu0
      %1190 = vmatprep.mubr.bf16.mxu0 0
      %1191 = vmatmul.mubr.bf16.gmra.mrb[0].mxu0 %v1049
      %v1192 = vpop.f32.mrb[0].mxu0
      %v1193 = vadd.f32 0.0, %v1192
      %v1194 = vpop.f32.mrb[0].mxu0
      %v1195 = vpop.f32.mrb[0].mxu0
      %v1196 = vadd.f32 0.0, %v1195
      %v1197 = vpop.f32.mrb[0].mxu0
      %1198 = vmatprep.mubr.bf16.mxu0 0
      %1199 = vmatmul.mubr.bf16.gmra.mrb[0].mxu0 %v1050
      %v1200 = vpop.f32.mrb[0].mxu0
      %v1201 = vadd.f32 0.0, %v1200
      %v1202 = vpop.f32.mrb[0].mxu0
      %v1203 = vpop.f32.mrb[0].mxu0
      %v1204 = vadd.f32 0.0, %v1203
      %v1205 = vpop.f32.mrb[0].mxu0
      %1206 = vmatprep.mubr.bf16.mxu0 0
      %1207 = vmatmul.mubr.bf16.gmra.mrb[0].mxu0 %v1051
      %v1208 = vpop.f32.mrb[0].mxu0
      %v1209 = vadd.f32 0.0, %v1208
      %v1210 = vpop.f32.mrb[0].mxu0
      %v1211 = vpop.f32.mrb[0].mxu0
      %v1212 = vadd.f32 0.0, %v1211
      %v1213 = vpop.f32.mrb[0].mxu0
      %1214 = vmatprep.mubr.bf16.mxu0 0
      %1215 = vmatmul.mubr.bf16.gmra.mrb[0].mxu0 %v1052
      %v1216 = vpop.f32.mrb[0].mxu0
      %v1217 = vadd.f32 0.0, %v1216
      %v1218 = vpop.f32.mrb[0].mxu0
      %v1219 = vpop.f32.mrb[0].mxu0
      %v1220 = vadd.f32 0.0, %v1219
      %v1221 = vpop.f32.mrb[0].mxu0
      %1222 = vmatprep.mubr.bf16.mxu0 0
      %1223 = vmatmul.mubr.bf16.gmra.mrb[0].mxu0 %v1053
      %v1224 = vpop.f32.mrb[0].mxu0
      %v1225 = vadd.f32 0.0, %v1224
      %v1226 = vpop.f32.mrb[0].mxu0
      %v1227 = vpop.f32.mrb[0].mxu0
      %v1228 = vadd.f32 0.0, %v1227
      %v1229 = vpop.f32.mrb[0].mxu0
      %1230 = vmatprep.mubr.bf16.mxu0 0
      %1231 = vmatmul.mubr.bf16.gmra.mrb[0].mxu0 %v1054
      %v1232 = vpop.f32.mrb[0].mxu0
      %v1233 = vadd.f32 0.0, %v1232
      %v1234 = vpop.f32.mrb[0].mxu0
      %v1235 = vpop.f32.mrb[0].mxu0
      %v1236 = vadd.f32 0.0, %v1235
      %v1237 = vpop.f32.mrb[0].mxu0
      %1238 = vmatprep.mubr.bf16.mxu0 0
      %1239 = vmatmul.mubr.bf16.gmra.mrb[0].mxu0 %v1055
      %v1240 = vpop.f32.mrb[0].mxu0
      %v1241 = vadd.f32 0.0, %v1240
      %v1242 = vpop.f32.mrb[0].mxu0
      %v1243 = vpop.f32.mrb[0].mxu0
      %v1244 = vadd.f32 0.0, %v1243
      %v1245 = vpop.f32.mrb[0].mxu0
      %1246 = vmatprep.mubr.bf16.mxu0 0
      %1247 = vmatmul.mubr.bf16.gmra.mrb[0].mxu0 %v1056
      %v1248 = vpop.f32.mrb[0].mxu0
      %v1249 = vadd.f32 0.0, %v1248
      %v1250 = vpop.f32.mrb[0].mxu0
      %v1251 = vpop.f32.mrb[0].mxu0
      %v1252 = vadd.f32 0.0, %v1251
      %v1253 = vpop.f32.mrb[0].mxu0
      %1254 = vmatprep.mubr.bf16.mxu0 0
      %1255 = vmatmul.mubr.bf16.gmra.mrb[0].mxu0 %v1057
      %v1256 = vpop.f32.mrb[0].mxu0
      %v1257 = vadd.f32 0.0, %v1256
      %v1258 = vpop.f32.mrb[0].mxu0
      %v1259 = vpop.f32.mrb[0].mxu0
      %v1260 = vadd.f32 0.0, %v1259
      %v1261 = vpop.f32.mrb[0].mxu0
      %1262 = vmatprep.mubr.bf16.mxu0 0
      %1263 = vmatmul.mubr.bf16.gmra.mrb[0].mxu0 %v1058
      %v1264 = vpop.f32.mrb[0].mxu0
      %v1265 = vadd.f32 0.0, %v1264
      %v1266 = vpop.f32.mrb[0].mxu0
      %v1267 = vpop.f32.mrb[0].mxu0
      %v1268 = vadd.f32 0.0, %v1267
      %v1269 = vpop.f32.mrb[0].mxu0
      %1270 = vmatprep.mubr.bf16.mxu0 0
      %1271 = vmatmul.mubr.bf16.gmra.mrb[0].mxu0 %v1059
      %v1272 = vpop.f32.mrb[0].mxu0
      %v1273 = vadd.f32 0.0, %v1272
      %v1274 = vpop.f32.mrb[0].mxu0
      %v1275 = vpop.f32.mrb[0].mxu0
      %v1276 = vadd.f32 0.0, %v1275
      %v1277 = vpop.f32.mrb[0].mxu0
      %1278 = vmatprep.mubr.bf16.mxu0 0
      %1279 = vmatmul.mubr.bf16.gmra.mrb[0].mxu0 %v1060
      %v1280 = vpop.f32.mrb[0].mxu0
      %v1281 = vadd.f32 0.0, %v1280
      %v1282 = vpop.f32.mrb[0].mxu0
      %v1283 = vpop.f32.mrb[0].mxu0
      %v1284 = vadd.f32 0.0, %v1283
      %v1285 = vpop.f32.mrb[0].mxu0
      %1286 = vdwg.mxu0
      %v1287 = vadd.f32 %v887, %v1161
      %v1288 = vadd.f32 %v890, %v1164
      %v1289 = vadd.f32 %v895, %v1169
      %v1290 = vadd.f32 %v898, %v1172
      %v1291 = vadd.f32 %v903, %v1177
      %v1292 = vadd.f32 %v906, %v1180
      %v1293 = vadd.f32 %v911, %v1185
      %v1294 = vadd.f32 %v914, %v1188
      %v1295 = vadd.f32 %v919, %v1193
      %v1296 = vadd.f32 %v922, %v1196
      %v1297 = vadd.f32 %v927, %v1201
      %v1298 = vadd.f32 %v930, %v1204
      %v1299 = vadd.f32 %v935, %v1209
      %v1300 = vadd.f32 %v938, %v1212
      %v1301 = vadd.f32 %v943, %v1217
      %v1302 = vadd.f32 %v946, %v1220
      %v1303 = vadd.f32 %v951, %v1225
      %v1304 = vadd.f32 %v954, %v1228
      %v1305 = vadd.f32 %v959, %v1233
      %v1306 = vadd.f32 %v962, %v1236
      %v1307 = vadd.f32 %v967, %v1241
      %v1308 = vadd.f32 %v970, %v1244
      %v1309 = vadd.f32 %v975, %v1249
      %v1310 = vadd.f32 %v978, %v1252
      %v1311 = vadd.f32 %v983, %v1257
      %v1312 = vadd.f32 %v986, %v1260
      %v1313 = vadd.f32 %v991, %v1265
      %v1314 = vadd.f32 %v994, %v1268
      %v1315 = vadd.f32 %v999, %v1273
      %v1316 = vadd.f32 %v1002, %v1276
      %v1317 = vadd.f32 %v1007, %v1281
      %v1318 = vadd.f32 %v1010, %v1284
      %v1319 = vld [vmem:[%s433] sm:$0xff]
      %v1320 = vld [vmem:[%s433 + $0x8] sm:$0xff]
      %v1321 = vld [vmem:[%s433 + $0x18] sm:$0xff]
      %v1322 = vld [vmem:[%s433 + $0x20] sm:$0xff]
      %v1323 = vld [vmem:[%s433 + $0x30] sm:$0xff]
      %v1324 = vld [vmem:[%s433 + $0x38] sm:$0xff]
      %v1325 = vld [vmem:[%s433 + $0x48] sm:$0xff]
      %v1326 = vld [vmem:[%s433 + $0x50] sm:$0xff]
      %v1327 = vld [vmem:[%s433 + $0x60] sm:$0xff]
      %v1328 = vld [vmem:[%s433 + $0x68] sm:$0xff]
      %v1329 = vld [vmem:[%s433 + $0x78] sm:$0xff]
      %v1330 = vld [vmem:[%s433 + $0x80] sm:$0xff]
      %v1331 = vld [vmem:[%s433 + $0x90] sm:$0xff]
      %v1332 = vld [vmem:[%s433 + $0x98] sm:$0xff]
      %v1333 = vld [vmem:[%s433 + $0xa8] sm:$0xff]
      %v1334 = vld [vmem:[%s433 + $0xb0] sm:$0xff]
      %v1335 = vld [vmem:[%s433 + $0xc0] sm:$0xff]
      %v1336 = vld [vmem:[%s433 + $0xc8] sm:$0xff]
      %v1337 = vld [vmem:[%s433 + $0xd8] sm:$0xff]
      %v1338 = vld [vmem:[%s433 + $0xe0] sm:$0xff]
      %v1339 = vld [vmem:[%s433 + $0xf0] sm:$0xff]
      %v1340 = vld [vmem:[%s433 + $0xf8] sm:$0xff]
      %v1341 = vld [vmem:[%s433 + $0x108] sm:$0xff]
      %v1342 = vld [vmem:[%s433 + $0x110] sm:$0xff]
      %v1343 = vld [vmem:[%s433 + $0x120] sm:$0xff]
      %v1344 = vld [vmem:[%s433 + $0x128] sm:$0xff]
      %v1345 = vld [vmem:[%s433 + $0x138] sm:$0xff]
      %v1346 = vld [vmem:[%s433 + $0x140] sm:$0xff]
      %v1347 = vld [vmem:[%s433 + $0x150] sm:$0xff]
      %v1348 = vld [vmem:[%s433 + $0x158] sm:$0xff]
      %v1349 = vld [vmem:[%s433 + $0x168] sm:$0xff]
      %v1350 = vld [vmem:[%s433 + $0x170] sm:$0xff]
      %v1351 = vpack.c.bf16 %v1320, %v1319
      %v1352 = vpack.c.bf16 %v1322, %v1321
      %v1353 = vpack.c.bf16 %v1324, %v1323
      %v1354 = vpack.c.bf16 %v1326, %v1325
      %v1355 = vpack.c.bf16 %v1328, %v1327
      %v1356 = vpack.c.bf16 %v1330, %v1329
      %v1357 = vpack.c.bf16 %v1332, %v1331
      %v1358 = vpack.c.bf16 %v1334, %v1333
      %v1359 = vpack.c.bf16 %v1336, %v1335
      %v1360 = vpack.c.bf16 %v1338, %v1337
      %v1361 = vpack.c.bf16 %v1340, %v1339
      %v1362 = vpack.c.bf16 %v1342, %v1341
      %v1363 = vpack.c.bf16 %v1344, %v1343
      %v1364 = vpack.c.bf16 %v1346, %v1345
      %v1365 = vpack.c.bf16 %v1348, %v1347
      %v1366 = vpack.c.bf16 %v1350, %v1349
      %s1367 = scalar_lea.vmem %s3, 192
      %v1368 = vld [vmem:[%s1367] sm:$0xf]
      %v1369 = vld [vmem:[%s1367 + $0x4] sm:$0xf]
      %v1370 = vld [vmem:[%s1367 + $0x8] sm:$0xf]
      %v1371 = vld [vmem:[%s1367 + $0xc] sm:$0xf]
      %v1372 = vld [vmem:[%s1367 + $0x10] sm:$0xf]
      %v1373 = vld [vmem:[%s1367 + $0x14] sm:$0xf]
      %v1374 = vld [vmem:[%s1367 + $0x18] sm:$0xf]
      %v1375 = vld [vmem:[%s1367 + $0x1c] sm:$0xf]
      %v1376 = vld [vmem:[%s1367 + $0x20] sm:$0xf]
      %v1377 = vld [vmem:[%s1367 + $0x24] sm:$0xf]
      %v1378 = vld [vmem:[%s1367 + $0x28] sm:$0xf]
      %v1379 = vld [vmem:[%s1367 + $0x2c] sm:$0xf]
      %v1380 = vld [vmem:[%s1367 + $0x30] sm:$0xf]
      %v1381 = vld [vmem:[%s1367 + $0x34] sm:$0xf]
      %v1382 = vld [vmem:[%s1367 + $0x38] sm:$0xf]
      %v1383 = vld [vmem:[%s1367 + $0x3c] sm:$0xf]
      %v1400 = vunpack.c.l.b16 %v1368
      %v1401 = vunpack.c.l.b16 %v1369
      %v1402 = vunpack.c.l.b16 %v1370
      %v1403 = vunpack.c.l.b16 %v1371
      %v1404 = vunpack.c.l.b16 %v1372
      %v1405 = vunpack.c.l.b16 %v1373
      %v1406 = vunpack.c.l.b16 %v1374
      %v1407 = vunpack.c.l.b16 %v1375
      %v1408 = vunpack.c.l.b16 %v1376
      %v1409 = vunpack.c.l.b16 %v1377
      %v1410 = vunpack.c.l.b16 %v1378
      %v1411 = vunpack.c.l.b16 %v1379
      %v1412 = vunpack.c.l.b16 %v1380
      %v1413 = vunpack.c.l.b16 %v1381
      %v1414 = vunpack.c.l.b16 %v1382
      %v1415 = vunpack.c.l.b16 %v1383
      %v1416 = vpack.c.b16 %v1401, %v1400
      %v1417 = vpack.c.b16 %v1403, %v1402
      %v1418 = vpack.c.b16 %v1405, %v1404
      %v1419 = vpack.c.b16 %v1407, %v1406
      %v1420 = vpack.c.b16 %v1409, %v1408
      %v1421 = vpack.c.b16 %v1411, %v1410
      %v1422 = vpack.c.b16 %v1413, %v1412
      %v1423 = vpack.c.b16 %v1415, %v1414
      %1432 = vmatprep.subr.bf16.mxu0 0
      %1433 = vmatpush1.bf16.msra.mxu0 %v1416
      %1434 = vmatprep.subr.bf16.mxu0 0
      %1435 = vmatpush1.bf16.msra.mxu0 %v1417
      %1436 = vmatprep.subr.bf16.mxu0 0
      %1437 = vmatpush1.bf16.msra.mxu0 %v1418
      %1438 = vmatprep.subr.bf16.mxu0 0
      %1439 = vmatpush1.bf16.msra.mxu0 %v1419
      %1440 = vmatprep.subr.bf16.mxu0 0
      %1441 = vmatpush1.bf16.msra.mxu0 %v1420
      %1442 = vmatprep.subr.bf16.mxu0 0
      %1443 = vmatpush1.bf16.msra.mxu0 %v1421
      %1444 = vmatprep.subr.bf16.mxu0 0
      %1445 = vmatpush1.bf16.msra.mxu0 %v1422
      %1446 = vmatprep.subr.bf16.mxu0 0
      %1447 = vmatpush1.bf16.msra.mxu0 %v1423
      %1448 = vmatprep.subr.bf16.mxu0 0
      %1449 = vmatpush1.bf16.msra.mxu0 0
      %1450 = vmatprep.subr.bf16.mxu0 0
      %1451 = vmatpush1.bf16.msra.mxu0 0
      %1452 = vmatprep.subr.bf16.mxu0 0
      %1453 = vmatpush1.bf16.msra.mxu0 0
      %1454 = vmatprep.subr.bf16.mxu0 0
      %1455 = vmatpush1.bf16.msra.mxu0 0
      %1456 = vmatprep.subr.bf16.mxu0 0
      %1457 = vmatpush1.bf16.msra.mxu0 0
      %1458 = vmatprep.subr.bf16.mxu0 0
      %1459 = vmatpush1.bf16.msra.mxu0 0
      %1460 = vmatprep.subr.bf16.mxu0 0
      %1461 = vmatpush1.bf16.msra.mxu0 0
      %1462 = vmatprep.subr.bf16.mxu0 0
      %1463 = vmatpush1.bf16.msra.mxu0 0
      %1464 = vmatprep.mubr.bf16.mxu0 0
      %1465 = vmatmul.mubr.bf16.gmra.mrb[0].mxu0 %v1351
      %v1466 = vpop.f32.mrb[0].mxu0
      %v1467 = vadd.f32 0.0, %v1466
      %v1468 = vpop.f32.mrb[0].mxu0
      %v1469 = vpop.f32.mrb[0].mxu0
      %v1470 = vadd.f32 0.0, %v1469
      %v1471 = vpop.f32.mrb[0].mxu0
      %1472 = vmatprep.mubr.bf16.mxu0 0
      %1473 = vmatmul.mubr.bf16.gmra.mrb[0].mxu0 %v1352
      %v1474 = vpop.f32.mrb[0].mxu0
      %v1475 = vadd.f32 0.0, %v1474
      %v1476 = vpop.f32.mrb[0].mxu0
      %v1477 = vpop.f32.mrb[0].mxu0
      %v1478 = vadd.f32 0.0, %v1477
      %v1479 = vpop.f32.mrb[0].mxu0
      %1480 = vmatprep.mubr.bf16.mxu0 0
      %1481 = vmatmul.mubr.bf16.gmra.mrb[0].mxu0 %v1353
      %v1482 = vpop.f32.mrb[0].mxu0
      %v1483 = vadd.f32 0.0, %v1482
      %v1484 = vpop.f32.mrb[0].mxu0
      %v1485 = vpop.f32.mrb[0].mxu0
      %v1486 = vadd.f32 0.0, %v1485
      %v1487 = vpop.f32.mrb[0].mxu0
      %1488 = vmatprep.mubr.bf16.mxu0 0
      %1489 = vmatmul.mubr.bf16.gmra.mrb[0].mxu0 %v1354
      %v1490 = vpop.f32.mrb[0].mxu0
      %v1491 = vadd.f32 0.0, %v1490
      %v1492 = vpop.f32.mrb[0].mxu0
      %v1493 = vpop.f32.mrb[0].mxu0
      %v1494 = vadd.f32 0.0, %v1493
      %v1495 = vpop.f32.mrb[0].mxu0
      %1496 = vmatprep.mubr.bf16.mxu0 0
      %1497 = vmatmul.mubr.bf16.gmra.mrb[0].mxu0 %v1355
      %v1498 = vpop.f32.mrb[0].mxu0
      %v1499 = vadd.f32 0.0, %v1498
      %v1500 = vpop.f32.mrb[0].mxu0
      %v1501 = vpop.f32.mrb[0].mxu0
      %v1502 = vadd.f32 0.0, %v1501
      %v1503 = vpop.f32.mrb[0].mxu0
      %1504 = vmatprep.mubr.bf16.mxu0 0
      %1505 = vmatmul.mubr.bf16.gmra.mrb[0].mxu0 %v1356
      %v1506 = vpop.f32.mrb[0].mxu0
      %v1507 = vadd.f32 0.0, %v1506
      %v1508 = vpop.f32.mrb[0].mxu0
      %v1509 = vpop.f32.mrb[0].mxu0
      %v1510 = vadd.f32 0.0, %v1509
      %v1511 = vpop.f32.mrb[0].mxu0
      %1512 = vmatprep.mubr.bf16.mxu0 0
      %1513 = vmatmul.mubr.bf16.gmra.mrb[0].mxu0 %v1357
      %v1514 = vpop.f32.mrb[0].mxu0
      %v1515 = vadd.f32 0.0, %v1514
      %v1516 = vpop.f32.mrb[0].mxu0
      %v1517 = vpop.f32.mrb[0].mxu0
      %v1518 = vadd.f32 0.0, %v1517
      %v1519 = vpop.f32.mrb[0].mxu0
      %1520 = vmatprep.mubr.bf16.mxu0 0
      %1521 = vmatmul.mubr.bf16.gmra.mrb[0].mxu0 %v1358
      %v1522 = vpop.f32.mrb[0].mxu0
      %v1523 = vadd.f32 0.0, %v1522
      %v1524 = vpop.f32.mrb[0].mxu0
      %v1525 = vpop.f32.mrb[0].mxu0
      %v1526 = vadd.f32 0.0, %v1525
      %v1527 = vpop.f32.mrb[0].mxu0
      %1528 = vmatprep.mubr.bf16.mxu0 0
      %1529 = vmatmul.mubr.bf16.gmra.mrb[0].mxu0 %v1359
      %v1530 = vpop.f32.mrb[0].mxu0
      %v1531 = vadd.f32 0.0, %v1530
      %v1532 = vpop.f32.mrb[0].mxu0
      %v1533 = vpop.f32.mrb[0].mxu0
      %v1534 = vadd.f32 0.0, %v1533
      %v1535 = vpop.f32.mrb[0].mxu0
      %1536 = vmatprep.mubr.bf16.mxu0 0
      %1537 = vmatmul.mubr.bf16.gmra.mrb[0].mxu0 %v1360
      %v1538 = vpop.f32.mrb[0].mxu0
      %v1539 = vadd.f32 0.0, %v1538
      %v1540 = vpop.f32.mrb[0].mxu0
      %v1541 = vpop.f32.mrb[0].mxu0
      %v1542 = vadd.f32 0.0, %v1541
      %v1543 = vpop.f32.mrb[0].mxu0
      %1544 = vmatprep.mubr.bf16.mxu0 0
      %1545 = vmatmul.mubr.bf16.gmra.mrb[0].mxu0 %v1361
      %v1546 = vpop.f32.mrb[0].mxu0
      %v1547 = vadd.f32 0.0, %v1546
      %v1548 = vpop.f32.mrb[0].mxu0
      %v1549 = vpop.f32.mrb[0].mxu0
      %v1550 = vadd.f32 0.0, %v1549
      %v1551 = vpop.f32.mrb[0].mxu0
      %1552 = vmatprep.mubr.bf16.mxu0 0
      %1553 = vmatmul.mubr.bf16.gmra.mrb[0].mxu0 %v1362
      %v1554 = vpop.f32.mrb[0].mxu0
      %v1555 = vadd.f32 0.0, %v1554
      %v1556 = vpop.f32.mrb[0].mxu0
      %v1557 = vpop.f32.mrb[0].mxu0
      %v1558 = vadd.f32 0.0, %v1557
      %v1559 = vpop.f32.mrb[0].mxu0
      %1560 = vmatprep.mubr.bf16.mxu0 0
      %1561 = vmatmul.mubr.bf16.gmra.mrb[0].mxu0 %v1363
      %v1562 = vpop.f32.mrb[0].mxu0
      %v1563 = vadd.f32 0.0, %v1562
      %v1564 = vpop.f32.mrb[0].mxu0
      %v1565 = vpop.f32.mrb[0].mxu0
      %v1566 = vadd.f32 0.0, %v1565
      %v1567 = vpop.f32.mrb[0].mxu0
      %1568 = vmatprep.mubr.bf16.mxu0 0
      %1569 = vmatmul.mubr.bf16.gmra.mrb[0].mxu0 %v1364
      %v1570 = vpop.f32.mrb[0].mxu0
      %v1571 = vadd.f32 0.0, %v1570
      %v1572 = vpop.f32.mrb[0].mxu0
      %v1573 = vpop.f32.mrb[0].mxu0
      %v1574 = vadd.f32 0.0, %v1573
      %v1575 = vpop.f32.mrb[0].mxu0
      %1576 = vmatprep.mubr.bf16.mxu0 0
      %1577 = vmatmul.mubr.bf16.gmra.mrb[0].mxu0 %v1365
      %v1578 = vpop.f32.mrb[0].mxu0
      %v1579 = vadd.f32 0.0, %v1578
      %v1580 = vpop.f32.mrb[0].mxu0
      %v1581 = vpop.f32.mrb[0].mxu0
      %v1582 = vadd.f32 0.0, %v1581
      %v1583 = vpop.f32.mrb[0].mxu0
      %1584 = vmatprep.mubr.bf16.mxu0 0
      %1585 = vmatmul.mubr.bf16.gmra.mrb[0].mxu0 %v1366
      %v1586 = vpop.f32.mrb[0].mxu0
      %v1587 = vadd.f32 0.0, %v1586
      %v1588 = vpop.f32.mrb[0].mxu0
      %v1589 = vpop.f32.mrb[0].mxu0
      %v1590 = vadd.f32 0.0, %v1589
      %v1591 = vpop.f32.mrb[0].mxu0
      %1592 = vdwg.mxu0
      %v1593 = vadd.f32 %v1287, %v1467
      %v1594 = vadd.f32 %v1288, %v1470
      %v1595 = vadd.f32 %v1289, %v1475
      %v1596 = vadd.f32 %v1290, %v1478
      %v1597 = vadd.f32 %v1291, %v1483
      %v1598 = vadd.f32 %v1292, %v1486
      %v1599 = vadd.f32 %v1293, %v1491
      %v1600 = vadd.f32 %v1294, %v1494
      %v1601 = vadd.f32 %v1295, %v1499
      %v1602 = vadd.f32 %v1296, %v1502
      %v1603 = vadd.f32 %v1297, %v1507
      %v1604 = vadd.f32 %v1298, %v1510
      %v1605 = vadd.f32 %v1299, %v1515
      %v1606 = vadd.f32 %v1300, %v1518
      %v1607 = vadd.f32 %v1301, %v1523
      %v1608 = vadd.f32 %v1302, %v1526
      %v1609 = vadd.f32 %v1303, %v1531
      %v1610 = vadd.f32 %v1304, %v1534
      %v1611 = vadd.f32 %v1305, %v1539
      %v1612 = vadd.f32 %v1306, %v1542
      %v1613 = vadd.f32 %v1307, %v1547
      %v1614 = vadd.f32 %v1308, %v1550
      %v1615 = vadd.f32 %v1309, %v1555
      %v1616 = vadd.f32 %v1310, %v1558
      %v1617 = vadd.f32 %v1311, %v1563
      %v1618 = vadd.f32 %v1312, %v1566
      %v1619 = vadd.f32 %v1313, %v1571
      %v1620 = vadd.f32 %v1314, %v1574
      %v1621 = vadd.f32 %v1315, %v1579
      %v1622 = vadd.f32 %v1316, %v1582
      %v1623 = vadd.f32 %v1317, %v1587
      %v1624 = vadd.f32 %v1318, %v1590
      %v1625 = vld [vmem:[%s433 + $0x1] sm:$0xff]
      %v1626 = vld [vmem:[%s433 + $0x9] sm:$0xff]
      %v1627 = vld [vmem:[%s433 + $0x19] sm:$0xff]
      %v1628 = vld [vmem:[%s433 + $0x21] sm:$0xff]
      %v1629 = vld [vmem:[%s433 + $0x31] sm:$0xff]
      %v1630 = vld [vmem:[%s433 + $0x39] sm:$0xff]
      %v1631 = vld [vmem:[%s433 + $0x49] sm:$0xff]
      %v1632 = vld [vmem:[%s433 + $0x51] sm:$0xff]
      %v1633 = vld [vmem:[%s433 + $0x61] sm:$0xff]
      %v1634 = vld [vmem:[%s433 + $0x69] sm:$0xff]
      %v1635 = vld [vmem:[%s433 + $0x79] sm:$0xff]
      %v1636 = vld [vmem:[%s433 + $0x81] sm:$0xff]
      %v1637 = vld [vmem:[%s433 + $0x91] sm:$0xff]
      %v1638 = vld [vmem:[%s433 + $0x99] sm:$0xff]
      %v1639 = vld [vmem:[%s433 + $0xa9] sm:$0xff]
      %v1640 = vld [vmem:[%s433 + $0xb1] sm:$0xff]
      %v1641 = vld [vmem:[%s433 + $0xc1] sm:$0xff]
      %v1642 = vld [vmem:[%s433 + $0xc9] sm:$0xff]
      %v1643 = vld [vmem:[%s433 + $0xd9] sm:$0xff]
      %v1644 = vld [vmem:[%s433 + $0xe1] sm:$0xff]
      %v1645 = vld [vmem:[%s433 + $0xf1] sm:$0xff]
      %v1646 = vld [vmem:[%s433 + $0xf9] sm:$0xff]
      %v1647 = vld [vmem:[%s433 + $0x109] sm:$0xff]
      %v1648 = vld [vmem:[%s433 + $0x111] sm:$0xff]
      %v1649 = vld [vmem:[%s433 + $0x121] sm:$0xff]
      %v1650 = vld [vmem:[%s433 + $0x129] sm:$0xff]
      %v1651 = vld [vmem:[%s433 + $0x139] sm:$0xff]
      %v1652 = vld [vmem:[%s433 + $0x141] sm:$0xff]
      %v1653 = vld [vmem:[%s433 + $0x151] sm:$0xff]
      %v1654 = vld [vmem:[%s433 + $0x159] sm:$0xff]
      %v1655 = vld [vmem:[%s433 + $0x169] sm:$0xff]
      %v1656 = vld [vmem:[%s433 + $0x171] sm:$0xff]
      %v1657 = vpack.c.bf16 %v1626, %v1625
      %v1658 = vpack.c.bf16 %v1628, %v1627
      %v1659 = vpack.c.bf16 %v1630, %v1629
      %v1660 = vpack.c.bf16 %v1632, %v1631
      %v1661 = vpack.c.bf16 %v1634, %v1633
      %v1662 = vpack.c.bf16 %v1636, %v1635
      %v1663 = vpack.c.bf16 %v1638, %v1637
      %v1664 = vpack.c.bf16 %v1640, %v1639
      %v1665 = vpack.c.bf16 %v1642, %v1641
      %v1666 = vpack.c.bf16 %v1644, %v1643
      %v1667 = vpack.c.bf16 %v1646, %v1645
      %v1668 = vpack.c.bf16 %v1648, %v1647
      %v1669 = vpack.c.bf16 %v1650, %v1649
      %v1670 = vpack.c.bf16 %v1652, %v1651
      %v1671 = vpack.c.bf16 %v1654, %v1653
      %v1672 = vpack.c.bf16 %v1656, %v1655
      %s1673 = scalar_lea.vmem %s3, 256
      %v1674 = vld [vmem:[%s1673] sm:$0xf]
      %v1675 = vld [vmem:[%s1673 + $0x4] sm:$0xf]
      %v1676 = vld [vmem:[%s1673 + $0x8] sm:$0xf]
      %v1677 = vld [vmem:[%s1673 + $0xc] sm:$0xf]
      %v1678 = vld [vmem:[%s1673 + $0x10] sm:$0xf]
      %v1679 = vld [vmem:[%s1673 + $0x14] sm:$0xf]
      %v1680 = vld [vmem:[%s1673 + $0x18] sm:$0xf]
      %v1681 = vld [vmem:[%s1673 + $0x1c] sm:$0xf]
      %v1682 = vld [vmem:[%s1673 + $0x20] sm:$0xf]
      %v1683 = vld [vmem:[%s1673 + $0x24] sm:$0xf]
      %v1684 = vld [vmem:[%s1673 + $0x28] sm:$0xf]
      %v1685 = vld [vmem:[%s1673 + $0x2c] sm:$0xf]
      %v1686 = vld [vmem:[%s1673 + $0x30] sm:$0xf]
      %v1687 = vld [vmem:[%s1673 + $0x34] sm:$0xf]
      %v1688 = vld [vmem:[%s1673 + $0x38] sm:$0xf]
      %v1689 = vld [vmem:[%s1673 + $0x3c] sm:$0xf]
      %v1706 = vunpack.c.l.b16 %v1674
      %v1707 = vunpack.c.l.b16 %v1675
      %v1708 = vunpack.c.l.b16 %v1676
      %v1709 = vunpack.c.l.b16 %v1677
      %v1710 = vunpack.c.l.b16 %v1678
      %v1711 = vunpack.c.l.b16 %v1679
      %v1712 = vunpack.c.l.b16 %v1680
      %v1713 = vunpack.c.l.b16 %v1681
      %v1714 = vunpack.c.l.b16 %v1682
      %v1715 = vunpack.c.l.b16 %v1683
      %v1716 = vunpack.c.l.b16 %v1684
      %v1717 = vunpack.c.l.b16 %v1685
      %v1718 = vunpack.c.l.b16 %v1686
      %v1719 = vunpack.c.l.b16 %v1687
      %v1720 = vunpack.c.l.b16 %v1688
      %v1721 = vunpack.c.l.b16 %v1689
      %v1722 = vpack.c.b16 %v1707, %v1706
      %v1723 = vpack.c.b16 %v1709, %v1708
      %v1724 = vpack.c.b16 %v1711, %v1710
      %v1725 = vpack.c.b16 %v1713, %v1712
      %v1726 = vpack.c.b16 %v1715, %v1714
      %v1727 = vpack.c.b16 %v1717, %v1716
      %v1728 = vpack.c.b16 %v1719, %v1718
      %v1729 = vpack.c.b16 %v1721, %v1720
      %1738 = vmatprep.subr.bf16.mxu0 0
      %1739 = vmatpush1.bf16.msra.mxu0 %v1722
      %1740 = vmatprep.subr.bf16.mxu0 0
      %1741 = vmatpush1.bf16.msra.mxu0 %v1723
      %1742 = vmatprep.subr.bf16.mxu0 0
      %1743 = vmatpush1.bf16.msra.mxu0 %v1724
      %1744 = vmatprep.subr.bf16.mxu0 0
      %1745 = vmatpush1.bf16.msra.mxu0 %v1725
      %1746 = vmatprep.subr.bf16.mxu0 0
      %1747 = vmatpush1.bf16.msra.mxu0 %v1726
      %1748 = vmatprep.subr.bf16.mxu0 0
      %1749 = vmatpush1.bf16.msra.mxu0 %v1727
      %1750 = vmatprep.subr.bf16.mxu0 0
      %1751 = vmatpush1.bf16.msra.mxu0 %v1728
      %1752 = vmatprep.subr.bf16.mxu0 0
      %1753 = vmatpush1.bf16.msra.mxu0 %v1729
      %1754 = vmatprep.subr.bf16.mxu0 0
      %1755 = vmatpush1.bf16.msra.mxu0 0
      %1756 = vmatprep.subr.bf16.mxu0 0
      %1757 = vmatpush1.bf16.msra.mxu0 0
      %1758 = vmatprep.subr.bf16.mxu0 0
      %1759 = vmatpush1.bf16.msra.mxu0 0
      %1760 = vmatprep.subr.bf16.mxu0 0
      %1761 = vmatpush1.bf16.msra.mxu0 0
      %1762 = vmatprep.subr.bf16.mxu0 0
      %1763 = vmatpush1.bf16.msra.mxu0 0
      %1764 = vmatprep.subr.bf16.mxu0 0
      %1765 = vmatpush1.bf16.msra.mxu0 0
      %1766 = vmatprep.subr.bf16.mxu0 0
      %1767 = vmatpush1.bf16.msra.mxu0 0
      %1768 = vmatprep.subr.bf16.mxu0 0
      %1769 = vmatpush1.bf16.msra.mxu0 0
      %1770 = vmatprep.mubr.bf16.mxu0 0
      %1771 = vmatmul.mubr.bf16.gmra.mrb[0].mxu0 %v1657
      %v1772 = vpop.f32.mrb[0].mxu0
      %v1773 = vadd.f32 0.0, %v1772
      %v1774 = vpop.f32.mrb[0].mxu0
      %v1775 = vpop.f32.mrb[0].mxu0
      %v1776 = vadd.f32 0.0, %v1775
      %v1777 = vpop.f32.mrb[0].mxu0
      %1778 = vmatprep.mubr.bf16.mxu0 0
      %1779 = vmatmul.mubr.bf16.gmra.mrb[0].mxu0 %v1658
      %v1780 = vpop.f32.mrb[0].mxu0
      %v1781 = vadd.f32 0.0, %v1780
      %v1782 = vpop.f32.mrb[0].mxu0
      %v1783 = vpop.f32.mrb[0].mxu0
      %v1784 = vadd.f32 0.0, %v1783
      %v1785 = vpop.f32.mrb[0].mxu0
      %1786 = vmatprep.mubr.bf16.mxu0 0
      %1787 = vmatmul.mubr.bf16.gmra.mrb[0].mxu0 %v1659
      %v1788 = vpop.f32.mrb[0].mxu0
      %v1789 = vadd.f32 0.0, %v1788
      %v1790 = vpop.f32.mrb[0].mxu0
      %v1791 = vpop.f32.mrb[0].mxu0
      %v1792 = vadd.f32 0.0, %v1791
      %v1793 = vpop.f32.mrb[0].mxu0
      %1794 = vmatprep.mubr.bf16.mxu0 0
      %1795 = vmatmul.mubr.bf16.gmra.mrb[0].mxu0 %v1660
      %v1796 = vpop.f32.mrb[0].mxu0
      %v1797 = vadd.f32 0.0, %v1796
      %v1798 = vpop.f32.mrb[0].mxu0
      %v1799 = vpop.f32.mrb[0].mxu0
      %v1800 = vadd.f32 0.0, %v1799
      %v1801 = vpop.f32.mrb[0].mxu0
      %1802 = vmatprep.mubr.bf16.mxu0 0
      %1803 = vmatmul.mubr.bf16.gmra.mrb[0].mxu0 %v1661
      %v1804 = vpop.f32.mrb[0].mxu0
      %v1805 = vadd.f32 0.0, %v1804
      %v1806 = vpop.f32.mrb[0].mxu0
      %v1807 = vpop.f32.mrb[0].mxu0
      %v1808 = vadd.f32 0.0, %v1807
      %v1809 = vpop.f32.mrb[0].mxu0
      %1810 = vmatprep.mubr.bf16.mxu0 0
      %1811 = vmatmul.mubr.bf16.gmra.mrb[0].mxu0 %v1662
      %v1812 = vpop.f32.mrb[0].mxu0
      %v1813 = vadd.f32 0.0, %v1812
      %v1814 = vpop.f32.mrb[0].mxu0
      %v1815 = vpop.f32.mrb[0].mxu0
      %v1816 = vadd.f32 0.0, %v1815
      %v1817 = vpop.f32.mrb[0].mxu0
      %1818 = vmatprep.mubr.bf16.mxu0 0
      %1819 = vmatmul.mubr.bf16.gmra.mrb[0].mxu0 %v1663
      %v1820 = vpop.f32.mrb[0].mxu0
      %v1821 = vadd.f32 0.0, %v1820
      %v1822 = vpop.f32.mrb[0].mxu0
      %v1823 = vpop.f32.mrb[0].mxu0
      %v1824 = vadd.f32 0.0, %v1823
      %v1825 = vpop.f32.mrb[0].mxu0
      %1826 = vmatprep.mubr.bf16.mxu0 0
      %1827 = vmatmul.mubr.bf16.gmra.mrb[0].mxu0 %v1664
      %v1828 = vpop.f32.mrb[0].mxu0
      %v1829 = vadd.f32 0.0, %v1828
      %v1830 = vpop.f32.mrb[0].mxu0
      %v1831 = vpop.f32.mrb[0].mxu0
      %v1832 = vadd.f32 0.0, %v1831
      %v1833 = vpop.f32.mrb[0].mxu0
      %1834 = vmatprep.mubr.bf16.mxu0 0
      %1835 = vmatmul.mubr.bf16.gmra.mrb[0].mxu0 %v1665
      %v1836 = vpop.f32.mrb[0].mxu0
      %v1837 = vadd.f32 0.0, %v1836
      %v1838 = vpop.f32.mrb[0].mxu0
      %v1839 = vpop.f32.mrb[0].mxu0
      %v1840 = vadd.f32 0.0, %v1839
      %v1841 = vpop.f32.mrb[0].mxu0
      %1842 = vmatprep.mubr.bf16.mxu0 0
      %1843 = vmatmul.mubr.bf16.gmra.mrb[0].mxu0 %v1666
      %v1844 = vpop.f32.mrb[0].mxu0
      %v1845 = vadd.f32 0.0, %v1844
      %v1846 = vpop.f32.mrb[0].mxu0
      %v1847 = vpop.f32.mrb[0].mxu0
      %v1848 = vadd.f32 0.0, %v1847
      %v1849 = vpop.f32.mrb[0].mxu0
      %1850 = vmatprep.mubr.bf16.mxu0 0
      %1851 = vmatmul.mubr.bf16.gmra.mrb[0].mxu0 %v1667
      %v1852 = vpop.f32.mrb[0].mxu0
      %v1853 = vadd.f32 0.0, %v1852
      %v1854 = vpop.f32.mrb[0].mxu0
      %v1855 = vpop.f32.mrb[0].mxu0
      %v1856 = vadd.f32 0.0, %v1855
      %v1857 = vpop.f32.mrb[0].mxu0
      %1858 = vmatprep.mubr.bf16.mxu0 0
      %1859 = vmatmul.mubr.bf16.gmra.mrb[0].mxu0 %v1668
      %v1860 = vpop.f32.mrb[0].mxu0
      %v1861 = vadd.f32 0.0, %v1860
      %v1862 = vpop.f32.mrb[0].mxu0
      %v1863 = vpop.f32.mrb[0].mxu0
      %v1864 = vadd.f32 0.0, %v1863
      %v1865 = vpop.f32.mrb[0].mxu0
      %1866 = vmatprep.mubr.bf16.mxu0 0
      %1867 = vmatmul.mubr.bf16.gmra.mrb[0].mxu0 %v1669
      %v1868 = vpop.f32.mrb[0].mxu0
      %v1869 = vadd.f32 0.0, %v1868
      %v1870 = vpop.f32.mrb[0].mxu0
      %v1871 = vpop.f32.mrb[0].mxu0
      %v1872 = vadd.f32 0.0, %v1871
      %v1873 = vpop.f32.mrb[0].mxu0
      %1874 = vmatprep.mubr.bf16.mxu0 0
      %1875 = vmatmul.mubr.bf16.gmra.mrb[0].mxu0 %v1670
      %v1876 = vpop.f32.mrb[0].mxu0
      %v1877 = vadd.f32 0.0, %v1876
      %v1878 = vpop.f32.mrb[0].mxu0
      %v1879 = vpop.f32.mrb[0].mxu0
      %v1880 = vadd.f32 0.0, %v1879
      %v1881 = vpop.f32.mrb[0].mxu0
      %1882 = vmatprep.mubr.bf16.mxu0 0
      %1883 = vmatmul.mubr.bf16.gmra.mrb[0].mxu0 %v1671
      %v1884 = vpop.f32.mrb[0].mxu0
      %v1885 = vadd.f32 0.0, %v1884
      %v1886 = vpop.f32.mrb[0].mxu0
      %v1887 = vpop.f32.mrb[0].mxu0
      %v1888 = vadd.f32 0.0, %v1887
      %v1889 = vpop.f32.mrb[0].mxu0
      %1890 = vmatprep.mubr.bf16.mxu0 0
      %1891 = vmatmul.mubr.bf16.gmra.mrb[0].mxu0 %v1672
      %v1892 = vpop.f32.mrb[0].mxu0
      %v1893 = vadd.f32 0.0, %v1892
      %v1894 = vpop.f32.mrb[0].mxu0
      %v1895 = vpop.f32.mrb[0].mxu0
      %v1896 = vadd.f32 0.0, %v1895
      %v1897 = vpop.f32.mrb[0].mxu0
      %1898 = vdwg.mxu0
      %v1899 = vadd.f32 %v1593, %v1773
      %v1900 = vadd.f32 %v1594, %v1776
      %v1901 = vadd.f32 %v1595, %v1781
      %v1902 = vadd.f32 %v1596, %v1784
      %v1903 = vadd.f32 %v1597, %v1789
      %v1904 = vadd.f32 %v1598, %v1792
      %v1905 = vadd.f32 %v1599, %v1797
      %v1906 = vadd.f32 %v1600, %v1800
      %v1907 = vadd.f32 %v1601, %v1805
      %v1908 = vadd.f32 %v1602, %v1808
      %v1909 = vadd.f32 %v1603, %v1813
      %v1910 = vadd.f32 %v1604, %v1816
      %v1911 = vadd.f32 %v1605, %v1821
      %v1912 = vadd.f32 %v1606, %v1824
      %v1913 = vadd.f32 %v1607, %v1829
      %v1914 = vadd.f32 %v1608, %v1832
      %v1915 = vadd.f32 %v1609, %v1837
      %v1916 = vadd.f32 %v1610, %v1840
      %v1917 = vadd.f32 %v1611, %v1845
      %v1918 = vadd.f32 %v1612, %v1848
      %v1919 = vadd.f32 %v1613, %v1853
      %v1920 = vadd.f32 %v1614, %v1856
      %v1921 = vadd.f32 %v1615, %v1861
      %v1922 = vadd.f32 %v1616, %v1864
      %v1923 = vadd.f32 %v1617, %v1869
      %v1924 = vadd.f32 %v1618, %v1872
      %v1925 = vadd.f32 %v1619, %v1877
      %v1926 = vadd.f32 %v1620, %v1880
      %v1927 = vadd.f32 %v1621, %v1885
      %v1928 = vadd.f32 %v1622, %v1888
      %v1929 = vadd.f32 %v1623, %v1893
      %v1930 = vadd.f32 %v1624, %v1896
      %v1931 = vld [vmem:[%s433 + $0x2] sm:$0xff]
      %v1932 = vld [vmem:[%s433 + $0xa] sm:$0xff]
      %v1933 = vld [vmem:[%s433 + $0x1a] sm:$0xff]
      %v1934 = vld [vmem:[%s433 + $0x22] sm:$0xff]
      %v1935 = vld [vmem:[%s433 + $0x32] sm:$0xff]
      %v1936 = vld [vmem:[%s433 + $0x3a] sm:$0xff]
      %v1937 = vld [vmem:[%s433 + $0x4a] sm:$0xff]
      %v1938 = vld [vmem:[%s433 + $0x52] sm:$0xff]
      %v1939 = vld [vmem:[%s433 + $0x62] sm:$0xff]
      %v1940 = vld [vmem:[%s433 + $0x6a] sm:$0xff]
      %v1941 = vld [vmem:[%s433 + $0x7a] sm:$0xff]
      %v1942 = vld [vmem:[%s433 + $0x82] sm:$0xff]
      %v1943 = vld [vmem:[%s433 + $0x92] sm:$0xff]
      %v1944 = vld [vmem:[%s433 + $0x9a] sm:$0xff]
      %v1945 = vld [vmem:[%s433 + $0xaa] sm:$0xff]
      %v1946 = vld [vmem:[%s433 + $0xb2] sm:$0xff]
      %v1947 = vld [vmem:[%s433 + $0xc2] sm:$0xff]
      %v1948 = vld [vmem:[%s433 + $0xca] sm:$0xff]
      %v1949 = vld [vmem:[%s433 + $0xda] sm:$0xff]
      %v1950 = vld [vmem:[%s433 + $0xe2] sm:$0xff]
      %v1951 = vld [vmem:[%s433 + $0xf2] sm:$0xff]
      %v1952 = vld [vmem:[%s433 + $0xfa] sm:$0xff]
      %v1953 = vld [vmem:[%s433 + $0x10a] sm:$0xff]
      %v1954 = vld [vmem:[%s433 + $0x112] sm:$0xff]
      %v1955 = vld [vmem:[%s433 + $0x122] sm:$0xff]
      %v1956 = vld [vmem:[%s433 + $0x12a] sm:$0xff]
      %v1957 = vld [vmem:[%s433 + $0x13a] sm:$0xff]
      %v1958 = vld [vmem:[%s433 + $0x142] sm:$0xff]
      %v1959 = vld [vmem:[%s433 + $0x152] sm:$0xff]
      %v1960 = vld [vmem:[%s433 + $0x15a] sm:$0xff]
      %v1961 = vld [vmem:[%s433 + $0x16a] sm:$0xff]
      %v1962 = vld [vmem:[%s433 + $0x172] sm:$0xff]
      %v1963 = vpack.c.bf16 %v1932, %v1931
      %v1964 = vpack.c.bf16 %v1934, %v1933
      %v1965 = vpack.c.bf16 %v1936, %v1935
      %v1966 = vpack.c.bf16 %v1938, %v1937
      %v1967 = vpack.c.bf16 %v1940, %v1939
      %v1968 = vpack.c.bf16 %v1942, %v1941
      %v1969 = vpack.c.bf16 %v1944, %v1943
      %v1970 = vpack.c.bf16 %v1946, %v1945
      %v1971 = vpack.c.bf16 %v1948, %v1947
      %v1972 = vpack.c.bf16 %v1950, %v1949
      %v1973 = vpack.c.bf16 %v1952, %v1951
      %v1974 = vpack.c.bf16 %v1954, %v1953
      %v1975 = vpack.c.bf16 %v1956, %v1955
      %v1976 = vpack.c.bf16 %v1958, %v1957
      %v1977 = vpack.c.bf16 %v1960, %v1959
      %v1978 = vpack.c.bf16 %v1962, %v1961
      %s1979 = scalar_lea.vmem %s3, 320
      %v1980 = vld [vmem:[%s1979] sm:$0xf]
      %v1981 = vld [vmem:[%s1979 + $0x4] sm:$0xf]
      %v1982 = vld [vmem:[%s1979 + $0x8] sm:$0xf]
      %v1983 = vld [vmem:[%s1979 + $0xc] sm:$0xf]
      %v1984 = vld [vmem:[%s1979 + $0x10] sm:$0xf]
      %v1985 = vld [vmem:[%s1979 + $0x14] sm:$0xf]
      %v1986 = vld [vmem:[%s1979 + $0x18] sm:$0xf]
      %v1987 = vld [vmem:[%s1979 + $0x1c] sm:$0xf]
      %v1988 = vld [vmem:[%s1979 + $0x20] sm:$0xf]
      %v1989 = vld [vmem:[%s1979 + $0x24] sm:$0xf]
      %v1990 = vld [vmem:[%s1979 + $0x28] sm:$0xf]
      %v1991 = vld [vmem:[%s1979 + $0x2c] sm:$0xf]
      %v1992 = vld [vmem:[%s1979 + $0x30] sm:$0xf]
      %v1993 = vld [vmem:[%s1979 + $0x34] sm:$0xf]
      %v1994 = vld [vmem:[%s1979 + $0x38] sm:$0xf]
      %v1995 = vld [vmem:[%s1979 + $0x3c] sm:$0xf]
      %v2012 = vunpack.c.l.b16 %v1980
      %v2013 = vunpack.c.l.b16 %v1981
      %v2014 = vunpack.c.l.b16 %v1982
      %v2015 = vunpack.c.l.b16 %v1983
      %v2016 = vunpack.c.l.b16 %v1984
      %v2017 = vunpack.c.l.b16 %v1985
      %v2018 = vunpack.c.l.b16 %v1986
      %v2019 = vunpack.c.l.b16 %v1987
      %v2020 = vunpack.c.l.b16 %v1988
      %v2021 = vunpack.c.l.b16 %v1989
      %v2022 = vunpack.c.l.b16 %v1990
      %v2023 = vunpack.c.l.b16 %v1991
      %v2024 = vunpack.c.l.b16 %v1992
      %v2025 = vunpack.c.l.b16 %v1993
      %v2026 = vunpack.c.l.b16 %v1994
      %v2027 = vunpack.c.l.b16 %v1995
      %v2028 = vpack.c.b16 %v2013, %v2012
      %v2029 = vpack.c.b16 %v2015, %v2014
      %v2030 = vpack.c.b16 %v2017, %v2016
      %v2031 = vpack.c.b16 %v2019, %v2018
      %v2032 = vpack.c.b16 %v2021, %v2020
      %v2033 = vpack.c.b16 %v2023, %v2022
      %v2034 = vpack.c.b16 %v2025, %v2024
      %v2035 = vpack.c.b16 %v2027, %v2026
      %2044 = vmatprep.subr.bf16.mxu0 0
      %2045 = vmatpush1.bf16.msra.mxu0 %v2028
      %2046 = vmatprep.subr.bf16.mxu0 0
      %2047 = vmatpush1.bf16.msra.mxu0 %v2029
      %2048 = vmatprep.subr.bf16.mxu0 0
      %2049 = vmatpush1.bf16.msra.mxu0 %v2030
      %2050 = vmatprep.subr.bf16.mxu0 0
      %2051 = vmatpush1.bf16.msra.mxu0 %v2031
      %2052 = vmatprep.subr.bf16.mxu0 0
      %2053 = vmatpush1.bf16.msra.mxu0 %v2032
      %2054 = vmatprep.subr.bf16.mxu0 0
      %2055 = vmatpush1.bf16.msra.mxu0 %v2033
      %2056 = vmatprep.subr.bf16.mxu0 0
      %2057 = vmatpush1.bf16.msra.mxu0 %v2034
      %2058 = vmatprep.subr.bf16.mxu0 0
      %2059 = vmatpush1.bf16.msra.mxu0 %v2035
      %2060 = vmatprep.subr.bf16.mxu0 0
      %2061 = vmatpush1.bf16.msra.mxu0 0
      %2062 = vmatprep.subr.bf16.mxu0 0
      %2063 = vmatpush1.bf16.msra.mxu0 0
      %2064 = vmatprep.subr.bf16.mxu0 0
      %2065 = vmatpush1.bf16.msra.mxu0 0
      %2066 = vmatprep.subr.bf16.mxu0 0
      %2067 = vmatpush1.bf16.msra.mxu0 0
      %2068 = vmatprep.subr.bf16.mxu0 0
      %2069 = vmatpush1.bf16.msra.mxu0 0
      %2070 = vmatprep.subr.bf16.mxu0 0
      %2071 = vmatpush1.bf16.msra.mxu0 0
      %2072 = vmatprep.subr.bf16.mxu0 0
      %2073 = vmatpush1.bf16.msra.mxu0 0
      %2074 = vmatprep.subr.bf16.mxu0 0
      %2075 = vmatpush1.bf16.msra.mxu0 0
      %2076 = vmatprep.mubr.bf16.mxu0 0
      %2077 = vmatmul.mubr.bf16.gmra.mrb[0].mxu0 %v1963
      %v2078 = vpop.f32.mrb[0].mxu0
      %v2079 = vadd.f32 0.0, %v2078
      %v2080 = vpop.f32.mrb[0].mxu0
      %v2081 = vpop.f32.mrb[0].mxu0
      %v2082 = vadd.f32 0.0, %v2081
      %v2083 = vpop.f32.mrb[0].mxu0
      %2084 = vmatprep.mubr.bf16.mxu0 0
      %2085 = vmatmul.mubr.bf16.gmra.mrb[0].mxu0 %v1964
      %v2086 = vpop.f32.mrb[0].mxu0
      %v2087 = vadd.f32 0.0, %v2086
      %v2088 = vpop.f32.mrb[0].mxu0
      %v2089 = vpop.f32.mrb[0].mxu0
      %v2090 = vadd.f32 0.0, %v2089
      %v2091 = vpop.f32.mrb[0].mxu0
      %2092 = vmatprep.mubr.bf16.mxu0 0
      %2093 = vmatmul.mubr.bf16.gmra.mrb[0].mxu0 %v1965
      %v2094 = vpop.f32.mrb[0].mxu0
      %v2095 = vadd.f32 0.0, %v2094
      %v2096 = vpop.f32.mrb[0].mxu0
      %v2097 = vpop.f32.mrb[0].mxu0
      %v2098 = vadd.f32 0.0, %v2097
      %v2099 = vpop.f32.mrb[0].mxu0
      %2100 = vmatprep.mubr.bf16.mxu0 0
      %2101 = vmatmul.mubr.bf16.gmra.mrb[0].mxu0 %v1966
      %v2102 = vpop.f32.mrb[0].mxu0
      %v2103 = vadd.f32 0.0, %v2102
      %v2104 = vpop.f32.mrb[0].mxu0
      %v2105 = vpop.f32.mrb[0].mxu0
      %v2106 = vadd.f32 0.0, %v2105
      %v2107 = vpop.f32.mrb[0].mxu0
      %2108 = vmatprep.mubr.bf16.mxu0 0
      %2109 = vmatmul.mubr.bf16.gmra.mrb[0].mxu0 %v1967
      %v2110 = vpop.f32.mrb[0].mxu0
      %v2111 = vadd.f32 0.0, %v2110
      %v2112 = vpop.f32.mrb[0].mxu0
      %v2113 = vpop.f32.mrb[0].mxu0
      %v2114 = vadd.f32 0.0, %v2113
      %v2115 = vpop.f32.mrb[0].mxu0
      %2116 = vmatprep.mubr.bf16.mxu0 0
      %2117 = vmatmul.mubr.bf16.gmra.mrb[0].mxu0 %v1968
      %v2118 = vpop.f32.mrb[0].mxu0
      %v2119 = vadd.f32 0.0, %v2118
      %v2120 = vpop.f32.mrb[0].mxu0
      %v2121 = vpop.f32.mrb[0].mxu0
      %v2122 = vadd.f32 0.0, %v2121
      %v2123 = vpop.f32.mrb[0].mxu0
      %2124 = vmatprep.mubr.bf16.mxu0 0
      %2125 = vmatmul.mubr.bf16.gmra.mrb[0].mxu0 %v1969
      %v2126 = vpop.f32.mrb[0].mxu0
      %v2127 = vadd.f32 0.0, %v2126
      %v2128 = vpop.f32.mrb[0].mxu0
      %v2129 = vpop.f32.mrb[0].mxu0
      %v2130 = vadd.f32 0.0, %v2129
      %v2131 = vpop.f32.mrb[0].mxu0
      %2132 = vmatprep.mubr.bf16.mxu0 0
      %2133 = vmatmul.mubr.bf16.gmra.mrb[0].mxu0 %v1970
      %v2134 = vpop.f32.mrb[0].mxu0
      %v2135 = vadd.f32 0.0, %v2134
      %v2136 = vpop.f32.mrb[0].mxu0
      %v2137 = vpop.f32.mrb[0].mxu0
      %v2138 = vadd.f32 0.0, %v2137
      %v2139 = vpop.f32.mrb[0].mxu0
      %2140 = vmatprep.mubr.bf16.mxu0 0
      %2141 = vmatmul.mubr.bf16.gmra.mrb[0].mxu0 %v1971
      %v2142 = vpop.f32.mrb[0].mxu0
      %v2143 = vadd.f32 0.0, %v2142
      %v2144 = vpop.f32.mrb[0].mxu0
      %v2145 = vpop.f32.mrb[0].mxu0
      %v2146 = vadd.f32 0.0, %v2145
      %v2147 = vpop.f32.mrb[0].mxu0
      %2148 = vmatprep.mubr.bf16.mxu0 0
      %2149 = vmatmul.mubr.bf16.gmra.mrb[0].mxu0 %v1972
      %v2150 = vpop.f32.mrb[0].mxu0
      %v2151 = vadd.f32 0.0, %v2150
      %v2152 = vpop.f32.mrb[0].mxu0
      %v2153 = vpop.f32.mrb[0].mxu0
      %v2154 = vadd.f32 0.0, %v2153
      %v2155 = vpop.f32.mrb[0].mxu0
      %2156 = vmatprep.mubr.bf16.mxu0 0
      %2157 = vmatmul.mubr.bf16.gmra.mrb[0].mxu0 %v1973
      %v2158 = vpop.f32.mrb[0].mxu0
      %v2159 = vadd.f32 0.0, %v2158
      %v2160 = vpop.f32.mrb[0].mxu0
      %v2161 = vpop.f32.mrb[0].mxu0
      %v2162 = vadd.f32 0.0, %v2161
      %v2163 = vpop.f32.mrb[0].mxu0
      %2164 = vmatprep.mubr.bf16.mxu0 0
      %2165 = vmatmul.mubr.bf16.gmra.mrb[0].mxu0 %v1974
      %v2166 = vpop.f32.mrb[0].mxu0
      %v2167 = vadd.f32 0.0, %v2166
      %v2168 = vpop.f32.mrb[0].mxu0
      %v2169 = vpop.f32.mrb[0].mxu0
      %v2170 = vadd.f32 0.0, %v2169
      %v2171 = vpop.f32.mrb[0].mxu0
      %2172 = vmatprep.mubr.bf16.mxu0 0
      %2173 = vmatmul.mubr.bf16.gmra.mrb[0].mxu0 %v1975
      %v2174 = vpop.f32.mrb[0].mxu0
      %v2175 = vadd.f32 0.0, %v2174
      %v2176 = vpop.f32.mrb[0].mxu0
      %v2177 = vpop.f32.mrb[0].mxu0
      %v2178 = vadd.f32 0.0, %v2177
      %v2179 = vpop.f32.mrb[0].mxu0
      %2180 = vmatprep.mubr.bf16.mxu0 0
      %2181 = vmatmul.mubr.bf16.gmra.mrb[0].mxu0 %v1976
      %v2182 = vpop.f32.mrb[0].mxu0
      %v2183 = vadd.f32 0.0, %v2182
      %v2184 = vpop.f32.mrb[0].mxu0
      %v2185 = vpop.f32.mrb[0].mxu0
      %v2186 = vadd.f32 0.0, %v2185
      %v2187 = vpop.f32.mrb[0].mxu0
      %2188 = vmatprep.mubr.bf16.mxu0 0
      %2189 = vmatmul.mubr.bf16.gmra.mrb[0].mxu0 %v1977
      %v2190 = vpop.f32.mrb[0].mxu0
      %v2191 = vadd.f32 0.0, %v2190
      %v2192 = vpop.f32.mrb[0].mxu0
      %v2193 = vpop.f32.mrb[0].mxu0
      %v2194 = vadd.f32 0.0, %v2193
      %v2195 = vpop.f32.mrb[0].mxu0
      %2196 = vmatprep.mubr.bf16.mxu0 0
      %2197 = vmatmul.mubr.bf16.gmra.mrb[0].mxu0 %v1978
      %v2198 = vpop.f32.mrb[0].mxu0
      %v2199 = vadd.f32 0.0, %v2198
      %v2200 = vpop.f32.mrb[0].mxu0
      %v2201 = vpop.f32.mrb[0].mxu0
      %v2202 = vadd.f32 0.0, %v2201
      %v2203 = vpop.f32.mrb[0].mxu0
      %2204 = vdwg.mxu0
      %v2205 = vadd.f32 %v1899, %v2079
      %v2206 = vadd.f32 %v1900, %v2082
      %v2207 = vadd.f32 %v1901, %v2087
      %v2208 = vadd.f32 %v1902, %v2090
      %v2209 = vadd.f32 %v1903, %v2095
      %v2210 = vadd.f32 %v1904, %v2098
      %v2211 = vadd.f32 %v1905, %v2103
      %v2212 = vadd.f32 %v1906, %v2106
      %v2213 = vadd.f32 %v1907, %v2111
      %v2214 = vadd.f32 %v1908, %v2114
      %v2215 = vadd.f32 %v1909, %v2119
      %v2216 = vadd.f32 %v1910, %v2122
      %v2217 = vadd.f32 %v1911, %v2127
      %v2218 = vadd.f32 %v1912, %v2130
      %v2219 = vadd.f32 %v1913, %v2135
      %v2220 = vadd.f32 %v1914, %v2138
      %v2221 = vadd.f32 %v1915, %v2143
      %v2222 = vadd.f32 %v1916, %v2146
      %v2223 = vadd.f32 %v1917, %v2151
      %v2224 = vadd.f32 %v1918, %v2154
      %v2225 = vadd.f32 %v1919, %v2159
      %v2226 = vadd.f32 %v1920, %v2162
      %v2227 = vadd.f32 %v1921, %v2167
      %v2228 = vadd.f32 %v1922, %v2170
      %v2229 = vadd.f32 %v1923, %v2175
      %v2230 = vadd.f32 %v1924, %v2178
      %v2231 = vadd.f32 %v1925, %v2183
      %v2232 = vadd.f32 %v1926, %v2186
      %v2233 = vadd.f32 %v1927, %v2191
      %v2234 = vadd.f32 %v1928, %v2194
      %v2235 = vadd.f32 %v1929, %v2199
      %v2236 = vadd.f32 %v1930, %v2202
      %s2237 = scalar_lea.vmem [#allocation2], 48
      %v2238 = vld [vmem:[%s2237] sm:$0xff]
      %v2239 = vld [vmem:[%s2237 + $0x8] sm:$0xff]
      %v2240 = vld [vmem:[%s2237 + $0x18] sm:$0xff]
      %v2241 = vld [vmem:[%s2237 + $0x20] sm:$0xff]
      %v2242 = vld [vmem:[%s2237 + $0x30] sm:$0xff]
      %v2243 = vld [vmem:[%s2237 + $0x38] sm:$0xff]
      %v2244 = vld [vmem:[%s2237 + $0x48] sm:$0xff]
      %v2245 = vld [vmem:[%s2237 + $0x50] sm:$0xff]
      %v2246 = vld [vmem:[%s2237 + $0x60] sm:$0xff]
      %v2247 = vld [vmem:[%s2237 + $0x68] sm:$0xff]
      %v2248 = vld [vmem:[%s2237 + $0x78] sm:$0xff]
      %v2249 = vld [vmem:[%s2237 + $0x80] sm:$0xff]
      %v2250 = vld [vmem:[%s2237 + $0x90] sm:$0xff]
      %v2251 = vld [vmem:[%s2237 + $0x98] sm:$0xff]
      %v2252 = vld [vmem:[%s2237 + $0xa8] sm:$0xff]
      %v2253 = vld [vmem:[%s2237 + $0xb0] sm:$0xff]
      %v2254 = vld [vmem:[%s2237 + $0xc0] sm:$0xff]
      %v2255 = vld [vmem:[%s2237 + $0xc8] sm:$0xff]
      %v2256 = vld [vmem:[%s2237 + $0xd8] sm:$0xff]
      %v2257 = vld [vmem:[%s2237 + $0xe0] sm:$0xff]
      %v2258 = vld [vmem:[%s2237 + $0xf0] sm:$0xff]
      %v2259 = vld [vmem:[%s2237 + $0xf8] sm:$0xff]
      %v2260 = vld [vmem:[%s2237 + $0x108] sm:$0xff]
      %v2261 = vld [vmem:[%s2237 + $0x110] sm:$0xff]
      %v2262 = vld [vmem:[%s2237 + $0x120] sm:$0xff]
      %v2263 = vld [vmem:[%s2237 + $0x128] sm:$0xff]
      %v2264 = vld [vmem:[%s2237 + $0x138] sm:$0xff]
      %v2265 = vld [vmem:[%s2237 + $0x140] sm:$0xff]
      %v2266 = vld [vmem:[%s2237 + $0x150] sm:$0xff]
      %v2267 = vld [vmem:[%s2237 + $0x158] sm:$0xff]
      %v2268 = vld [vmem:[%s2237 + $0x168] sm:$0xff]
      %v2269 = vld [vmem:[%s2237 + $0x170] sm:$0xff]
      %v2270 = vpack.c.bf16 %v2239, %v2238
      %v2271 = vpack.c.bf16 %v2241, %v2240
      %v2272 = vpack.c.bf16 %v2243, %v2242
      %v2273 = vpack.c.bf16 %v2245, %v2244
      %v2274 = vpack.c.bf16 %v2247, %v2246
      %v2275 = vpack.c.bf16 %v2249, %v2248
      %v2276 = vpack.c.bf16 %v2251, %v2250
      %v2277 = vpack.c.bf16 %v2253, %v2252
      %v2278 = vpack.c.bf16 %v2255, %v2254
      %v2279 = vpack.c.bf16 %v2257, %v2256
      %v2280 = vpack.c.bf16 %v2259, %v2258
      %v2281 = vpack.c.bf16 %v2261, %v2260
      %v2282 = vpack.c.bf16 %v2263, %v2262
      %v2283 = vpack.c.bf16 %v2265, %v2264
      %v2284 = vpack.c.bf16 %v2267, %v2266
      %v2285 = vpack.c.bf16 %v2269, %v2268
      %s2286 = scalar_lea.vmem %s3, 384
      %v2287 = vld [vmem:[%s2286] sm:$0xf]
      %v2288 = vld [vmem:[%s2286 + $0x4] sm:$0xf]
      %v2289 = vld [vmem:[%s2286 + $0x8] sm:$0xf]
      %v2290 = vld [vmem:[%s2286 + $0xc] sm:$0xf]
      %v2291 = vld [vmem:[%s2286 + $0x10] sm:$0xf]
      %v2292 = vld [vmem:[%s2286 + $0x14] sm:$0xf]
      %v2293 = vld [vmem:[%s2286 + $0x18] sm:$0xf]
      %v2294 = vld [vmem:[%s2286 + $0x1c] sm:$0xf]
      %v2295 = vld [vmem:[%s2286 + $0x20] sm:$0xf]
      %v2296 = vld [vmem:[%s2286 + $0x24] sm:$0xf]
      %v2297 = vld [vmem:[%s2286 + $0x28] sm:$0xf]
      %v2298 = vld [vmem:[%s2286 + $0x2c] sm:$0xf]
      %v2299 = vld [vmem:[%s2286 + $0x30] sm:$0xf]
      %v2300 = vld [vmem:[%s2286 + $0x34] sm:$0xf]
      %v2301 = vld [vmem:[%s2286 + $0x38] sm:$0xf]
      %v2302 = vld [vmem:[%s2286 + $0x3c] sm:$0xf]
      %v2319 = vunpack.c.l.b16 %v2287
      %v2320 = vunpack.c.l.b16 %v2288
      %v2321 = vunpack.c.l.b16 %v2289
      %v2322 = vunpack.c.l.b16 %v2290
      %v2323 = vunpack.c.l.b16 %v2291
      %v2324 = vunpack.c.l.b16 %v2292
      %v2325 = vunpack.c.l.b16 %v2293
      %v2326 = vunpack.c.l.b16 %v2294
      %v2327 = vunpack.c.l.b16 %v2295
      %v2328 = vunpack.c.l.b16 %v2296
      %v2329 = vunpack.c.l.b16 %v2297
      %v2330 = vunpack.c.l.b16 %v2298
      %v2331 = vunpack.c.l.b16 %v2299
      %v2332 = vunpack.c.l.b16 %v2300
      %v2333 = vunpack.c.l.b16 %v2301
      %v2334 = vunpack.c.l.b16 %v2302
      %v2335 = vpack.c.b16 %v2320, %v2319
      %v2336 = vpack.c.b16 %v2322, %v2321
      %v2337 = vpack.c.b16 %v2324, %v2323
      %v2338 = vpack.c.b16 %v2326, %v2325
      %v2339 = vpack.c.b16 %v2328, %v2327
      %v2340 = vpack.c.b16 %v2330, %v2329
      %v2341 = vpack.c.b16 %v2332, %v2331
      %v2342 = vpack.c.b16 %v2334, %v2333
      %2351 = vmatprep.subr.bf16.mxu0 0
      %2352 = vmatpush1.bf16.msra.mxu0 %v2335
      %2353 = vmatprep.subr.bf16.mxu0 0
      %2354 = vmatpush1.bf16.msra.mxu0 %v2336
      %2355 = vmatprep.subr.bf16.mxu0 0
      %2356 = vmatpush1.bf16.msra.mxu0 %v2337
      %2357 = vmatprep.subr.bf16.mxu0 0
      %2358 = vmatpush1.bf16.msra.mxu0 %v2338
      %2359 = vmatprep.subr.bf16.mxu0 0
      %2360 = vmatpush1.bf16.msra.mxu0 %v2339
      %2361 = vmatprep.subr.bf16.mxu0 0
      %2362 = vmatpush1.bf16.msra.mxu0 %v2340
      %2363 = vmatprep.subr.bf16.mxu0 0
      %2364 = vmatpush1.bf16.msra.mxu0 %v2341
      %2365 = vmatprep.subr.bf16.mxu0 0
      %2366 = vmatpush1.bf16.msra.mxu0 %v2342
      %2367 = vmatprep.subr.bf16.mxu0 0
      %2368 = vmatpush1.bf16.msra.mxu0 0
      %2369 = vmatprep.subr.bf16.mxu0 0
      %2370 = vmatpush1.bf16.msra.mxu0 0
      %2371 = vmatprep.subr.bf16.mxu0 0
      %2372 = vmatpush1.bf16.msra.mxu0 0
      %2373 = vmatprep.subr.bf16.mxu0 0
      %2374 = vmatpush1.bf16.msra.mxu0 0
      %2375 = vmatprep.subr.bf16.mxu0 0
      %2376 = vmatpush1.bf16.msra.mxu0 0
      %2377 = vmatprep.subr.bf16.mxu0 0
      %2378 = vmatpush1.bf16.msra.mxu0 0
      %2379 = vmatprep.subr.bf16.mxu0 0
      %2380 = vmatpush1.bf16.msra.mxu0 0
      %2381 = vmatprep.subr.bf16.mxu0 0
      %2382 = vmatpush1.bf16.msra.mxu0 0
      %2383 = vmatprep.mubr.bf16.mxu0 0
      %2384 = vmatmul.mubr.bf16.gmra.mrb[0].mxu0 %v2270
      %v2385 = vpop.f32.mrb[0].mxu0
      %v2386 = vadd.f32 0.0, %v2385
      %v2387 = vpop.f32.mrb[0].mxu0
      %v2388 = vpop.f32.mrb[0].mxu0
      %v2389 = vadd.f32 0.0, %v2388
      %v2390 = vpop.f32.mrb[0].mxu0
      %2391 = vmatprep.mubr.bf16.mxu0 0
      %2392 = vmatmul.mubr.bf16.gmra.mrb[0].mxu0 %v2271
      %v2393 = vpop.f32.mrb[0].mxu0
      %v2394 = vadd.f32 0.0, %v2393
      %v2395 = vpop.f32.mrb[0].mxu0
      %v2396 = vpop.f32.mrb[0].mxu0
      %v2397 = vadd.f32 0.0, %v2396
      %v2398 = vpop.f32.mrb[0].mxu0
      %2399 = vmatprep.mubr.bf16.mxu0 0
      %2400 = vmatmul.mubr.bf16.gmra.mrb[0].mxu0 %v2272
      %v2401 = vpop.f32.mrb[0].mxu0
      %v2402 = vadd.f32 0.0, %v2401
      %v2403 = vpop.f32.mrb[0].mxu0
      %v2404 = vpop.f32.mrb[0].mxu0
      %v2405 = vadd.f32 0.0, %v2404
      %v2406 = vpop.f32.mrb[0].mxu0
      %2407 = vmatprep.mubr.bf16.mxu0 0
      %2408 = vmatmul.mubr.bf16.gmra.mrb[0].mxu0 %v2273
      %v2409 = vpop.f32.mrb[0].mxu0
      %v2410 = vadd.f32 0.0, %v2409
      %v2411 = vpop.f32.mrb[0].mxu0
      %v2412 = vpop.f32.mrb[0].mxu0
      %v2413 = vadd.f32 0.0, %v2412
      %v2414 = vpop.f32.mrb[0].mxu0
      %2415 = vmatprep.mubr.bf16.mxu0 0
      %2416 = vmatmul.mubr.bf16.gmra.mrb[0].mxu0 %v2274
      %v2417 = vpop.f32.mrb[0].mxu0
      %v2418 = vadd.f32 0.0, %v2417
      %v2419 = vpop.f32.mrb[0].mxu0
      %v2420 = vpop.f32.mrb[0].mxu0
      %v2421 = vadd.f32 0.0, %v2420
      %v2422 = vpop.f32.mrb[0].mxu0
      %2423 = vmatprep.mubr.bf16.mxu0 0
      %2424 = vmatmul.mubr.bf16.gmra.mrb[0].mxu0 %v2275
      %v2425 = vpop.f32.mrb[0].mxu0
      %v2426 = vadd.f32 0.0, %v2425
      %v2427 = vpop.f32.mrb[0].mxu0
      %v2428 = vpop.f32.mrb[0].mxu0
      %v2429 = vadd.f32 0.0, %v2428
      %v2430 = vpop.f32.mrb[0].mxu0
      %2431 = vmatprep.mubr.bf16.mxu0 0
      %2432 = vmatmul.mubr.bf16.gmra.mrb[0].mxu0 %v2276
      %v2433 = vpop.f32.mrb[0].mxu0
      %v2434 = vadd.f32 0.0, %v2433
      %v2435 = vpop.f32.mrb[0].mxu0
      %v2436 = vpop.f32.mrb[0].mxu0
      %v2437 = vadd.f32 0.0, %v2436
      %v2438 = vpop.f32.mrb[0].mxu0
      %2439 = vmatprep.mubr.bf16.mxu0 0
      %2440 = vmatmul.mubr.bf16.gmra.mrb[0].mxu0 %v2277
      %v2441 = vpop.f32.mrb[0].mxu0
      %v2442 = vadd.f32 0.0, %v2441
      %v2443 = vpop.f32.mrb[0].mxu0
      %v2444 = vpop.f32.mrb[0].mxu0
      %v2445 = vadd.f32 0.0, %v2444
      %v2446 = vpop.f32.mrb[0].mxu0
      %2447 = vmatprep.mubr.bf16.mxu0 0
      %2448 = vmatmul.mubr.bf16.gmra.mrb[0].mxu0 %v2278
      %v2449 = vpop.f32.mrb[0].mxu0
      %v2450 = vadd.f32 0.0, %v2449
      %v2451 = vpop.f32.mrb[0].mxu0
      %v2452 = vpop.f32.mrb[0].mxu0
      %v2453 = vadd.f32 0.0, %v2452
      %v2454 = vpop.f32.mrb[0].mxu0
      %2455 = vmatprep.mubr.bf16.mxu0 0
      %2456 = vmatmul.mubr.bf16.gmra.mrb[0].mxu0 %v2279
      %v2457 = vpop.f32.mrb[0].mxu0
      %v2458 = vadd.f32 0.0, %v2457
      %v2459 = vpop.f32.mrb[0].mxu0
      %v2460 = vpop.f32.mrb[0].mxu0
      %v2461 = vadd.f32 0.0, %v2460
      %v2462 = vpop.f32.mrb[0].mxu0
      %2463 = vmatprep.mubr.bf16.mxu0 0
      %2464 = vmatmul.mubr.bf16.gmra.mrb[0].mxu0 %v2280
      %v2465 = vpop.f32.mrb[0].mxu0
      %v2466 = vadd.f32 0.0, %v2465
      %v2467 = vpop.f32.mrb[0].mxu0
      %v2468 = vpop.f32.mrb[0].mxu0
      %v2469 = vadd.f32 0.0, %v2468
      %v2470 = vpop.f32.mrb[0].mxu0
      %2471 = vmatprep.mubr.bf16.mxu0 0
      %2472 = vmatmul.mubr.bf16.gmra.mrb[0].mxu0 %v2281
      %v2473 = vpop.f32.mrb[0].mxu0
      %v2474 = vadd.f32 0.0, %v2473
      %v2475 = vpop.f32.mrb[0].mxu0
      %v2476 = vpop.f32.mrb[0].mxu0
      %v2477 = vadd.f32 0.0, %v2476
      %v2478 = vpop.f32.mrb[0].mxu0
      %2479 = vmatprep.mubr.bf16.mxu0 0
      %2480 = vmatmul.mubr.bf16.gmra.mrb[0].mxu0 %v2282
      %v2481 = vpop.f32.mrb[0].mxu0
      %v2482 = vadd.f32 0.0, %v2481
      %v2483 = vpop.f32.mrb[0].mxu0
      %v2484 = vpop.f32.mrb[0].mxu0
      %v2485 = vadd.f32 0.0, %v2484
      %v2486 = vpop.f32.mrb[0].mxu0
      %2487 = vmatprep.mubr.bf16.mxu0 0
      %2488 = vmatmul.mubr.bf16.gmra.mrb[0].mxu0 %v2283
      %v2489 = vpop.f32.mrb[0].mxu0
      %v2490 = vadd.f32 0.0, %v2489
      %v2491 = vpop.f32.mrb[0].mxu0
      %v2492 = vpop.f32.mrb[0].mxu0
      %v2493 = vadd.f32 0.0, %v2492
      %v2494 = vpop.f32.mrb[0].mxu0
      %2495 = vmatprep.mubr.bf16.mxu0 0
      %2496 = vmatmul.mubr.bf16.gmra.mrb[0].mxu0 %v2284
      %v2497 = vpop.f32.mrb[0].mxu0
      %v2498 = vadd.f32 0.0, %v2497
      %v2499 = vpop.f32.mrb[0].mxu0
      %v2500 = vpop.f32.mrb[0].mxu0
      %v2501 = vadd.f32 0.0, %v2500
      %v2502 = vpop.f32.mrb[0].mxu0
      %2503 = vmatprep.mubr.bf16.mxu0 0
      %2504 = vmatmul.mubr.bf16.gmra.mrb[0].mxu0 %v2285
      %v2505 = vpop.f32.mrb[0].mxu0
      %v2506 = vadd.f32 0.0, %v2505
      %v2507 = vpop.f32.mrb[0].mxu0
      %v2508 = vpop.f32.mrb[0].mxu0
      %v2509 = vadd.f32 0.0, %v2508
      %v2510 = vpop.f32.mrb[0].mxu0
      %2511 = vdwg.mxu0
      %v2512 = vadd.f32 %v2205, %v2386
      %v2513 = vadd.f32 %v2206, %v2389
      %v2514 = vadd.f32 %v2207, %v2394
      %v2515 = vadd.f32 %v2208, %v2397
      %v2516 = vadd.f32 %v2209, %v2402
      %v2517 = vadd.f32 %v2210, %v2405
      %v2518 = vadd.f32 %v2211, %v2410
      %v2519 = vadd.f32 %v2212, %v2413
      %v2520 = vadd.f32 %v2213, %v2418
      %v2521 = vadd.f32 %v2214, %v2421
      %v2522 = vadd.f32 %v2215, %v2426
      %v2523 = vadd.f32 %v2216, %v2429
      %v2524 = vadd.f32 %v2217, %v2434
      %v2525 = vadd.f32 %v2218, %v2437
      %v2526 = vadd.f32 %v2219, %v2442
      %v2527 = vadd.f32 %v2220, %v2445
      %v2528 = vadd.f32 %v2221, %v2450
      %v2529 = vadd.f32 %v2222, %v2453
      %v2530 = vadd.f32 %v2223, %v2458
      %v2531 = vadd.f32 %v2224, %v2461
      %v2532 = vadd.f32 %v2225, %v2466
      %v2533 = vadd.f32 %v2226, %v2469
      %v2534 = vadd.f32 %v2227, %v2474
      %v2535 = vadd.f32 %v2228, %v2477
      %v2536 = vadd.f32 %v2229, %v2482
      %v2537 = vadd.f32 %v2230, %v2485
      %v2538 = vadd.f32 %v2231, %v2490
      %v2539 = vadd.f32 %v2232, %v2493
      %v2540 = vadd.f32 %v2233, %v2498
      %v2541 = vadd.f32 %v2234, %v2501
      %v2542 = vadd.f32 %v2235, %v2506
      %v2543 = vadd.f32 %v2236, %v2509
      %v2544 = vld [vmem:[%s2237 + $0x1] sm:$0xff]
      %v2545 = vld [vmem:[%s2237 + $0x9] sm:$0xff]
      %v2546 = vld [vmem:[%s2237 + $0x19] sm:$0xff]
      %v2547 = vld [vmem:[%s2237 + $0x21] sm:$0xff]
      %v2548 = vld [vmem:[%s2237 + $0x31] sm:$0xff]
      %v2549 = vld [vmem:[%s2237 + $0x39] sm:$0xff]
      %v2550 = vld [vmem:[%s2237 + $0x49] sm:$0xff]
      %v2551 = vld [vmem:[%s2237 + $0x51] sm:$0xff]
      %v2552 = vld [vmem:[%s2237 + $0x61] sm:$0xff]
      %v2553 = vld [vmem:[%s2237 + $0x69] sm:$0xff]
      %v2554 = vld [vmem:[%s2237 + $0x79] sm:$0xff]
      %v2555 = vld [vmem:[%s2237 + $0x81] sm:$0xff]
      %v2556 = vld [vmem:[%s2237 + $0x91] sm:$0xff]
      %v2557 = vld [vmem:[%s2237 + $0x99] sm:$0xff]
      %v2558 = vld [vmem:[%s2237 + $0xa9] sm:$0xff]
      %v2559 = vld [vmem:[%s2237 + $0xb1] sm:$0xff]
      %v2560 = vld [vmem:[%s2237 + $0xc1] sm:$0xff]
      %v2561 = vld [vmem:[%s2237 + $0xc9] sm:$0xff]
      %v2562 = vld [vmem:[%s2237 + $0xd9] sm:$0xff]
      %v2563 = vld [vmem:[%s2237 + $0xe1] sm:$0xff]
      %v2564 = vld [vmem:[%s2237 + $0xf1] sm:$0xff]
      %v2565 = vld [vmem:[%s2237 + $0xf9] sm:$0xff]
      %v2566 = vld [vmem:[%s2237 + $0x109] sm:$0xff]
      %v2567 = vld [vmem:[%s2237 + $0x111] sm:$0xff]
      %v2568 = vld [vmem:[%s2237 + $0x121] sm:$0xff]
      %v2569 = vld [vmem:[%s2237 + $0x129] sm:$0xff]
      %v2570 = vld [vmem:[%s2237 + $0x139] sm:$0xff]
      %v2571 = vld [vmem:[%s2237 + $0x141] sm:$0xff]
      %v2572 = vld [vmem:[%s2237 + $0x151] sm:$0xff]
      %v2573 = vld [vmem:[%s2237 + $0x159] sm:$0xff]
      %v2574 = vld [vmem:[%s2237 + $0x169] sm:$0xff]
      %v2575 = vld [vmem:[%s2237 + $0x171] sm:$0xff]
      %v2576 = vpack.c.bf16 %v2545, %v2544
      %v2577 = vpack.c.bf16 %v2547, %v2546
      %v2578 = vpack.c.bf16 %v2549, %v2548
      %v2579 = vpack.c.bf16 %v2551, %v2550
      %v2580 = vpack.c.bf16 %v2553, %v2552
      %v2581 = vpack.c.bf16 %v2555, %v2554
      %v2582 = vpack.c.bf16 %v2557, %v2556
      %v2583 = vpack.c.bf16 %v2559, %v2558
      %v2584 = vpack.c.bf16 %v2561, %v2560
      %v2585 = vpack.c.bf16 %v2563, %v2562
      %v2586 = vpack.c.bf16 %v2565, %v2564
      %v2587 = vpack.c.bf16 %v2567, %v2566
      %v2588 = vpack.c.bf16 %v2569, %v2568
      %v2589 = vpack.c.bf16 %v2571, %v2570
      %v2590 = vpack.c.bf16 %v2573, %v2572
      %v2591 = vpack.c.bf16 %v2575, %v2574
      %s2592 = scalar_lea.vmem %s3, 448
      %v2593 = vld [vmem:[%s2592] sm:$0xf]
      %v2594 = vld [vmem:[%s2592 + $0x4] sm:$0xf]
      %v2595 = vld [vmem:[%s2592 + $0x8] sm:$0xf]
      %v2596 = vld [vmem:[%s2592 + $0xc] sm:$0xf]
      %v2597 = vld [vmem:[%s2592 + $0x10] sm:$0xf]
      %v2598 = vld [vmem:[%s2592 + $0x14] sm:$0xf]
      %v2599 = vld [vmem:[%s2592 + $0x18] sm:$0xf]
      %v2600 = vld [vmem:[%s2592 + $0x1c] sm:$0xf]
      %v2601 = vld [vmem:[%s2592 + $0x20] sm:$0xf]
      %v2602 = vld [vmem:[%s2592 + $0x24] sm:$0xf]
      %v2603 = vld [vmem:[%s2592 + $0x28] sm:$0xf]
      %v2604 = vld [vmem:[%s2592 + $0x2c] sm:$0xf]
      %v2605 = vld [vmem:[%s2592 + $0x30] sm:$0xf]
      %v2606 = vld [vmem:[%s2592 + $0x34] sm:$0xf]
      %v2607 = vld [vmem:[%s2592 + $0x38] sm:$0xf]
      %v2608 = vld [vmem:[%s2592 + $0x3c] sm:$0xf]
      %v2625 = vunpack.c.l.b16 %v2593
      %v2626 = vunpack.c.l.b16 %v2594
      %v2627 = vunpack.c.l.b16 %v2595
      %v2628 = vunpack.c.l.b16 %v2596
      %v2629 = vunpack.c.l.b16 %v2597
      %v2630 = vunpack.c.l.b16 %v2598
      %v2631 = vunpack.c.l.b16 %v2599
      %v2632 = vunpack.c.l.b16 %v2600
      %v2633 = vunpack.c.l.b16 %v2601
      %v2634 = vunpack.c.l.b16 %v2602
      %v2635 = vunpack.c.l.b16 %v2603
      %v2636 = vunpack.c.l.b16 %v2604
      %v2637 = vunpack.c.l.b16 %v2605
      %v2638 = vunpack.c.l.b16 %v2606
      %v2639 = vunpack.c.l.b16 %v2607
      %v2640 = vunpack.c.l.b16 %v2608
      %v2641 = vpack.c.b16 %v2626, %v2625
      %v2642 = vpack.c.b16 %v2628, %v2627
      %v2643 = vpack.c.b16 %v2630, %v2629
      %v2644 = vpack.c.b16 %v2632, %v2631
      %v2645 = vpack.c.b16 %v2634, %v2633
      %v2646 = vpack.c.b16 %v2636, %v2635
      %v2647 = vpack.c.b16 %v2638, %v2637
      %v2648 = vpack.c.b16 %v2640, %v2639
      %2657 = vmatprep.subr.bf16.mxu0 0
      %2658 = vmatpush1.bf16.msra.mxu0 %v2641
      %2659 = vmatprep.subr.bf16.mxu0 0
      %2660 = vmatpush1.bf16.msra.mxu0 %v2642
      %2661 = vmatprep.subr.bf16.mxu0 0
      %2662 = vmatpush1.bf16.msra.mxu0 %v2643
      %2663 = vmatprep.subr.bf16.mxu0 0
      %2664 = vmatpush1.bf16.msra.mxu0 %v2644
      %2665 = vmatprep.subr.bf16.mxu0 0
      %2666 = vmatpush1.bf16.msra.mxu0 %v2645
      %2667 = vmatprep.subr.bf16.mxu0 0
      %2668 = vmatpush1.bf16.msra.mxu0 %v2646
      %2669 = vmatprep.subr.bf16.mxu0 0
      %2670 = vmatpush1.bf16.msra.mxu0 %v2647
      %2671 = vmatprep.subr.bf16.mxu0 0
      %2672 = vmatpush1.bf16.msra.mxu0 %v2648
      %2673 = vmatprep.subr.bf16.mxu0 0
      %2674 = vmatpush1.bf16.msra.mxu0 0
      %2675 = vmatprep.subr.bf16.mxu0 0
      %2676 = vmatpush1.bf16.msra.mxu0 0
      %2677 = vmatprep.subr.bf16.mxu0 0
      %2678 = vmatpush1.bf16.msra.mxu0 0
      %2679 = vmatprep.subr.bf16.mxu0 0
      %2680 = vmatpush1.bf16.msra.mxu0 0
      %2681 = vmatprep.subr.bf16.mxu0 0
      %2682 = vmatpush1.bf16.msra.mxu0 0
      %2683 = vmatprep.subr.bf16.mxu0 0
      %2684 = vmatpush1.bf16.msra.mxu0 0
      %2685 = vmatprep.subr.bf16.mxu0 0
      %2686 = vmatpush1.bf16.msra.mxu0 0
      %2687 = vmatprep.subr.bf16.mxu0 0
      %2688 = vmatpush1.bf16.msra.mxu0 0
      %2689 = vmatprep.mubr.bf16.mxu0 0
      %2690 = vmatmul.mubr.bf16.gmra.mrb[0].mxu0 %v2576
      %v2691 = vpop.f32.mrb[0].mxu0
      %v2692 = vadd.f32 0.0, %v2691
      %v2693 = vpop.f32.mrb[0].mxu0
      %v2694 = vpop.f32.mrb[0].mxu0
      %v2695 = vadd.f32 0.0, %v2694
      %v2696 = vpop.f32.mrb[0].mxu0
      %2697 = vmatprep.mubr.bf16.mxu0 0
      %2698 = vmatmul.mubr.bf16.gmra.mrb[0].mxu0 %v2577
      %v2699 = vpop.f32.mrb[0].mxu0
      %v2700 = vadd.f32 0.0, %v2699
      %v2701 = vpop.f32.mrb[0].mxu0
      %v2702 = vpop.f32.mrb[0].mxu0
      %v2703 = vadd.f32 0.0, %v2702
      %v2704 = vpop.f32.mrb[0].mxu0
      %2705 = vmatprep.mubr.bf16.mxu0 0
      %2706 = vmatmul.mubr.bf16.gmra.mrb[0].mxu0 %v2578
      %v2707 = vpop.f32.mrb[0].mxu0
      %v2708 = vadd.f32 0.0, %v2707
      %v2709 = vpop.f32.mrb[0].mxu0
      %v2710 = vpop.f32.mrb[0].mxu0
      %v2711 = vadd.f32 0.0, %v2710
      %v2712 = vpop.f32.mrb[0].mxu0
      %2713 = vmatprep.mubr.bf16.mxu0 0
      %2714 = vmatmul.mubr.bf16.gmra.mrb[0].mxu0 %v2579
      %v2715 = vpop.f32.mrb[0].mxu0
      %v2716 = vadd.f32 0.0, %v2715
      %v2717 = vpop.f32.mrb[0].mxu0
      %v2718 = vpop.f32.mrb[0].mxu0
      %v2719 = vadd.f32 0.0, %v2718
      %v2720 = vpop.f32.mrb[0].mxu0
      %2721 = vmatprep.mubr.bf16.mxu0 0
      %2722 = vmatmul.mubr.bf16.gmra.mrb[0].mxu0 %v2580
      %v2723 = vpop.f32.mrb[0].mxu0
      %v2724 = vadd.f32 0.0, %v2723
      %v2725 = vpop.f32.mrb[0].mxu0
      %v2726 = vpop.f32.mrb[0].mxu0
      %v2727 = vadd.f32 0.0, %v2726
      %v2728 = vpop.f32.mrb[0].mxu0
      %2729 = vmatprep.mubr.bf16.mxu0 0
      %2730 = vmatmul.mubr.bf16.gmra.mrb[0].mxu0 %v2581
      %v2731 = vpop.f32.mrb[0].mxu0
      %v2732 = vadd.f32 0.0, %v2731
      %v2733 = vpop.f32.mrb[0].mxu0
      %v2734 = vpop.f32.mrb[0].mxu0
      %v2735 = vadd.f32 0.0, %v2734
      %v2736 = vpop.f32.mrb[0].mxu0
      %2737 = vmatprep.mubr.bf16.mxu0 0
      %2738 = vmatmul.mubr.bf16.gmra.mrb[0].mxu0 %v2582
      %v2739 = vpop.f32.mrb[0].mxu0
      %v2740 = vadd.f32 0.0, %v2739
      %v2741 = vpop.f32.mrb[0].mxu0
      %v2742 = vpop.f32.mrb[0].mxu0
      %v2743 = vadd.f32 0.0, %v2742
      %v2744 = vpop.f32.mrb[0].mxu0
      %2745 = vmatprep.mubr.bf16.mxu0 0
      %2746 = vmatmul.mubr.bf16.gmra.mrb[0].mxu0 %v2583
      %v2747 = vpop.f32.mrb[0].mxu0
      %v2748 = vadd.f32 0.0, %v2747
      %v2749 = vpop.f32.mrb[0].mxu0
      %v2750 = vpop.f32.mrb[0].mxu0
      %v2751 = vadd.f32 0.0, %v2750
      %v2752 = vpop.f32.mrb[0].mxu0
      %2753 = vmatprep.mubr.bf16.mxu0 0
      %2754 = vmatmul.mubr.bf16.gmra.mrb[0].mxu0 %v2584
      %v2755 = vpop.f32.mrb[0].mxu0
      %v2756 = vadd.f32 0.0, %v2755
      %v2757 = vpop.f32.mrb[0].mxu0
      %v2758 = vpop.f32.mrb[0].mxu0
      %v2759 = vadd.f32 0.0, %v2758
      %v2760 = vpop.f32.mrb[0].mxu0
      %2761 = vmatprep.mubr.bf16.mxu0 0
      %2762 = vmatmul.mubr.bf16.gmra.mrb[0].mxu0 %v2585
      %v2763 = vpop.f32.mrb[0].mxu0
      %v2764 = vadd.f32 0.0, %v2763
      %v2765 = vpop.f32.mrb[0].mxu0
      %v2766 = vpop.f32.mrb[0].mxu0
      %v2767 = vadd.f32 0.0, %v2766
      %v2768 = vpop.f32.mrb[0].mxu0
      %2769 = vmatprep.mubr.bf16.mxu0 0
      %2770 = vmatmul.mubr.bf16.gmra.mrb[0].mxu0 %v2586
      %v2771 = vpop.f32.mrb[0].mxu0
      %v2772 = vadd.f32 0.0, %v2771
      %v2773 = vpop.f32.mrb[0].mxu0
      %v2774 = vpop.f32.mrb[0].mxu0
      %v2775 = vadd.f32 0.0, %v2774
      %v2776 = vpop.f32.mrb[0].mxu0
      %2777 = vmatprep.mubr.bf16.mxu0 0
      %2778 = vmatmul.mubr.bf16.gmra.mrb[0].mxu0 %v2587
      %v2779 = vpop.f32.mrb[0].mxu0
      %v2780 = vadd.f32 0.0, %v2779
      %v2781 = vpop.f32.mrb[0].mxu0
      %v2782 = vpop.f32.mrb[0].mxu0
      %v2783 = vadd.f32 0.0, %v2782
      %v2784 = vpop.f32.mrb[0].mxu0
      %2785 = vmatprep.mubr.bf16.mxu0 0
      %2786 = vmatmul.mubr.bf16.gmra.mrb[0].mxu0 %v2588
      %v2787 = vpop.f32.mrb[0].mxu0
      %v2788 = vadd.f32 0.0, %v2787
      %v2789 = vpop.f32.mrb[0].mxu0
      %v2790 = vpop.f32.mrb[0].mxu0
      %v2791 = vadd.f32 0.0, %v2790
      %v2792 = vpop.f32.mrb[0].mxu0
      %2793 = vmatprep.mubr.bf16.mxu0 0
      %2794 = vmatmul.mubr.bf16.gmra.mrb[0].mxu0 %v2589
      %v2795 = vpop.f32.mrb[0].mxu0
      %v2796 = vadd.f32 0.0, %v2795
      %v2797 = vpop.f32.mrb[0].mxu0
      %v2798 = vpop.f32.mrb[0].mxu0
      %v2799 = vadd.f32 0.0, %v2798
      %v2800 = vpop.f32.mrb[0].mxu0
      %2801 = vmatprep.mubr.bf16.mxu0 0
      %2802 = vmatmul.mubr.bf16.gmra.mrb[0].mxu0 %v2590
      %v2803 = vpop.f32.mrb[0].mxu0
      %v2804 = vadd.f32 0.0, %v2803
      %v2805 = vpop.f32.mrb[0].mxu0
      %v2806 = vpop.f32.mrb[0].mxu0
      %v2807 = vadd.f32 0.0, %v2806
      %v2808 = vpop.f32.mrb[0].mxu0
      %2809 = vmatprep.mubr.bf16.mxu0 0
      %2810 = vmatmul.mubr.bf16.gmra.mrb[0].mxu0 %v2591
      %v2811 = vpop.f32.mrb[0].mxu0
      %v2812 = vadd.f32 0.0, %v2811
      %v2813 = vpop.f32.mrb[0].mxu0
      %v2814 = vpop.f32.mrb[0].mxu0
      %v2815 = vadd.f32 0.0, %v2814
      %v2816 = vpop.f32.mrb[0].mxu0
      %2817 = vdwg.mxu0
      %v2818 = vadd.f32 %v2512, %v2692
      %v2819 = vadd.f32 %v2513, %v2695
      %v2820 = vadd.f32 %v2514, %v2700
      %v2821 = vadd.f32 %v2515, %v2703
      %v2822 = vadd.f32 %v2516, %v2708
      %v2823 = vadd.f32 %v2517, %v2711
      %v2824 = vadd.f32 %v2518, %v2716
      %v2825 = vadd.f32 %v2519, %v2719
      %v2826 = vadd.f32 %v2520, %v2724
      %v2827 = vadd.f32 %v2521, %v2727
      %v2828 = vadd.f32 %v2522, %v2732
      %v2829 = vadd.f32 %v2523, %v2735
      %v2830 = vadd.f32 %v2524, %v2740
      %v2831 = vadd.f32 %v2525, %v2743
      %v2832 = vadd.f32 %v2526, %v2748
      %v2833 = vadd.f32 %v2527, %v2751
      %v2834 = vadd.f32 %v2528, %v2756
      %v2835 = vadd.f32 %v2529, %v2759
      %v2836 = vadd.f32 %v2530, %v2764
      %v2837 = vadd.f32 %v2531, %v2767
      %v2838 = vadd.f32 %v2532, %v2772
      %v2839 = vadd.f32 %v2533, %v2775
      %v2840 = vadd.f32 %v2534, %v2780
      %v2841 = vadd.f32 %v2535, %v2783
      %v2842 = vadd.f32 %v2536, %v2788
      %v2843 = vadd.f32 %v2537, %v2791
      %v2844 = vadd.f32 %v2538, %v2796
      %v2845 = vadd.f32 %v2539, %v2799
      %v2846 = vadd.f32 %v2540, %v2804
      %v2847 = vadd.f32 %v2541, %v2807
      %v2848 = vadd.f32 %v2542, %v2812
      %v2849 = vadd.f32 %v2543, %v2815
      %v2850 = vld [vmem:[%s2237 + $0x2] sm:$0xff]
      %v2851 = vld [vmem:[%s2237 + $0xa] sm:$0xff]
      %v2852 = vld [vmem:[%s2237 + $0x1a] sm:$0xff]
      %v2853 = vld [vmem:[%s2237 + $0x22] sm:$0xff]
      %v2854 = vld [vmem:[%s2237 + $0x32] sm:$0xff]
      %v2855 = vld [vmem:[%s2237 + $0x3a] sm:$0xff]
      %v2856 = vld [vmem:[%s2237 + $0x4a] sm:$0xff]
      %v2857 = vld [vmem:[%s2237 + $0x52] sm:$0xff]
      %v2858 = vld [vmem:[%s2237 + $0x62] sm:$0xff]
      %v2859 = vld [vmem:[%s2237 + $0x6a] sm:$0xff]
      %v2860 = vld [vmem:[%s2237 + $0x7a] sm:$0xff]
      %v2861 = vld [vmem:[%s2237 + $0x82] sm:$0xff]
      %v2862 = vld [vmem:[%s2237 + $0x92] sm:$0xff]
      %v2863 = vld [vmem:[%s2237 + $0x9a] sm:$0xff]
      %v2864 = vld [vmem:[%s2237 + $0xaa] sm:$0xff]
      %v2865 = vld [vmem:[%s2237 + $0xb2] sm:$0xff]
      %v2866 = vld [vmem:[%s2237 + $0xc2] sm:$0xff]
      %v2867 = vld [vmem:[%s2237 + $0xca] sm:$0xff]
      %v2868 = vld [vmem:[%s2237 + $0xda] sm:$0xff]
      %v2869 = vld [vmem:[%s2237 + $0xe2] sm:$0xff]
      %v2870 = vld [vmem:[%s2237 + $0xf2] sm:$0xff]
      %v2871 = vld [vmem:[%s2237 + $0xfa] sm:$0xff]
      %v2872 = vld [vmem:[%s2237 + $0x10a] sm:$0xff]
      %v2873 = vld [vmem:[%s2237 + $0x112] sm:$0xff]
      %v2874 = vld [vmem:[%s2237 + $0x122] sm:$0xff]
      %v2875 = vld [vmem:[%s2237 + $0x12a] sm:$0xff]
      %v2876 = vld [vmem:[%s2237 + $0x13a] sm:$0xff]
      %v2877 = vld [vmem:[%s2237 + $0x142] sm:$0xff]
      %v2878 = vld [vmem:[%s2237 + $0x152] sm:$0xff]
      %v2879 = vld [vmem:[%s2237 + $0x15a] sm:$0xff]
      %v2880 = vld [vmem:[%s2237 + $0x16a] sm:$0xff]
      %v2881 = vld [vmem:[%s2237 + $0x172] sm:$0xff]
      %v2882 = vpack.c.bf16 %v2851, %v2850
      %v2883 = vpack.c.bf16 %v2853, %v2852
      %v2884 = vpack.c.bf16 %v2855, %v2854
      %v2885 = vpack.c.bf16 %v2857, %v2856
      %v2886 = vpack.c.bf16 %v2859, %v2858
      %v2887 = vpack.c.bf16 %v2861, %v2860
      %v2888 = vpack.c.bf16 %v2863, %v2862
      %v2889 = vpack.c.bf16 %v2865, %v2864
      %v2890 = vpack.c.bf16 %v2867, %v2866
      %v2891 = vpack.c.bf16 %v2869, %v2868
      %v2892 = vpack.c.bf16 %v2871, %v2870
      %v2893 = vpack.c.bf16 %v2873, %v2872
      %v2894 = vpack.c.bf16 %v2875, %v2874
      %v2895 = vpack.c.bf16 %v2877, %v2876
      %v2896 = vpack.c.bf16 %v2879, %v2878
      %v2897 = vpack.c.bf16 %v2881, %v2880
      %s2898 = scalar_lea.vmem %s3, 512
      %v2899 = vld [vmem:[%s2898] sm:$0xf]
      %v2900 = vld [vmem:[%s2898 + $0x4] sm:$0xf]
      %v2901 = vld [vmem:[%s2898 + $0x8] sm:$0xf]
      %v2902 = vld [vmem:[%s2898 + $0xc] sm:$0xf]
      %v2903 = vld [vmem:[%s2898 + $0x10] sm:$0xf]
      %v2904 = vld [vmem:[%s2898 + $0x14] sm:$0xf]
      %v2905 = vld [vmem:[%s2898 + $0x18] sm:$0xf]
      %v2906 = vld [vmem:[%s2898 + $0x1c] sm:$0xf]
      %v2907 = vld [vmem:[%s2898 + $0x20] sm:$0xf]
      %v2908 = vld [vmem:[%s2898 + $0x24] sm:$0xf]
      %v2909 = vld [vmem:[%s2898 + $0x28] sm:$0xf]
      %v2910 = vld [vmem:[%s2898 + $0x2c] sm:$0xf]
      %v2911 = vld [vmem:[%s2898 + $0x30] sm:$0xf]
      %v2912 = vld [vmem:[%s2898 + $0x34] sm:$0xf]
      %v2913 = vld [vmem:[%s2898 + $0x38] sm:$0xf]
      %v2914 = vld [vmem:[%s2898 + $0x3c] sm:$0xf]
      %v2931 = vunpack.c.l.b16 %v2899
      %v2932 = vunpack.c.l.b16 %v2900
      %v2933 = vunpack.c.l.b16 %v2901
      %v2934 = vunpack.c.l.b16 %v2902
      %v2935 = vunpack.c.l.b16 %v2903
      %v2936 = vunpack.c.l.b16 %v2904
      %v2937 = vunpack.c.l.b16 %v2905
      %v2938 = vunpack.c.l.b16 %v2906
      %v2939 = vunpack.c.l.b16 %v2907
      %v2940 = vunpack.c.l.b16 %v2908
      %v2941 = vunpack.c.l.b16 %v2909
      %v2942 = vunpack.c.l.b16 %v2910
      %v2943 = vunpack.c.l.b16 %v2911
      %v2944 = vunpack.c.l.b16 %v2912
      %v2945 = vunpack.c.l.b16 %v2913
      %v2946 = vunpack.c.l.b16 %v2914
      %v2947 = vpack.c.b16 %v2932, %v2931
      %v2948 = vpack.c.b16 %v2934, %v2933
      %v2949 = vpack.c.b16 %v2936, %v2935
      %v2950 = vpack.c.b16 %v2938, %v2937
      %v2951 = vpack.c.b16 %v2940, %v2939
      %v2952 = vpack.c.b16 %v2942, %v2941
      %v2953 = vpack.c.b16 %v2944, %v2943
      %v2954 = vpack.c.b16 %v2946, %v2945
      %2963 = vmatprep.subr.bf16.mxu0 0
      %2964 = vmatpush1.bf16.msra.mxu0 %v2947
      %2965 = vmatprep.subr.bf16.mxu0 0
      %2966 = vmatpush1.bf16.msra.mxu0 %v2948
      %2967 = vmatprep.subr.bf16.mxu0 0
      %2968 = vmatpush1.bf16.msra.mxu0 %v2949
      %2969 = vmatprep.subr.bf16.mxu0 0
      %2970 = vmatpush1.bf16.msra.mxu0 %v2950
      %2971 = vmatprep.subr.bf16.mxu0 0
      %2972 = vmatpush1.bf16.msra.mxu0 %v2951
      %2973 = vmatprep.subr.bf16.mxu0 0
      %2974 = vmatpush1.bf16.msra.mxu0 %v2952
      %2975 = vmatprep.subr.bf16.mxu0 0
      %2976 = vmatpush1.bf16.msra.mxu0 %v2953
      %2977 = vmatprep.subr.bf16.mxu0 0
      %2978 = vmatpush1.bf16.msra.mxu0 %v2954
      %2979 = vmatprep.subr.bf16.mxu0 0
      %2980 = vmatpush1.bf16.msra.mxu0 0
      %2981 = vmatprep.subr.bf16.mxu0 0
      %2982 = vmatpush1.bf16.msra.mxu0 0
      %2983 = vmatprep.subr.bf16.mxu0 0
      %2984 = vmatpush1.bf16.msra.mxu0 0
      %2985 = vmatprep.subr.bf16.mxu0 0
      %2986 = vmatpush1.bf16.msra.mxu0 0
      %2987 = vmatprep.subr.bf16.mxu0 0
      %2988 = vmatpush1.bf16.msra.mxu0 0
      %2989 = vmatprep.subr.bf16.mxu0 0
      %2990 = vmatpush1.bf16.msra.mxu0 0
      %2991 = vmatprep.subr.bf16.mxu0 0
      %2992 = vmatpush1.bf16.msra.mxu0 0
      %2993 = vmatprep.subr.bf16.mxu0 0
      %2994 = vmatpush1.bf16.msra.mxu0 0
      %2995 = vmatprep.mubr.bf16.mxu0 0
      %2996 = vmatmul.mubr.bf16.gmra.mrb[0].mxu0 %v2882
      %v2997 = vpop.f32.mrb[0].mxu0
      %v2998 = vadd.f32 0.0, %v2997
      %v2999 = vpop.f32.mrb[0].mxu0
      %v3000 = vpop.f32.mrb[0].mxu0
      %v3001 = vadd.f32 0.0, %v3000
      %v3002 = vpop.f32.mrb[0].mxu0
      %3003 = vmatprep.mubr.bf16.mxu0 0
      %3004 = vmatmul.mubr.bf16.gmra.mrb[0].mxu0 %v2883
      %v3005 = vpop.f32.mrb[0].mxu0
      %v3006 = vadd.f32 0.0, %v3005
      %v3007 = vpop.f32.mrb[0].mxu0
      %v3008 = vpop.f32.mrb[0].mxu0
      %v3009 = vadd.f32 0.0, %v3008
      %v3010 = vpop.f32.mrb[0].mxu0
      %3011 = vmatprep.mubr.bf16.mxu0 0
      %3012 = vmatmul.mubr.bf16.gmra.mrb[0].mxu0 %v2884
      %v3013 = vpop.f32.mrb[0].mxu0
      %v3014 = vadd.f32 0.0, %v3013
      %v3015 = vpop.f32.mrb[0].mxu0
      %v3016 = vpop.f32.mrb[0].mxu0
      %v3017 = vadd.f32 0.0, %v3016
      %v3018 = vpop.f32.mrb[0].mxu0
      %3019 = vmatprep.mubr.bf16.mxu0 0
      %3020 = vmatmul.mubr.bf16.gmra.mrb[0].mxu0 %v2885
      %v3021 = vpop.f32.mrb[0].mxu0
      %v3022 = vadd.f32 0.0, %v3021
      %v3023 = vpop.f32.mrb[0].mxu0
      %v3024 = vpop.f32.mrb[0].mxu0
      %v3025 = vadd.f32 0.0, %v3024
      %v3026 = vpop.f32.mrb[0].mxu0
      %3027 = vmatprep.mubr.bf16.mxu0 0
      %3028 = vmatmul.mubr.bf16.gmra.mrb[0].mxu0 %v2886
      %v3029 = vpop.f32.mrb[0].mxu0
      %v3030 = vadd.f32 0.0, %v3029
      %v3031 = vpop.f32.mrb[0].mxu0
      %v3032 = vpop.f32.mrb[0].mxu0
      %v3033 = vadd.f32 0.0, %v3032
      %v3034 = vpop.f32.mrb[0].mxu0
      %3035 = vmatprep.mubr.bf16.mxu0 0
      %3036 = vmatmul.mubr.bf16.gmra.mrb[0].mxu0 %v2887
      %v3037 = vpop.f32.mrb[0].mxu0
      %v3038 = vadd.f32 0.0, %v3037
      %v3039 = vpop.f32.mrb[0].mxu0
      %v3040 = vpop.f32.mrb[0].mxu0
      %v3041 = vadd.f32 0.0, %v3040
      %v3042 = vpop.f32.mrb[0].mxu0
      %3043 = vmatprep.mubr.bf16.mxu0 0
      %3044 = vmatmul.mubr.bf16.gmra.mrb[0].mxu0 %v2888
      %v3045 = vpop.f32.mrb[0].mxu0
      %v3046 = vadd.f32 0.0, %v3045
      %v3047 = vpop.f32.mrb[0].mxu0
      %v3048 = vpop.f32.mrb[0].mxu0
      %v3049 = vadd.f32 0.0, %v3048
      %v3050 = vpop.f32.mrb[0].mxu0
      %3051 = vmatprep.mubr.bf16.mxu0 0
      %3052 = vmatmul.mubr.bf16.gmra.mrb[0].mxu0 %v2889
      %v3053 = vpop.f32.mrb[0].mxu0
      %v3054 = vadd.f32 0.0, %v3053
      %v3055 = vpop.f32.mrb[0].mxu0
      %v3056 = vpop.f32.mrb[0].mxu0
      %v3057 = vadd.f32 0.0, %v3056
      %v3058 = vpop.f32.mrb[0].mxu0
      %3059 = vmatprep.mubr.bf16.mxu0 0
      %3060 = vmatmul.mubr.bf16.gmra.mrb[0].mxu0 %v2890
      %v3061 = vpop.f32.mrb[0].mxu0
      %v3062 = vadd.f32 0.0, %v3061
      %v3063 = vpop.f32.mrb[0].mxu0
      %v3064 = vpop.f32.mrb[0].mxu0
      %v3065 = vadd.f32 0.0, %v3064
      %v3066 = vpop.f32.mrb[0].mxu0
      %3067 = vmatprep.mubr.bf16.mxu0 0
      %3068 = vmatmul.mubr.bf16.gmra.mrb[0].mxu0 %v2891
      %v3069 = vpop.f32.mrb[0].mxu0
      %v3070 = vadd.f32 0.0, %v3069
      %v3071 = vpop.f32.mrb[0].mxu0
      %v3072 = vpop.f32.mrb[0].mxu0
      %v3073 = vadd.f32 0.0, %v3072
      %v3074 = vpop.f32.mrb[0].mxu0
      %3075 = vmatprep.mubr.bf16.mxu0 0
      %3076 = vmatmul.mubr.bf16.gmra.mrb[0].mxu0 %v2892
      %v3077 = vpop.f32.mrb[0].mxu0
      %v3078 = vadd.f32 0.0, %v3077
      %v3079 = vpop.f32.mrb[0].mxu0
      %v3080 = vpop.f32.mrb[0].mxu0
      %v3081 = vadd.f32 0.0, %v3080
      %v3082 = vpop.f32.mrb[0].mxu0
      %3083 = vmatprep.mubr.bf16.mxu0 0
      %3084 = vmatmul.mubr.bf16.gmra.mrb[0].mxu0 %v2893
      %v3085 = vpop.f32.mrb[0].mxu0
      %v3086 = vadd.f32 0.0, %v3085
      %v3087 = vpop.f32.mrb[0].mxu0
      %v3088 = vpop.f32.mrb[0].mxu0
      %v3089 = vadd.f32 0.0, %v3088
      %v3090 = vpop.f32.mrb[0].mxu0
      %3091 = vmatprep.mubr.bf16.mxu0 0
      %3092 = vmatmul.mubr.bf16.gmra.mrb[0].mxu0 %v2894
      %v3093 = vpop.f32.mrb[0].mxu0
      %v3094 = vadd.f32 0.0, %v3093
      %v3095 = vpop.f32.mrb[0].mxu0
      %v3096 = vpop.f32.mrb[0].mxu0
      %v3097 = vadd.f32 0.0, %v3096
      %v3098 = vpop.f32.mrb[0].mxu0
      %3099 = vmatprep.mubr.bf16.mxu0 0
      %3100 = vmatmul.mubr.bf16.gmra.mrb[0].mxu0 %v2895
      %v3101 = vpop.f32.mrb[0].mxu0
      %v3102 = vadd.f32 0.0, %v3101
      %v3103 = vpop.f32.mrb[0].mxu0
      %v3104 = vpop.f32.mrb[0].mxu0
      %v3105 = vadd.f32 0.0, %v3104
      %v3106 = vpop.f32.mrb[0].mxu0
      %3107 = vmatprep.mubr.bf16.mxu0 0
      %3108 = vmatmul.mubr.bf16.gmra.mrb[0].mxu0 %v2896
      %v3109 = vpop.f32.mrb[0].mxu0
      %v3110 = vadd.f32 0.0, %v3109
      %v3111 = vpop.f32.mrb[0].mxu0
      %v3112 = vpop.f32.mrb[0].mxu0
      %v3113 = vadd.f32 0.0, %v3112
      %v3114 = vpop.f32.mrb[0].mxu0
      %3115 = vmatprep.mubr.bf16.mxu0 0
      %3116 = vmatmul.mubr.bf16.gmra.mrb[0].mxu0 %v2897
      %v3117 = vpop.f32.mrb[0].mxu0
      %v3118 = vadd.f32 0.0, %v3117
      %v3119 = vpop.f32.mrb[0].mxu0
      %v3120 = vpop.f32.mrb[0].mxu0
      %v3121 = vadd.f32 0.0, %v3120
      %v3122 = vpop.f32.mrb[0].mxu0
      %3123 = vdwg.mxu0
      %v3124 = vadd.f32 %v2818, %v2998
      %v3125 = vadd.f32 %v2819, %v3001
      %v3126 = vadd.f32 %v2820, %v3006
      %v3127 = vadd.f32 %v2821, %v3009
      %v3128 = vadd.f32 %v2822, %v3014
      %v3129 = vadd.f32 %v2823, %v3017
      %v3130 = vadd.f32 %v2824, %v3022
      %v3131 = vadd.f32 %v2825, %v3025
      %v3132 = vadd.f32 %v2826, %v3030
      %v3133 = vadd.f32 %v2827, %v3033
      %v3134 = vadd.f32 %v2828, %v3038
      %v3135 = vadd.f32 %v2829, %v3041
      %v3136 = vadd.f32 %v2830, %v3046
      %v3137 = vadd.f32 %v2831, %v3049
      %v3138 = vadd.f32 %v2832, %v3054
      %v3139 = vadd.f32 %v2833, %v3057
      %v3140 = vadd.f32 %v2834, %v3062
      %v3141 = vadd.f32 %v2835, %v3065
      %v3142 = vadd.f32 %v2836, %v3070
      %v3143 = vadd.f32 %v2837, %v3073
      %v3144 = vadd.f32 %v2838, %v3078
      %v3145 = vadd.f32 %v2839, %v3081
      %v3146 = vadd.f32 %v2840, %v3086
      %v3147 = vadd.f32 %v2841, %v3089
      %v3148 = vadd.f32 %v2842, %v3094
      %v3149 = vadd.f32 %v2843, %v3097
      %v3150 = vadd.f32 %v2844, %v3102
      %v3151 = vadd.f32 %v2845, %v3105
      %v3152 = vadd.f32 %v2846, %v3110
      %v3153 = vadd.f32 %v2847, %v3113
      %v3154 = vadd.f32 %v2848, %v3118
      %v3155 = vadd.f32 %v2849, %v3121
      %3156 = vst [vmem:[%s231] sm:$0xff] %v3124
      %3157 = vst [vmem:[%s231 + $0x8] sm:$0xff] %v3125
      %3158 = vst [vmem:[%s231 + $0x10] sm:$0xff] %v3126
      %3159 = vst [vmem:[%s231 + $0x18] sm:$0xff] %v3127
      %3160 = vst [vmem:[%s231 + $0x20] sm:$0xff] %v3128
      %3161 = vst [vmem:[%s231 + $0x28] sm:$0xff] %v3129
      %3162 = vst [vmem:[%s231 + $0x30] sm:$0xff] %v3130
      %3163 = vst [vmem:[%s231 + $0x38] sm:$0xff] %v3131
      %3164 = vst [vmem:[%s231 + $0x40] sm:$0xff] %v3132
      %3165 = vst [vmem:[%s231 + $0x48] sm:$0xff] %v3133
      %3166 = vst [vmem:[%s231 + $0x50] sm:$0xff] %v3134
      %3167 = vst [vmem:[%s231 + $0x58] sm:$0xff] %v3135
      %3168 = vst [vmem:[%s231 + $0x60] sm:$0xff] %v3136
      %3169 = vst [vmem:[%s231 + $0x68] sm:$0xff] %v3137
      %3170 = vst [vmem:[%s231 + $0x70] sm:$0xff] %v3138
      %3171 = vst [vmem:[%s231 + $0x78] sm:$0xff] %v3139
      %3172 = vst [vmem:[%s231 + $0x80] sm:$0xff] %v3140
      %3173 = vst [vmem:[%s231 + $0x88] sm:$0xff] %v3141
      %3174 = vst [vmem:[%s231 + $0x90] sm:$0xff] %v3142
      %3175 = vst [vmem:[%s231 + $0x98] sm:$0xff] %v3143
      %3176 = vst [vmem:[%s231 + $0xa0] sm:$0xff] %v3144
      %3177 = vst [vmem:[%s231 + $0xa8] sm:$0xff] %v3145
      %3178 = vst [vmem:[%s231 + $0xb0] sm:$0xff] %v3146
      %3179 = vst [vmem:[%s231 + $0xb8] sm:$0xff] %v3147
      %3180 = vst [vmem:[%s231 + $0xc0] sm:$0xff] %v3148
      %3181 = vst [vmem:[%s231 + $0xc8] sm:$0xff] %v3149
      %3182 = vst [vmem:[%s231 + $0xd0] sm:$0xff] %v3150
      %3183 = vst [vmem:[%s231 + $0xd8] sm:$0xff] %v3151
      %3184 = vst [vmem:[%s231 + $0xe0] sm:$0xff] %v3152
      %3185 = vst [vmem:[%s231 + $0xe8] sm:$0xff] %v3153
      %3186 = vst [vmem:[%s231 + $0xf0] sm:$0xff] %v3154
      %3187 = vst [vmem:[%s231 + $0xf8] sm:$0xff] %v3155
      %v3188 = vadd.f32 %v3124, %v3125
      %v3189 = vadd.f32 %v3188, %v3126
      %v3190 = vadd.f32 %v3189, %v3127
      %v3191 = vadd.f32 %v3190, %v3128
      %v3192 = vadd.f32 %v3191, %v3129
      %v3193 = vadd.f32 %v3192, %v3130
      %v3194 = vadd.f32 %v3193, %v3131
      %v3195 = vadd.f32 %v3194, %v3132
      %v3196 = vadd.f32 %v3195, %v3133
      %v3197 = vadd.f32 %v3196, %v3134
      %v3198 = vadd.f32 %v3197, %v3135
      %v3199 = vadd.f32 %v3198, %v3136
      %v3200 = vadd.f32 %v3199, %v3137
      %v3201 = vadd.f32 %v3200, %v3138
      %v3202 = vadd.f32 %v3201, %v3139
      %v3203 = vadd.f32 %v3202, %v3140
      %v3204 = vadd.f32 %v3203, %v3141
      %v3205 = vadd.f32 %v3204, %v3142
      %v3206 = vadd.f32 %v3205, %v3143
      %v3207 = vadd.f32 %v3206, %v3144
      %v3208 = vadd.f32 %v3207, %v3145
      %v3209 = vadd.f32 %v3208, %v3146
      %v3210 = vadd.f32 %v3209, %v3147
      %v3211 = vadd.f32 %v3210, %v3148
      %v3212 = vadd.f32 %v3211, %v3149
      %v3213 = vadd.f32 %v3212, %v3150
      %v3214 = vadd.f32 %v3213, %v3151
      %v3215 = vadd.f32 %v3214, %v3152
      %v3216 = vadd.f32 %v3215, %v3153
      %v3217 = vadd.f32 %v3216, %v3154
      %v3218 = vadd.f32 %v3217, %v3155
      %v3219 = vrot.slane %v3218, 4
      %v3220 = vadd.f32 %v3218, %v3219
      %v3221 = vrot.slane %v3220, 2
      %v3222 = vadd.f32 %v3220, %v3221
      %v3223 = vrot.slane %v3222, 1
      %v3224 = vadd.f32 %v3222, %v3223
      %3225 = vst [vmem:[%s235] sm:$0x1] %v3224
      %v3226 = vmul.f32 %v3124, %v3124
      %v3227 = vmul.f32 %v3125, %v3125
      %v3228 = vmul.f32 %v3126, %v3126
      %v3229 = vmul.f32 %v3127, %v3127
      %v3230 = vmul.f32 %v3128, %v3128
      %v3231 = vmul.f32 %v3129, %v3129
      %v3232 = vmul.f32 %v3130, %v3130
      %v3233 = vmul.f32 %v3131, %v3131
      %v3234 = vmul.f32 %v3132, %v3132
      %v3235 = vmul.f32 %v3133, %v3133
      %v3236 = vmul.f32 %v3134, %v3134
      %v3237 = vmul.f32 %v3135, %v3135
      %v3238 = vmul.f32 %v3136, %v3136
      %v3239 = vmul.f32 %v3137, %v3137
      %v3240 = vmul.f32 %v3138, %v3138
      %v3241 = vmul.f32 %v3139, %v3139
      %v3242 = vmul.f32 %v3140, %v3140
      %v3243 = vmul.f32 %v3141, %v3141
      %v3244 = vmul.f32 %v3142, %v3142
      %v3245 = vmul.f32 %v3143, %v3143
      %v3246 = vmul.f32 %v3144, %v3144
      %v3247 = vmul.f32 %v3145, %v3145
      %v3248 = vmul.f32 %v3146, %v3146
      %v3249 = vmul.f32 %v3147, %v3147
      %v3250 = vmul.f32 %v3148, %v3148
      %v3251 = vmul.f32 %v3149, %v3149
      %v3252 = vmul.f32 %v3150, %v3150
      %v3253 = vmul.f32 %v3151, %v3151
      %v3254 = vmul.f32 %v3152, %v3152
      %v3255 = vmul.f32 %v3153, %v3153
      %v3256 = vmul.f32 %v3154, %v3154
      %v3257 = vmul.f32 %v3155, %v3155
      %v3258 = vadd.f32 %v3226, %v3227
      %v3259 = vadd.f32 %v3258, %v3228
      %v3260 = vadd.f32 %v3259, %v3229
      %v3261 = vadd.f32 %v3260, %v3230
      %v3262 = vadd.f32 %v3261, %v3231
      %v3263 = vadd.f32 %v3262, %v3232
      %v3264 = vadd.f32 %v3263, %v3233
      %v3265 = vadd.f32 %v3264, %v3234
      %v3266 = vadd.f32 %v3265, %v3235
      %v3267 = vadd.f32 %v3266, %v3236
      %v3268 = vadd.f32 %v3267, %v3237
      %v3269 = vadd.f32 %v3268, %v3238
      %v3270 = vadd.f32 %v3269, %v3239
      %v3271 = vadd.f32 %v3270, %v3240
      %v3272 = vadd.f32 %v3271, %v3241
      %v3273 = vadd.f32 %v3272, %v3242
      %v3274 = vadd.f32 %v3273, %v3243
      %v3275 = vadd.f32 %v3274, %v3244
      %v3276 = vadd.f32 %v3275, %v3245
      %v3277 = vadd.f32 %v3276, %v3246
      %v3278 = vadd.f32 %v3277, %v3247
      %v3279 = vadd.f32 %v3278, %v3248
      %v3280 = vadd.f32 %v3279, %v3249
      %v3281 = vadd.f32 %v3280, %v3250
      %v3282 = vadd.f32 %v3281, %v3251
      %v3283 = vadd.f32 %v3282, %v3252
      %v3284 = vadd.f32 %v3283, %v3253
      %v3285 = vadd.f32 %v3284, %v3254
      %v3286 = vadd.f32 %v3285, %v3255
      %v3287 = vadd.f32 %v3286, %v3256
      %v3288 = vadd.f32 %v3287, %v3257
      %v3289 = vrot.slane %v3288, 4
      %v3290 = vadd.f32 %v3288, %v3289
      %v3291 = vrot.slane %v3290, 2
      %v3292 = vadd.f32 %v3290, %v3291
      %v3293 = vrot.slane %v3292, 1
      %v3294 = vadd.f32 %v3292, %v3293
      %3295 = vst [vmem:[%s235 + $0x1] sm:$0x1] %v3294
      %p3296 = scmp.lt.s32.totalorder %s17, 1
      %s3297 = scalar_select %p3296, %s17, 1
      %s3298 = smul.addr %s3297, 32
      %s3299 = smul.addr %s3298, 8
      %s3300 = scalar_lea.vmem %s4, %s3299
      %p3301 = scmp.lt.s32.totalorder %s17, 1
      %s3302 = scalar_select %p3301, %s17, 1
      %s3303 = smul.addr %s3302, 2
      %s3304 = scalar_lea.vmem %s5, %s3303
      // Predicated region
      $region37: #{up_forward.8} parent=35 // pred_check
        %p3305 = pneg %p124
      $region38: #{up_forward.8} parent=35 // pred_check_branch
        %3307 = sbr.rel (%p3305) target = $region40
      $region39: #{up_forward.8} parent=35 // pred_region
        _
      $region40: #{up_forward.8} parent=35 // pred_fallthru
        _
      // Predicated region
      $region41: #{up_forward.8} parent=35 // pred_check
        %p3308 = pneg %p150
      $region42: #{up_forward.8} parent=35 // pred_check_branch
        %3310 = sbr.rel (%p3308) target = $region44
      $region43: #{up_forward.8} parent=35 // pred_region
        _
      $region44: #{up_forward.8} parent=35 // pred_fallthru
        _
    $region36: #{up_forward.8} parent=5 // pred_fallthru
      _
    %p3311 = scmp.le.s32.totalorder 2, %s12
    // Predicated region
    $region45: #{up_forward.8} parent=5 // pred_check
      %p3312 = pneg %p3311
    $region46: #{up_forward.8} parent=5 // pred_check_branch
      %3314 = sbr.rel (%p3312) target = $region48
    $region47: #{up_forward.8} parent=5 // pred_region
      %s3315 = ssub.s32 %s12, 2
      // Predicated region
      $region49: #{up_forward.8} parent=47 // pred_check
        %p3316 = pneg %p130
      $region50: #{up_forward.8} parent=47 // pred_check_branch
        %3318 = sbr.rel (%p3316) target = $region52
      $region51: #{up_forward.8} parent=47 // pred_region
        %p3319 = scmp.lt.s32.totalorder %s18, 1
        %s3320 = scalar_select %p3319, %s18, 1
        %s3321 = smul.addr %s3320, 32
        %s3322 = smul.addr %s3321, 8
        %s3323 = scalar_lea.vmem %s4, %s3322
      $region52: #{up_forward.8} parent=47 // pred_fallthru
        _
      // Predicated region
      $region53: #{up_forward.8} parent=47 // pred_check
        %p3324 = pneg %p156
      $region54: #{up_forward.8} parent=47 // pred_check_branch
        %3326 = sbr.rel (%p3324) target = $region56
      $region55: #{up_forward.8} parent=47 // pred_region
        %p3327 = scmp.lt.s32.totalorder %s18, 1
        %s3328 = scalar_select %p3327, %s18, 1
        %s3329 = smul.addr %s3328, 2
        %s3330 = scalar_lea.vmem %s5, %s3329
      $region56: #{up_forward.8} parent=47 // pred_fallthru
        _
    $region48: #{up_forward.8} parent=5 // pred_fallthru
      _
  $region6: #{up_forward.8} parent=0 // loop_footer
    %s16 = sadd.s32 1, %s12
  $region7: #{up_forward.8} parent=0 // loop_footer_branch
    %11 = sbr.rel target = $region3
  $region8: #{up_forward.8} parent=0 // loop_exit
    _

</llo_original>
